<compile_context>
chip_gen: v7x
topology: tpu7x:2x2x1
jax: 0.10.0
libtpu: 0.0.40
codegen_flags: <defaults>
</compile_context>

<pallas_src>
import numpy as np
import jax
import jax.numpy as jnp
from jax.experimental import pallas as pl
from jax.experimental.pallas import tpu as pltpu

# Values the reference module reads from `config`.
CONFIG = dict(
    fc_input=4,                          # config.fc_input
    kernel_size=5,                       # config.kernel_size
    padding=2,                           # config.padding
    stride=2,                            # config.stride
    output_pad_dec=(True, True, True),   # config.output_pad_dec -> output_padding=1
)
BN_EPS = 1e-5
VMEM_LIMIT = 32 * 1024 * 1024


# ---------------------- init-time weight preprocessing (numpy) -------------------

def build_deconv_merged_weights(w_pt, w_in):
    """ConvTranspose2d(k=5, s=2, p=2, output_padding=1) weight (Cin, Cout, 5, 5)
    -> 3 row-offset matrices of shape (W*Cin, 2*Wo*Cout).

    Row offset d selects which padded input row (i = j + d - 1) feeds output row
    pair (2j, 2j+1).  Columns [0:n] produce the even output row (phase 0), columns
    [n:2n] the odd output row (phase 1).  Column taps, column parity, width padding
    and the stride-2 zero structure are all folded into the band (review opt 1)."""
    cin, cout, kh_n, kw_n = w_pt.shape
    wo = 2 * w_in
    n = wo * cout
    w_np = np.asarray(w_pt, np.float32)
    kh_of = {(0, 0): 4, (0, 1): 2, (0, 2): 0, (1, 1): 3, (1, 2): 1}  # (phase,d)->kh
    mats = np.zeros((3, w_in * cin, 2 * n), np.float32)
    for (ph, d), kh in kh_of.items():
        for iw in range(w_in):
            for ow in range(wo):
                kw = ow + 2 - 2 * iw
                if 0 <= kw < kw_n:
                    mats[d, iw * cin:(iw + 1) * cin,
                         ph * n + ow * cout:ph * n + (ow + 1) * cout] = \
                        w_np[:, :, kh, kw]
    return jnp.asarray(mats, jnp.bfloat16)


def build_conv_banded_weights(w_pt, w_in, cout_pad, pad=2):
    """Conv2d(k=5, s=1, p=2) weight (Cout, Cin, 5, 5) -> 5 banded matrices (per kh),
    with Cout padded to `cout_pad` so the output minor dim is lane-dense (opt 5)."""
    cout, cin, kh_n, kw_n = w_pt.shape
    w_np = np.asarray(w_pt, np.float32)
    mats = np.zeros((kh_n, w_in * cin, w_in * cout_pad), np.float32)
    for kh in range(kh_n):
        for iw in range(w_in):
            for ow in range(w_in):
                kw = iw - ow + pad
                if 0 <= kw < kw_n:
                    mats[kh, iw * cin:(iw + 1) * cin,
                         ow * cout_pad:ow * cout_pad + cout] = w_np[:, :, kh, kw].T
    return jnp.asarray(mats, jnp.bfloat16)


def build_channel_pool(w_out, cout):
    """(Wo*Cout, Wo*Cout) 0/1 matrix pooling same-channel columns (BN2d stats)."""
    return jnp.asarray(np.kron(np.ones((w_out, w_out), np.float32),
                               np.eye(cout, dtype=np.float32)), jnp.float32)


def build_row_interleave(h):
    """(2, 2h, h): G[0] scatters row j -> 2j (even phase), G[1] -> 2j+1 (odd)."""
    g = np.zeros((2, 2 * h, h), np.float32)
    g[0, 0::2, :] = np.eye(h, dtype=np.float32)
    g[1, 1::2, :] = np.eye(h, dtype=np.float32)
    return jnp.asarray(g, jnp.float32)


# ------------------------------ fused decoder kernel -----------------------------

def make_decoder_kernel(batch, fc_in, c0, chans):
    b_n = batch

    def fill_xpad(xpad, ys, h, k, halo):
        # Zero only the halo rows (review opt 4); data rows get one dense store.
        stride = h + 2 * halo
        zhalo = jnp.zeros((halo, k), jnp.bfloat16)
        for b in range(b_n):
            base = b * stride
            xpad[base:base + halo, :] = zhalo
            xpad[base + halo + h:base + stride, :] = zhalo
            xpad[base + halo:base + halo + h, :] = ys[b]

    def deconv_stage(xpad, h, cout, wm_ref, p_ref, g_ref, be_ref, gi_ref):
        """One DecoderBlock: ConvTranspose2d(k5,s2,p2,op=1,bias=False)
        + BatchNorm2d(batch stats, biased var) + ReLU, all images at once."""
        n = wm_ref.shape[2] // 2
        ho = 2 * h
        wo = n // cout
        stride = h + 2
        m = b_n * stride - 2
        acc = None
        for d in range(3):                    # merged row taps: 3 wide dots (opt 1)
            t = jnp.dot(xpad[d:d + m, :], wm_ref[d],
                        preferred_element_type=jnp.float32)
            acc = t if acc is None else acc + t
        # Valid rows for image b are [b*stride, b*stride+h); the 2 rows between
        # images mix neighbouring images through the shared matmul and are dropped.
        halves = []
        colsum = jnp.zeros((1, n), jnp.float32)
        for b in range(b_n):
            ab = acc[b * stride:b * stride + h, :]
            ae, ao = ab[:, :n], ab[:, n:]     # even / odd output-row phases
            halves.append((ae, ao))
            colsum = colsum + jnp.sum(ae, axis=0, keepdims=True) \
                            + jnp.sum(ao, axis=0, keepdims=True)
        cnt = float(b_n * ho * wo)
        # BN2d batch stats: pool same-channel columns with a 0/1 matmul; two-pass
        # (shifted) variance to avoid E[x^2]-mean^2 cancellation.
        mean_t = jnp.dot(colsum, p_ref[...],
                         preferred_element_type=jnp.float32) / cnt
        sq = jnp.zeros((1, n), jnp.float32)
        for ae, ao in halves:
            de = ae - mean_t
            do = ao - mean_t
            sq = sq + jnp.sum(de * de, axis=0, keepdims=True) \
                    + jnp.sum(do * do, axis=0, keepdims=True)
        var_t = jnp.dot(sq, p_ref[...], preferred_element_type=jnp.float32) / cnt
        scale_t = g_ref[...] * jax.lax.rsqrt(var_t + BN_EPS)
        shift_t = be_ref[...] - mean_t * scale_t
        ge = gi_ref[0]
        go = gi_ref[1]
        outs = []
        for ae, ao in halves:
            ye = jnp.maximum(ae * scale_t + shift_t, 0.0)
            yo = jnp.maximum(ao * scale_t + shift_t, 0.0)
            # even/odd row interleave via exact 0/1 scatter matmuls -> a single
            # contiguous natural-order (2h, n) slab per image.
            yb = jnp.dot(ge, ye, preferred_element_type=jnp.float32) \
               + jnp.dot(go, yo, preferred_element_type=jnp.float32)
            outs.append(yb.astype(jnp.bfloat16))
        return outs

    def kernel(z_ref, fcw_ref, fcg_ref, fcb_ref,
               w1_ref, p1_ref, g1_ref, b1_ref, gi1_ref,
               w2_ref, p2_ref, g2_ref, b2_ref, gi2_ref,
               w3_ref, p3_ref, g3_ref, b3_ref, gi3_ref,
               wf_ref, bf_ref,
               o_ref,
               xpad1, xpad2, xpad3, xpadf):
        # ---- fc: Linear(bias=False) + BatchNorm1d (batch stats) + ReLU ----
        y = jnp.dot(z_ref[...].astype(jnp.bfloat16), fcw_ref[...],
                    preferred_element_type=jnp.float32)             # (B, F)
        mu = jnp.mean(y, axis=0, keepdims=True)
        yc = y - mu
        var = jnp.mean(yc * yc, axis=0, keepdims=True)              # biased var
        sc = fcg_ref[...] * jax.lax.rsqrt(var + BN_EPS)
        act = jnp.maximum(yc * sc + fcb_ref[...], 0.0)              # (B, F) f32

        # scatter NHWC-flat fc rows into block-1's stacked padded scratch
        h1 = fc_in
        k1 = fc_in * c0
        stride1 = h1 + 2
        zrow = jnp.zeros((1, k1), jnp.bfloat16)
        for b in range(b_n):
            base = b * stride1
            xpad1[base:base + 1, :] = zrow
            xpad1[base + h1 + 1:base + h1 + 2, :] = zrow
            for r in range(h1):
                xpad1[base + 1 + r:base + 2 + r, :] = \
                    act[b:b + 1, r * k1:(r + 1) * k1].astype(jnp.bfloat16)

        # ---- three DecoderBlocks (ConvTranspose2d + BatchNorm2d + ReLU) ----
        ys = deconv_stage(xpad1, h1, chans[0][1],
                          w1_ref, p1_ref, g1_ref, b1_ref, gi1_ref)
        h2, k2 = 2 * h1, 2 * fc_in * chans[0][1]
        fill_xpad(xpad2, ys, h2, k2, halo=1)
        ys = deconv_stage(xpad2, h2, chans[1][1],
                          w2_ref, p2_ref, g2_ref, b2_ref, gi2_ref)
        h3, k3 = 2 * h2, 4 * fc_in * chans[1][1]
        fill_xpad(xpad3, ys, h3, k3, halo=1)
        ys = deconv_stage(xpad3, h3, chans[2][1],
                          w3_ref, p3_ref, g3_ref, b3_ref, gi3_ref)
        hf, kf = 2 * h3, 8 * fc_in * chans[2][1]
        fill_xpad(xpadf, ys, hf, kf, halo=2)

        # ---- final Conv2d(k5, s1, p2) + bias + Tanh (Cout padded 3 -> 4) ----
        stridef = hf + 4
        mf = b_n * stridef - 4
        accf = None
        for kh in range(5):
            t = jnp.dot(xpadf[kh:kh + mf, :], wf_ref[kh],
                        preferred_element_type=jnp.float32)
            accf = t if accf is None else accf + t
        for b in range(b_n):
            ab = accf[b * stridef:b * stridef + hf, :]
            o_ref[b] = jnp.tanh(ab + bf_ref[...])                   # lane-dense 128

    return kernel


# ------------------------------- params & forward --------------------------------

def init_params(key, z_size, size, cfg):
    assert cfg["kernel_size"] == 5 and cfg["padding"] == 2 and cfg["stride"] == 2
    assert all(cfg["output_pad_dec"])
    fc_in = cfg["fc_input"]
    k = cfg["kernel_size"]
    fc_feat = fc_in * fc_in * size
    keys = jax.random.split(key, 16)

    def nrm(kk, shape, scale=0.05):
        return scale * jax.random.normal(kk, shape, dtype=jnp.float32)

    # Permute fc columns from NCHW-flat (c,h,w) to NHWC-flat (h,w,c) feature order
    # so the fc output is already the lane-dense (H, W*C) slab the conv stages use.
    def to_nhwc_cols(v, c):
        return v.reshape(-1, c, fc_in, fc_in).transpose(0, 2, 3, 1).reshape(
            v.shape[0], fc_feat)

    fc_w = nrm(keys[0], (z_size, fc_feat))
    fc_gamma = 1.0 + 0.1 * jax.random.normal(keys[1], (fc_feat,), jnp.float32)
    fc_beta = 0.1 * jax.random.normal(keys[2], (fc_feat,), jnp.float32)

    params = {
        "c0": size,
        "chans": [(size, size), (size, size // 2), (size // 2, size // 8)],
        "fc_w": to_nhwc_cols(fc_w, size).astype(jnp.bfloat16),
        "fc_gamma": to_nhwc_cols(fc_gamma[None], size),
        "fc_beta": to_nhwc_cols(fc_beta[None], size),
        "blocks": [],
    }

    w_in = fc_in
    for i, (cin, cout) in enumerate(params["chans"]):
        h_in = w_in                                   # square feature maps
        w_pt = nrm(keys[3 + i], (cin, cout, k, k))    # ConvTranspose2d (Cin,Cout,K,K)
        wo = 2 * w_in
        gamma = 1.0 + 0.1 * jax.random.normal(keys[6 + i], (cout,), jnp.float32)
        beta = 0.1 * jax.random.normal(keys[9 + i], (cout,), jnp.float32)
        params["blocks"].append(dict(
            w=build_deconv_merged_weights(w_pt, w_in),
            p=build_channel_pool(wo, cout),
            gamma_t=jnp.tile(gamma, wo).reshape(1, wo * cout),
            beta_t=jnp.tile(beta, wo).reshape(1, wo * cout),
            gi=build_row_interleave(h_in),
        ))
        w_in *= 2

    cin_f = size // 8
    w_pt = nrm(keys[12], (3, cin_f, k, k))            # Conv2d (Cout,Cin,K,K)
    bias = 0.01 * jax.random.normal(keys[13], (3,), jnp.float32)
    params["out_w"] = build_conv_banded_weights(w_pt, w_in, cout_pad=4)
    bias_pad = jnp.concatenate([bias, jnp.zeros((1,), jnp.float32)])
    params["out_b_t"] = jnp.tile(bias_pad, w_in).reshape(1, w_in * 4)
    return params


def decoder_forward(z, params, cfg):
    b = z.shape[0]
    fc_in = cfg["fc_input"]
    c0 = params["c0"]
    chans = params["chans"]
    blk = params["blocks"]
    h_out = 8 * fc_in
    w_out = 8 * fc_in
    nf = w_out * 4                                     # padded channels -> 128 lanes

    kernel = make_decoder_kernel(b, fc_in, c0, chans)
    vspec = pl.BlockSpec(memory_space=pltpu.MemorySpace.VMEM)
    out = pl.pallas_call(
        kernel,
        out_shape=jax.ShapeDtypeStruct((b, h_out, nf), jnp.float32),
        in_specs=[vspec] * 21,
        out_specs=vspec,
        scratch_shapes=[
            pltpu.VMEM((b * (fc_in + 2), fc_in * c0), jnp.bfloat16),
            pltpu.VMEM((b * (2 * fc_in + 2), 2 * fc_in * chans[0][1]), jnp.bfloat16),
            pltpu.VMEM((b * (4 * fc_in + 2), 4 * fc_in * chans[1][1]), jnp.bfloat16),
            pltpu.VMEM((b * (8 * fc_in + 4), 8 * fc_in * chans[2][1]), jnp.bfloat16),
        ],
        compiler_params=pltpu.CompilerParams(vmem_limit_bytes=VMEM_LIMIT),
    )(z, params["fc_w"], params["fc_gamma"], params["fc_beta"],
      blk[0]["w"], blk[0]["p"], blk[0]["gamma_t"], blk[0]["beta_t"], blk[0]["gi"],
      blk[1]["w"], blk[1]["p"], blk[1]["gamma_t"], blk[1]["beta_t"], blk[1]["gi"],
      blk[2]["w"], blk[2]["p"], blk[2]["gamma_t"], blk[2]["beta_t"], blk[2]["gi"],
      params["out_w"], params["out_b_t"])

    # (B, H, W*4) -> (B, H, W, 4) -> drop the pad channel -> NCHW like PyTorch
    img = out.reshape(b, h_out, w_out, 4)[..., :3]
    return img.transpose(0, 3, 1, 2)


if __name__ == "__main__":
    key = jax.random.PRNGKey(0)
    k_param, k_z = jax.random.split(key)

    batch, z_size, size = 2, 32, 32
    params = init_params(k_param, z_size, size, CONFIG)
    z = jax.random.normal(k_z, (batch, z_size), dtype=jnp.float32)

    fwd = jax.jit(lambda zz: decoder_forward(zz, params, CONFIG))
    out = fwd(z)
    jax.block_until_ready(out)

    assert out.shape == (batch, 3, 8 * CONFIG["fc_input"], 8 * CONFIG["fc_input"]), out.shape
    assert bool(jnp.all(jnp.isfinite(out)))
    print("KERNEL_OK")
</pallas_src>

<mosaic_0001>
module attributes {stable_mosaic.version = 11 : i64} {
  func.func @kernel(%arg0: memref<2x32xf32, #tpu.memory_space<vmem>>, %arg1: memref<32x512xbf16, #tpu.memory_space<vmem>>, %arg2: memref<1x512xf32, #tpu.memory_space<vmem>>, %arg3: memref<1x512xf32, #tpu.memory_space<vmem>>, %arg4: memref<3x128x512xbf16, #tpu.memory_space<vmem>>, %arg5: memref<256x256xf32, #tpu.memory_space<vmem>>, %arg6: memref<1x256xf32, #tpu.memory_space<vmem>>, %arg7: memref<1x256xf32, #tpu.memory_space<vmem>>, %arg8: memref<2x8x4xf32, #tpu.memory_space<vmem>>, %arg9: memref<3x256x512xbf16, #tpu.memory_space<vmem>>, %arg10: memref<256x256xf32, #tpu.memory_space<vmem>>, %arg11: memref<1x256xf32, #tpu.memory_space<vmem>>, %arg12: memref<1x256xf32, #tpu.memory_space<vmem>>, %arg13: memref<2x16x8xf32, #tpu.memory_space<vmem>>, %arg14: memref<3x256x256xbf16, #tpu.memory_space<vmem>>, %arg15: memref<128x128xf32, #tpu.memory_space<vmem>>, %arg16: memref<1x128xf32, #tpu.memory_space<vmem>>, %arg17: memref<1x128xf32, #tpu.memory_space<vmem>>, %arg18: memref<2x32x16xf32, #tpu.memory_space<vmem>>, %arg19: memref<5x128x128xbf16, #tpu.memory_space<vmem>>, %arg20: memref<1x128xf32, #tpu.memory_space<vmem>>, %arg21: memref<2x32x128xf32, #tpu.memory_space<vmem>>, %arg22: memref<12x128xbf16, #tpu.memory_space<vmem>>, %arg23: memref<20x256xbf16, #tpu.memory_space<vmem>>, %arg24: memref<36x256xbf16, #tpu.memory_space<vmem>>, %arg25: memref<72x128xbf16, #tpu.memory_space<vmem>>) attributes {dimension_semantics = [], scalar_prefetch = 0 : i64, scratch_operands = 4 : i64, tpu.core_type = #tpu.core_type<tc>} {
    %c0 = arith.constant 0 : index
    %c0_0 = arith.constant 0 : index
    %0 = vector.load %arg0[%c0, %c0_0] : memref<2x32xf32, #tpu.memory_space<vmem>>, vector<2x32xf32>
    %1 = arith.truncf %0 : vector<2x32xf32> to vector<2x32xbf16>
    %c0_1 = arith.constant 0 : index
    %c0_2 = arith.constant 0 : index
    %2 = vector.load %arg1[%c0_1, %c0_2] : memref<32x512xbf16, #tpu.memory_space<vmem>>, vector<32x512xbf16>
    %cst = arith.constant dense<0.000000e+00> : vector<2x512xf32>
    %3 = tpu.matmul %1, %2, %cst {dimension_numbers = #tpu.dot_dimension_numbers<[1], [0], [0], [1], [0, 0, 1, 1], [], []>} : vector<2x32xbf16>, vector<32x512xbf16>, vector<2x512xf32> -> vector<2x512xf32>
    %cst_3 = arith.constant dense<0.000000e+00> : vector<512xf32>
    %4 = vector.multi_reduction <add>, %3, %cst_3 [0] : vector<2x512xf32> to vector<512xf32>
    %5 = vector.shape_cast %4 : vector<512xf32> to vector<1x512xf32>
    %cst_4 = arith.constant 2.000000e+00 : f32
    %6 = vector.broadcast %cst_4 : f32 to vector<1x512xf32>
    %7 = arith.divf %5, %6 : vector<1x512xf32>
    %8 = vector.broadcast %7 : vector<1x512xf32> to vector<2x512xf32>
    %9 = arith.subf %3, %8 : vector<2x512xf32>
    %10 = arith.mulf %9, %9 : vector<2x512xf32>
    %cst_5 = arith.constant dense<0.000000e+00> : vector<512xf32>
    %11 = vector.multi_reduction <add>, %10, %cst_5 [0] : vector<2x512xf32> to vector<512xf32>
    %12 = vector.shape_cast %11 : vector<512xf32> to vector<1x512xf32>
    %cst_6 = arith.constant 2.000000e+00 : f32
    %13 = vector.broadcast %cst_6 : f32 to vector<1x512xf32>
    %14 = arith.divf %12, %13 : vector<1x512xf32>
    %c0_7 = arith.constant 0 : index
    %c0_8 = arith.constant 0 : index
    %15 = vector.load %arg2[%c0_7, %c0_8] : memref<1x512xf32, #tpu.memory_space<vmem>>, vector<1x512xf32>
    %cst_9 = arith.constant 9.99999974E-6 : f32
    %16 = vector.broadcast %cst_9 : f32 to vector<1x512xf32>
    %17 = arith.addf %14, %16 : vector<1x512xf32>
    %18 = math.rsqrt %17 : vector<1x512xf32>
    %19 = arith.mulf %15, %18 : vector<1x512xf32>
    %20 = vector.broadcast %19 : vector<1x512xf32> to vector<2x512xf32>
    %21 = arith.mulf %9, %20 : vector<2x512xf32>
    %c0_10 = arith.constant 0 : index
    %c0_11 = arith.constant 0 : index
    %22 = vector.load %arg3[%c0_10, %c0_11] : memref<1x512xf32, #tpu.memory_space<vmem>>, vector<1x512xf32>
    %23 = vector.broadcast %22 : vector<1x512xf32> to vector<2x512xf32>
    %24 = arith.addf %21, %23 : vector<2x512xf32>
    %cst_12 = arith.constant 0.000000e+00 : f32
    %25 = vector.broadcast %cst_12 : f32 to vector<2x512xf32>
    %26 = arith.maximumf %24, %25 : vector<2x512xf32>
    %cst_13 = arith.constant 0.000000e+00 : bf16
    %27 = vector.broadcast %cst_13 : bf16 to vector<1x128xbf16>
    %c0_14 = arith.constant 0 : index
    %c0_15 = arith.constant 0 : index
    %28 = vector.load %arg22[%c0_14, %c0_15] : memref<12x128xbf16, #tpu.memory_space<vmem>>, vector<1x128xbf16>
    tpu.vector_store %arg22[%c0_14, %c0_15], %27 {strides = array<i32>} : memref<12x128xbf16, #tpu.memory_space<vmem>>, vector<1x128xbf16>,
    %c5 = arith.constant 5 : index
    %c0_16 = arith.constant 0 : index
    %29 = vector.load %arg22[%c5, %c0_16] : memref<12x128xbf16, #tpu.memory_space<vmem>>, vector<1x128xbf16>
    tpu.vector_store %arg22[%c5, %c0_16], %27 {strides = array<i32>} : memref<12x128xbf16, #tpu.memory_space<vmem>>, vector<1x128xbf16>,
    %30 = vector.extract_strided_slice %26 {offsets = [0, 0], sizes = [1, 128], strides = [1, 1]} : vector<2x512xf32> to vector<1x128xf32>
    %31 = arith.truncf %30 : vector<1x128xf32> to vector<1x128xbf16>
    %c1 = arith.constant 1 : index
    %c0_17 = arith.constant 0 : index
    %32 = vector.load %arg22[%c1, %c0_17] : memref<12x128xbf16, #tpu.memory_space<vmem>>, vector<1x128xbf16>
    tpu.vector_store %arg22[%c1, %c0_17], %31 {strides = array<i32>} : memref<12x128xbf16, #tpu.memory_space<vmem>>, vector<1x128xbf16>,
    %33 = vector.extract_strided_slice %26 {offsets = [0, 128], sizes = [1, 128], strides = [1, 1]} : vector<2x512xf32> to vector<1x128xf32>
    %34 = arith.truncf %33 : vector<1x128xf32> to vector<1x128xbf16>
    %c2 = arith.constant 2 : index
    %c0_18 = arith.constant 0 : index
    %35 = vector.load %arg22[%c2, %c0_18] : memref<12x128xbf16, #tpu.memory_space<vmem>>, vector<1x128xbf16>
    tpu.vector_store %arg22[%c2, %c0_18], %34 {strides = array<i32>} : memref<12x128xbf16, #tpu.memory_space<vmem>>, vector<1x128xbf16>,
    %36 = vector.extract_strided_slice %26 {offsets = [0, 256], sizes = [1, 128], strides = [1, 1]} : vector<2x512xf32> to vector<1x128xf32>
    %37 = arith.truncf %36 : vector<1x128xf32> to vector<1x128xbf16>
    %c3 = arith.constant 3 : index
    %c0_19 = arith.constant 0 : index
    %38 = vector.load %arg22[%c3, %c0_19] : memref<12x128xbf16, #tpu.memory_space<vmem>>, vector<1x128xbf16>
    tpu.vector_store %arg22[%c3, %c0_19], %37 {strides = array<i32>} : memref<12x128xbf16, #tpu.memory_space<vmem>>, vector<1x128xbf16>,
    %39 = vector.extract_strided_slice %26 {offsets = [0, 384], sizes = [1, 128], strides = [1, 1]} : vector<2x512xf32> to vector<1x128xf32>
    %40 = arith.truncf %39 : vector<1x128xf32> to vector<1x128xbf16>
    %c4 = arith.constant 4 : index
    %c0_20 = arith.constant 0 : index
    %41 = vector.load %arg22[%c4, %c0_20] : memref<12x128xbf16, #tpu.memory_space<vmem>>, vector<1x128xbf16>
    tpu.vector_store %arg22[%c4, %c0_20], %40 {strides = array<i32>} : memref<12x128xbf16, #tpu.memory_space<vmem>>, vector<1x128xbf16>,
    %c6 = arith.constant 6 : index
    %c0_21 = arith.constant 0 : index
    %42 = vector.load %arg22[%c6, %c0_21] : memref<12x128xbf16, #tpu.memory_space<vmem>>, vector<1x128xbf16>
    tpu.vector_store %arg22[%c6, %c0_21], %27 {strides = array<i32>} : memref<12x128xbf16, #tpu.memory_space<vmem>>, vector<1x128xbf16>,
    %c11 = arith.constant 11 : index
    %c0_22 = arith.constant 0 : index
    %43 = vector.load %arg22[%c11, %c0_22] : memref<12x128xbf16, #tpu.memory_space<vmem>>, vector<1x128xbf16>
    tpu.vector_store %arg22[%c11, %c0_22], %27 {strides = array<i32>} : memref<12x128xbf16, #tpu.memory_space<vmem>>, vector<1x128xbf16>,
    %44 = vector.extract_strided_slice %26 {offsets = [1, 0], sizes = [1, 128], strides = [1, 1]} : vector<2x512xf32> to vector<1x128xf32>
    %45 = arith.truncf %44 : vector<1x128xf32> to vector<1x128xbf16>
    %c7 = arith.constant 7 : index
    %c0_23 = arith.constant 0 : index
    %46 = vector.load %arg22[%c7, %c0_23] : memref<12x128xbf16, #tpu.memory_space<vmem>>, vector<1x128xbf16>
    tpu.vector_store %arg22[%c7, %c0_23], %45 {strides = array<i32>} : memref<12x128xbf16, #tpu.memory_space<vmem>>, vector<1x128xbf16>,
    %47 = vector.extract_strided_slice %26 {offsets = [1, 128], sizes = [1, 128], strides = [1, 1]} : vector<2x512xf32> to vector<1x128xf32>
    %48 = arith.truncf %47 : vector<1x128xf32> to vector<1x128xbf16>
    %c8 = arith.constant 8 : index
    %c0_24 = arith.constant 0 : index
    %49 = vector.load %arg22[%c8, %c0_24] : memref<12x128xbf16, #tpu.memory_space<vmem>>, vector<1x128xbf16>
    tpu.vector_store %arg22[%c8, %c0_24], %48 {strides = array<i32>} : memref<12x128xbf16, #tpu.memory_space<vmem>>, vector<1x128xbf16>,
    %50 = vector.extract_strided_slice %26 {offsets = [1, 256], sizes = [1, 128], strides = [1, 1]} : vector<2x512xf32> to vector<1x128xf32>
    %51 = arith.truncf %50 : vector<1x128xf32> to vector<1x128xbf16>
    %c9 = arith.constant 9 : index
    %c0_25 = arith.constant 0 : index
    %52 = vector.load %arg22[%c9, %c0_25] : memref<12x128xbf16, #tpu.memory_space<vmem>>, vector<1x128xbf16>
    tpu.vector_store %arg22[%c9, %c0_25], %51 {strides = array<i32>} : memref<12x128xbf16, #tpu.memory_space<vmem>>, vector<1x128xbf16>,
    %53 = vector.extract_strided_slice %26 {offsets = [1, 384], sizes = [1, 128], strides = [1, 1]} : vector<2x512xf32> to vector<1x128xf32>
    %54 = arith.truncf %53 : vector<1x128xf32> to vector<1x128xbf16>
    %c10 = arith.constant 10 : index
    %c0_26 = arith.constant 0 : index
    %55 = vector.load %arg22[%c10, %c0_26] : memref<12x128xbf16, #tpu.memory_space<vmem>>, vector<1x128xbf16>
    tpu.vector_store %arg22[%c10, %c0_26], %54 {strides = array<i32>} : memref<12x128xbf16, #tpu.memory_space<vmem>>, vector<1x128xbf16>,
    %c0_27 = arith.constant 0 : index
    %c0_28 = arith.constant 0 : index
    %56 = vector.load %arg22[%c0_27, %c0_28] : memref<12x128xbf16, #tpu.memory_space<vmem>>, vector<10x128xbf16>
    %c0_29 = arith.constant 0 : index
    %c0_30 = arith.constant 0 : index
    %c0_31 = arith.constant 0 : index
    %57 = vector.load %arg4[%c0_29, %c0_30, %c0_31] : memref<3x128x512xbf16, #tpu.memory_space<vmem>>, vector<1x128x512xbf16>
    %58 = vector.shape_cast %57 : vector<1x128x512xbf16> to vector<128x512xbf16>
    %cst_32 = arith.constant dense<0.000000e+00> : vector<10x512xf32>
    %59 = tpu.matmul %56, %58, %cst_32 {dimension_numbers = #tpu.dot_dimension_numbers<[1], [0], [0], [1], [0, 0, 1, 1], [], []>} : vector<10x128xbf16>, vector<128x512xbf16>, vector<10x512xf32> -> vector<10x512xf32>
    %c1_33 = arith.constant 1 : index
    %c0_34 = arith.constant 0 : index
    %60 = vector.load %arg22[%c1_33, %c0_34] : memref<12x128xbf16, #tpu.memory_space<vmem>>, vector<10x128xbf16>
    %c1_35 = arith.constant 1 : index
    %c0_36 = arith.constant 0 : index
    %c0_37 = arith.constant 0 : index
    %61 = vector.load %arg4[%c1_35, %c0_36, %c0_37] : memref<3x128x512xbf16, #tpu.memory_space<vmem>>, vector<1x128x512xbf16>
    %62 = vector.shape_cast %61 : vector<1x128x512xbf16> to vector<128x512xbf16>
    %cst_38 = arith.constant dense<0.000000e+00> : vector<10x512xf32>
    %63 = tpu.matmul %60, %62, %cst_38 {dimension_numbers = #tpu.dot_dimension_numbers<[1], [0], [0], [1], [0, 0, 1, 1], [], []>} : vector<10x128xbf16>, vector<128x512xbf16>, vector<10x512xf32> -> vector<10x512xf32>
    %64 = arith.addf %59, %63 : vector<10x512xf32>
    %c2_39 = arith.constant 2 : index
    %c0_40 = arith.constant 0 : index
    %65 = vector.load %arg22[%c2_39, %c0_40] : memref<12x128xbf16, #tpu.memory_space<vmem>>, vector<10x128xbf16>
    %c2_41 = arith.constant 2 : index
    %c0_42 = arith.constant 0 : index
    %c0_43 = arith.constant 0 : index
    %66 = vector.load %arg4[%c2_41, %c0_42, %c0_43] : memref<3x128x512xbf16, #tpu.memory_space<vmem>>, vector<1x128x512xbf16>
    %67 = vector.shape_cast %66 : vector<1x128x512xbf16> to vector<128x512xbf16>
    %cst_44 = arith.constant dense<0.000000e+00> : vector<10x512xf32>
    %68 = tpu.matmul %65, %67, %cst_44 {dimension_numbers = #tpu.dot_dimension_numbers<[1], [0], [0], [1], [0, 0, 1, 1], [], []>} : vector<10x128xbf16>, vector<128x512xbf16>, vector<10x512xf32> -> vector<10x512xf32>
    %69 = arith.addf %64, %68 : vector<10x512xf32>
    %cst_45 = arith.constant 0.000000e+00 : f32
    %70 = vector.broadcast %cst_45 : f32 to vector<1x256xf32>
    %71 = vector.extract_strided_slice %69 {offsets = [0, 0], sizes = [4, 512], strides = [1, 1]} : vector<10x512xf32> to vector<4x512xf32>
    %72 = vector.extract_strided_slice %71 {offsets = [0, 0], sizes = [4, 256], strides = [1, 1]} : vector<4x512xf32> to vector<4x256xf32>
    %73 = vector.extract_strided_slice %71 {offsets = [0, 256], sizes = [4, 256], strides = [1, 1]} : vector<4x512xf32> to vector<4x256xf32>
    %cst_46 = arith.constant dense<0.000000e+00> : vector<256xf32>
    %74 = vector.multi_reduction <add>, %72, %cst_46 [0] : vector<4x256xf32> to vector<256xf32>
    %75 = vector.shape_cast %74 : vector<256xf32> to vector<1x256xf32>
    %76 = arith.addf %70, %75 : vector<1x256xf32>
    %cst_47 = arith.constant dense<0.000000e+00> : vector<256xf32>
    %77 = vector.multi_reduction <add>, %73, %cst_47 [0] : vector<4x256xf32> to vector<256xf32>
    %78 = vector.shape_cast %77 : vector<256xf32> to vector<1x256xf32>
    %79 = arith.addf %76, %78 : vector<1x256xf32>
    %80 = vector.extract_strided_slice %69 {offsets = [6, 0], sizes = [4, 512], strides = [1, 1]} : vector<10x512xf32> to vector<4x512xf32>
    %81 = vector.extract_strided_slice %80 {offsets = [0, 0], sizes = [4, 256], strides = [1, 1]} : vector<4x512xf32> to vector<4x256xf32>
    %82 = vector.extract_strided_slice %80 {offsets = [0, 256], sizes = [4, 256], strides = [1, 1]} : vector<4x512xf32> to vector<4x256xf32>
    %cst_48 = arith.constant dense<0.000000e+00> : vector<256xf32>
    %83 = vector.multi_reduction <add>, %81, %cst_48 [0] : vector<4x256xf32> to vector<256xf32>
    %84 = vector.shape_cast %83 : vector<256xf32> to vector<1x256xf32>
    %85 = arith.addf %79, %84 : vector<1x256xf32>
    %cst_49 = arith.constant dense<0.000000e+00> : vector<256xf32>
    %86 = vector.multi_reduction <add>, %82, %cst_49 [0] : vector<4x256xf32> to vector<256xf32>
    %87 = vector.shape_cast %86 : vector<256xf32> to vector<1x256xf32>
    %88 = arith.addf %85, %87 : vector<1x256xf32>
    %c0_50 = arith.constant 0 : index
    %c0_51 = arith.constant 0 : index
    %89 = vector.load %arg5[%c0_50, %c0_51] : memref<256x256xf32, #tpu.memory_space<vmem>>, vector<256x256xf32>
    %cst_52 = arith.constant dense<0.000000e+00> : vector<1x256xf32>
    %90 = tpu.matmul %88, %89, %cst_52 {dimension_numbers = #tpu.dot_dimension_numbers<[1], [0], [0], [1], [0, 0, 1, 1], [], []>} : vector<1x256xf32>, vector<256x256xf32>, vector<1x256xf32> -> vector<1x256xf32>
    %cst_53 = arith.constant 1.280000e+02 : f32
    %91 = vector.broadcast %cst_53 : f32 to vector<1x256xf32>
    %92 = arith.divf %90, %91 : vector<1x256xf32>
    %cst_54 = arith.constant 0.000000e+00 : f32
    %93 = vector.broadcast %cst_54 : f32 to vector<1x256xf32>
    %94 = vector.broadcast %92 : vector<1x256xf32> to vector<4x256xf32>
    %95 = arith.subf %72, %94 : vector<4x256xf32>
    %96 = vector.broadcast %92 : vector<1x256xf32> to vector<4x256xf32>
    %97 = arith.subf %73, %96 : vector<4x256xf32>
    %98 = arith.mulf %95, %95 : vector<4x256xf32>
    %cst_55 = arith.constant dense<0.000000e+00> : vector<256xf32>
    %99 = vector.multi_reduction <add>, %98, %cst_55 [0] : vector<4x256xf32> to vector<256xf32>
    %100 = vector.shape_cast %99 : vector<256xf32> to vector<1x256xf32>
    %101 = arith.addf %93, %100 : vector<1x256xf32>
    %102 = arith.mulf %97, %97 : vector<4x256xf32>
    %cst_56 = arith.constant dense<0.000000e+00> : vector<256xf32>
    %103 = vector.multi_reduction <add>, %102, %cst_56 [0] : vector<4x256xf32> to vector<256xf32>
    %104 = vector.shape_cast %103 : vector<256xf32> to vector<1x256xf32>
    %105 = arith.addf %101, %104 : vector<1x256xf32>
    %106 = vector.broadcast %92 : vector<1x256xf32> to vector<4x256xf32>
    %107 = arith.subf %81, %106 : vector<4x256xf32>
    %108 = vector.broadcast %92 : vector<1x256xf32> to vector<4x256xf32>
    %109 = arith.subf %82, %108 : vector<4x256xf32>
    %110 = arith.mulf %107, %107 : vector<4x256xf32>
    %cst_57 = arith.constant dense<0.000000e+00> : vector<256xf32>
    %111 = vector.multi_reduction <add>, %110, %cst_57 [0] : vector<4x256xf32> to vector<256xf32>
    %112 = vector.shape_cast %111 : vector<256xf32> to vector<1x256xf32>
    %113 = arith.addf %105, %112 : vector<1x256xf32>
    %114 = arith.mulf %109, %109 : vector<4x256xf32>
    %cst_58 = arith.constant dense<0.000000e+00> : vector<256xf32>
    %115 = vector.multi_reduction <add>, %114, %cst_58 [0] : vector<4x256xf32> to vector<256xf32>
    %116 = vector.shape_cast %115 : vector<256xf32> to vector<1x256xf32>
    %117 = arith.addf %113, %116 : vector<1x256xf32>
    %c0_59 = arith.constant 0 : index
    %c0_60 = arith.constant 0 : index
    %118 = vector.load %arg5[%c0_59, %c0_60] : memref<256x256xf32, #tpu.memory_space<vmem>>, vector<256x256xf32>
    %cst_61 = arith.constant dense<0.000000e+00> : vector<1x256xf32>
    %119 = tpu.matmul %117, %118, %cst_61 {dimension_numbers = #tpu.dot_dimension_numbers<[1], [0], [0], [1], [0, 0, 1, 1], [], []>} : vector<1x256xf32>, vector<256x256xf32>, vector<1x256xf32> -> vector<1x256xf32>
    %cst_62 = arith.constant 1.280000e+02 : f32
    %120 = vector.broadcast %cst_62 : f32 to vector<1x256xf32>
    %121 = arith.divf %119, %120 : vector<1x256xf32>
    %c0_63 = arith.constant 0 : index
    %c0_64 = arith.constant 0 : index
    %122 = vector.load %arg6[%c0_63, %c0_64] : memref<1x256xf32, #tpu.memory_space<vmem>>, vector<1x256xf32>
    %cst_65 = arith.constant 9.99999974E-6 : f32
    %123 = vector.broadcast %cst_65 : f32 to vector<1x256xf32>
    %124 = arith.addf %121, %123 : vector<1x256xf32>
    %125 = math.rsqrt %124 : vector<1x256xf32>
    %126 = arith.mulf %122, %125 : vector<1x256xf32>
    %c0_66 = arith.constant 0 : index
    %c0_67 = arith.constant 0 : index
    %127 = vector.load %arg7[%c0_66, %c0_67] : memref<1x256xf32, #tpu.memory_space<vmem>>, vector<1x256xf32>
    %128 = arith.mulf %92, %126 : vector<1x256xf32>
    %129 = arith.subf %127, %128 : vector<1x256xf32>
    %c0_68 = arith.constant 0 : index
    %c0_69 = arith.constant 0 : index
    %c0_70 = arith.constant 0 : index
    %130 = vector.load %arg8[%c0_68, %c0_69, %c0_70] : memref<2x8x4xf32, #tpu.memory_space<vmem>>, vector<1x8x4xf32>
    %131 = vector.shape_cast %130 : vector<1x8x4xf32> to vector<8x4xf32>
    %c1_71 = arith.constant 1 : index
    %c0_72 = arith.constant 0 : index
    %c0_73 = arith.constant 0 : index
    %132 = vector.load %arg8[%c1_71, %c0_72, %c0_73] : memref<2x8x4xf32, #tpu.memory_space<vmem>>, vector<1x8x4xf32>
    %133 = vector.shape_cast %132 : vector<1x8x4xf32> to vector<8x4xf32>
    %134 = vector.broadcast %126 : vector<1x256xf32> to vector<4x256xf32>
    %135 = arith.mulf %72, %134 : vector<4x256xf32>
    %136 = vector.broadcast %129 : vector<1x256xf32> to vector<4x256xf32>
    %137 = arith.addf %135, %136 : vector<4x256xf32>
    %cst_74 = arith.constant 0.000000e+00 : f32
    %138 = vector.broadcast %cst_74 : f32 to vector<4x256xf32>
    %139 = arith.maximumf %137, %138 : vector<4x256xf32>
    %140 = vector.broadcast %126 : vector<1x256xf32> to vector<4x256xf32>
    %141 = arith.mulf %73, %140 : vector<4x256xf32>
    %142 = vector.broadcast %129 : vector<1x256xf32> to vector<4x256xf32>
    %143 = arith.addf %141, %142 : vector<4x256xf32>
    %cst_75 = arith.constant 0.000000e+00 : f32
    %144 = vector.broadcast %cst_75 : f32 to vector<4x256xf32>
    %145 = arith.maximumf %143, %144 : vector<4x256xf32>
    %cst_76 = arith.constant dense<0.000000e+00> : vector<8x256xf32>
    %146 = tpu.matmul %131, %139, %cst_76 {dimension_numbers = #tpu.dot_dimension_numbers<[1], [0], [0], [1], [0, 0, 1, 1], [], []>} : vector<8x4xf32>, vector<4x256xf32>, vector<8x256xf32> -> vector<8x256xf32>
    %cst_77 = arith.constant dense<0.000000e+00> : vector<8x256xf32>
    %147 = tpu.matmul %133, %145, %cst_77 {dimension_numbers = #tpu.dot_dimension_numbers<[1], [0], [0], [1], [0, 0, 1, 1], [], []>} : vector<8x4xf32>, vector<4x256xf32>, vector<8x256xf32> -> vector<8x256xf32>
    %148 = arith.addf %146, %147 : vector<8x256xf32>
    %149 = arith.truncf %148 : vector<8x256xf32> to vector<8x256xbf16>
    %150 = vector.broadcast %126 : vector<1x256xf32> to vector<4x256xf32>
    %151 = arith.mulf %81, %150 : vector<4x256xf32>
    %152 = vector.broadcast %129 : vector<1x256xf32> to vector<4x256xf32>
    %153 = arith.addf %151, %152 : vector<4x256xf32>
    %cst_78 = arith.constant 0.000000e+00 : f32
    %154 = vector.broadcast %cst_78 : f32 to vector<4x256xf32>
    %155 = arith.maximumf %153, %154 : vector<4x256xf32>
    %156 = vector.broadcast %126 : vector<1x256xf32> to vector<4x256xf32>
    %157 = arith.mulf %82, %156 : vector<4x256xf32>
    %158 = vector.broadcast %129 : vector<1x256xf32> to vector<4x256xf32>
    %159 = arith.addf %157, %158 : vector<4x256xf32>
    %cst_79 = arith.constant 0.000000e+00 : f32
    %160 = vector.broadcast %cst_79 : f32 to vector<4x256xf32>
    %161 = arith.maximumf %159, %160 : vector<4x256xf32>
    %cst_80 = arith.constant dense<0.000000e+00> : vector<8x256xf32>
    %162 = tpu.matmul %131, %155, %cst_80 {dimension_numbers = #tpu.dot_dimension_numbers<[1], [0], [0], [1], [0, 0, 1, 1], [], []>} : vector<8x4xf32>, vector<4x256xf32>, vector<8x256xf32> -> vector<8x256xf32>
    %cst_81 = arith.constant dense<0.000000e+00> : vector<8x256xf32>
    %163 = tpu.matmul %133, %161, %cst_81 {dimension_numbers = #tpu.dot_dimension_numbers<[1], [0], [0], [1], [0, 0, 1, 1], [], []>} : vector<8x4xf32>, vector<4x256xf32>, vector<8x256xf32> -> vector<8x256xf32>
    %164 = arith.addf %162, %163 : vector<8x256xf32>
    %165 = arith.truncf %164 : vector<8x256xf32> to vector<8x256xbf16>
    %cst_82 = arith.constant 0.000000e+00 : bf16
    %166 = vector.broadcast %cst_82 : bf16 to vector<1x256xbf16>
    %c0_83 = arith.constant 0 : index
    %c0_84 = arith.constant 0 : index
    %167 = vector.load %arg23[%c0_83, %c0_84] : memref<20x256xbf16, #tpu.memory_space<vmem>>, vector<1x256xbf16>
    tpu.vector_store %arg23[%c0_83, %c0_84], %166 {strides = array<i32>} : memref<20x256xbf16, #tpu.memory_space<vmem>>, vector<1x256xbf16>,
    %c9_85 = arith.constant 9 : index
    %c0_86 = arith.constant 0 : index
    %168 = vector.load %arg23[%c9_85, %c0_86] : memref<20x256xbf16, #tpu.memory_space<vmem>>, vector<1x256xbf16>
    tpu.vector_store %arg23[%c9_85, %c0_86], %166 {strides = array<i32>} : memref<20x256xbf16, #tpu.memory_space<vmem>>, vector<1x256xbf16>,
    %c1_87 = arith.constant 1 : index
    %c0_88 = arith.constant 0 : index
    %169 = vector.load %arg23[%c1_87, %c0_88] : memref<20x256xbf16, #tpu.memory_space<vmem>>, vector<8x256xbf16>
    tpu.vector_store %arg23[%c1_87, %c0_88], %149 {strides = array<i32>} : memref<20x256xbf16, #tpu.memory_space<vmem>>, vector<8x256xbf16>,
    %c10_89 = arith.constant 10 : index
    %c0_90 = arith.constant 0 : index
    %170 = vector.load %arg23[%c10_89, %c0_90] : memref<20x256xbf16, #tpu.memory_space<vmem>>, vector<1x256xbf16>
    tpu.vector_store %arg23[%c10_89, %c0_90], %166 {strides = array<i32>} : memref<20x256xbf16, #tpu.memory_space<vmem>>, vector<1x256xbf16>,
    %c19 = arith.constant 19 : index
    %c0_91 = arith.constant 0 : index
    %171 = vector.load %arg23[%c19, %c0_91] : memref<20x256xbf16, #tpu.memory_space<vmem>>, vector<1x256xbf16>
    tpu.vector_store %arg23[%c19, %c0_91], %166 {strides = array<i32>} : memref<20x256xbf16, #tpu.memory_space<vmem>>, vector<1x256xbf16>,
    %c11_92 = arith.constant 11 : index
    %c0_93 = arith.constant 0 : index
    %172 = vector.load %arg23[%c11_92, %c0_93] : memref<20x256xbf16, #tpu.memory_space<vmem>>, vector<8x256xbf16>
    tpu.vector_store %arg23[%c11_92, %c0_93], %165 {strides = array<i32>} : memref<20x256xbf16, #tpu.memory_space<vmem>>, vector<8x256xbf16>,
    %c0_94 = arith.constant 0 : index
    %c0_95 = arith.constant 0 : index
    %173 = vector.load %arg23[%c0_94, %c0_95] : memref<20x256xbf16, #tpu.memory_space<vmem>>, vector<18x256xbf16>
    %c0_96 = arith.constant 0 : index
    %c0_97 = arith.constant 0 : index
    %c0_98 = arith.constant 0 : index
    %174 = vector.load %arg9[%c0_96, %c0_97, %c0_98] : memref<3x256x512xbf16, #tpu.memory_space<vmem>>, vector<1x256x512xbf16>
    %175 = vector.shape_cast %174 : vector<1x256x512xbf16> to vector<256x512xbf16>
    %cst_99 = arith.constant dense<0.000000e+00> : vector<18x512xf32>
    %176 = tpu.matmul %173, %175, %cst_99 {dimension_numbers = #tpu.dot_dimension_numbers<[1], [0], [0], [1], [0, 0, 1, 1], [], []>} : vector<18x256xbf16>, vector<256x512xbf16>, vector<18x512xf32> -> vector<18x512xf32>
    %c1_100 = arith.constant 1 : index
    %c0_101 = arith.constant 0 : index
    %177 = vector.load %arg23[%c1_100, %c0_101] : memref<20x256xbf16, #tpu.memory_space<vmem>>, vector<18x256xbf16>
    %c1_102 = arith.constant 1 : index
    %c0_103 = arith.constant 0 : index
    %c0_104 = arith.constant 0 : index
    %178 = vector.load %arg9[%c1_102, %c0_103, %c0_104] : memref<3x256x512xbf16, #tpu.memory_space<vmem>>, vector<1x256x512xbf16>
    %179 = vector.shape_cast %178 : vector<1x256x512xbf16> to vector<256x512xbf16>
    %cst_105 = arith.constant dense<0.000000e+00> : vector<18x512xf32>
    %180 = tpu.matmul %177, %179, %cst_105 {dimension_numbers = #tpu.dot_dimension_numbers<[1], [0], [0], [1], [0, 0, 1, 1], [], []>} : vector<18x256xbf16>, vector<256x512xbf16>, vector<18x512xf32> -> vector<18x512xf32>
    %181 = arith.addf %176, %180 : vector<18x512xf32>
    %c2_106 = arith.constant 2 : index
    %c0_107 = arith.constant 0 : index
    %182 = vector.load %arg23[%c2_106, %c0_107] : memref<20x256xbf16, #tpu.memory_space<vmem>>, vector<18x256xbf16>
    %c2_108 = arith.constant 2 : index
    %c0_109 = arith.constant 0 : index
    %c0_110 = arith.constant 0 : index
    %183 = vector.load %arg9[%c2_108, %c0_109, %c0_110] : memref<3x256x512xbf16, #tpu.memory_space<vmem>>, vector<1x256x512xbf16>
    %184 = vector.shape_cast %183 : vector<1x256x512xbf16> to vector<256x512xbf16>
    %cst_111 = arith.constant dense<0.000000e+00> : vector<18x512xf32>
    %185 = tpu.matmul %182, %184, %cst_111 {dimension_numbers = #tpu.dot_dimension_numbers<[1], [0], [0], [1], [0, 0, 1, 1], [], []>} : vector<18x256xbf16>, vector<256x512xbf16>, vector<18x512xf32> -> vector<18x512xf32>
    %186 = arith.addf %181, %185 : vector<18x512xf32>
    %cst_112 = arith.constant 0.000000e+00 : f32
    %187 = vector.broadcast %cst_112 : f32 to vector<1x256xf32>
    %188 = vector.extract_strided_slice %186 {offsets = [0, 0], sizes = [8, 512], strides = [1, 1]} : vector<18x512xf32> to vector<8x512xf32>
    %189 = vector.extract_strided_slice %188 {offsets = [0, 0], sizes = [8, 256], strides = [1, 1]} : vector<8x512xf32> to vector<8x256xf32>
    %190 = vector.extract_strided_slice %188 {offsets = [0, 256], sizes = [8, 256], strides = [1, 1]} : vector<8x512xf32> to vector<8x256xf32>
    %cst_113 = arith.constant dense<0.000000e+00> : vector<256xf32>
    %191 = vector.multi_reduction <add>, %189, %cst_113 [0] : vector<8x256xf32> to vector<256xf32>
    %192 = vector.shape_cast %191 : vector<256xf32> to vector<1x256xf32>
    %193 = arith.addf %187, %192 : vector<1x256xf32>
    %cst_114 = arith.constant dense<0.000000e+00> : vector<256xf32>
    %194 = vector.multi_reduction <add>, %190, %cst_114 [0] : vector<8x256xf32> to vector<256xf32>
    %195 = vector.shape_cast %194 : vector<256xf32> to vector<1x256xf32>
    %196 = arith.addf %193, %195 : vector<1x256xf32>
    %197 = vector.extract_strided_slice %186 {offsets = [10, 0], sizes = [8, 512], strides = [1, 1]} : vector<18x512xf32> to vector<8x512xf32>
    %198 = vector.extract_strided_slice %197 {offsets = [0, 0], sizes = [8, 256], strides = [1, 1]} : vector<8x512xf32> to vector<8x256xf32>
    %199 = vector.extract_strided_slice %197 {offsets = [0, 256], sizes = [8, 256], strides = [1, 1]} : vector<8x512xf32> to vector<8x256xf32>
    %cst_115 = arith.constant dense<0.000000e+00> : vector<256xf32>
    %200 = vector.multi_reduction <add>, %198, %cst_115 [0] : vector<8x256xf32> to vector<256xf32>
    %201 = vector.shape_cast %200 : vector<256xf32> to vector<1x256xf32>
    %202 = arith.addf %196, %201 : vector<1x256xf32>
    %cst_116 = arith.constant dense<0.000000e+00> : vector<256xf32>
    %203 = vector.multi_reduction <add>, %199, %cst_116 [0] : vector<8x256xf32> to vector<256xf32>
    %204 = vector.shape_cast %203 : vector<256xf32> to vector<1x256xf32>
    %205 = arith.addf %202, %204 : vector<1x256xf32>
    %c0_117 = arith.constant 0 : index
    %c0_118 = arith.constant 0 : index
    %206 = vector.load %arg10[%c0_117, %c0_118] : memref<256x256xf32, #tpu.memory_space<vmem>>, vector<256x256xf32>
    %cst_119 = arith.constant dense<0.000000e+00> : vector<1x256xf32>
    %207 = tpu.matmul %205, %206, %cst_119 {dimension_numbers = #tpu.dot_dimension_numbers<[1], [0], [0], [1], [0, 0, 1, 1], [], []>} : vector<1x256xf32>, vector<256x256xf32>, vector<1x256xf32> -> vector<1x256xf32>
    %cst_120 = arith.constant 5.120000e+02 : f32
    %208 = vector.broadcast %cst_120 : f32 to vector<1x256xf32>
    %209 = arith.divf %207, %208 : vector<1x256xf32>
    %cst_121 = arith.constant 0.000000e+00 : f32
    %210 = vector.broadcast %cst_121 : f32 to vector<1x256xf32>
    %211 = vector.broadcast %209 : vector<1x256xf32> to vector<8x256xf32>
    %212 = arith.subf %189, %211 : vector<8x256xf32>
    %213 = vector.broadcast %209 : vector<1x256xf32> to vector<8x256xf32>
    %214 = arith.subf %190, %213 : vector<8x256xf32>
    %215 = arith.mulf %212, %212 : vector<8x256xf32>
    %cst_122 = arith.constant dense<0.000000e+00> : vector<256xf32>
    %216 = vector.multi_reduction <add>, %215, %cst_122 [0] : vector<8x256xf32> to vector<256xf32>
    %217 = vector.shape_cast %216 : vector<256xf32> to vector<1x256xf32>
    %218 = arith.addf %210, %217 : vector<1x256xf32>
    %219 = arith.mulf %214, %214 : vector<8x256xf32>
    %cst_123 = arith.constant dense<0.000000e+00> : vector<256xf32>
    %220 = vector.multi_reduction <add>, %219, %cst_123 [0] : vector<8x256xf32> to vector<256xf32>
    %221 = vector.shape_cast %220 : vector<256xf32> to vector<1x256xf32>
    %222 = arith.addf %218, %221 : vector<1x256xf32>
    %223 = vector.broadcast %209 : vector<1x256xf32> to vector<8x256xf32>
    %224 = arith.subf %198, %223 : vector<8x256xf32>
    %225 = vector.broadcast %209 : vector<1x256xf32> to vector<8x256xf32>
    %226 = arith.subf %199, %225 : vector<8x256xf32>
    %227 = arith.mulf %224, %224 : vector<8x256xf32>
    %cst_124 = arith.constant dense<0.000000e+00> : vector<256xf32>
    %228 = vector.multi_reduction <add>, %227, %cst_124 [0] : vector<8x256xf32> to vector<256xf32>
    %229 = vector.shape_cast %228 : vector<256xf32> to vector<1x256xf32>
    %230 = arith.addf %222, %229 : vector<1x256xf32>
    %231 = arith.mulf %226, %226 : vector<8x256xf32>
    %cst_125 = arith.constant dense<0.000000e+00> : vector<256xf32>
    %232 = vector.multi_reduction <add>, %231, %cst_125 [0] : vector<8x256xf32> to vector<256xf32>
    %233 = vector.shape_cast %232 : vector<256xf32> to vector<1x256xf32>
    %234 = arith.addf %230, %233 : vector<1x256xf32>
    %c0_126 = arith.constant 0 : index
    %c0_127 = arith.constant 0 : index
    %235 = vector.load %arg10[%c0_126, %c0_127] : memref<256x256xf32, #tpu.memory_space<vmem>>, vector<256x256xf32>
    %cst_128 = arith.constant dense<0.000000e+00> : vector<1x256xf32>
    %236 = tpu.matmul %234, %235, %cst_128 {dimension_numbers = #tpu.dot_dimension_numbers<[1], [0], [0], [1], [0, 0, 1, 1], [], []>} : vector<1x256xf32>, vector<256x256xf32>, vector<1x256xf32> -> vector<1x256xf32>
    %cst_129 = arith.constant 5.120000e+02 : f32
    %237 = vector.broadcast %cst_129 : f32 to vector<1x256xf32>
    %238 = arith.divf %236, %237 : vector<1x256xf32>
    %c0_130 = arith.constant 0 : index
    %c0_131 = arith.constant 0 : index
    %239 = vector.load %arg11[%c0_130, %c0_131] : memref<1x256xf32, #tpu.memory_space<vmem>>, vector<1x256xf32>
    %cst_132 = arith.constant 9.99999974E-6 : f32
    %240 = vector.broadcast %cst_132 : f32 to vector<1x256xf32>
    %241 = arith.addf %238, %240 : vector<1x256xf32>
    %242 = math.rsqrt %241 : vector<1x256xf32>
    %243 = arith.mulf %239, %242 : vector<1x256xf32>
    %c0_133 = arith.constant 0 : index
    %c0_134 = arith.constant 0 : index
    %244 = vector.load %arg12[%c0_133, %c0_134] : memref<1x256xf32, #tpu.memory_space<vmem>>, vector<1x256xf32>
    %245 = arith.mulf %209, %243 : vector<1x256xf32>
    %246 = arith.subf %244, %245 : vector<1x256xf32>
    %c0_135 = arith.constant 0 : index
    %c0_136 = arith.constant 0 : index
    %c0_137 = arith.constant 0 : index
    %247 = vector.load %arg13[%c0_135, %c0_136, %c0_137] : memref<2x16x8xf32, #tpu.memory_space<vmem>>, vector<1x16x8xf32>
    %248 = vector.shape_cast %247 : vector<1x16x8xf32> to vector<16x8xf32>
    %c1_138 = arith.constant 1 : index
    %c0_139 = arith.constant 0 : index
    %c0_140 = arith.constant 0 : index
    %249 = vector.load %arg13[%c1_138, %c0_139, %c0_140] : memref<2x16x8xf32, #tpu.memory_space<vmem>>, vector<1x16x8xf32>
    %250 = vector.shape_cast %249 : vector<1x16x8xf32> to vector<16x8xf32>
    %251 = vector.broadcast %243 : vector<1x256xf32> to vector<8x256xf32>
    %252 = arith.mulf %189, %251 : vector<8x256xf32>
    %253 = vector.broadcast %246 : vector<1x256xf32> to vector<8x256xf32>
    %254 = arith.addf %252, %253 : vector<8x256xf32>
    %cst_141 = arith.constant 0.000000e+00 : f32
    %255 = vector.broadcast %cst_141 : f32 to vector<8x256xf32>
    %256 = arith.maximumf %254, %255 : vector<8x256xf32>
    %257 = vector.broadcast %243 : vector<1x256xf32> to vector<8x256xf32>
    %258 = arith.mulf %190, %257 : vector<8x256xf32>
    %259 = vector.broadcast %246 : vector<1x256xf32> to vector<8x256xf32>
    %260 = arith.addf %258, %259 : vector<8x256xf32>
    %cst_142 = arith.constant 0.000000e+00 : f32
    %261 = vector.broadcast %cst_142 : f32 to vector<8x256xf32>
    %262 = arith.maximumf %260, %261 : vector<8x256xf32>
    %cst_143 = arith.constant dense<0.000000e+00> : vector<16x256xf32>
    %263 = tpu.matmul %248, %256, %cst_143 {dimension_numbers = #tpu.dot_dimension_numbers<[1], [0], [0], [1], [0, 0, 1, 1], [], []>} : vector<16x8xf32>, vector<8x256xf32>, vector<16x256xf32> -> vector<16x256xf32>
    %cst_144 = arith.constant dense<0.000000e+00> : vector<16x256xf32>
    %264 = tpu.matmul %250, %262, %cst_144 {dimension_numbers = #tpu.dot_dimension_numbers<[1], [0], [0], [1], [0, 0, 1, 1], [], []>} : vector<16x8xf32>, vector<8x256xf32>, vector<16x256xf32> -> vector<16x256xf32>
    %265 = arith.addf %263, %264 : vector<16x256xf32>
    %266 = arith.truncf %265 : vector<16x256xf32> to vector<16x256xbf16>
    %267 = vector.broadcast %243 : vector<1x256xf32> to vector<8x256xf32>
    %268 = arith.mulf %198, %267 : vector<8x256xf32>
    %269 = vector.broadcast %246 : vector<1x256xf32> to vector<8x256xf32>
    %270 = arith.addf %268, %269 : vector<8x256xf32>
    %cst_145 = arith.constant 0.000000e+00 : f32
    %271 = vector.broadcast %cst_145 : f32 to vector<8x256xf32>
    %272 = arith.maximumf %270, %271 : vector<8x256xf32>
    %273 = vector.broadcast %243 : vector<1x256xf32> to vector<8x256xf32>
    %274 = arith.mulf %199, %273 : vector<8x256xf32>
    %275 = vector.broadcast %246 : vector<1x256xf32> to vector<8x256xf32>
    %276 = arith.addf %274, %275 : vector<8x256xf32>
    %cst_146 = arith.constant 0.000000e+00 : f32
    %277 = vector.broadcast %cst_146 : f32 to vector<8x256xf32>
    %278 = arith.maximumf %276, %277 : vector<8x256xf32>
    %cst_147 = arith.constant dense<0.000000e+00> : vector<16x256xf32>
    %279 = tpu.matmul %248, %272, %cst_147 {dimension_numbers = #tpu.dot_dimension_numbers<[1], [0], [0], [1], [0, 0, 1, 1], [], []>} : vector<16x8xf32>, vector<8x256xf32>, vector<16x256xf32> -> vector<16x256xf32>
    %cst_148 = arith.constant dense<0.000000e+00> : vector<16x256xf32>
    %280 = tpu.matmul %250, %278, %cst_148 {dimension_numbers = #tpu.dot_dimension_numbers<[1], [0], [0], [1], [0, 0, 1, 1], [], []>} : vector<16x8xf32>, vector<8x256xf32>, vector<16x256xf32> -> vector<16x256xf32>
    %281 = arith.addf %279, %280 : vector<16x256xf32>
    %282 = arith.truncf %281 : vector<16x256xf32> to vector<16x256xbf16>
    %cst_149 = arith.constant 0.000000e+00 : bf16
    %283 = vector.broadcast %cst_149 : bf16 to vector<1x256xbf16>
    %c0_150 = arith.constant 0 : index
    %c0_151 = arith.constant 0 : index
    %284 = vector.load %arg24[%c0_150, %c0_151] : memref<36x256xbf16, #tpu.memory_space<vmem>>, vector<1x256xbf16>
    tpu.vector_store %arg24[%c0_150, %c0_151], %283 {strides = array<i32>} : memref<36x256xbf16, #tpu.memory_space<vmem>>, vector<1x256xbf16>,
    %c17 = arith.constant 17 : index
    %c0_152 = arith.constant 0 : index
    %285 = vector.load %arg24[%c17, %c0_152] : memref<36x256xbf16, #tpu.memory_space<vmem>>, vector<1x256xbf16>
    tpu.vector_store %arg24[%c17, %c0_152], %283 {strides = array<i32>} : memref<36x256xbf16, #tpu.memory_space<vmem>>, vector<1x256xbf16>,
    %c1_153 = arith.constant 1 : index
    %c0_154 = arith.constant 0 : index
    %286 = vector.load %arg24[%c1_153, %c0_154] : memref<36x256xbf16, #tpu.memory_space<vmem>>, vector<16x256xbf16>
    tpu.vector_store %arg24[%c1_153, %c0_154], %266 {strides = array<i32>} : memref<36x256xbf16, #tpu.memory_space<vmem>>, vector<16x256xbf16>,
    %c18 = arith.constant 18 : index
    %c0_155 = arith.constant 0 : index
    %287 = vector.load %arg24[%c18, %c0_155] : memref<36x256xbf16, #tpu.memory_space<vmem>>, vector<1x256xbf16>
    tpu.vector_store %arg24[%c18, %c0_155], %283 {strides = array<i32>} : memref<36x256xbf16, #tpu.memory_space<vmem>>, vector<1x256xbf16>,
    %c35 = arith.constant 35 : index
    %c0_156 = arith.constant 0 : index
    %288 = vector.load %arg24[%c35, %c0_156] : memref<36x256xbf16, #tpu.memory_space<vmem>>, vector<1x256xbf16>
    tpu.vector_store %arg24[%c35, %c0_156], %283 {strides = array<i32>} : memref<36x256xbf16, #tpu.memory_space<vmem>>, vector<1x256xbf16>,
    %c19_157 = arith.constant 19 : index
    %c0_158 = arith.constant 0 : index
    %289 = vector.load %arg24[%c19_157, %c0_158] : memref<36x256xbf16, #tpu.memory_space<vmem>>, vector<16x256xbf16>
    tpu.vector_store %arg24[%c19_157, %c0_158], %282 {strides = array<i32>} : memref<36x256xbf16, #tpu.memory_space<vmem>>, vector<16x256xbf16>,
    %c0_159 = arith.constant 0 : index
    %c0_160 = arith.constant 0 : index
    %290 = vector.load %arg24[%c0_159, %c0_160] : memref<36x256xbf16, #tpu.memory_space<vmem>>, vector<34x256xbf16>
    %c0_161 = arith.constant 0 : index
    %c0_162 = arith.constant 0 : index
    %c0_163 = arith.constant 0 : index
    %291 = vector.load %arg14[%c0_161, %c0_162, %c0_163] : memref<3x256x256xbf16, #tpu.memory_space<vmem>>, vector<1x256x256xbf16>
    %292 = vector.shape_cast %291 : vector<1x256x256xbf16> to vector<256x256xbf16>
    %cst_164 = arith.constant dense<0.000000e+00> : vector<34x256xf32>
    %293 = tpu.matmul %290, %292, %cst_164 {dimension_numbers = #tpu.dot_dimension_numbers<[1], [0], [0], [1], [0, 0, 1, 1], [], []>} : vector<34x256xbf16>, vector<256x256xbf16>, vector<34x256xf32> -> vector<34x256xf32>
    %c1_165 = arith.constant 1 : index
    %c0_166 = arith.constant 0 : index
    %294 = vector.load %arg24[%c1_165, %c0_166] : memref<36x256xbf16, #tpu.memory_space<vmem>>, vector<34x256xbf16>
    %c1_167 = arith.constant 1 : index
    %c0_168 = arith.constant 0 : index
    %c0_169 = arith.constant 0 : index
    %295 = vector.load %arg14[%c1_167, %c0_168, %c0_169] : memref<3x256x256xbf16, #tpu.memory_space<vmem>>, vector<1x256x256xbf16>
    %296 = vector.shape_cast %295 : vector<1x256x256xbf16> to vector<256x256xbf16>
    %cst_170 = arith.constant dense<0.000000e+00> : vector<34x256xf32>
    %297 = tpu.matmul %294, %296, %cst_170 {dimension_numbers = #tpu.dot_dimension_numbers<[1], [0], [0], [1], [0, 0, 1, 1], [], []>} : vector<34x256xbf16>, vector<256x256xbf16>, vector<34x256xf32> -> vector<34x256xf32>
    %298 = arith.addf %293, %297 : vector<34x256xf32>
    %c2_171 = arith.constant 2 : index
    %c0_172 = arith.constant 0 : index
    %299 = vector.load %arg24[%c2_171, %c0_172] : memref<36x256xbf16, #tpu.memory_space<vmem>>, vector<34x256xbf16>
    %c2_173 = arith.constant 2 : index
    %c0_174 = arith.constant 0 : index
    %c0_175 = arith.constant 0 : index
    %300 = vector.load %arg14[%c2_173, %c0_174, %c0_175] : memref<3x256x256xbf16, #tpu.memory_space<vmem>>, vector<1x256x256xbf16>
    %301 = vector.shape_cast %300 : vector<1x256x256xbf16> to vector<256x256xbf16>
    %cst_176 = arith.constant dense<0.000000e+00> : vector<34x256xf32>
    %302 = tpu.matmul %299, %301, %cst_176 {dimension_numbers = #tpu.dot_dimension_numbers<[1], [0], [0], [1], [0, 0, 1, 1], [], []>} : vector<34x256xbf16>, vector<256x256xbf16>, vector<34x256xf32> -> vector<34x256xf32>
    %303 = arith.addf %298, %302 : vector<34x256xf32>
    %cst_177 = arith.constant 0.000000e+00 : f32
    %304 = vector.broadcast %cst_177 : f32 to vector<1x128xf32>
    %305 = vector.extract_strided_slice %303 {offsets = [0, 0], sizes = [16, 256], strides = [1, 1]} : vector<34x256xf32> to vector<16x256xf32>
    %306 = vector.extract_strided_slice %305 {offsets = [0, 0], sizes = [16, 128], strides = [1, 1]} : vector<16x256xf32> to vector<16x128xf32>
    %307 = vector.extract_strided_slice %305 {offsets = [0, 128], sizes = [16, 128], strides = [1, 1]} : vector<16x256xf32> to vector<16x128xf32>
    %cst_178 = arith.constant dense<0.000000e+00> : vector<128xf32>
    %308 = vector.multi_reduction <add>, %306, %cst_178 [0] : vector<16x128xf32> to vector<128xf32>
    %309 = vector.shape_cast %308 : vector<128xf32> to vector<1x128xf32>
    %310 = arith.addf %304, %309 : vector<1x128xf32>
    %cst_179 = arith.constant dense<0.000000e+00> : vector<128xf32>
    %311 = vector.multi_reduction <add>, %307, %cst_179 [0] : vector<16x128xf32> to vector<128xf32>
    %312 = vector.shape_cast %311 : vector<128xf32> to vector<1x128xf32>
    %313 = arith.addf %310, %312 : vector<1x128xf32>
    %314 = vector.extract_strided_slice %303 {offsets = [18, 0], sizes = [16, 256], strides = [1, 1]} : vector<34x256xf32> to vector<16x256xf32>
    %315 = vector.extract_strided_slice %314 {offsets = [0, 0], sizes = [16, 128], strides = [1, 1]} : vector<16x256xf32> to vector<16x128xf32>
    %316 = vector.extract_strided_slice %314 {offsets = [0, 128], sizes = [16, 128], strides = [1, 1]} : vector<16x256xf32> to vector<16x128xf32>
    %cst_180 = arith.constant dense<0.000000e+00> : vector<128xf32>
    %317 = vector.multi_reduction <add>, %315, %cst_180 [0] : vector<16x128xf32> to vector<128xf32>
    %318 = vector.shape_cast %317 : vector<128xf32> to vector<1x128xf32>
    %319 = arith.addf %313, %318 : vector<1x128xf32>
    %cst_181 = arith.constant dense<0.000000e+00> : vector<128xf32>
    %320 = vector.multi_reduction <add>, %316, %cst_181 [0] : vector<16x128xf32> to vector<128xf32>
    %321 = vector.shape_cast %320 : vector<128xf32> to vector<1x128xf32>
    %322 = arith.addf %319, %321 : vector<1x128xf32>
    %c0_182 = arith.constant 0 : index
    %c0_183 = arith.constant 0 : index
    %323 = vector.load %arg15[%c0_182, %c0_183] : memref<128x128xf32, #tpu.memory_space<vmem>>, vector<128x128xf32>
    %cst_184 = arith.constant dense<0.000000e+00> : vector<1x128xf32>
    %324 = tpu.matmul %322, %323, %cst_184 {dimension_numbers = #tpu.dot_dimension_numbers<[1], [0], [0], [1], [0, 0, 1, 1], [], []>} : vector<1x128xf32>, vector<128x128xf32>, vector<1x128xf32> -> vector<1x128xf32>
    %cst_185 = arith.constant 2.048000e+03 : f32
    %325 = vector.broadcast %cst_185 : f32 to vector<1x128xf32>
    %326 = arith.divf %324, %325 : vector<1x128xf32>
    %cst_186 = arith.constant 0.000000e+00 : f32
    %327 = vector.broadcast %cst_186 : f32 to vector<1x128xf32>
    %328 = vector.broadcast %326 : vector<1x128xf32> to vector<16x128xf32>
    %329 = arith.subf %306, %328 : vector<16x128xf32>
    %330 = vector.broadcast %326 : vector<1x128xf32> to vector<16x128xf32>
    %331 = arith.subf %307, %330 : vector<16x128xf32>
    %332 = arith.mulf %329, %329 : vector<16x128xf32>
    %cst_187 = arith.constant dense<0.000000e+00> : vector<128xf32>
    %333 = vector.multi_reduction <add>, %332, %cst_187 [0] : vector<16x128xf32> to vector<128xf32>
    %334 = vector.shape_cast %333 : vector<128xf32> to vector<1x128xf32>
    %335 = arith.addf %327, %334 : vector<1x128xf32>
    %336 = arith.mulf %331, %331 : vector<16x128xf32>
    %cst_188 = arith.constant dense<0.000000e+00> : vector<128xf32>
    %337 = vector.multi_reduction <add>, %336, %cst_188 [0] : vector<16x128xf32> to vector<128xf32>
    %338 = vector.shape_cast %337 : vector<128xf32> to vector<1x128xf32>
    %339 = arith.addf %335, %338 : vector<1x128xf32>
    %340 = vector.broadcast %326 : vector<1x128xf32> to vector<16x128xf32>
    %341 = arith.subf %315, %340 : vector<16x128xf32>
    %342 = vector.broadcast %326 : vector<1x128xf32> to vector<16x128xf32>
    %343 = arith.subf %316, %342 : vector<16x128xf32>
    %344 = arith.mulf %341, %341 : vector<16x128xf32>
    %cst_189 = arith.constant dense<0.000000e+00> : vector<128xf32>
    %345 = vector.multi_reduction <add>, %344, %cst_189 [0] : vector<16x128xf32> to vector<128xf32>
    %346 = vector.shape_cast %345 : vector<128xf32> to vector<1x128xf32>
    %347 = arith.addf %339, %346 : vector<1x128xf32>
    %348 = arith.mulf %343, %343 : vector<16x128xf32>
    %cst_190 = arith.constant dense<0.000000e+00> : vector<128xf32>
    %349 = vector.multi_reduction <add>, %348, %cst_190 [0] : vector<16x128xf32> to vector<128xf32>
    %350 = vector.shape_cast %349 : vector<128xf32> to vector<1x128xf32>
    %351 = arith.addf %347, %350 : vector<1x128xf32>
    %c0_191 = arith.constant 0 : index
    %c0_192 = arith.constant 0 : index
    %352 = vector.load %arg15[%c0_191, %c0_192] : memref<128x128xf32, #tpu.memory_space<vmem>>, vector<128x128xf32>
    %cst_193 = arith.constant dense<0.000000e+00> : vector<1x128xf32>
    %353 = tpu.matmul %351, %352, %cst_193 {dimension_numbers = #tpu.dot_dimension_numbers<[1], [0], [0], [1], [0, 0, 1, 1], [], []>} : vector<1x128xf32>, vector<128x128xf32>, vector<1x128xf32> -> vector<1x128xf32>
    %cst_194 = arith.constant 2.048000e+03 : f32
    %354 = vector.broadcast %cst_194 : f32 to vector<1x128xf32>
    %355 = arith.divf %353, %354 : vector<1x128xf32>
    %c0_195 = arith.constant 0 : index
    %c0_196 = arith.constant 0 : index
    %356 = vector.load %arg16[%c0_195, %c0_196] : memref<1x128xf32, #tpu.memory_space<vmem>>, vector<1x128xf32>
    %cst_197 = arith.constant 9.99999974E-6 : f32
    %357 = vector.broadcast %cst_197 : f32 to vector<1x128xf32>
    %358 = arith.addf %355, %357 : vector<1x128xf32>
    %359 = math.rsqrt %358 : vector<1x128xf32>
    %360 = arith.mulf %356, %359 : vector<1x128xf32>
    %c0_198 = arith.constant 0 : index
    %c0_199 = arith.constant 0 : index
    %361 = vector.load %arg17[%c0_198, %c0_199] : memref<1x128xf32, #tpu.memory_space<vmem>>, vector<1x128xf32>
    %362 = arith.mulf %326, %360 : vector<1x128xf32>
    %363 = arith.subf %361, %362 : vector<1x128xf32>
    %c0_200 = arith.constant 0 : index
    %c0_201 = arith.constant 0 : index
    %c0_202 = arith.constant 0 : index
    %364 = vector.load %arg18[%c0_200, %c0_201, %c0_202] : memref<2x32x16xf32, #tpu.memory_space<vmem>>, vector<1x32x16xf32>
    %365 = vector.shape_cast %364 : vector<1x32x16xf32> to vector<32x16xf32>
    %c1_203 = arith.constant 1 : index
    %c0_204 = arith.constant 0 : index
    %c0_205 = arith.constant 0 : index
    %366 = vector.load %arg18[%c1_203, %c0_204, %c0_205] : memref<2x32x16xf32, #tpu.memory_space<vmem>>, vector<1x32x16xf32>
    %367 = vector.shape_cast %366 : vector<1x32x16xf32> to vector<32x16xf32>
    %368 = vector.broadcast %360 : vector<1x128xf32> to vector<16x128xf32>
    %369 = arith.mulf %306, %368 : vector<16x128xf32>
    %370 = vector.broadcast %363 : vector<1x128xf32> to vector<16x128xf32>
    %371 = arith.addf %369, %370 : vector<16x128xf32>
    %cst_206 = arith.constant 0.000000e+00 : f32
    %372 = vector.broadcast %cst_206 : f32 to vector<16x128xf32>
    %373 = arith.maximumf %371, %372 : vector<16x128xf32>
    %374 = vector.broadcast %360 : vector<1x128xf32> to vector<16x128xf32>
    %375 = arith.mulf %307, %374 : vector<16x128xf32>
    %376 = vector.broadcast %363 : vector<1x128xf32> to vector<16x128xf32>
    %377 = arith.addf %375, %376 : vector<16x128xf32>
    %cst_207 = arith.constant 0.000000e+00 : f32
    %378 = vector.broadcast %cst_207 : f32 to vector<16x128xf32>
    %379 = arith.maximumf %377, %378 : vector<16x128xf32>
    %cst_208 = arith.constant dense<0.000000e+00> : vector<32x128xf32>
    %380 = tpu.matmul %365, %373, %cst_208 {dimension_numbers = #tpu.dot_dimension_numbers<[1], [0], [0], [1], [0, 0, 1, 1], [], []>} : vector<32x16xf32>, vector<16x128xf32>, vector<32x128xf32> -> vector<32x128xf32>
    %cst_209 = arith.constant dense<0.000000e+00> : vector<32x128xf32>
    %381 = tpu.matmul %367, %379, %cst_209 {dimension_numbers = #tpu.dot_dimension_numbers<[1], [0], [0], [1], [0, 0, 1, 1], [], []>} : vector<32x16xf32>, vector<16x128xf32>, vector<32x128xf32> -> vector<32x128xf32>
    %382 = arith.addf %380, %381 : vector<32x128xf32>
    %383 = arith.truncf %382 : vector<32x128xf32> to vector<32x128xbf16>
    %384 = vector.broadcast %360 : vector<1x128xf32> to vector<16x128xf32>
    %385 = arith.mulf %315, %384 : vector<16x128xf32>
    %386 = vector.broadcast %363 : vector<1x128xf32> to vector<16x128xf32>
    %387 = arith.addf %385, %386 : vector<16x128xf32>
    %cst_210 = arith.constant 0.000000e+00 : f32
    %388 = vector.broadcast %cst_210 : f32 to vector<16x128xf32>
    %389 = arith.maximumf %387, %388 : vector<16x128xf32>
    %390 = vector.broadcast %360 : vector<1x128xf32> to vector<16x128xf32>
    %391 = arith.mulf %316, %390 : vector<16x128xf32>
    %392 = vector.broadcast %363 : vector<1x128xf32> to vector<16x128xf32>
    %393 = arith.addf %391, %392 : vector<16x128xf32>
    %cst_211 = arith.constant 0.000000e+00 : f32
    %394 = vector.broadcast %cst_211 : f32 to vector<16x128xf32>
    %395 = arith.maximumf %393, %394 : vector<16x128xf32>
    %cst_212 = arith.constant dense<0.000000e+00> : vector<32x128xf32>
    %396 = tpu.matmul %365, %389, %cst_212 {dimension_numbers = #tpu.dot_dimension_numbers<[1], [0], [0], [1], [0, 0, 1, 1], [], []>} : vector<32x16xf32>, vector<16x128xf32>, vector<32x128xf32> -> vector<32x128xf32>
    %cst_213 = arith.constant dense<0.000000e+00> : vector<32x128xf32>
    %397 = tpu.matmul %367, %395, %cst_213 {dimension_numbers = #tpu.dot_dimension_numbers<[1], [0], [0], [1], [0, 0, 1, 1], [], []>} : vector<32x16xf32>, vector<16x128xf32>, vector<32x128xf32> -> vector<32x128xf32>
    %398 = arith.addf %396, %397 : vector<32x128xf32>
    %399 = arith.truncf %398 : vector<32x128xf32> to vector<32x128xbf16>
    %cst_214 = arith.constant 0.000000e+00 : bf16
    %400 = vector.broadcast %cst_214 : bf16 to vector<2x128xbf16>
    %c0_215 = arith.constant 0 : index
    %c0_216 = arith.constant 0 : index
    %401 = vector.load %arg25[%c0_215, %c0_216] : memref<72x128xbf16, #tpu.memory_space<vmem>>, vector<2x128xbf16>
    tpu.vector_store %arg25[%c0_215, %c0_216], %400 {strides = array<i32>} : memref<72x128xbf16, #tpu.memory_space<vmem>>, vector<2x128xbf16>,
    %c34 = arith.constant 34 : index
    %c0_217 = arith.constant 0 : index
    %402 = vector.load %arg25[%c34, %c0_217] : memref<72x128xbf16, #tpu.memory_space<vmem>>, vector<2x128xbf16>
    tpu.vector_store %arg25[%c34, %c0_217], %400 {strides = array<i32>} : memref<72x128xbf16, #tpu.memory_space<vmem>>, vector<2x128xbf16>,
    %c2_218 = arith.constant 2 : index
    %c0_219 = arith.constant 0 : index
    %403 = vector.load %arg25[%c2_218, %c0_219] : memref<72x128xbf16, #tpu.memory_space<vmem>>, vector<32x128xbf16>
    tpu.vector_store %arg25[%c2_218, %c0_219], %383 {strides = array<i32>} : memref<72x128xbf16, #tpu.memory_space<vmem>>, vector<32x128xbf16>,
    %c36 = arith.constant 36 : index
    %c0_220 = arith.constant 0 : index
    %404 = vector.load %arg25[%c36, %c0_220] : memref<72x128xbf16, #tpu.memory_space<vmem>>, vector<2x128xbf16>
    tpu.vector_store %arg25[%c36, %c0_220], %400 {strides = array<i32>} : memref<72x128xbf16, #tpu.memory_space<vmem>>, vector<2x128xbf16>,
    %c70 = arith.constant 70 : index
    %c0_221 = arith.constant 0 : index
    %405 = vector.load %arg25[%c70, %c0_221] : memref<72x128xbf16, #tpu.memory_space<vmem>>, vector<2x128xbf16>
    tpu.vector_store %arg25[%c70, %c0_221], %400 {strides = array<i32>} : memref<72x128xbf16, #tpu.memory_space<vmem>>, vector<2x128xbf16>,
    %c38 = arith.constant 38 : index
    %c0_222 = arith.constant 0 : index
    %406 = vector.load %arg25[%c38, %c0_222] : memref<72x128xbf16, #tpu.memory_space<vmem>>, vector<32x128xbf16>
    tpu.vector_store %arg25[%c38, %c0_222], %399 {strides = array<i32>} : memref<72x128xbf16, #tpu.memory_space<vmem>>, vector<32x128xbf16>,
    %c0_223 = arith.constant 0 : index
    %c0_224 = arith.constant 0 : index
    %407 = vector.load %arg25[%c0_223, %c0_224] : memref<72x128xbf16, #tpu.memory_space<vmem>>, vector<68x128xbf16>
    %c0_225 = arith.constant 0 : index
    %c0_226 = arith.constant 0 : index
    %c0_227 = arith.constant 0 : index
    %408 = vector.load %arg19[%c0_225, %c0_226, %c0_227] : memref<5x128x128xbf16, #tpu.memory_space<vmem>>, vector<1x128x128xbf16>
    %409 = vector.shape_cast %408 : vector<1x128x128xbf16> to vector<128x128xbf16>
    %cst_228 = arith.constant dense<0.000000e+00> : vector<68x128xf32>
    %410 = tpu.matmul %407, %409, %cst_228 {dimension_numbers = #tpu.dot_dimension_numbers<[1], [0], [0], [1], [0, 0, 1, 1], [], []>} : vector<68x128xbf16>, vector<128x128xbf16>, vector<68x128xf32> -> vector<68x128xf32>
    %c1_229 = arith.constant 1 : index
    %c0_230 = arith.constant 0 : index
    %411 = vector.load %arg25[%c1_229, %c0_230] : memref<72x128xbf16, #tpu.memory_space<vmem>>, vector<68x128xbf16>
    %c1_231 = arith.constant 1 : index
    %c0_232 = arith.constant 0 : index
    %c0_233 = arith.constant 0 : index
    %412 = vector.load %arg19[%c1_231, %c0_232, %c0_233] : memref<5x128x128xbf16, #tpu.memory_space<vmem>>, vector<1x128x128xbf16>
    %413 = vector.shape_cast %412 : vector<1x128x128xbf16> to vector<128x128xbf16>
    %cst_234 = arith.constant dense<0.000000e+00> : vector<68x128xf32>
    %414 = tpu.matmul %411, %413, %cst_234 {dimension_numbers = #tpu.dot_dimension_numbers<[1], [0], [0], [1], [0, 0, 1, 1], [], []>} : vector<68x128xbf16>, vector<128x128xbf16>, vector<68x128xf32> -> vector<68x128xf32>
    %415 = arith.addf %410, %414 : vector<68x128xf32>
    %c2_235 = arith.constant 2 : index
    %c0_236 = arith.constant 0 : index
    %416 = vector.load %arg25[%c2_235, %c0_236] : memref<72x128xbf16, #tpu.memory_space<vmem>>, vector<68x128xbf16>
    %c2_237 = arith.constant 2 : index
    %c0_238 = arith.constant 0 : index
    %c0_239 = arith.constant 0 : index
    %417 = vector.load %arg19[%c2_237, %c0_238, %c0_239] : memref<5x128x128xbf16, #tpu.memory_space<vmem>>, vector<1x128x128xbf16>
    %418 = vector.shape_cast %417 : vector<1x128x128xbf16> to vector<128x128xbf16>
    %cst_240 = arith.constant dense<0.000000e+00> : vector<68x128xf32>
    %419 = tpu.matmul %416, %418, %cst_240 {dimension_numbers = #tpu.dot_dimension_numbers<[1], [0], [0], [1], [0, 0, 1, 1], [], []>} : vector<68x128xbf16>, vector<128x128xbf16>, vector<68x128xf32> -> vector<68x128xf32>
    %420 = arith.addf %415, %419 : vector<68x128xf32>
    %c3_241 = arith.constant 3 : index
    %c0_242 = arith.constant 0 : index
    %421 = vector.load %arg25[%c3_241, %c0_242] : memref<72x128xbf16, #tpu.memory_space<vmem>>, vector<68x128xbf16>
    %c3_243 = arith.constant 3 : index
    %c0_244 = arith.constant 0 : index
    %c0_245 = arith.constant 0 : index
    %422 = vector.load %arg19[%c3_243, %c0_244, %c0_245] : memref<5x128x128xbf16, #tpu.memory_space<vmem>>, vector<1x128x128xbf16>
    %423 = vector.shape_cast %422 : vector<1x128x128xbf16> to vector<128x128xbf16>
    %cst_246 = arith.constant dense<0.000000e+00> : vector<68x128xf32>
    %424 = tpu.matmul %421, %423, %cst_246 {dimension_numbers = #tpu.dot_dimension_numbers<[1], [0], [0], [1], [0, 0, 1, 1], [], []>} : vector<68x128xbf16>, vector<128x128xbf16>, vector<68x128xf32> -> vector<68x128xf32>
    %425 = arith.addf %420, %424 : vector<68x128xf32>
    %c4_247 = arith.constant 4 : index
    %c0_248 = arith.constant 0 : index
    %426 = vector.load %arg25[%c4_247, %c0_248] : memref<72x128xbf16, #tpu.memory_space<vmem>>, vector<68x128xbf16>
    %c4_249 = arith.constant 4 : index
    %c0_250 = arith.constant 0 : index
    %c0_251 = arith.constant 0 : index
    %427 = vector.load %arg19[%c4_249, %c0_250, %c0_251] : memref<5x128x128xbf16, #tpu.memory_space<vmem>>, vector<1x128x128xbf16>
    %428 = vector.shape_cast %427 : vector<1x128x128xbf16> to vector<128x128xbf16>
    %cst_252 = arith.constant dense<0.000000e+00> : vector<68x128xf32>
    %429 = tpu.matmul %426, %428, %cst_252 {dimension_numbers = #tpu.dot_dimension_numbers<[1], [0], [0], [1], [0, 0, 1, 1], [], []>} : vector<68x128xbf16>, vector<128x128xbf16>, vector<68x128xf32> -> vector<68x128xf32>
    %430 = arith.addf %425, %429 : vector<68x128xf32>
    %431 = vector.extract_strided_slice %430 {offsets = [0, 0], sizes = [32, 128], strides = [1, 1]} : vector<68x128xf32> to vector<32x128xf32>
    %c0_253 = arith.constant 0 : index
    %c0_254 = arith.constant 0 : index
    %432 = vector.load %arg20[%c0_253, %c0_254] : memref<1x128xf32, #tpu.memory_space<vmem>>, vector<1x128xf32>
    %433 = vector.broadcast %432 : vector<1x128xf32> to vector<32x128xf32>
    %434 = arith.addf %431, %433 : vector<32x128xf32>
    %435 = math.tanh %434 : vector<32x128xf32>
    %c0_255 = arith.constant 0 : index
    %c0_256 = arith.constant 0 : index
    %c0_257 = arith.constant 0 : index
    %436 = vector.load %arg21[%c0_255, %c0_256, %c0_257] : memref<2x32x128xf32, #tpu.memory_space<vmem>>, vector<1x32x128xf32>
    %437 = vector.shape_cast %436 : vector<1x32x128xf32> to vector<32x128xf32>
    %438 = vector.shape_cast %435 : vector<32x128xf32> to vector<1x32x128xf32>
    tpu.vector_store %arg21[%c0_255, %c0_256, %c0_257], %438 {strides = array<i32>} : memref<2x32x128xf32, #tpu.memory_space<vmem>>, vector<1x32x128xf32>,
    %439 = vector.extract_strided_slice %430 {offsets = [36, 0], sizes = [32, 128], strides = [1, 1]} : vector<68x128xf32> to vector<32x128xf32>
    %c0_258 = arith.constant 0 : index
    %c0_259 = arith.constant 0 : index
    %440 = vector.load %arg20[%c0_258, %c0_259] : memref<1x128xf32, #tpu.memory_space<vmem>>, vector<1x128xf32>
    %441 = vector.broadcast %440 : vector<1x128xf32> to vector<32x128xf32>
    %442 = arith.addf %439, %441 : vector<32x128xf32>
    %443 = math.tanh %442 : vector<32x128xf32>
    %c1_260 = arith.constant 1 : index
    %c0_261 = arith.constant 0 : index
    %c0_262 = arith.constant 0 : index
    %444 = vector.load %arg21[%c1_260, %c0_261, %c0_262] : memref<2x32x128xf32, #tpu.memory_space<vmem>>, vector<1x32x128xf32>
    %445 = vector.shape_cast %444 : vector<1x32x128xf32> to vector<32x128xf32>
    %446 = vector.shape_cast %443 : vector<32x128xf32> to vector<1x32x128xf32>
    tpu.vector_store %arg21[%c1_260, %c0_261, %c0_262], %446 {strides = array<i32>} : memref<2x32x128xf32, #tpu.memory_space<vmem>>, vector<1x32x128xf32>,
    return
  }
}

</mosaic_0001>

<llo_original>
// kernel: _lambda_.1
$region0: #{_lambda_.1}
  #allocation0 [shape = 'u32[]', space=smem, size = 0x4, offset = 0x4, fixed_abs, tag = 'smem constant byte address 0x4 - core index']
  #allocation1 [shape = 'u32[144,128]{1,0:T(1,128)}', space=vmem, size = 0x12000, scoped, tag = 'internal scratch']
  #allocation2 [shape = 'bf16[12,128]{1,0:T(8,128)(2,1)}', space=vmem, size = 0x1000, scoped, tag = 'scratch operand']
  #allocation3 [shape = 'bf16[20,256]{1,0:T(8,128)(2,1)}', space=vmem, size = 0x3000, scoped, tag = 'scratch operand']
  #allocation4 [shape = 'bf16[36,256]{1,0:T(8,128)(2,1)}', space=vmem, size = 0x5000, scoped, tag = 'scratch operand']
  #allocation5 [shape = 'bf16[72,128]{1,0:T(8,128)(2,1)}', space=vmem, size = 0x4800, scoped, tag = 'scratch operand']
  %s0 = inlined_call_operand.vmem [shape: f32[2,32], index: 0, kind: input, shape index: {}]
  %s1 = inlined_call_operand.vmem [shape: bf16[32,512], index: 1, kind: input, shape index: {}]
  %s2 = inlined_call_operand.vmem [shape: f32[1,512], index: 2, kind: input, shape index: {}]
  %s3 = inlined_call_operand.vmem [shape: f32[1,512], index: 3, kind: input, shape index: {}]
  %s4 = inlined_call_operand.vmem [shape: bf16[3,128,512], index: 4, kind: input, shape index: {}]
  %s5 = inlined_call_operand.vmem [shape: f32[256,256], index: 5, kind: input, shape index: {}]
  %s6 = inlined_call_operand.vmem [shape: f32[1,256], index: 6, kind: input, shape index: {}]
  %s7 = inlined_call_operand.vmem [shape: f32[1,256], index: 7, kind: input, shape index: {}]
  %s8 = inlined_call_operand.vmem [shape: f32[2,8,4], index: 8, kind: input, shape index: {}]
  %s9 = inlined_call_operand.vmem [shape: bf16[3,256,512], index: 9, kind: input, shape index: {}]
  %s10 = inlined_call_operand.vmem [shape: f32[256,256], index: 10, kind: input, shape index: {}]
  %s11 = inlined_call_operand.vmem [shape: f32[1,256], index: 11, kind: input, shape index: {}]
  %s12 = inlined_call_operand.vmem [shape: f32[1,256], index: 12, kind: input, shape index: {}]
  %s13 = inlined_call_operand.vmem [shape: f32[2,16,8], index: 13, kind: input, shape index: {}]
  %s14 = inlined_call_operand.vmem [shape: bf16[3,256,256], index: 14, kind: input, shape index: {}]
  %s15 = inlined_call_operand.vmem [shape: f32[128,128], index: 15, kind: input, shape index: {}]
  %s16 = inlined_call_operand.vmem [shape: f32[1,128], index: 16, kind: input, shape index: {}]
  %s17 = inlined_call_operand.vmem [shape: f32[1,128], index: 17, kind: input, shape index: {}]
  %s18 = inlined_call_operand.vmem [shape: f32[2,32,16], index: 18, kind: input, shape index: {}]
  %s19 = inlined_call_operand.vmem [shape: bf16[5,128,128], index: 19, kind: input, shape index: {}]
  %s20 = inlined_call_operand.vmem [shape: f32[1,128], index: 20, kind: input, shape index: {}]
  %s21 = inlined_call_operand.vmem [shape: f32[2,32,128], index: 21, kind: output, shape index: {}]
  %s22 = sld [smem:[#allocation0]]
  $region94: #{_lambda_.1} parent=0
    _
  %s24 = ssub.s32 1, %s22
  %s25 = scalar_select 0, %s24, %s22
  // Predicated region
  $region2: #{_lambda_.1} parent=0 // pred_check
    _
  $region3: #{_lambda_.1} parent=0 // pred_check_branch
    %27 = sbr.rel (0) target = $region5
  $region4: #{_lambda_.1} parent=0 // pred_region
    _
  $region5: #{_lambda_.1} parent=0 // pred_fallthru
    _
  // Predicated region
  $region6: #{_lambda_.1} parent=0 // pred_check
    _
  $region7: #{_lambda_.1} parent=0 // pred_check_branch
    %29 = sbr.rel (0) target = $region9
  $region8: #{_lambda_.1} parent=0 // pred_region
    _
  $region9: #{_lambda_.1} parent=0 // pred_fallthru
    _
  // Predicated region
  $region10: #{_lambda_.1} parent=0 // pred_check
    _
  $region11: #{_lambda_.1} parent=0 // pred_check_branch
    %31 = sbr.rel (0) target = $region13
  $region12: #{_lambda_.1} parent=0 // pred_region
    _
  $region13: #{_lambda_.1} parent=0 // pred_fallthru
    _
  // Predicated region
  $region14: #{_lambda_.1} parent=0 // pred_check
    _
  $region15: #{_lambda_.1} parent=0 // pred_check_branch
    %33 = sbr.rel (0) target = $region17
  $region16: #{_lambda_.1} parent=0 // pred_region
    _
  $region17: #{_lambda_.1} parent=0 // pred_fallthru
    _
  // Predicated region
  $region18: #{_lambda_.1} parent=0 // pred_check
    _
  $region19: #{_lambda_.1} parent=0 // pred_check_branch
    %35 = sbr.rel (0) target = $region21
  $region20: #{_lambda_.1} parent=0 // pred_region
    _
  $region21: #{_lambda_.1} parent=0 // pred_fallthru
    _
  // Predicated region
  $region22: #{_lambda_.1} parent=0 // pred_check
    _
  $region23: #{_lambda_.1} parent=0 // pred_check_branch
    %37 = sbr.rel (0) target = $region25
  $region24: #{_lambda_.1} parent=0 // pred_region
    _
  $region25: #{_lambda_.1} parent=0 // pred_fallthru
    _
  // Predicated region
  $region26: #{_lambda_.1} parent=0 // pred_check
    _
  $region27: #{_lambda_.1} parent=0 // pred_check_branch
    %39 = sbr.rel (0) target = $region29
  $region28: #{_lambda_.1} parent=0 // pred_region
    _
  $region29: #{_lambda_.1} parent=0 // pred_fallthru
    _
  // Predicated region
  $region30: #{_lambda_.1} parent=0 // pred_check
    _
  $region31: #{_lambda_.1} parent=0 // pred_check_branch
    %41 = sbr.rel (0) target = $region33
  $region32: #{_lambda_.1} parent=0 // pred_region
    _
  $region33: #{_lambda_.1} parent=0 // pred_fallthru
    _
  // Predicated region
  $region34: #{_lambda_.1} parent=0 // pred_check
    _
  $region35: #{_lambda_.1} parent=0 // pred_check_branch
    %43 = sbr.rel (0) target = $region37
  $region36: #{_lambda_.1} parent=0 // pred_region
    _
  $region37: #{_lambda_.1} parent=0 // pred_fallthru
    _
  // Predicated region
  $region38: #{_lambda_.1} parent=0 // pred_check
    _
  $region39: #{_lambda_.1} parent=0 // pred_check_branch
    %45 = sbr.rel (0) target = $region41
  $region40: #{_lambda_.1} parent=0 // pred_region
    _
  $region41: #{_lambda_.1} parent=0 // pred_fallthru
    _
  // Predicated region
  $region42: #{_lambda_.1} parent=0 // pred_check
    _
  $region43: #{_lambda_.1} parent=0 // pred_check_branch
    %47 = sbr.rel (0) target = $region45
  $region44: #{_lambda_.1} parent=0 // pred_region
    _
  $region45: #{_lambda_.1} parent=0 // pred_fallthru
    _
  // Predicated region
  $region46: #{_lambda_.1} parent=0 // pred_check
    _
  $region47: #{_lambda_.1} parent=0 // pred_check_branch
    %49 = sbr.rel (0) target = $region49
  $region48: #{_lambda_.1} parent=0 // pred_region
    _
  $region49: #{_lambda_.1} parent=0 // pred_fallthru
    _
  // Predicated region
  $region50: #{_lambda_.1} parent=0 // pred_check
    _
  $region51: #{_lambda_.1} parent=0 // pred_check_branch
    %51 = sbr.rel (0) target = $region53
  $region52: #{_lambda_.1} parent=0 // pred_region
    _
  $region53: #{_lambda_.1} parent=0 // pred_fallthru
    _
  // Predicated region
  $region54: #{_lambda_.1} parent=0 // pred_check
    _
  $region55: #{_lambda_.1} parent=0 // pred_check_branch
    %53 = sbr.rel (0) target = $region57
  $region56: #{_lambda_.1} parent=0 // pred_region
    _
  $region57: #{_lambda_.1} parent=0 // pred_fallthru
    _
  // Predicated region
  $region58: #{_lambda_.1} parent=0 // pred_check
    _
  $region59: #{_lambda_.1} parent=0 // pred_check_branch
    %55 = sbr.rel (0) target = $region61
  $region60: #{_lambda_.1} parent=0 // pred_region
    _
  $region61: #{_lambda_.1} parent=0 // pred_fallthru
    _
  // Predicated region
  $region62: #{_lambda_.1} parent=0 // pred_check
    _
  $region63: #{_lambda_.1} parent=0 // pred_check_branch
    %57 = sbr.rel (0) target = $region65
  $region64: #{_lambda_.1} parent=0 // pred_region
    _
  $region65: #{_lambda_.1} parent=0 // pred_fallthru
    _
  // Predicated region
  $region66: #{_lambda_.1} parent=0 // pred_check
    _
  $region67: #{_lambda_.1} parent=0 // pred_check_branch
    %59 = sbr.rel (0) target = $region69
  $region68: #{_lambda_.1} parent=0 // pred_region
    _
  $region69: #{_lambda_.1} parent=0 // pred_fallthru
    _
  // Predicated region
  $region70: #{_lambda_.1} parent=0 // pred_check
    _
  $region71: #{_lambda_.1} parent=0 // pred_check_branch
    %61 = sbr.rel (0) target = $region73
  $region72: #{_lambda_.1} parent=0 // pred_region
    _
  $region73: #{_lambda_.1} parent=0 // pred_fallthru
    _
  // Predicated region
  $region74: #{_lambda_.1} parent=0 // pred_check
    _
  $region75: #{_lambda_.1} parent=0 // pred_check_branch
    %63 = sbr.rel (0) target = $region77
  $region76: #{_lambda_.1} parent=0 // pred_region
    _
  $region77: #{_lambda_.1} parent=0 // pred_fallthru
    _
  // Predicated region
  $region78: #{_lambda_.1} parent=0 // pred_check
    _
  $region79: #{_lambda_.1} parent=0 // pred_check_branch
    %65 = sbr.rel (0) target = $region81
  $region80: #{_lambda_.1} parent=0 // pred_region
    _
  $region81: #{_lambda_.1} parent=0 // pred_fallthru
    _
  // Predicated region
  $region82: #{_lambda_.1} parent=0 // pred_check
    _
  $region83: #{_lambda_.1} parent=0 // pred_check_branch
    %67 = sbr.rel (0) target = $region85
  $region84: #{_lambda_.1} parent=0 // pred_region
    _
  $region85: #{_lambda_.1} parent=0 // pred_fallthru
    _
  %v69 = vld [vmem:[%s0] sm:$0x3]
  %v70 = vpack.c.bf16 %v69, %v69
  %v71 = vld [vmem:[%s1] sm:$0xff]
  %v72 = vld [vmem:[%s1 + $0x8] sm:$0xff]
  %v73 = vld [vmem:[%s1 + $0x10] sm:$0xff]
  %v74 = vld [vmem:[%s1 + $0x18] sm:$0xff]
  %v75 = vld [vmem:[%s1 + $0x20] sm:$0xff]
  %v76 = vld [vmem:[%s1 + $0x28] sm:$0xff]
  %v77 = vld [vmem:[%s1 + $0x30] sm:$0xff]
  %v78 = vld [vmem:[%s1 + $0x38] sm:$0xff]
  %v87 = vunpack.c.l.b16 %v71
  %v88 = vunpack.c.h.b16 %v71
  %v89 = vunpack.c.l.b16 %v72
  %v90 = vunpack.c.h.b16 %v72
  %v91 = vunpack.c.l.b16 %v73
  %v92 = vunpack.c.h.b16 %v73
  %v93 = vunpack.c.l.b16 %v74
  %v94 = vunpack.c.h.b16 %v74
  %v95 = vunpack.c.l.b16 %v75
  %v96 = vunpack.c.h.b16 %v75
  %v97 = vunpack.c.l.b16 %v76
  %v98 = vunpack.c.h.b16 %v76
  %v99 = vunpack.c.l.b16 %v77
  %v100 = vunpack.c.h.b16 %v77
  %v101 = vunpack.c.l.b16 %v78
  %v102 = vunpack.c.h.b16 %v78
  %v103 = vpack.c.b16 %v91, %v87
  %v104 = vpack.c.b16 %v92, %v88
  %v105 = vpack.c.b16 %v93, %v89
  %v106 = vpack.c.b16 %v94, %v90
  %v107 = vpack.c.b16 %v99, %v95
  %v108 = vpack.c.b16 %v100, %v96
  %v109 = vpack.c.b16 %v101, %v97
  %v110 = vpack.c.b16 %v102, %v98
  %vm119 = vcmask 261120
  %v121 = vsel %vm119, %v70, 0
  %123 = vmatprep.subr.bf16.mxu0 %v104
  %124 = vmatpush1.bf16.msra.mxu0 %v103
  %125 = vmatprep.subr.bf16.mxu0 %v108
  %126 = vmatpush1.bf16.msra.mxu0 %v107
  %127 = vmatprep.subr.bf16.mxu0 0
  %128 = vmatpush1.bf16.msra.mxu0 0
  %129 = vmatprep.subr.bf16.mxu0 0
  %130 = vmatpush1.bf16.msra.mxu0 0
  %131 = vmatprep.subr.bf16.mxu0 0
  %132 = vmatpush1.bf16.msra.mxu0 0
  %133 = vmatprep.subr.bf16.mxu0 0
  %134 = vmatpush1.bf16.msra.mxu0 0
  %135 = vmatprep.subr.bf16.mxu0 0
  %136 = vmatpush1.bf16.msra.mxu0 0
  %137 = vmatprep.subr.bf16.mxu0 0
  %138 = vmatpush1.bf16.msra.mxu0 0
  %139 = vmatprep.subr.bf16.mxu0 0
  %140 = vmatpush1.bf16.msra.mxu0 0
  %141 = vmatprep.subr.bf16.mxu0 0
  %142 = vmatpush1.bf16.msra.mxu0 0
  %143 = vmatprep.subr.bf16.mxu0 0
  %144 = vmatpush1.bf16.msra.mxu0 0
  %145 = vmatprep.subr.bf16.mxu0 0
  %146 = vmatpush1.bf16.msra.mxu0 0
  %147 = vmatprep.subr.bf16.mxu0 0
  %148 = vmatpush1.bf16.msra.mxu0 0
  %149 = vmatprep.subr.bf16.mxu0 0
  %150 = vmatpush1.bf16.msra.mxu0 0
  %151 = vmatprep.subr.bf16.mxu0 0
  %152 = vmatpush1.bf16.msra.mxu0 0
  %153 = vmatprep.subr.bf16.mxu0 0
  %154 = vmatpush1.bf16.msra.mxu0 0
  %155 = vmatprep.mubr.bf16.mxu0 0
  %156 = vmatmul.mubr.bf16.gmra.mrb[0].mxu0 %v121
  %v157 = vpop.f32.mrb[0].mxu0
  %v158 = vadd.f32 0.0, %v157
  %v159 = vpop.f32.mrb[0].mxu0
  %v160 = vadd.f32 0.0, %v159
  %v161 = vpop.f32.mrb[0].mxu0
  %v162 = vpop.f32.mrb[0].mxu0
  %163 = vdwg.mxu0
  %164 = vmatprep.subr.bf16.mxu0 %v106
  %165 = vmatpush1.bf16.msra.mxu0 %v105
  %166 = vmatprep.subr.bf16.mxu0 %v110
  %167 = vmatpush1.bf16.msra.mxu0 %v109
  %168 = vmatprep.subr.bf16.mxu0 0
  %169 = vmatpush1.bf16.msra.mxu0 0
  %170 = vmatprep.subr.bf16.mxu0 0
  %171 = vmatpush1.bf16.msra.mxu0 0
  %172 = vmatprep.subr.bf16.mxu0 0
  %173 = vmatpush1.bf16.msra.mxu0 0
  %174 = vmatprep.subr.bf16.mxu0 0
  %175 = vmatpush1.bf16.msra.mxu0 0
  %176 = vmatprep.subr.bf16.mxu0 0
  %177 = vmatpush1.bf16.msra.mxu0 0
  %178 = vmatprep.subr.bf16.mxu0 0
  %179 = vmatpush1.bf16.msra.mxu0 0
  %180 = vmatprep.subr.bf16.mxu0 0
  %181 = vmatpush1.bf16.msra.mxu0 0
  %182 = vmatprep.subr.bf16.mxu0 0
  %183 = vmatpush1.bf16.msra.mxu0 0
  %184 = vmatprep.subr.bf16.mxu0 0
  %185 = vmatpush1.bf16.msra.mxu0 0
  %186 = vmatprep.subr.bf16.mxu0 0
  %187 = vmatpush1.bf16.msra.mxu0 0
  %188 = vmatprep.subr.bf16.mxu0 0
  %189 = vmatpush1.bf16.msra.mxu0 0
  %190 = vmatprep.subr.bf16.mxu0 0
  %191 = vmatpush1.bf16.msra.mxu0 0
  %192 = vmatprep.subr.bf16.mxu0 0
  %193 = vmatpush1.bf16.msra.mxu0 0
  %194 = vmatprep.subr.bf16.mxu0 0
  %195 = vmatpush1.bf16.msra.mxu0 0
  %196 = vmatprep.mubr.bf16.mxu0 0
  %197 = vmatmul.mubr.bf16.gmra.mrb[0].mxu0 %v121
  %v198 = vpop.f32.mrb[0].mxu0
  %v199 = vadd.f32 0.0, %v198
  %v200 = vpop.f32.mrb[0].mxu0
  %v201 = vadd.f32 0.0, %v200
  %v202 = vpop.f32.mrb[0].mxu0
  %v203 = vpop.f32.mrb[0].mxu0
  %204 = vdwg.mxu0
  %vm205 = vcmask 1041408
  %v206 = vsel %vm205, %v158, 0.0
  %v207 = vrot.slane %v206, 4
  %v208 = vadd.f32 %v206, %v207
  %v209 = vrot.slane %v208, 2
  %v210 = vadd.f32 %v208, %v209
  %v211 = vrot.slane %v210, 1
  %v212 = vadd.f32 %v210, %v211
  %v213 = vsel %vm205, %v160, 0.0
  %v214 = vrot.slane %v213, 4
  %v215 = vadd.f32 %v213, %v214
  %v216 = vrot.slane %v215, 2
  %v217 = vadd.f32 %v215, %v216
  %v218 = vrot.slane %v217, 1
  %v219 = vadd.f32 %v217, %v218
  %v220 = vsel %vm205, %v199, 0.0
  %v221 = vrot.slane %v220, 4
  %v222 = vadd.f32 %v220, %v221
  %v223 = vrot.slane %v222, 2
  %v224 = vadd.f32 %v222, %v223
  %v225 = vrot.slane %v224, 1
  %v226 = vadd.f32 %v224, %v225
  %v227 = vsel %vm205, %v201, 0.0
  %v228 = vrot.slane %v227, 4
  %v229 = vadd.f32 %v227, %v228
  %v230 = vrot.slane %v229, 2
  %v231 = vadd.f32 %v229, %v230
  %v232 = vrot.slane %v231, 1
  %v233 = vadd.f32 %v231, %v232
  %v234 = vrcp.pop 2.0
  %v235 = vmul.f32 %v212, %v234
  %v236 = vmul.f32 %v219, %v234
  %v237 = vmul.f32 %v226, %v234
  %v238 = vmul.f32 %v233, %v234
  %v239 = vsub.f32 %v158, %v235
  %v240 = vsub.f32 %v160, %v236
  %v241 = vsub.f32 %v199, %v237
  %v242 = vsub.f32 %v201, %v238
  %v243 = vmul.f32 %v239, %v239
  %v244 = vmul.f32 %v240, %v240
  %v245 = vmul.f32 %v241, %v241
  %v246 = vmul.f32 %v242, %v242
  %v247 = vsel %vm205, %v243, 0.0
  %v248 = vrot.slane %v247, 4
  %v249 = vadd.f32 %v247, %v248
  %v250 = vrot.slane %v249, 2
  %v251 = vadd.f32 %v249, %v250
  %v252 = vrot.slane %v251, 1
  %v253 = vadd.f32 %v251, %v252
  %v254 = vsel %vm205, %v244, 0.0
  %v255 = vrot.slane %v254, 4
  %v256 = vadd.f32 %v254, %v255
  %v257 = vrot.slane %v256, 2
  %v258 = vadd.f32 %v256, %v257
  %v259 = vrot.slane %v258, 1
  %v260 = vadd.f32 %v258, %v259
  %v261 = vsel %vm205, %v245, 0.0
  %v262 = vrot.slane %v261, 4
  %v263 = vadd.f32 %v261, %v262
  %v264 = vrot.slane %v263, 2
  %v265 = vadd.f32 %v263, %v264
  %v266 = vrot.slane %v265, 1
  %v267 = vadd.f32 %v265, %v266
  %v268 = vsel %vm205, %v246, 0.0
  %v269 = vrot.slane %v268, 4
  %v270 = vadd.f32 %v268, %v269
  %v271 = vrot.slane %v270, 2
  %v272 = vadd.f32 %v270, %v271
  %v273 = vrot.slane %v272, 1
  %v274 = vadd.f32 %v272, %v273
  %v275 = vmul.f32 %v253, %v234
  %v276 = vmul.f32 %v260, %v234
  %v277 = vmul.f32 %v267, %v234
  %v278 = vmul.f32 %v274, %v234
  %v279 = vld [vmem:[%s2] sm:$0xf]
  %v280 = vadd.f32 %v275, 1e-05
  %v281 = vadd.f32 %v276, 1e-05
  %v282 = vadd.f32 %v277, 1e-05
  %v283 = vadd.f32 %v278, 1e-05
  %v284 = vrsqrt.pop %v280
  %v285 = vrsqrt.pop %v281
  %v286 = vrsqrt.pop %v282
  %v287 = vrsqrt.pop %v283
  %v292 = vcombine.low %v284, %v285
  %v293 = vcombine.low %v286, %v287
  %v295 = vunpack.c.l.s4 1966171168
  %v296 = vunpack.c.0.s8 %v295
  %v297 = vlaneseq
  %v298 = vshrl.u32 %v297, 7
  %v299 = vsub.s32 %v296, %v298
  %v300 = vrot.slane %v292, %v299
  %v302 = vunpack.c.l.s4 1966171168
  %v303 = vunpack.c.0.s8 %v302
  %v304 = vlaneseq
  %v305 = vshrl.u32 %v304, 7
  %v306 = vsub.s32 %v303, %v305
  %v307 = vrot.slane %v293, %v306
  %v308 = vcombine.low %v300, %v307
  %v310 = vunpack.c.l.s4 1966171168
  %v311 = vunpack.c.0.s8 %v310
  %v312 = vlaneseq
  %v313 = vshrl.u32 %v312, 7
  %v314 = vsub.s32 %v311, %v313
  %v315 = vrot.slane %v308, %v314
  %v317 = vmul.f32 %v279, %v315
  %v319 = vlaneseq
  %v320 = vshrl.u32 %v319, 7
  %v321 = vsub.s32 0, %v320
  %v322 = vrot.slane %v317, %v321
  %v323 = vlaneseq
  %v324 = vshrl.u32 %v323, 7
  %v325 = vsub.s32 1, %v324
  %v326 = vrot.slane %v317, %v325
  %v327 = vlaneseq
  %v328 = vshrl.u32 %v327, 7
  %v329 = vsub.s32 2, %v328
  %v330 = vrot.slane %v317, %v329
  %v331 = vlaneseq
  %v332 = vshrl.u32 %v331, 7
  %v333 = vsub.s32 3, %v332
  %v334 = vrot.slane %v317, %v333
  %v339 = vmul.f32 %v239, %v322
  %v340 = vmul.f32 %v240, %v326
  %v341 = vmul.f32 %v241, %v330
  %v342 = vmul.f32 %v242, %v334
  %v343 = vld [vmem:[%s3] sm:$0xf]
  %v345 = vlaneseq
  %v346 = vshrl.u32 %v345, 7
  %v347 = vsub.s32 0, %v346
  %v348 = vrot.slane %v343, %v347
  %v349 = vlaneseq
  %v350 = vshrl.u32 %v349, 7
  %v351 = vsub.s32 1, %v350
  %v352 = vrot.slane %v343, %v351
  %v353 = vlaneseq
  %v354 = vshrl.u32 %v353, 7
  %v355 = vsub.s32 2, %v354
  %v356 = vrot.slane %v343, %v355
  %v357 = vlaneseq
  %v358 = vshrl.u32 %v357, 7
  %v359 = vsub.s32 3, %v358
  %v360 = vrot.slane %v343, %v359
  %v365 = vadd.f32 %v339, %v348
  %v366 = vadd.f32 %v340, %v352
  %v367 = vadd.f32 %v341, %v356
  %v368 = vadd.f32 %v342, %v360
  %v369 = vmax.f32 %v365, 0.0
  %v370 = vmax.f32 %v366, 0.0
  %v371 = vmax.f32 %v367, 0.0
  %v372 = vmax.f32 %v368, 0.0
  %vm373 = vcmask 1040384
  %vm374 = vsmask.f32 256
  %vm375 = vmand %vm373, %vm374
  %v376 = vld [vmem:[#allocation2] sm:$0x1]
  %v377 = vsel %vm375, 0, %v376
  %378 = vst [vmem:[#allocation2] sm:$0x1] %v377
  %vm379 = vcmask 1042434
  %vm380 = vsmask.f32 7946
  %vm381 = vmand %vm379, %vm380
  %v382 = vld [vmem:[#allocation2] sm:$0x4]
  %v383 = vsel %vm381, 0, %v382
  %384 = vst [vmem:[#allocation2] sm:$0x4] %v383
  %v385 = vpack.c.bf16 %v369, %v369
  %v387 = vunpack.c.l.b16 %v385
  %v388 = vpack.c.b16 %v387, %v387
  %v390 = vshll.u32 %v388, 16
  %vm393 = vsmask.f32 7938
  %vm394 = vmand %vm373, %vm393
  %v395 = vld [vmem:[#allocation2] sm:$0x1]
  %v396 = vsel %vm394, %v390, %v395
  %397 = vst [vmem:[#allocation2] sm:$0x1] %v396
  %v398 = vpack.c.bf16 %v370, %v370
  %v400 = vunpack.c.l.b16 %v398
  %v401 = vpack.c.b16 %v400, %v400
  %v402 = vrot.slane %v401, 7
  %vm404 = vcmask 1041409
  %vm405 = vsmask.f32 1280
  %vm406 = vmand %vm404, %vm405
  %v407 = vld [vmem:[#allocation2] sm:$0x2]
  %v408 = vsel %vm406, %v402, %v407
  %409 = vst [vmem:[#allocation2] sm:$0x2] %v408
  %v410 = vpack.c.bf16 %v371, %v371
  %v412 = vunpack.c.l.b16 %v410
  %v413 = vpack.c.b16 %v412, %v412
  %v415 = vshll.u32 %v413, 16
  %v417 = vrot.slane %v415, 7
  %vm419 = vsmask.f32 7942
  %vm420 = vmand %vm404, %vm419
  %v421 = vld [vmem:[#allocation2] sm:$0x2]
  %v422 = vsel %vm420, %v417, %v421
  %423 = vst [vmem:[#allocation2] sm:$0x2] %v422
  %v424 = vpack.c.bf16 %v372, %v372
  %v426 = vunpack.c.l.b16 %v424
  %v427 = vpack.c.b16 %v426, %v426
  %v428 = vrot.slane %v427, 6
  %vm430 = vsmask.f32 2304
  %vm431 = vmand %vm379, %vm430
  %v432 = vld [vmem:[#allocation2] sm:$0x4]
  %v433 = vsel %vm431, %v428, %v432
  %434 = vst [vmem:[#allocation2] sm:$0x4] %v433
  %vm435 = vcmask 1043459
  %vm436 = vsmask.f32 3328
  %vm437 = vmand %vm435, %vm436
  %v438 = vld [vmem:[#allocation2] sm:$0x8]
  %v439 = vsel %vm437, 0, %v438
  %440 = vst [vmem:[#allocation2] sm:$0x8] %v439
  %v441 = vld [vmem:[#allocation2 + $0x4] sm:$0x2]
  %v442 = vsel %vm420, 0, %v441
  %443 = vst [vmem:[#allocation2 + $0x4] sm:$0x2] %v442
  %v444 = vrot.slane %v388, 5
  %vm446 = vsmask.f32 7950
  %vm447 = vmand %vm435, %vm446
  %v448 = vld [vmem:[#allocation2] sm:$0x8]
  %v449 = vsel %vm447, %v444, %v448
  %450 = vst [vmem:[#allocation2] sm:$0x8] %v449
  %v452 = vshrl.u32 %v401, 16
  %v454 = vrot.slane %v452, 4
  %v455 = vrot.slane %v454, 4
  %v457 = vld [vmem:[#allocation2 + $0x4] sm:$0x1]
  %v458 = vsel %vm375, %v455, %v457
  %459 = vst [vmem:[#allocation2 + $0x4] sm:$0x1] %v458
  %v460 = vld [vmem:[#allocation2 + $0x4] sm:$0x1]
  %v461 = vsel %vm394, %v410, %v460
  %462 = vst [vmem:[#allocation2 + $0x4] sm:$0x1] %v461
  %v464 = vshrl.u32 %v427, 16
  %v466 = vrot.slane %v464, 7
  %v468 = vld [vmem:[#allocation2 + $0x4] sm:$0x2]
  %v469 = vsel %vm406, %v466, %v468
  %470 = vst [vmem:[#allocation2 + $0x4] sm:$0x2] %v469
  %v471 = vld [vmem:[#allocation2] sm:$0xf]
  %v472 = vld [vmem:[#allocation2 + $0x4] sm:$0x1]
  %v473 = vld [vmem:[%s4] sm:$0xff]
  %v474 = vld [vmem:[%s4 + $0x8] sm:$0xff]
  %v475 = vld [vmem:[%s4 + $0x10] sm:$0xff]
  %v476 = vld [vmem:[%s4 + $0x18] sm:$0xff]
  %v477 = vld [vmem:[%s4 + $0x20] sm:$0xff]
  %v478 = vld [vmem:[%s4 + $0x28] sm:$0xff]
  %v479 = vld [vmem:[%s4 + $0x30] sm:$0xff]
  %v480 = vld [vmem:[%s4 + $0x38] sm:$0xff]
  %v481 = vld [vmem:[%s4 + $0x40] sm:$0xff]
  %v482 = vld [vmem:[%s4 + $0x48] sm:$0xff]
  %v483 = vld [vmem:[%s4 + $0x50] sm:$0xff]
  %v484 = vld [vmem:[%s4 + $0x58] sm:$0xff]
  %v485 = vld [vmem:[%s4 + $0x60] sm:$0xff]
  %v486 = vld [vmem:[%s4 + $0x68] sm:$0xff]
  %v487 = vld [vmem:[%s4 + $0x70] sm:$0xff]
  %v488 = vld [vmem:[%s4 + $0x78] sm:$0xff]
  %v489 = vld [vmem:[%s4 + $0x80] sm:$0xff]
  %v490 = vld [vmem:[%s4 + $0x88] sm:$0xff]
  %v491 = vld [vmem:[%s4 + $0x90] sm:$0xff]
  %v492 = vld [vmem:[%s4 + $0x98] sm:$0xff]
  %v493 = vld [vmem:[%s4 + $0xa0] sm:$0xff]
  %v494 = vld [vmem:[%s4 + $0xa8] sm:$0xff]
  %v495 = vld [vmem:[%s4 + $0xb0] sm:$0xff]
  %v496 = vld [vmem:[%s4 + $0xb8] sm:$0xff]
  %v497 = vld [vmem:[%s4 + $0xc0] sm:$0xff]
  %v498 = vld [vmem:[%s4 + $0xc8] sm:$0xff]
  %v499 = vld [vmem:[%s4 + $0xd0] sm:$0xff]
  %v500 = vld [vmem:[%s4 + $0xd8] sm:$0xff]
  %v501 = vld [vmem:[%s4 + $0xe0] sm:$0xff]
  %v502 = vld [vmem:[%s4 + $0xe8] sm:$0xff]
  %v503 = vld [vmem:[%s4 + $0xf0] sm:$0xff]
  %v504 = vld [vmem:[%s4 + $0xf8] sm:$0xff]
  %v505 = vld [vmem:[#allocation2 + $0x4] sm:$0x3]
  %s506 = scalar_lea.vmem %s4, 256
  %v507 = vld [vmem:[%s506] sm:$0xff]
  %v508 = vld [vmem:[%s506 + $0x8] sm:$0xff]
  %v509 = vld [vmem:[%s506 + $0x10] sm:$0xff]
  %v510 = vld [vmem:[%s506 + $0x18] sm:$0xff]
  %v511 = vld [vmem:[%s506 + $0x20] sm:$0xff]
  %v512 = vld [vmem:[%s506 + $0x28] sm:$0xff]
  %v513 = vld [vmem:[%s506 + $0x30] sm:$0xff]
  %v514 = vld [vmem:[%s506 + $0x38] sm:$0xff]
  %v515 = vld [vmem:[%s506 + $0x40] sm:$0xff]
  %v516 = vld [vmem:[%s506 + $0x48] sm:$0xff]
  %v517 = vld [vmem:[%s506 + $0x50] sm:$0xff]
  %v518 = vld [vmem:[%s506 + $0x58] sm:$0xff]
  %v519 = vld [vmem:[%s506 + $0x60] sm:$0xff]
  %v520 = vld [vmem:[%s506 + $0x68] sm:$0xff]
  %v521 = vld [vmem:[%s506 + $0x70] sm:$0xff]
  %v522 = vld [vmem:[%s506 + $0x78] sm:$0xff]
  %v523 = vld [vmem:[%s506 + $0x80] sm:$0xff]
  %v524 = vld [vmem:[%s506 + $0x88] sm:$0xff]
  %v525 = vld [vmem:[%s506 + $0x90] sm:$0xff]
  %v526 = vld [vmem:[%s506 + $0x98] sm:$0xff]
  %v527 = vld [vmem:[%s506 + $0xa0] sm:$0xff]
  %v528 = vld [vmem:[%s506 + $0xa8] sm:$0xff]
  %v529 = vld [vmem:[%s506 + $0xb0] sm:$0xff]
  %v530 = vld [vmem:[%s506 + $0xb8] sm:$0xff]
  %v531 = vld [vmem:[%s506 + $0xc0] sm:$0xff]
  %v532 = vld [vmem:[%s506 + $0xc8] sm:$0xff]
  %v533 = vld [vmem:[%s506 + $0xd0] sm:$0xff]
  %v534 = vld [vmem:[%s506 + $0xd8] sm:$0xff]
  %v535 = vld [vmem:[%s506 + $0xe0] sm:$0xff]
  %v536 = vld [vmem:[%s506 + $0xe8] sm:$0xff]
  %v537 = vld [vmem:[%s506 + $0xf0] sm:$0xff]
  %v538 = vld [vmem:[%s506 + $0xf8] sm:$0xff]
  %v541 = vunpack.c.l.b16 %v471
  %v542 = vunpack.c.l.b16 %v505
  %v543 = vpack.c.b16 %v542, %v541
  %v545 = vshrl.u32 %v543, 16
  %v547 = vshll.u32 %v543, 16
  %v549 = vrot.slane %v547, 1
  %v550 = vor.u32 %v545, %v549
  %v584 = vunpack.c.l.b16 %v507
  %v585 = vunpack.c.h.b16 %v507
  %v586 = vunpack.c.l.b16 %v508
  %v587 = vunpack.c.h.b16 %v508
  %v588 = vunpack.c.l.b16 %v509
  %v589 = vunpack.c.h.b16 %v509
  %v590 = vunpack.c.l.b16 %v510
  %v591 = vunpack.c.h.b16 %v510
  %v592 = vunpack.c.l.b16 %v511
  %v593 = vunpack.c.h.b16 %v511
  %v594 = vunpack.c.l.b16 %v512
  %v595 = vunpack.c.h.b16 %v512
  %v596 = vunpack.c.l.b16 %v513
  %v597 = vunpack.c.h.b16 %v513
  %v598 = vunpack.c.l.b16 %v514
  %v599 = vunpack.c.h.b16 %v514
  %v600 = vunpack.c.l.b16 %v515
  %v601 = vunpack.c.h.b16 %v515
  %v602 = vunpack.c.l.b16 %v516
  %v603 = vunpack.c.h.b16 %v516
  %v604 = vunpack.c.l.b16 %v517
  %v605 = vunpack.c.h.b16 %v517
  %v606 = vunpack.c.l.b16 %v518
  %v607 = vunpack.c.h.b16 %v518
  %v608 = vunpack.c.l.b16 %v519
  %v609 = vunpack.c.h.b16 %v519
  %v610 = vunpack.c.l.b16 %v520
  %v611 = vunpack.c.h.b16 %v520
  %v612 = vunpack.c.l.b16 %v521
  %v613 = vunpack.c.h.b16 %v521
  %v614 = vunpack.c.l.b16 %v522
  %v615 = vunpack.c.h.b16 %v522
  %v616 = vunpack.c.l.b16 %v523
  %v617 = vunpack.c.h.b16 %v523
  %v618 = vunpack.c.l.b16 %v524
  %v619 = vunpack.c.h.b16 %v524
  %v620 = vunpack.c.l.b16 %v525
  %v621 = vunpack.c.h.b16 %v525
  %v622 = vunpack.c.l.b16 %v526
  %v623 = vunpack.c.h.b16 %v526
  %v624 = vunpack.c.l.b16 %v527
  %v625 = vunpack.c.h.b16 %v527
  %v626 = vunpack.c.l.b16 %v528
  %v627 = vunpack.c.h.b16 %v528
  %v628 = vunpack.c.l.b16 %v529
  %v629 = vunpack.c.h.b16 %v529
  %v630 = vunpack.c.l.b16 %v530
  %v631 = vunpack.c.h.b16 %v530
  %v632 = vunpack.c.l.b16 %v531
  %v633 = vunpack.c.h.b16 %v531
  %v634 = vunpack.c.l.b16 %v532
  %v635 = vunpack.c.h.b16 %v532
  %v636 = vunpack.c.l.b16 %v533
  %v637 = vunpack.c.h.b16 %v533
  %v638 = vunpack.c.l.b16 %v534
  %v639 = vunpack.c.h.b16 %v534
  %v640 = vunpack.c.l.b16 %v535
  %v641 = vunpack.c.h.b16 %v535
  %v642 = vunpack.c.l.b16 %v536
  %v643 = vunpack.c.h.b16 %v536
  %v644 = vunpack.c.l.b16 %v537
  %v645 = vunpack.c.h.b16 %v537
  %v646 = vunpack.c.l.b16 %v538
  %v647 = vunpack.c.h.b16 %v538
  %v648 = vpack.c.b16 %v588, %v584
  %v649 = vpack.c.b16 %v589, %v585
  %v650 = vpack.c.b16 %v590, %v586
  %v651 = vpack.c.b16 %v591, %v587
  %v652 = vpack.c.b16 %v596, %v592
  %v653 = vpack.c.b16 %v597, %v593
  %v654 = vpack.c.b16 %v598, %v594
  %v655 = vpack.c.b16 %v599, %v595
  %v656 = vpack.c.b16 %v604, %v600
  %v657 = vpack.c.b16 %v605, %v601
  %v658 = vpack.c.b16 %v606, %v602
  %v659 = vpack.c.b16 %v607, %v603
  %v660 = vpack.c.b16 %v612, %v608
  %v661 = vpack.c.b16 %v613, %v609
  %v662 = vpack.c.b16 %v614, %v610
  %v663 = vpack.c.b16 %v615, %v611
  %v664 = vpack.c.b16 %v620, %v616
  %v665 = vpack.c.b16 %v621, %v617
  %v666 = vpack.c.b16 %v622, %v618
  %v667 = vpack.c.b16 %v623, %v619
  %v668 = vpack.c.b16 %v628, %v624
  %v669 = vpack.c.b16 %v629, %v625
  %v670 = vpack.c.b16 %v630, %v626
  %v671 = vpack.c.b16 %v631, %v627
  %v672 = vpack.c.b16 %v636, %v632
  %v673 = vpack.c.b16 %v637, %v633
  %v674 = vpack.c.b16 %v638, %v634
  %v675 = vpack.c.b16 %v639, %v635
  %v676 = vpack.c.b16 %v644, %v640
  %v677 = vpack.c.b16 %v645, %v641
  %v678 = vpack.c.b16 %v646, %v642
  %v679 = vpack.c.b16 %v647, %v643
  %712 = vmatprep.subr.bf16.mxu0 %v649
  %713 = vmatpush1.bf16.msra.mxu0 %v648
  %714 = vmatprep.subr.bf16.mxu0 %v653
  %715 = vmatpush1.bf16.msra.mxu0 %v652
  %716 = vmatprep.subr.bf16.mxu0 %v657
  %717 = vmatpush1.bf16.msra.mxu0 %v656
  %718 = vmatprep.subr.bf16.mxu0 %v661
  %719 = vmatpush1.bf16.msra.mxu0 %v660
  %720 = vmatprep.subr.bf16.mxu0 %v665
  %721 = vmatpush1.bf16.msra.mxu0 %v664
  %722 = vmatprep.subr.bf16.mxu0 %v669
  %723 = vmatpush1.bf16.msra.mxu0 %v668
  %724 = vmatprep.subr.bf16.mxu0 %v673
  %725 = vmatpush1.bf16.msra.mxu0 %v672
  %726 = vmatprep.subr.bf16.mxu0 %v677
  %727 = vmatpush1.bf16.msra.mxu0 %v676
  %728 = vmatprep.subr.bf16.mxu0 0
  %729 = vmatpush1.bf16.msra.mxu0 0
  %730 = vmatprep.subr.bf16.mxu0 0
  %731 = vmatpush1.bf16.msra.mxu0 0
  %732 = vmatprep.subr.bf16.mxu0 0
  %733 = vmatpush1.bf16.msra.mxu0 0
  %734 = vmatprep.subr.bf16.mxu0 0
  %735 = vmatpush1.bf16.msra.mxu0 0
  %736 = vmatprep.subr.bf16.mxu0 0
  %737 = vmatpush1.bf16.msra.mxu0 0
  %738 = vmatprep.subr.bf16.mxu0 0
  %739 = vmatpush1.bf16.msra.mxu0 0
  %740 = vmatprep.subr.bf16.mxu0 0
  %741 = vmatpush1.bf16.msra.mxu0 0
  %742 = vmatprep.subr.bf16.mxu0 0
  %743 = vmatpush1.bf16.msra.mxu0 0
  %744 = vmatprep.mubr.bf16.mxu0 0
  %745 = vmatmul.mubr.bf16.gmra.mrb[0].mxu0 %v550
  %v746 = vpop.f32.mrb[0].mxu0
  %v747 = vadd.f32 0.0, %v746
  %v748 = vpop.f32.mrb[0].mxu0
  %v749 = vadd.f32 0.0, %v748
  %v750 = vpop.f32.mrb[0].mxu0
  %v751 = vadd.f32 0.0, %v750
  %v752 = vpop.f32.mrb[0].mxu0
  %v753 = vadd.f32 0.0, %v752
  %754 = vdwg.mxu0
  %755 = vmatprep.subr.bf16.mxu0 %v651
  %756 = vmatpush1.bf16.msra.mxu0 %v650
  %757 = vmatprep.subr.bf16.mxu0 %v655
  %758 = vmatpush1.bf16.msra.mxu0 %v654
  %759 = vmatprep.subr.bf16.mxu0 %v659
  %760 = vmatpush1.bf16.msra.mxu0 %v658
  %761 = vmatprep.subr.bf16.mxu0 %v663
  %762 = vmatpush1.bf16.msra.mxu0 %v662
  %763 = vmatprep.subr.bf16.mxu0 %v667
  %764 = vmatpush1.bf16.msra.mxu0 %v666
  %765 = vmatprep.subr.bf16.mxu0 %v671
  %766 = vmatpush1.bf16.msra.mxu0 %v670
  %767 = vmatprep.subr.bf16.mxu0 %v675
  %768 = vmatpush1.bf16.msra.mxu0 %v674
  %769 = vmatprep.subr.bf16.mxu0 %v679
  %770 = vmatpush1.bf16.msra.mxu0 %v678
  %771 = vmatprep.subr.bf16.mxu0 0
  %772 = vmatpush1.bf16.msra.mxu0 0
  %773 = vmatprep.subr.bf16.mxu0 0
  %774 = vmatpush1.bf16.msra.mxu0 0
  %775 = vmatprep.subr.bf16.mxu0 0
  %776 = vmatpush1.bf16.msra.mxu0 0
  %777 = vmatprep.subr.bf16.mxu0 0
  %778 = vmatpush1.bf16.msra.mxu0 0
  %779 = vmatprep.subr.bf16.mxu0 0
  %780 = vmatpush1.bf16.msra.mxu0 0
  %781 = vmatprep.subr.bf16.mxu0 0
  %782 = vmatpush1.bf16.msra.mxu0 0
  %783 = vmatprep.subr.bf16.mxu0 0
  %784 = vmatpush1.bf16.msra.mxu0 0
  %785 = vmatprep.subr.bf16.mxu0 0
  %786 = vmatpush1.bf16.msra.mxu0 0
  %787 = vmatprep.mubr.bf16.mxu0 0
  %788 = vmatmul.mubr.bf16.gmra.mrb[0].mxu0 %v550
  %v789 = vpop.f32.mrb[0].mxu0
  %v790 = vadd.f32 0.0, %v789
  %v791 = vpop.f32.mrb[0].mxu0
  %v792 = vadd.f32 0.0, %v791
  %v793 = vpop.f32.mrb[0].mxu0
  %v794 = vadd.f32 0.0, %v793
  %v795 = vpop.f32.mrb[0].mxu0
  %v796 = vadd.f32 0.0, %v795
  %797 = vdwg.mxu0
  %v799 = vunpack.c.l.b16 %v472
  %v800 = vpack.c.b16 %v799, %v541
  %v834 = vunpack.c.l.b16 %v473
  %v835 = vunpack.c.h.b16 %v473
  %v836 = vunpack.c.l.b16 %v474
  %v837 = vunpack.c.h.b16 %v474
  %v838 = vunpack.c.l.b16 %v475
  %v839 = vunpack.c.h.b16 %v475
  %v840 = vunpack.c.l.b16 %v476
  %v841 = vunpack.c.h.b16 %v476
  %v842 = vunpack.c.l.b16 %v477
  %v843 = vunpack.c.h.b16 %v477
  %v844 = vunpack.c.l.b16 %v478
  %v845 = vunpack.c.h.b16 %v478
  %v846 = vunpack.c.l.b16 %v479
  %v847 = vunpack.c.h.b16 %v479
  %v848 = vunpack.c.l.b16 %v480
  %v849 = vunpack.c.h.b16 %v480
  %v850 = vunpack.c.l.b16 %v481
  %v851 = vunpack.c.h.b16 %v481
  %v852 = vunpack.c.l.b16 %v482
  %v853 = vunpack.c.h.b16 %v482
  %v854 = vunpack.c.l.b16 %v483
  %v855 = vunpack.c.h.b16 %v483
  %v856 = vunpack.c.l.b16 %v484
  %v857 = vunpack.c.h.b16 %v484
  %v858 = vunpack.c.l.b16 %v485
  %v859 = vunpack.c.h.b16 %v485
  %v860 = vunpack.c.l.b16 %v486
  %v861 = vunpack.c.h.b16 %v486
  %v862 = vunpack.c.l.b16 %v487
  %v863 = vunpack.c.h.b16 %v487
  %v864 = vunpack.c.l.b16 %v488
  %v865 = vunpack.c.h.b16 %v488
  %v866 = vunpack.c.l.b16 %v489
  %v867 = vunpack.c.h.b16 %v489
  %v868 = vunpack.c.l.b16 %v490
  %v869 = vunpack.c.h.b16 %v490
  %v870 = vunpack.c.l.b16 %v491
  %v871 = vunpack.c.h.b16 %v491
  %v872 = vunpack.c.l.b16 %v492
  %v873 = vunpack.c.h.b16 %v492
  %v874 = vunpack.c.l.b16 %v493
  %v875 = vunpack.c.h.b16 %v493
  %v876 = vunpack.c.l.b16 %v494
  %v877 = vunpack.c.h.b16 %v494
  %v878 = vunpack.c.l.b16 %v495
  %v879 = vunpack.c.h.b16 %v495
  %v880 = vunpack.c.l.b16 %v496
  %v881 = vunpack.c.h.b16 %v496
  %v882 = vunpack.c.l.b16 %v497
  %v883 = vunpack.c.h.b16 %v497
  %v884 = vunpack.c.l.b16 %v498
  %v885 = vunpack.c.h.b16 %v498
  %v886 = vunpack.c.l.b16 %v499
  %v887 = vunpack.c.h.b16 %v499
  %v888 = vunpack.c.l.b16 %v500
  %v889 = vunpack.c.h.b16 %v500
  %v890 = vunpack.c.l.b16 %v501
  %v891 = vunpack.c.h.b16 %v501
  %v892 = vunpack.c.l.b16 %v502
  %v893 = vunpack.c.h.b16 %v502
  %v894 = vunpack.c.l.b16 %v503
  %v895 = vunpack.c.h.b16 %v503
  %v896 = vunpack.c.l.b16 %v504
  %v897 = vunpack.c.h.b16 %v504
  %v898 = vpack.c.b16 %v838, %v834
  %v899 = vpack.c.b16 %v839, %v835
  %v900 = vpack.c.b16 %v840, %v836
  %v901 = vpack.c.b16 %v841, %v837
  %v902 = vpack.c.b16 %v846, %v842
  %v903 = vpack.c.b16 %v847, %v843
  %v904 = vpack.c.b16 %v848, %v844
  %v905 = vpack.c.b16 %v849, %v845
  %v906 = vpack.c.b16 %v854, %v850
  %v907 = vpack.c.b16 %v855, %v851
  %v908 = vpack.c.b16 %v856, %v852
  %v909 = vpack.c.b16 %v857, %v853
  %v910 = vpack.c.b16 %v862, %v858
  %v911 = vpack.c.b16 %v863, %v859
  %v912 = vpack.c.b16 %v864, %v860
  %v913 = vpack.c.b16 %v865, %v861
  %v914 = vpack.c.b16 %v870, %v866
  %v915 = vpack.c.b16 %v871, %v867
  %v916 = vpack.c.b16 %v872, %v868
  %v917 = vpack.c.b16 %v873, %v869
  %v918 = vpack.c.b16 %v878, %v874
  %v919 = vpack.c.b16 %v879, %v875
  %v920 = vpack.c.b16 %v880, %v876
  %v921 = vpack.c.b16 %v881, %v877
  %v922 = vpack.c.b16 %v886, %v882
  %v923 = vpack.c.b16 %v887, %v883
  %v924 = vpack.c.b16 %v888, %v884
  %v925 = vpack.c.b16 %v889, %v885
  %v926 = vpack.c.b16 %v894, %v890
  %v927 = vpack.c.b16 %v895, %v891
  %v928 = vpack.c.b16 %v896, %v892
  %v929 = vpack.c.b16 %v897, %v893
  %962 = vmatprep.subr.bf16.mxu0 %v899
  %963 = vmatpush1.bf16.msra.mxu0 %v898
  %964 = vmatprep.subr.bf16.mxu0 %v903
  %965 = vmatpush1.bf16.msra.mxu0 %v902
  %966 = vmatprep.subr.bf16.mxu0 %v907
  %967 = vmatpush1.bf16.msra.mxu0 %v906
  %968 = vmatprep.subr.bf16.mxu0 %v911
  %969 = vmatpush1.bf16.msra.mxu0 %v910
  %970 = vmatprep.subr.bf16.mxu0 %v915
  %971 = vmatpush1.bf16.msra.mxu0 %v914
  %972 = vmatprep.subr.bf16.mxu0 %v919
  %973 = vmatpush1.bf16.msra.mxu0 %v918
  %974 = vmatprep.subr.bf16.mxu0 %v923
  %975 = vmatpush1.bf16.msra.mxu0 %v922
  %976 = vmatprep.subr.bf16.mxu0 %v927
  %977 = vmatpush1.bf16.msra.mxu0 %v926
  %978 = vmatprep.subr.bf16.mxu0 0
  %979 = vmatpush1.bf16.msra.mxu0 0
  %980 = vmatprep.subr.bf16.mxu0 0
  %981 = vmatpush1.bf16.msra.mxu0 0
  %982 = vmatprep.subr.bf16.mxu0 0
  %983 = vmatpush1.bf16.msra.mxu0 0
  %984 = vmatprep.subr.bf16.mxu0 0
  %985 = vmatpush1.bf16.msra.mxu0 0
  %986 = vmatprep.subr.bf16.mxu0 0
  %987 = vmatpush1.bf16.msra.mxu0 0
  %988 = vmatprep.subr.bf16.mxu0 0
  %989 = vmatpush1.bf16.msra.mxu0 0
  %990 = vmatprep.subr.bf16.mxu0 0
  %991 = vmatpush1.bf16.msra.mxu0 0
  %992 = vmatprep.subr.bf16.mxu0 0
  %993 = vmatpush1.bf16.msra.mxu0 0
  %994 = vmatprep.mubr.bf16.mxu0 0
  %995 = vmatmul.mubr.bf16.gmra.mrb[0].mxu0 %v800
  %v996 = vpop.f32.mrb[0].mxu0
  %v997 = vadd.f32 %v747, %v996
  %v998 = vpop.f32.mrb[0].mxu0
  %v999 = vadd.f32 %v749, %v998
  %v1000 = vpop.f32.mrb[0].mxu0
  %v1001 = vadd.f32 %v751, %v1000
  %v1002 = vpop.f32.mrb[0].mxu0
  %v1003 = vadd.f32 %v753, %v1002
  %1004 = vdwg.mxu0
  %1005 = vmatprep.subr.bf16.mxu0 %v901
  %1006 = vmatpush1.bf16.msra.mxu0 %v900
  %1007 = vmatprep.subr.bf16.mxu0 %v905
  %1008 = vmatpush1.bf16.msra.mxu0 %v904
  %1009 = vmatprep.subr.bf16.mxu0 %v909
  %1010 = vmatpush1.bf16.msra.mxu0 %v908
  %1011 = vmatprep.subr.bf16.mxu0 %v913
  %1012 = vmatpush1.bf16.msra.mxu0 %v912
  %1013 = vmatprep.subr.bf16.mxu0 %v917
  %1014 = vmatpush1.bf16.msra.mxu0 %v916
  %1015 = vmatprep.subr.bf16.mxu0 %v921
  %1016 = vmatpush1.bf16.msra.mxu0 %v920
  %1017 = vmatprep.subr.bf16.mxu0 %v925
  %1018 = vmatpush1.bf16.msra.mxu0 %v924
  %1019 = vmatprep.subr.bf16.mxu0 %v929
  %1020 = vmatpush1.bf16.msra.mxu0 %v928
  %1021 = vmatprep.subr.bf16.mxu0 0
  %1022 = vmatpush1.bf16.msra.mxu0 0
  %1023 = vmatprep.subr.bf16.mxu0 0
  %1024 = vmatpush1.bf16.msra.mxu0 0
  %1025 = vmatprep.subr.bf16.mxu0 0
  %1026 = vmatpush1.bf16.msra.mxu0 0
  %1027 = vmatprep.subr.bf16.mxu0 0
  %1028 = vmatpush1.bf16.msra.mxu0 0
  %1029 = vmatprep.subr.bf16.mxu0 0
  %1030 = vmatpush1.bf16.msra.mxu0 0
  %1031 = vmatprep.subr.bf16.mxu0 0
  %1032 = vmatpush1.bf16.msra.mxu0 0
  %1033 = vmatprep.subr.bf16.mxu0 0
  %1034 = vmatpush1.bf16.msra.mxu0 0
  %1035 = vmatprep.subr.bf16.mxu0 0
  %1036 = vmatpush1.bf16.msra.mxu0 0
  %1037 = vmatprep.mubr.bf16.mxu0 0
  %1038 = vmatmul.mubr.bf16.gmra.mrb[0].mxu0 %v800
  %v1039 = vpop.f32.mrb[0].mxu0
  %v1040 = vadd.f32 %v790, %v1039
  %v1041 = vpop.f32.mrb[0].mxu0
  %v1042 = vadd.f32 %v792, %v1041
  %v1043 = vpop.f32.mrb[0].mxu0
  %v1044 = vadd.f32 %v794, %v1043
  %v1045 = vpop.f32.mrb[0].mxu0
  %v1046 = vadd.f32 %v796, %v1045
  %1047 = vdwg.mxu0
  %v1048 = vld [vmem:[#allocation2] sm:$0xe]
  %s1049 = scalar_lea.vmem %s4, 512
  %v1050 = vld [vmem:[%s1049] sm:$0xff]
  %v1051 = vld [vmem:[%s1049 + $0x8] sm:$0xff]
  %v1052 = vld [vmem:[%s1049 + $0x10] sm:$0xff]
  %v1053 = vld [vmem:[%s1049 + $0x18] sm:$0xff]
  %v1054 = vld [vmem:[%s1049 + $0x20] sm:$0xff]
  %v1055 = vld [vmem:[%s1049 + $0x28] sm:$0xff]
  %v1056 = vld [vmem:[%s1049 + $0x30] sm:$0xff]
  %v1057 = vld [vmem:[%s1049 + $0x38] sm:$0xff]
  %v1058 = vld [vmem:[%s1049 + $0x40] sm:$0xff]
  %v1059 = vld [vmem:[%s1049 + $0x48] sm:$0xff]
  %v1060 = vld [vmem:[%s1049 + $0x50] sm:$0xff]
  %v1061 = vld [vmem:[%s1049 + $0x58] sm:$0xff]
  %v1062 = vld [vmem:[%s1049 + $0x60] sm:$0xff]
  %v1063 = vld [vmem:[%s1049 + $0x68] sm:$0xff]
  %v1064 = vld [vmem:[%s1049 + $0x70] sm:$0xff]
  %v1065 = vld [vmem:[%s1049 + $0x78] sm:$0xff]
  %v1066 = vld [vmem:[%s1049 + $0x80] sm:$0xff]
  %v1067 = vld [vmem:[%s1049 + $0x88] sm:$0xff]
  %v1068 = vld [vmem:[%s1049 + $0x90] sm:$0xff]
  %v1069 = vld [vmem:[%s1049 + $0x98] sm:$0xff]
  %v1070 = vld [vmem:[%s1049 + $0xa0] sm:$0xff]
  %v1071 = vld [vmem:[%s1049 + $0xa8] sm:$0xff]
  %v1072 = vld [vmem:[%s1049 + $0xb0] sm:$0xff]
  %v1073 = vld [vmem:[%s1049 + $0xb8] sm:$0xff]
  %v1074 = vld [vmem:[%s1049 + $0xc0] sm:$0xff]
  %v1075 = vld [vmem:[%s1049 + $0xc8] sm:$0xff]
  %v1076 = vld [vmem:[%s1049 + $0xd0] sm:$0xff]
  %v1077 = vld [vmem:[%s1049 + $0xd8] sm:$0xff]
  %v1078 = vld [vmem:[%s1049 + $0xe0] sm:$0xff]
  %v1079 = vld [vmem:[%s1049 + $0xe8] sm:$0xff]
  %v1080 = vld [vmem:[%s1049 + $0xf0] sm:$0xff]
  %v1081 = vld [vmem:[%s1049 + $0xf8] sm:$0xff]
  %v1083 = vunpack.c.l.b16 %v1048
  %v1084 = vpack.c.b16 %v542, %v1083
  %v1085 = vrot.slane %v1084, 1
  %v1119 = vunpack.c.l.b16 %v1050
  %v1120 = vunpack.c.h.b16 %v1050
  %v1121 = vunpack.c.l.b16 %v1051
  %v1122 = vunpack.c.h.b16 %v1051
  %v1123 = vunpack.c.l.b16 %v1052
  %v1124 = vunpack.c.h.b16 %v1052
  %v1125 = vunpack.c.l.b16 %v1053
  %v1126 = vunpack.c.h.b16 %v1053
  %v1127 = vunpack.c.l.b16 %v1054
  %v1128 = vunpack.c.h.b16 %v1054
  %v1129 = vunpack.c.l.b16 %v1055
  %v1130 = vunpack.c.h.b16 %v1055
  %v1131 = vunpack.c.l.b16 %v1056
  %v1132 = vunpack.c.h.b16 %v1056
  %v1133 = vunpack.c.l.b16 %v1057
  %v1134 = vunpack.c.h.b16 %v1057
  %v1135 = vunpack.c.l.b16 %v1058
  %v1136 = vunpack.c.h.b16 %v1058
  %v1137 = vunpack.c.l.b16 %v1059
  %v1138 = vunpack.c.h.b16 %v1059
  %v1139 = vunpack.c.l.b16 %v1060
  %v1140 = vunpack.c.h.b16 %v1060
  %v1141 = vunpack.c.l.b16 %v1061
  %v1142 = vunpack.c.h.b16 %v1061
  %v1143 = vunpack.c.l.b16 %v1062
  %v1144 = vunpack.c.h.b16 %v1062
  %v1145 = vunpack.c.l.b16 %v1063
  %v1146 = vunpack.c.h.b16 %v1063
  %v1147 = vunpack.c.l.b16 %v1064
  %v1148 = vunpack.c.h.b16 %v1064
  %v1149 = vunpack.c.l.b16 %v1065
  %v1150 = vunpack.c.h.b16 %v1065
  %v1151 = vunpack.c.l.b16 %v1066
  %v1152 = vunpack.c.h.b16 %v1066
  %v1153 = vunpack.c.l.b16 %v1067
  %v1154 = vunpack.c.h.b16 %v1067
  %v1155 = vunpack.c.l.b16 %v1068
  %v1156 = vunpack.c.h.b16 %v1068
  %v1157 = vunpack.c.l.b16 %v1069
  %v1158 = vunpack.c.h.b16 %v1069
  %v1159 = vunpack.c.l.b16 %v1070
  %v1160 = vunpack.c.h.b16 %v1070
  %v1161 = vunpack.c.l.b16 %v1071
  %v1162 = vunpack.c.h.b16 %v1071
  %v1163 = vunpack.c.l.b16 %v1072
  %v1164 = vunpack.c.h.b16 %v1072
  %v1165 = vunpack.c.l.b16 %v1073
  %v1166 = vunpack.c.h.b16 %v1073
  %v1167 = vunpack.c.l.b16 %v1074
  %v1168 = vunpack.c.h.b16 %v1074
  %v1169 = vunpack.c.l.b16 %v1075
  %v1170 = vunpack.c.h.b16 %v1075
  %v1171 = vunpack.c.l.b16 %v1076
  %v1172 = vunpack.c.h.b16 %v1076
  %v1173 = vunpack.c.l.b16 %v1077
  %v1174 = vunpack.c.h.b16 %v1077
  %v1175 = vunpack.c.l.b16 %v1078
  %v1176 = vunpack.c.h.b16 %v1078
  %v1177 = vunpack.c.l.b16 %v1079
  %v1178 = vunpack.c.h.b16 %v1079
  %v1179 = vunpack.c.l.b16 %v1080
  %v1180 = vunpack.c.h.b16 %v1080
  %v1181 = vunpack.c.l.b16 %v1081
  %v1182 = vunpack.c.h.b16 %v1081
  %v1183 = vpack.c.b16 %v1123, %v1119
  %v1184 = vpack.c.b16 %v1124, %v1120
  %v1185 = vpack.c.b16 %v1125, %v1121
  %v1186 = vpack.c.b16 %v1126, %v1122
  %v1187 = vpack.c.b16 %v1131, %v1127
  %v1188 = vpack.c.b16 %v1132, %v1128
  %v1189 = vpack.c.b16 %v1133, %v1129
  %v1190 = vpack.c.b16 %v1134, %v1130
  %v1191 = vpack.c.b16 %v1139, %v1135
  %v1192 = vpack.c.b16 %v1140, %v1136
  %v1193 = vpack.c.b16 %v1141, %v1137
  %v1194 = vpack.c.b16 %v1142, %v1138
  %v1195 = vpack.c.b16 %v1147, %v1143
  %v1196 = vpack.c.b16 %v1148, %v1144
  %v1197 = vpack.c.b16 %v1149, %v1145
  %v1198 = vpack.c.b16 %v1150, %v1146
  %v1199 = vpack.c.b16 %v1155, %v1151
  %v1200 = vpack.c.b16 %v1156, %v1152
  %v1201 = vpack.c.b16 %v1157, %v1153
  %v1202 = vpack.c.b16 %v1158, %v1154
  %v1203 = vpack.c.b16 %v1163, %v1159
  %v1204 = vpack.c.b16 %v1164, %v1160
  %v1205 = vpack.c.b16 %v1165, %v1161
  %v1206 = vpack.c.b16 %v1166, %v1162
  %v1207 = vpack.c.b16 %v1171, %v1167
  %v1208 = vpack.c.b16 %v1172, %v1168
  %v1209 = vpack.c.b16 %v1173, %v1169
  %v1210 = vpack.c.b16 %v1174, %v1170
  %v1211 = vpack.c.b16 %v1179, %v1175
  %v1212 = vpack.c.b16 %v1180, %v1176
  %v1213 = vpack.c.b16 %v1181, %v1177
  %v1214 = vpack.c.b16 %v1182, %v1178
  %1247 = vmatprep.subr.bf16.mxu0 %v1184
  %1248 = vmatpush1.bf16.msra.mxu0 %v1183
  %1249 = vmatprep.subr.bf16.mxu0 %v1188
  %1250 = vmatpush1.bf16.msra.mxu0 %v1187
  %1251 = vmatprep.subr.bf16.mxu0 %v1192
  %1252 = vmatpush1.bf16.msra.mxu0 %v1191
  %1253 = vmatprep.subr.bf16.mxu0 %v1196
  %1254 = vmatpush1.bf16.msra.mxu0 %v1195
  %1255 = vmatprep.subr.bf16.mxu0 %v1200
  %1256 = vmatpush1.bf16.msra.mxu0 %v1199
  %1257 = vmatprep.subr.bf16.mxu0 %v1204
  %1258 = vmatpush1.bf16.msra.mxu0 %v1203
  %1259 = vmatprep.subr.bf16.mxu0 %v1208
  %1260 = vmatpush1.bf16.msra.mxu0 %v1207
  %1261 = vmatprep.subr.bf16.mxu0 %v1212
  %1262 = vmatpush1.bf16.msra.mxu0 %v1211
  %1263 = vmatprep.subr.bf16.mxu0 0
  %1264 = vmatpush1.bf16.msra.mxu0 0
  %1265 = vmatprep.subr.bf16.mxu0 0
  %1266 = vmatpush1.bf16.msra.mxu0 0
  %1267 = vmatprep.subr.bf16.mxu0 0
  %1268 = vmatpush1.bf16.msra.mxu0 0
  %1269 = vmatprep.subr.bf16.mxu0 0
  %1270 = vmatpush1.bf16.msra.mxu0 0
  %1271 = vmatprep.subr.bf16.mxu0 0
  %1272 = vmatpush1.bf16.msra.mxu0 0
  %1273 = vmatprep.subr.bf16.mxu0 0
  %1274 = vmatpush1.bf16.msra.mxu0 0
  %1275 = vmatprep.subr.bf16.mxu0 0
  %1276 = vmatpush1.bf16.msra.mxu0 0
  %1277 = vmatprep.subr.bf16.mxu0 0
  %1278 = vmatpush1.bf16.msra.mxu0 0
  %1279 = vmatprep.mubr.bf16.mxu0 0
  %1280 = vmatmul.mubr.bf16.gmra.mrb[0].mxu0 %v1085
  %v1281 = vpop.f32.mrb[0].mxu0
  %v1282 = vadd.f32 0.0, %v1281
  %v1283 = vpop.f32.mrb[0].mxu0
  %v1284 = vadd.f32 0.0, %v1283
  %v1285 = vpop.f32.mrb[0].mxu0
  %v1286 = vadd.f32 0.0, %v1285
  %v1287 = vpop.f32.mrb[0].mxu0
  %v1288 = vadd.f32 0.0, %v1287
  %1289 = vdwg.mxu0
  %1290 = vmatprep.subr.bf16.mxu0 %v1186
  %1291 = vmatpush1.bf16.msra.mxu0 %v1185
  %1292 = vmatprep.subr.bf16.mxu0 %v1190
  %1293 = vmatpush1.bf16.msra.mxu0 %v1189
  %1294 = vmatprep.subr.bf16.mxu0 %v1194
  %1295 = vmatpush1.bf16.msra.mxu0 %v1193
  %1296 = vmatprep.subr.bf16.mxu0 %v1198
  %1297 = vmatpush1.bf16.msra.mxu0 %v1197
  %1298 = vmatprep.subr.bf16.mxu0 %v1202
  %1299 = vmatpush1.bf16.msra.mxu0 %v1201
  %1300 = vmatprep.subr.bf16.mxu0 %v1206
  %1301 = vmatpush1.bf16.msra.mxu0 %v1205
  %1302 = vmatprep.subr.bf16.mxu0 %v1210
  %1303 = vmatpush1.bf16.msra.mxu0 %v1209
  %1304 = vmatprep.subr.bf16.mxu0 %v1214
  %1305 = vmatpush1.bf16.msra.mxu0 %v1213
  %1306 = vmatprep.subr.bf16.mxu0 0
  %1307 = vmatpush1.bf16.msra.mxu0 0
  %1308 = vmatprep.subr.bf16.mxu0 0
  %1309 = vmatpush1.bf16.msra.mxu0 0
  %1310 = vmatprep.subr.bf16.mxu0 0
  %1311 = vmatpush1.bf16.msra.mxu0 0
  %1312 = vmatprep.subr.bf16.mxu0 0
  %1313 = vmatpush1.bf16.msra.mxu0 0
  %1314 = vmatprep.subr.bf16.mxu0 0
  %1315 = vmatpush1.bf16.msra.mxu0 0
  %1316 = vmatprep.subr.bf16.mxu0 0
  %1317 = vmatpush1.bf16.msra.mxu0 0
  %1318 = vmatprep.subr.bf16.mxu0 0
  %1319 = vmatpush1.bf16.msra.mxu0 0
  %1320 = vmatprep.subr.bf16.mxu0 0
  %1321 = vmatpush1.bf16.msra.mxu0 0
  %1322 = vmatprep.mubr.bf16.mxu0 0
  %1323 = vmatmul.mubr.bf16.gmra.mrb[0].mxu0 %v1085
  %v1324 = vpop.f32.mrb[0].mxu0
  %v1325 = vadd.f32 0.0, %v1324
  %v1326 = vpop.f32.mrb[0].mxu0
  %v1327 = vadd.f32 0.0, %v1326
  %v1328 = vpop.f32.mrb[0].mxu0
  %v1329 = vadd.f32 0.0, %v1328
  %v1330 = vpop.f32.mrb[0].mxu0
  %v1331 = vadd.f32 0.0, %v1330
  %1332 = vdwg.mxu0
  %v1333 = vadd.f32 %v997, %v1282
  %v1334 = vadd.f32 %v999, %v1284
  %v1335 = vadd.f32 %v1040, %v1325
  %v1336 = vadd.f32 %v1042, %v1327
  %v1337 = vadd.f32 %v1001, %v1286
  %v1338 = vadd.f32 %v1003, %v1288
  %v1339 = vadd.f32 %v1044, %v1329
  %v1340 = vadd.f32 %v1046, %v1331
  %vm1341 = vcmask 1043456
  %v1342 = vsel %vm1341, %v1333, 0.0
  %v1343 = vrot.slane %v1342, 4
  %v1344 = vadd.f32 %v1342, %v1343
  %v1345 = vrot.slane %v1344, 2
  %v1346 = vadd.f32 %v1344, %v1345
  %v1347 = vrot.slane %v1346, 1
  %v1348 = vadd.f32 %v1346, %v1347
  %v1349 = vsel %vm1341, %v1334, 0.0
  %v1350 = vrot.slane %v1349, 4
  %v1351 = vadd.f32 %v1349, %v1350
  %v1352 = vrot.slane %v1351, 2
  %v1353 = vadd.f32 %v1351, %v1352
  %v1354 = vrot.slane %v1353, 1
  %v1355 = vadd.f32 %v1353, %v1354
  %v1356 = vadd.f32 %v1348, 0.0
  %v1357 = vadd.f32 %v1355, 0.0
  %v1358 = vsel %vm1341, %v1335, 0.0
  %v1359 = vrot.slane %v1358, 4
  %v1360 = vadd.f32 %v1358, %v1359
  %v1361 = vrot.slane %v1360, 2
  %v1362 = vadd.f32 %v1360, %v1361
  %v1363 = vrot.slane %v1362, 1
  %v1364 = vadd.f32 %v1362, %v1363
  %v1365 = vsel %vm1341, %v1336, 0.0
  %v1366 = vrot.slane %v1365, 4
  %v1367 = vadd.f32 %v1365, %v1366
  %v1368 = vrot.slane %v1367, 2
  %v1369 = vadd.f32 %v1367, %v1368
  %v1370 = vrot.slane %v1369, 1
  %v1371 = vadd.f32 %v1369, %v1370
  %v1372 = vadd.f32 %v1356, %v1364
  %v1373 = vadd.f32 %v1357, %v1371
  %v1378 = vrot.slane %v1333, 6
  %v1379 = vrot.slane %v1337, 6
  %v1380 = vsel %vm205, %v1378, %v1379
  %v1381 = vrot.slane %v1334, 6
  %v1382 = vrot.slane %v1338, 6
  %v1383 = vsel %vm205, %v1381, %v1382
  %v1386 = vsel %vm1341, %v1380, 0.0
  %v1387 = vrot.slane %v1386, 4
  %v1388 = vadd.f32 %v1386, %v1387
  %v1389 = vrot.slane %v1388, 2
  %v1390 = vadd.f32 %v1388, %v1389
  %v1391 = vrot.slane %v1390, 1
  %v1392 = vadd.f32 %v1390, %v1391
  %v1393 = vsel %vm1341, %v1383, 0.0
  %v1394 = vrot.slane %v1393, 4
  %v1395 = vadd.f32 %v1393, %v1394
  %v1396 = vrot.slane %v1395, 2
  %v1397 = vadd.f32 %v1395, %v1396
  %v1398 = vrot.slane %v1397, 1
  %v1399 = vadd.f32 %v1397, %v1398
  %v1400 = vadd.f32 %v1372, %v1392
  %v1401 = vadd.f32 %v1373, %v1399
  %v1406 = vrot.slane %v1335, 6
  %v1407 = vrot.slane %v1339, 6
  %v1408 = vsel %vm205, %v1406, %v1407
  %v1409 = vrot.slane %v1336, 6
  %v1410 = vrot.slane %v1340, 6
  %v1411 = vsel %vm205, %v1409, %v1410
  %v1414 = vsel %vm1341, %v1408, 0.0
  %v1415 = vrot.slane %v1414, 4
  %v1416 = vadd.f32 %v1414, %v1415
  %v1417 = vrot.slane %v1416, 2
  %v1418 = vadd.f32 %v1416, %v1417
  %v1419 = vrot.slane %v1418, 1
  %v1420 = vadd.f32 %v1418, %v1419
  %v1421 = vsel %vm1341, %v1411, 0.0
  %v1422 = vrot.slane %v1421, 4
  %v1423 = vadd.f32 %v1421, %v1422
  %v1424 = vrot.slane %v1423, 2
  %v1425 = vadd.f32 %v1423, %v1424
  %v1426 = vrot.slane %v1425, 1
  %v1427 = vadd.f32 %v1425, %v1426
  %v1428 = vadd.f32 %v1400, %v1420
  %v1429 = vadd.f32 %v1401, %v1427
  %v1430 = vld [vmem:[%s5] sm:$0xff]
  %v1431 = vld [vmem:[%s5 + $0x8] sm:$0xff]
  %v1432 = vld [vmem:[%s5 + $0x10] sm:$0xff]
  %v1433 = vld [vmem:[%s5 + $0x18] sm:$0xff]
  %v1434 = vld [vmem:[%s5 + $0x20] sm:$0xff]
  %v1435 = vld [vmem:[%s5 + $0x28] sm:$0xff]
  %v1436 = vld [vmem:[%s5 + $0x30] sm:$0xff]
  %v1437 = vld [vmem:[%s5 + $0x38] sm:$0xff]
  %v1438 = vld [vmem:[%s5 + $0x40] sm:$0xff]
  %v1439 = vld [vmem:[%s5 + $0x48] sm:$0xff]
  %v1440 = vld [vmem:[%s5 + $0x50] sm:$0xff]
  %v1441 = vld [vmem:[%s5 + $0x58] sm:$0xff]
  %v1442 = vld [vmem:[%s5 + $0x60] sm:$0xff]
  %v1443 = vld [vmem:[%s5 + $0x68] sm:$0xff]
  %v1444 = vld [vmem:[%s5 + $0x70] sm:$0xff]
  %v1445 = vld [vmem:[%s5 + $0x78] sm:$0xff]
  %v1446 = vld [vmem:[%s5 + $0x80] sm:$0xff]
  %v1447 = vld [vmem:[%s5 + $0x88] sm:$0xff]
  %v1448 = vld [vmem:[%s5 + $0x90] sm:$0xff]
  %v1449 = vld [vmem:[%s5 + $0x98] sm:$0xff]
  %v1450 = vld [vmem:[%s5 + $0xa0] sm:$0xff]
  %v1451 = vld [vmem:[%s5 + $0xa8] sm:$0xff]
  %v1452 = vld [vmem:[%s5 + $0xb0] sm:$0xff]
  %v1453 = vld [vmem:[%s5 + $0xb8] sm:$0xff]
  %v1454 = vld [vmem:[%s5 + $0xc0] sm:$0xff]
  %v1455 = vld [vmem:[%s5 + $0xc8] sm:$0xff]
  %v1456 = vld [vmem:[%s5 + $0xd0] sm:$0xff]
  %v1457 = vld [vmem:[%s5 + $0xd8] sm:$0xff]
  %v1458 = vld [vmem:[%s5 + $0xe0] sm:$0xff]
  %v1459 = vld [vmem:[%s5 + $0xe8] sm:$0xff]
  %v1460 = vld [vmem:[%s5 + $0xf0] sm:$0xff]
  %v1461 = vld [vmem:[%s5 + $0xf8] sm:$0xff]
  %v1462 = vld [vmem:[%s5 + $0x100] sm:$0xff]
  %v1463 = vld [vmem:[%s5 + $0x108] sm:$0xff]
  %v1464 = vld [vmem:[%s5 + $0x110] sm:$0xff]
  %v1465 = vld [vmem:[%s5 + $0x118] sm:$0xff]
  %v1466 = vld [vmem:[%s5 + $0x120] sm:$0xff]
  %v1467 = vld [vmem:[%s5 + $0x128] sm:$0xff]
  %v1468 = vld [vmem:[%s5 + $0x130] sm:$0xff]
  %v1469 = vld [vmem:[%s5 + $0x138] sm:$0xff]
  %v1470 = vld [vmem:[%s5 + $0x140] sm:$0xff]
  %v1471 = vld [vmem:[%s5 + $0x148] sm:$0xff]
  %v1472 = vld [vmem:[%s5 + $0x150] sm:$0xff]
  %v1473 = vld [vmem:[%s5 + $0x158] sm:$0xff]
  %v1474 = vld [vmem:[%s5 + $0x160] sm:$0xff]
  %v1475 = vld [vmem:[%s5 + $0x168] sm:$0xff]
  %v1476 = vld [vmem:[%s5 + $0x170] sm:$0xff]
  %v1477 = vld [vmem:[%s5 + $0x178] sm:$0xff]
  %v1478 = vld [vmem:[%s5 + $0x180] sm:$0xff]
  %v1479 = vld [vmem:[%s5 + $0x188] sm:$0xff]
  %v1480 = vld [vmem:[%s5 + $0x190] sm:$0xff]
  %v1481 = vld [vmem:[%s5 + $0x198] sm:$0xff]
  %v1482 = vld [vmem:[%s5 + $0x1a0] sm:$0xff]
  %v1483 = vld [vmem:[%s5 + $0x1a8] sm:$0xff]
  %v1484 = vld [vmem:[%s5 + $0x1b0] sm:$0xff]
  %v1485 = vld [vmem:[%s5 + $0x1b8] sm:$0xff]
  %v1486 = vld [vmem:[%s5 + $0x1c0] sm:$0xff]
  %v1487 = vld [vmem:[%s5 + $0x1c8] sm:$0xff]
  %v1488 = vld [vmem:[%s5 + $0x1d0] sm:$0xff]
  %v1489 = vld [vmem:[%s5 + $0x1d8] sm:$0xff]
  %v1490 = vld [vmem:[%s5 + $0x1e0] sm:$0xff]
  %v1491 = vld [vmem:[%s5 + $0x1e8] sm:$0xff]
  %v1492 = vld [vmem:[%s5 + $0x1f0] sm:$0xff]
  %v1493 = vld [vmem:[%s5 + $0x1f8] sm:$0xff]
  %1494 = vmatprep.subr.mxu0 %v1431
  %1495 = vmatpush1.msra.mxu0 %v1430
  %1496 = vmatprep.subr.mxu0 %v1433
  %1497 = vmatpush1.msra.mxu0 %v1432
  %1498 = vmatprep.subr.mxu0 %v1435
  %1499 = vmatpush1.msra.mxu0 %v1434
  %1500 = vmatprep.subr.mxu0 %v1437
  %1501 = vmatpush1.msra.mxu0 %v1436
  %1502 = vmatprep.subr.mxu0 %v1439
  %1503 = vmatpush1.msra.mxu0 %v1438
  %1504 = vmatprep.subr.mxu0 %v1441
  %1505 = vmatpush1.msra.mxu0 %v1440
  %1506 = vmatprep.subr.mxu0 %v1443
  %1507 = vmatpush1.msra.mxu0 %v1442
  %1508 = vmatprep.subr.mxu0 %v1445
  %1509 = vmatpush1.msra.mxu0 %v1444
  %1510 = vmatprep.subr.mxu0 %v1447
  %1511 = vmatpush1.msra.mxu0 %v1446
  %1512 = vmatprep.subr.mxu0 %v1449
  %1513 = vmatpush1.msra.mxu0 %v1448
  %1514 = vmatprep.subr.mxu0 %v1451
  %1515 = vmatpush1.msra.mxu0 %v1450
  %1516 = vmatprep.subr.mxu0 %v1453
  %1517 = vmatpush1.msra.mxu0 %v1452
  %1518 = vmatprep.subr.mxu0 %v1455
  %1519 = vmatpush1.msra.mxu0 %v1454
  %1520 = vmatprep.subr.mxu0 %v1457
  %1521 = vmatpush1.msra.mxu0 %v1456
  %1522 = vmatprep.subr.mxu0 %v1459
  %1523 = vmatpush1.msra.mxu0 %v1458
  %1524 = vmatprep.subr.mxu0 %v1461
  %1525 = vmatpush1.msra.mxu0 %v1460
  %1526 = vmatprep.subr.mxu0 %v1463
  %1527 = vmatpush1.msra.mxu0 %v1462
  %1528 = vmatprep.subr.mxu0 %v1465
  %1529 = vmatpush1.msra.mxu0 %v1464
  %1530 = vmatprep.subr.mxu0 %v1467
  %1531 = vmatpush1.msra.mxu0 %v1466
  %1532 = vmatprep.subr.mxu0 %v1469
  %1533 = vmatpush1.msra.mxu0 %v1468
  %1534 = vmatprep.subr.mxu0 %v1471
  %1535 = vmatpush1.msra.mxu0 %v1470
  %1536 = vmatprep.subr.mxu0 %v1473
  %1537 = vmatpush1.msra.mxu0 %v1472
  %1538 = vmatprep.subr.mxu0 %v1475
  %1539 = vmatpush1.msra.mxu0 %v1474
  %1540 = vmatprep.subr.mxu0 %v1477
  %1541 = vmatpush1.msra.mxu0 %v1476
  %1542 = vmatprep.subr.mxu0 %v1479
  %1543 = vmatpush1.msra.mxu0 %v1478
  %1544 = vmatprep.subr.mxu0 %v1481
  %1545 = vmatpush1.msra.mxu0 %v1480
  %1546 = vmatprep.subr.mxu0 %v1483
  %1547 = vmatpush1.msra.mxu0 %v1482
  %1548 = vmatprep.subr.mxu0 %v1485
  %1549 = vmatpush1.msra.mxu0 %v1484
  %1550 = vmatprep.subr.mxu0 %v1487
  %1551 = vmatpush1.msra.mxu0 %v1486
  %1552 = vmatprep.subr.mxu0 %v1489
  %1553 = vmatpush1.msra.mxu0 %v1488
  %1554 = vmatprep.subr.mxu0 %v1491
  %1555 = vmatpush1.msra.mxu0 %v1490
  %1556 = vmatprep.subr.mxu0 %v1493
  %1557 = vmatpush1.msra.mxu0 %v1492
  %1558 = vmatprep.mubr.f32.mxu0 %v1429
  %1559 = vmatmul.mubr.f32.gmra.mrb[0].mxu0 %v1428
  %v1560 = vpop.f32.mrb[0].mxu0
  %v1561 = vadd.f32 0.0, %v1560
  %v1562 = vpop.f32.mrb[0].mxu0
  %v1563 = vadd.f32 0.0, %v1562
  %1564 = vdwg.mxu0
  %v1565 = vrcp.pop 128.0
  %v1566 = vmul.f32 %v1561, %v1565
  %v1567 = vmul.f32 %v1563, %v1565
  %v1568 = vlaneseq
  %v1569 = vshrl.u32 %v1568, 7
  %v1570 = vsub.s32 0, %v1569
  %v1571 = vrot.slane %v1566, %v1570
  %v1572 = vlaneseq
  %v1573 = vshrl.u32 %v1572, 7
  %v1574 = vsub.s32 0, %v1573
  %v1575 = vrot.slane %v1567, %v1574
  %v1576 = vsub.f32 %v1333, %v1571
  %v1577 = vsub.f32 %v1334, %v1575
  %v1578 = vsub.f32 %v1335, %v1571
  %v1579 = vsub.f32 %v1336, %v1575
  %v1580 = vmul.f32 %v1576, %v1576
  %v1581 = vmul.f32 %v1577, %v1577
  %v1582 = vsel %vm1341, %v1580, 0.0
  %v1583 = vrot.slane %v1582, 4
  %v1584 = vadd.f32 %v1582, %v1583
  %v1585 = vrot.slane %v1584, 2
  %v1586 = vadd.f32 %v1584, %v1585
  %v1587 = vrot.slane %v1586, 1
  %v1588 = vadd.f32 %v1586, %v1587
  %v1589 = vsel %vm1341, %v1581, 0.0
  %v1590 = vrot.slane %v1589, 4
  %v1591 = vadd.f32 %v1589, %v1590
  %v1592 = vrot.slane %v1591, 2
  %v1593 = vadd.f32 %v1591, %v1592
  %v1594 = vrot.slane %v1593, 1
  %v1595 = vadd.f32 %v1593, %v1594
  %v1596 = vadd.f32 %v1588, 0.0
  %v1597 = vadd.f32 %v1595, 0.0
  %v1598 = vmul.f32 %v1578, %v1578
  %v1599 = vmul.f32 %v1579, %v1579
  %v1600 = vsel %vm1341, %v1598, 0.0
  %v1601 = vrot.slane %v1600, 4
  %v1602 = vadd.f32 %v1600, %v1601
  %v1603 = vrot.slane %v1602, 2
  %v1604 = vadd.f32 %v1602, %v1603
  %v1605 = vrot.slane %v1604, 1
  %v1606 = vadd.f32 %v1604, %v1605
  %v1607 = vsel %vm1341, %v1599, 0.0
  %v1608 = vrot.slane %v1607, 4
  %v1609 = vadd.f32 %v1607, %v1608
  %v1610 = vrot.slane %v1609, 2
  %v1611 = vadd.f32 %v1609, %v1610
  %v1612 = vrot.slane %v1611, 1
  %v1613 = vadd.f32 %v1611, %v1612
  %v1614 = vadd.f32 %v1596, %v1606
  %v1615 = vadd.f32 %v1597, %v1613
  %v1616 = vsub.f32 %v1337, %v1571
  %v1617 = vsub.f32 %v1338, %v1575
  %v1618 = vsub.f32 %v1339, %v1571
  %v1619 = vsub.f32 %v1340, %v1575
  %v1620 = vmul.f32 %v1616, %v1616
  %v1621 = vmul.f32 %v1617, %v1617
  %v1626 = vrot.slane %v1580, 6
  %v1627 = vrot.slane %v1620, 6
  %v1628 = vsel %vm205, %v1626, %v1627
  %v1629 = vrot.slane %v1581, 6
  %v1630 = vrot.slane %v1621, 6
  %v1631 = vsel %vm205, %v1629, %v1630
  %v1634 = vsel %vm1341, %v1628, 0.0
  %v1635 = vrot.slane %v1634, 4
  %v1636 = vadd.f32 %v1634, %v1635
  %v1637 = vrot.slane %v1636, 2
  %v1638 = vadd.f32 %v1636, %v1637
  %v1639 = vrot.slane %v1638, 1
  %v1640 = vadd.f32 %v1638, %v1639
  %v1641 = vsel %vm1341, %v1631, 0.0
  %v1642 = vrot.slane %v1641, 4
  %v1643 = vadd.f32 %v1641, %v1642
  %v1644 = vrot.slane %v1643, 2
  %v1645 = vadd.f32 %v1643, %v1644
  %v1646 = vrot.slane %v1645, 1
  %v1647 = vadd.f32 %v1645, %v1646
  %v1648 = vadd.f32 %v1614, %v1640
  %v1649 = vadd.f32 %v1615, %v1647
  %v1650 = vmul.f32 %v1618, %v1618
  %v1651 = vmul.f32 %v1619, %v1619
  %v1656 = vrot.slane %v1598, 6
  %v1657 = vrot.slane %v1650, 6
  %v1658 = vsel %vm205, %v1656, %v1657
  %v1659 = vrot.slane %v1599, 6
  %v1660 = vrot.slane %v1651, 6
  %v1661 = vsel %vm205, %v1659, %v1660
  %v1664 = vsel %vm1341, %v1658, 0.0
  %v1665 = vrot.slane %v1664, 4
  %v1666 = vadd.f32 %v1664, %v1665
  %v1667 = vrot.slane %v1666, 2
  %v1668 = vadd.f32 %v1666, %v1667
  %v1669 = vrot.slane %v1668, 1
  %v1670 = vadd.f32 %v1668, %v1669
  %v1671 = vsel %vm1341, %v1661, 0.0
  %v1672 = vrot.slane %v1671, 4
  %v1673 = vadd.f32 %v1671, %v1672
  %v1674 = vrot.slane %v1673, 2
  %v1675 = vadd.f32 %v1673, %v1674
  %v1676 = vrot.slane %v1675, 1
  %v1677 = vadd.f32 %v1675, %v1676
  %v1678 = vadd.f32 %v1648, %v1670
  %v1679 = vadd.f32 %v1649, %v1677
  %1680 = vmatprep.subr.mxu0 %v1431
  %1681 = vmatpush1.msra.mxu0 %v1430
  %1682 = vmatprep.subr.mxu0 %v1433
  %1683 = vmatpush1.msra.mxu0 %v1432
  %1684 = vmatprep.subr.mxu0 %v1435
  %1685 = vmatpush1.msra.mxu0 %v1434
  %1686 = vmatprep.subr.mxu0 %v1437
  %1687 = vmatpush1.msra.mxu0 %v1436
  %1688 = vmatprep.subr.mxu0 %v1439
  %1689 = vmatpush1.msra.mxu0 %v1438
  %1690 = vmatprep.subr.mxu0 %v1441
  %1691 = vmatpush1.msra.mxu0 %v1440
  %1692 = vmatprep.subr.mxu0 %v1443
  %1693 = vmatpush1.msra.mxu0 %v1442
  %1694 = vmatprep.subr.mxu0 %v1445
  %1695 = vmatpush1.msra.mxu0 %v1444
  %1696 = vmatprep.subr.mxu0 %v1447
  %1697 = vmatpush1.msra.mxu0 %v1446
  %1698 = vmatprep.subr.mxu0 %v1449
  %1699 = vmatpush1.msra.mxu0 %v1448
  %1700 = vmatprep.subr.mxu0 %v1451
  %1701 = vmatpush1.msra.mxu0 %v1450
  %1702 = vmatprep.subr.mxu0 %v1453
  %1703 = vmatpush1.msra.mxu0 %v1452
  %1704 = vmatprep.subr.mxu0 %v1455
  %1705 = vmatpush1.msra.mxu0 %v1454
  %1706 = vmatprep.subr.mxu0 %v1457
  %1707 = vmatpush1.msra.mxu0 %v1456
  %1708 = vmatprep.subr.mxu0 %v1459
  %1709 = vmatpush1.msra.mxu0 %v1458
  %1710 = vmatprep.subr.mxu0 %v1461
  %1711 = vmatpush1.msra.mxu0 %v1460
  %1712 = vmatprep.subr.mxu0 %v1463
  %1713 = vmatpush1.msra.mxu0 %v1462
  %1714 = vmatprep.subr.mxu0 %v1465
  %1715 = vmatpush1.msra.mxu0 %v1464
  %1716 = vmatprep.subr.mxu0 %v1467
  %1717 = vmatpush1.msra.mxu0 %v1466
  %1718 = vmatprep.subr.mxu0 %v1469
  %1719 = vmatpush1.msra.mxu0 %v1468
  %1720 = vmatprep.subr.mxu0 %v1471
  %1721 = vmatpush1.msra.mxu0 %v1470
  %1722 = vmatprep.subr.mxu0 %v1473
  %1723 = vmatpush1.msra.mxu0 %v1472
  %1724 = vmatprep.subr.mxu0 %v1475
  %1725 = vmatpush1.msra.mxu0 %v1474
  %1726 = vmatprep.subr.mxu0 %v1477
  %1727 = vmatpush1.msra.mxu0 %v1476
  %1728 = vmatprep.subr.mxu0 %v1479
  %1729 = vmatpush1.msra.mxu0 %v1478
  %1730 = vmatprep.subr.mxu0 %v1481
  %1731 = vmatpush1.msra.mxu0 %v1480
  %1732 = vmatprep.subr.mxu0 %v1483
  %1733 = vmatpush1.msra.mxu0 %v1482
  %1734 = vmatprep.subr.mxu0 %v1485
  %1735 = vmatpush1.msra.mxu0 %v1484
  %1736 = vmatprep.subr.mxu0 %v1487
  %1737 = vmatpush1.msra.mxu0 %v1486
  %1738 = vmatprep.subr.mxu0 %v1489
  %1739 = vmatpush1.msra.mxu0 %v1488
  %1740 = vmatprep.subr.mxu0 %v1491
  %1741 = vmatpush1.msra.mxu0 %v1490
  %1742 = vmatprep.subr.mxu0 %v1493
  %1743 = vmatpush1.msra.mxu0 %v1492
  %1744 = vmatprep.mubr.f32.mxu0 %v1679
  %1745 = vmatmul.mubr.f32.gmra.mrb[0].mxu0 %v1678
  %v1746 = vpop.f32.mrb[0].mxu0
  %v1747 = vadd.f32 0.0, %v1746
  %v1748 = vpop.f32.mrb[0].mxu0
  %v1749 = vadd.f32 0.0, %v1748
  %1750 = vdwg.mxu0
  %v1751 = vmul.f32 %v1747, %v1565
  %v1752 = vmul.f32 %v1749, %v1565
  %v1753 = vld [vmem:[%s6] sm:$0x3]
  %v1754 = vadd.f32 %v1751, 1e-05
  %v1755 = vadd.f32 %v1752, 1e-05
  %v1756 = vrsqrt.pop %v1754
  %v1757 = vrsqrt.pop %v1755
  %v1760 = vcombine.low %v1756, %v1757
  %v1762 = vunpack.c.l.s4 1966171168
  %v1763 = vunpack.c.0.s8 %v1762
  %v1764 = vlaneseq
  %v1765 = vshrl.u32 %v1764, 7
  %v1766 = vsub.s32 %v1763, %v1765
  %v1767 = vrot.slane %v1760, %v1766
  %v1769 = vunpack.c.l.s4 1966171168
  %v1770 = vunpack.c.0.s8 %v1769
  %v1771 = vlaneseq
  %v1772 = vshrl.u32 %v1771, 7
  %v1773 = vsub.s32 %v1770, %v1772
  %v1774 = vrot.slane %v1767, %v1773
  %v1776 = vmul.f32 %v1753, %v1774
  %v1777 = vld [vmem:[%s7] sm:$0x3]
  %v1779 = vlaneseq
  %v1780 = vshrl.u32 %v1779, 7
  %v1781 = vsub.s32 0, %v1780
  %v1782 = vrot.slane %v1776, %v1781
  %v1783 = vlaneseq
  %v1784 = vshrl.u32 %v1783, 7
  %v1785 = vsub.s32 1, %v1784
  %v1786 = vrot.slane %v1776, %v1785
  %v1789 = vmul.f32 %v1566, %v1782
  %v1790 = vmul.f32 %v1567, %v1786
  %v1793 = vcombine.low %v1789, %v1790
  %v1795 = vunpack.c.l.s4 1966171168
  %v1796 = vunpack.c.0.s8 %v1795
  %v1797 = vlaneseq
  %v1798 = vshrl.u32 %v1797, 7
  %v1799 = vsub.s32 %v1796, %v1798
  %v1800 = vrot.slane %v1793, %v1799
  %v1802 = vunpack.c.l.s4 1966171168
  %v1803 = vunpack.c.0.s8 %v1802
  %v1804 = vlaneseq
  %v1805 = vshrl.u32 %v1804, 7
  %v1806 = vsub.s32 %v1803, %v1805
  %v1807 = vrot.slane %v1800, %v1806
  %v1809 = vsub.f32 %v1777, %v1807
  %v1810 = vld [vmem:[%s8] sm:$0xff]
  %s1811 = scalar_lea.vmem %s8, 8
  %v1812 = vld [vmem:[%s1811] sm:$0xff]
  %v1813 = vmul.f32 %v1333, %v1782
  %v1814 = vmul.f32 %v1334, %v1786
  %v1816 = vlaneseq
  %v1817 = vshrl.u32 %v1816, 7
  %v1818 = vsub.s32 0, %v1817
  %v1819 = vrot.slane %v1809, %v1818
  %v1820 = vlaneseq
  %v1821 = vshrl.u32 %v1820, 7
  %v1822 = vsub.s32 1, %v1821
  %v1823 = vrot.slane %v1809, %v1822
  %v1826 = vadd.f32 %v1813, %v1819
  %v1827 = vadd.f32 %v1814, %v1823
  %v1828 = vmax.f32 %v1826, 0.0
  %v1829 = vmax.f32 %v1827, 0.0
  %v1830 = vmul.f32 %v1335, %v1782
  %v1831 = vmul.f32 %v1336, %v1786
  %v1832 = vadd.f32 %v1830, %v1819
  %v1833 = vadd.f32 %v1831, %v1823
  %v1834 = vmax.f32 %v1832, 0.0
  %v1835 = vmax.f32 %v1833, 0.0
  %vm1836 = vcmask 31744
  %v1838 = vsel %vm1836, %v1812, 0
  %v1841 = vsel %vm1341, %v1834, 0
  %v1844 = vsel %vm1341, %v1835, 0
  %1846 = vmatprep.subr.mxu0 %v1844
  %1847 = vmatpush1.msra.mxu0 %v1841
  %1848 = vmatprep.subr.mxu0 0.0
  %1849 = vmatpush1.msra.mxu0 0.0
  %1850 = vmatprep.subr.mxu0 0.0
  %1851 = vmatpush1.msra.mxu0 0.0
  %1852 = vmatprep.subr.mxu0 0.0
  %1853 = vmatpush1.msra.mxu0 0.0
  %1854 = vmatprep.subr.mxu0 0.0
  %1855 = vmatpush1.msra.mxu0 0.0
  %1856 = vmatprep.subr.mxu0 0.0
  %1857 = vmatpush1.msra.mxu0 0.0
  %1858 = vmatprep.subr.mxu0 0.0
  %1859 = vmatpush1.msra.mxu0 0.0
  %1860 = vmatprep.subr.mxu0 0.0
  %1861 = vmatpush1.msra.mxu0 0.0
  %1862 = vmatprep.subr.mxu0 0.0
  %1863 = vmatpush1.msra.mxu0 0.0
  %1864 = vmatprep.subr.mxu0 0.0
  %1865 = vmatpush1.msra.mxu0 0.0
  %1866 = vmatprep.subr.mxu0 0.0
  %1867 = vmatpush1.msra.mxu0 0.0
  %1868 = vmatprep.subr.mxu0 0.0
  %1869 = vmatpush1.msra.mxu0 0.0
  %1870 = vmatprep.subr.mxu0 0.0
  %1871 = vmatpush1.msra.mxu0 0.0
  %1872 = vmatprep.subr.mxu0 0.0
  %1873 = vmatpush1.msra.mxu0 0.0
  %1874 = vmatprep.subr.mxu0 0.0
  %1875 = vmatpush1.msra.mxu0 0.0
  %1876 = vmatprep.subr.mxu0 0.0
  %1877 = vmatpush1.msra.mxu0 0.0
  %1878 = vmatprep.subr.mxu0 0.0
  %1879 = vmatpush1.msra.mxu0 0.0
  %1880 = vmatprep.subr.mxu0 0.0
  %1881 = vmatpush1.msra.mxu0 0.0
  %1882 = vmatprep.subr.mxu0 0.0
  %1883 = vmatpush1.msra.mxu0 0.0
  %1884 = vmatprep.subr.mxu0 0.0
  %1885 = vmatpush1.msra.mxu0 0.0
  %1886 = vmatprep.subr.mxu0 0.0
  %1887 = vmatpush1.msra.mxu0 0.0
  %1888 = vmatprep.subr.mxu0 0.0
  %1889 = vmatpush1.msra.mxu0 0.0
  %1890 = vmatprep.subr.mxu0 0.0
  %1891 = vmatpush1.msra.mxu0 0.0
  %1892 = vmatprep.subr.mxu0 0.0
  %1893 = vmatpush1.msra.mxu0 0.0
  %1894 = vmatprep.subr.mxu0 0.0
  %1895 = vmatpush1.msra.mxu0 0.0
  %1896 = vmatprep.subr.mxu0 0.0
  %1897 = vmatpush1.msra.mxu0 0.0
  %1898 = vmatprep.subr.mxu0 0.0
  %1899 = vmatpush1.msra.mxu0 0.0
  %1900 = vmatprep.subr.mxu0 0.0
  %1901 = vmatpush1.msra.mxu0 0.0
  %1902 = vmatprep.subr.mxu0 0.0
  %1903 = vmatpush1.msra.mxu0 0.0
  %1904 = vmatprep.subr.mxu0 0.0
  %1905 = vmatpush1.msra.mxu0 0.0
  %1906 = vmatprep.subr.mxu0 0.0
  %1907 = vmatpush1.msra.mxu0 0.0
  %1908 = vmatprep.subr.mxu0 0.0
  %1909 = vmatpush1.msra.mxu0 0.0
  %1910 = vmatprep.mubr.f32.mxu0 0.0
  %1911 = vmatmul.mubr.f32.gmra.mrb[0].mxu0 %v1838
  %v1912 = vpop.f32.mrb[0].mxu0
  %v1913 = vadd.f32 0.0, %v1912
  %v1914 = vpop.f32.mrb[0].mxu0
  %v1915 = vadd.f32 0.0, %v1914
  %1916 = vdwg.mxu0
  %v1918 = vsel %vm1836, %v1810, 0
  %v1921 = vsel %vm1341, %v1828, 0
  %v1924 = vsel %vm1341, %v1829, 0
  %1926 = vmatprep.subr.mxu0 %v1924
  %1927 = vmatpush1.msra.mxu0 %v1921
  %1928 = vmatprep.subr.mxu0 0.0
  %1929 = vmatpush1.msra.mxu0 0.0
  %1930 = vmatprep.subr.mxu0 0.0
  %1931 = vmatpush1.msra.mxu0 0.0
  %1932 = vmatprep.subr.mxu0 0.0
  %1933 = vmatpush1.msra.mxu0 0.0
  %1934 = vmatprep.subr.mxu0 0.0
  %1935 = vmatpush1.msra.mxu0 0.0
  %1936 = vmatprep.subr.mxu0 0.0
  %1937 = vmatpush1.msra.mxu0 0.0
  %1938 = vmatprep.subr.mxu0 0.0
  %1939 = vmatpush1.msra.mxu0 0.0
  %1940 = vmatprep.subr.mxu0 0.0
  %1941 = vmatpush1.msra.mxu0 0.0
  %1942 = vmatprep.subr.mxu0 0.0
  %1943 = vmatpush1.msra.mxu0 0.0
  %1944 = vmatprep.subr.mxu0 0.0
  %1945 = vmatpush1.msra.mxu0 0.0
  %1946 = vmatprep.subr.mxu0 0.0
  %1947 = vmatpush1.msra.mxu0 0.0
  %1948 = vmatprep.subr.mxu0 0.0
  %1949 = vmatpush1.msra.mxu0 0.0
  %1950 = vmatprep.subr.mxu0 0.0
  %1951 = vmatpush1.msra.mxu0 0.0
  %1952 = vmatprep.subr.mxu0 0.0
  %1953 = vmatpush1.msra.mxu0 0.0
  %1954 = vmatprep.subr.mxu0 0.0
  %1955 = vmatpush1.msra.mxu0 0.0
  %1956 = vmatprep.subr.mxu0 0.0
  %1957 = vmatpush1.msra.mxu0 0.0
  %1958 = vmatprep.subr.mxu0 0.0
  %1959 = vmatpush1.msra.mxu0 0.0
  %1960 = vmatprep.subr.mxu0 0.0
  %1961 = vmatpush1.msra.mxu0 0.0
  %1962 = vmatprep.subr.mxu0 0.0
  %1963 = vmatpush1.msra.mxu0 0.0
  %1964 = vmatprep.subr.mxu0 0.0
  %1965 = vmatpush1.msra.mxu0 0.0
  %1966 = vmatprep.subr.mxu0 0.0
  %1967 = vmatpush1.msra.mxu0 0.0
  %1968 = vmatprep.subr.mxu0 0.0
  %1969 = vmatpush1.msra.mxu0 0.0
  %1970 = vmatprep.subr.mxu0 0.0
  %1971 = vmatpush1.msra.mxu0 0.0
  %1972 = vmatprep.subr.mxu0 0.0
  %1973 = vmatpush1.msra.mxu0 0.0
  %1974 = vmatprep.subr.mxu0 0.0
  %1975 = vmatpush1.msra.mxu0 0.0
  %1976 = vmatprep.subr.mxu0 0.0
  %1977 = vmatpush1.msra.mxu0 0.0
  %1978 = vmatprep.subr.mxu0 0.0
  %1979 = vmatpush1.msra.mxu0 0.0
  %1980 = vmatprep.subr.mxu0 0.0
  %1981 = vmatpush1.msra.mxu0 0.0
  %1982 = vmatprep.subr.mxu0 0.0
  %1983 = vmatpush1.msra.mxu0 0.0
  %1984 = vmatprep.subr.mxu0 0.0
  %1985 = vmatpush1.msra.mxu0 0.0
  %1986 = vmatprep.subr.mxu0 0.0
  %1987 = vmatpush1.msra.mxu0 0.0
  %1988 = vmatprep.subr.mxu0 0.0
  %1989 = vmatpush1.msra.mxu0 0.0
  %1990 = vmatprep.mubr.f32.mxu0 0.0
  %1991 = vmatmul.mubr.f32.gmra.mrb[0].mxu0 %v1918
  %v1992 = vpop.f32.mrb[0].mxu0
  %v1993 = vadd.f32 %v1913, %v1992
  %v1994 = vpop.f32.mrb[0].mxu0
  %v1995 = vadd.f32 %v1915, %v1994
  %1996 = vdwg.mxu0
  %v1997 = vpack.c.bf16 %v1993, %v1993
  %v1998 = vpack.c.bf16 %v1995, %v1995
  %v1999 = vmul.f32 %v1337, %v1782
  %v2000 = vmul.f32 %v1338, %v1786
  %v2001 = vadd.f32 %v1999, %v1819
  %v2002 = vadd.f32 %v2000, %v1823
  %v2003 = vmax.f32 %v2001, 0.0
  %v2004 = vmax.f32 %v2002, 0.0
  %v2005 = vmul.f32 %v1339, %v1782
  %v2006 = vmul.f32 %v1340, %v1786
  %v2007 = vadd.f32 %v2005, %v1819
  %v2008 = vadd.f32 %v2006, %v1823
  %v2009 = vmax.f32 %v2007, 0.0
  %v2010 = vmax.f32 %v2008, 0.0
  %v2013 = vrot.slane %v1834, 6
  %v2014 = vrot.slane %v2009, 6
  %v2015 = vsel %vm205, %v2013, %v2014
  %v2016 = vrot.slane %v1835, 6
  %v2017 = vrot.slane %v2010, 6
  %v2018 = vsel %vm205, %v2016, %v2017
  %v2019 = vsel %vm1341, %v2015, 0
  %v2021 = vsel %vm1341, %v2018, 0
  %2023 = vmatprep.subr.mxu0 %v2021
  %2024 = vmatpush1.msra.mxu0 %v2019
  %2025 = vmatprep.subr.mxu0 0.0
  %2026 = vmatpush1.msra.mxu0 0.0
  %2027 = vmatprep.subr.mxu0 0.0
  %2028 = vmatpush1.msra.mxu0 0.0
  %2029 = vmatprep.subr.mxu0 0.0
  %2030 = vmatpush1.msra.mxu0 0.0
  %2031 = vmatprep.subr.mxu0 0.0
  %2032 = vmatpush1.msra.mxu0 0.0
  %2033 = vmatprep.subr.mxu0 0.0
  %2034 = vmatpush1.msra.mxu0 0.0
  %2035 = vmatprep.subr.mxu0 0.0
  %2036 = vmatpush1.msra.mxu0 0.0
  %2037 = vmatprep.subr.mxu0 0.0
  %2038 = vmatpush1.msra.mxu0 0.0
  %2039 = vmatprep.subr.mxu0 0.0
  %2040 = vmatpush1.msra.mxu0 0.0
  %2041 = vmatprep.subr.mxu0 0.0
  %2042 = vmatpush1.msra.mxu0 0.0
  %2043 = vmatprep.subr.mxu0 0.0
  %2044 = vmatpush1.msra.mxu0 0.0
  %2045 = vmatprep.subr.mxu0 0.0
  %2046 = vmatpush1.msra.mxu0 0.0
  %2047 = vmatprep.subr.mxu0 0.0
  %2048 = vmatpush1.msra.mxu0 0.0
  %2049 = vmatprep.subr.mxu0 0.0
  %2050 = vmatpush1.msra.mxu0 0.0
  %2051 = vmatprep.subr.mxu0 0.0
  %2052 = vmatpush1.msra.mxu0 0.0
  %2053 = vmatprep.subr.mxu0 0.0
  %2054 = vmatpush1.msra.mxu0 0.0
  %2055 = vmatprep.subr.mxu0 0.0
  %2056 = vmatpush1.msra.mxu0 0.0
  %2057 = vmatprep.subr.mxu0 0.0
  %2058 = vmatpush1.msra.mxu0 0.0
  %2059 = vmatprep.subr.mxu0 0.0
  %2060 = vmatpush1.msra.mxu0 0.0
  %2061 = vmatprep.subr.mxu0 0.0
  %2062 = vmatpush1.msra.mxu0 0.0
  %2063 = vmatprep.subr.mxu0 0.0
  %2064 = vmatpush1.msra.mxu0 0.0
  %2065 = vmatprep.subr.mxu0 0.0
  %2066 = vmatpush1.msra.mxu0 0.0
  %2067 = vmatprep.subr.mxu0 0.0
  %2068 = vmatpush1.msra.mxu0 0.0
  %2069 = vmatprep.subr.mxu0 0.0
  %2070 = vmatpush1.msra.mxu0 0.0
  %2071 = vmatprep.subr.mxu0 0.0
  %2072 = vmatpush1.msra.mxu0 0.0
  %2073 = vmatprep.subr.mxu0 0.0
  %2074 = vmatpush1.msra.mxu0 0.0
  %2075 = vmatprep.subr.mxu0 0.0
  %2076 = vmatpush1.msra.mxu0 0.0
  %2077 = vmatprep.subr.mxu0 0.0
  %2078 = vmatpush1.msra.mxu0 0.0
  %2079 = vmatprep.subr.mxu0 0.0
  %2080 = vmatpush1.msra.mxu0 0.0
  %2081 = vmatprep.subr.mxu0 0.0
  %2082 = vmatpush1.msra.mxu0 0.0
  %2083 = vmatprep.subr.mxu0 0.0
  %2084 = vmatpush1.msra.mxu0 0.0
  %2085 = vmatprep.subr.mxu0 0.0
  %2086 = vmatpush1.msra.mxu0 0.0
  %2087 = vmatprep.mubr.f32.mxu0 0.0
  %2088 = vmatmul.mubr.f32.gmra.mrb[0].mxu0 %v1838
  %v2089 = vpop.f32.mrb[0].mxu0
  %v2090 = vadd.f32 0.0, %v2089
  %v2091 = vpop.f32.mrb[0].mxu0
  %v2092 = vadd.f32 0.0, %v2091
  %2093 = vdwg.mxu0
  %v2096 = vrot.slane %v1828, 6
  %v2097 = vrot.slane %v2003, 6
  %v2098 = vsel %vm205, %v2096, %v2097
  %v2099 = vrot.slane %v1829, 6
  %v2100 = vrot.slane %v2004, 6
  %v2101 = vsel %vm205, %v2099, %v2100
  %v2102 = vsel %vm1341, %v2098, 0
  %v2104 = vsel %vm1341, %v2101, 0
  %2106 = vmatprep.subr.mxu0 %v2104
  %2107 = vmatpush1.msra.mxu0 %v2102
  %2108 = vmatprep.subr.mxu0 0.0
  %2109 = vmatpush1.msra.mxu0 0.0
  %2110 = vmatprep.subr.mxu0 0.0
  %2111 = vmatpush1.msra.mxu0 0.0
  %2112 = vmatprep.subr.mxu0 0.0
  %2113 = vmatpush1.msra.mxu0 0.0
  %2114 = vmatprep.subr.mxu0 0.0
  %2115 = vmatpush1.msra.mxu0 0.0
  %2116 = vmatprep.subr.mxu0 0.0
  %2117 = vmatpush1.msra.mxu0 0.0
  %2118 = vmatprep.subr.mxu0 0.0
  %2119 = vmatpush1.msra.mxu0 0.0
  %2120 = vmatprep.subr.mxu0 0.0
  %2121 = vmatpush1.msra.mxu0 0.0
  %2122 = vmatprep.subr.mxu0 0.0
  %2123 = vmatpush1.msra.mxu0 0.0
  %2124 = vmatprep.subr.mxu0 0.0
  %2125 = vmatpush1.msra.mxu0 0.0
  %2126 = vmatprep.subr.mxu0 0.0
  %2127 = vmatpush1.msra.mxu0 0.0
  %2128 = vmatprep.subr.mxu0 0.0
  %2129 = vmatpush1.msra.mxu0 0.0
  %2130 = vmatprep.subr.mxu0 0.0
  %2131 = vmatpush1.msra.mxu0 0.0
  %2132 = vmatprep.subr.mxu0 0.0
  %2133 = vmatpush1.msra.mxu0 0.0
  %2134 = vmatprep.subr.mxu0 0.0
  %2135 = vmatpush1.msra.mxu0 0.0
  %2136 = vmatprep.subr.mxu0 0.0
  %2137 = vmatpush1.msra.mxu0 0.0
  %2138 = vmatprep.subr.mxu0 0.0
  %2139 = vmatpush1.msra.mxu0 0.0
  %2140 = vmatprep.subr.mxu0 0.0
  %2141 = vmatpush1.msra.mxu0 0.0
  %2142 = vmatprep.subr.mxu0 0.0
  %2143 = vmatpush1.msra.mxu0 0.0
  %2144 = vmatprep.subr.mxu0 0.0
  %2145 = vmatpush1.msra.mxu0 0.0
  %2146 = vmatprep.subr.mxu0 0.0
  %2147 = vmatpush1.msra.mxu0 0.0
  %2148 = vmatprep.subr.mxu0 0.0
  %2149 = vmatpush1.msra.mxu0 0.0
  %2150 = vmatprep.subr.mxu0 0.0
  %2151 = vmatpush1.msra.mxu0 0.0
  %2152 = vmatprep.subr.mxu0 0.0
  %2153 = vmatpush1.msra.mxu0 0.0
  %2154 = vmatprep.subr.mxu0 0.0
  %2155 = vmatpush1.msra.mxu0 0.0
  %2156 = vmatprep.subr.mxu0 0.0
  %2157 = vmatpush1.msra.mxu0 0.0
  %2158 = vmatprep.subr.mxu0 0.0
  %2159 = vmatpush1.msra.mxu0 0.0
  %2160 = vmatprep.subr.mxu0 0.0
  %2161 = vmatpush1.msra.mxu0 0.0
  %2162 = vmatprep.subr.mxu0 0.0
  %2163 = vmatpush1.msra.mxu0 0.0
  %2164 = vmatprep.subr.mxu0 0.0
  %2165 = vmatpush1.msra.mxu0 0.0
  %2166 = vmatprep.subr.mxu0 0.0
  %2167 = vmatpush1.msra.mxu0 0.0
  %2168 = vmatprep.subr.mxu0 0.0
  %2169 = vmatpush1.msra.mxu0 0.0
  %2170 = vmatprep.mubr.f32.mxu0 0.0
  %2171 = vmatmul.mubr.f32.gmra.mrb[0].mxu0 %v1918
  %v2172 = vpop.f32.mrb[0].mxu0
  %v2173 = vadd.f32 %v2090, %v2172
  %v2174 = vpop.f32.mrb[0].mxu0
  %v2175 = vadd.f32 %v2092, %v2174
  %2176 = vdwg.mxu0
  %v2177 = vpack.c.bf16 %v2173, %v2173
  %v2178 = vpack.c.bf16 %v2175, %v2175
  %vm2179 = vcmask 1044484
  %vm2180 = vsmask.f32 4352
  %vm2181 = vmand %vm2179, %vm2180
  %vm2182 = vmor %vm2181, %vm375
  %v2183 = vld [vmem:[#allocation3] sm:$0x11]
  %v2184 = vsel %vm2182, 0, %v2183
  %2185 = vst [vmem:[#allocation3] sm:$0x11] %v2184
  %vm2186 = vsmask.f32 7954
  %vm2187 = vmand %vm2179, %vm2186
  %vm2188 = vmor %vm2187, %vm394
  %v2189 = vld [vmem:[#allocation3 + $0x8] sm:$0x11]
  %v2190 = vsel %vm2188, 0, %v2189
  %2191 = vst [vmem:[#allocation3 + $0x8] sm:$0x11] %v2190
  %v2194 = vunpack.c.l.b16 %v1997
  %v2195 = vunpack.c.l.b16 %v1998
  %v2196 = vpack.c.b16 %v2195, %v2194
  %v2198 = vshrl.u32 %v2196, 16
  %v2200 = vrot.slane %v2198, 7
  %v2201 = vshll.u32 %v2196, 16
  %v2203 = vor.u32 %v2200, %v2201
  %v2204 = vrot.slane %v2200, 4
  %vm2207 = vcmask 1043456
  %vm2208 = vmand %vm2207, %vm393
  %vm2209 = vcmask 1047556
  %vm2210 = vmand %vm2209, %vm2186
  %vm2211 = vmor %vm2210, %vm2208
  %v2212 = vld [vmem:[#allocation3] sm:$0xff]
  %v2213 = vsel %vm2211, %v2203, %v2212
  %2214 = vst [vmem:[#allocation3] sm:$0xff] %v2213
  %v2215 = vld [vmem:[#allocation3 + $0x8] sm:$0x11]
  %v2216 = vsel %vm2182, %v2204, %v2215
  %2217 = vst [vmem:[#allocation3 + $0x8] sm:$0x11] %v2216
  %vm2218 = vcmask 1045509
  %vm2219 = vsmask.f32 5376
  %vm2220 = vmand %vm2218, %vm2219
  %vm2221 = vmor %vm2220, %vm406
  %v2222 = vld [vmem:[#allocation3 + $0x8] sm:$0x22]
  %v2223 = vsel %vm2221, 0, %v2222
  %2224 = vst [vmem:[#allocation3 + $0x8] sm:$0x22] %v2223
  %vm2225 = vsmask.f32 7958
  %vm2226 = vmand %vm2218, %vm2225
  %vm2227 = vmor %vm2226, %vm420
  %v2228 = vld [vmem:[#allocation3 + $0x10] sm:$0x22]
  %v2229 = vsel %vm2227, 0, %v2228
  %2230 = vst [vmem:[#allocation3 + $0x10] sm:$0x22] %v2229
  %v2233 = vunpack.c.l.b16 %v2177
  %v2234 = vunpack.c.l.b16 %v2178
  %v2235 = vpack.c.b16 %v2234, %v2233
  %v2237 = vshrl.u32 %v2235, 16
  %v2239 = vrot.slane %v2237, 6
  %v2240 = vshll.u32 %v2235, 16
  %v2242 = vrot.slane %v2240, 7
  %v2243 = vor.u32 %v2239, %v2242
  %v2244 = vrot.slane %v2243, 4
  %vm2247 = vcmask 1043457
  %vm2248 = vmand %vm2247, %vm419
  %vm2249 = vcmask 1047557
  %vm2250 = vmand %vm2249, %vm2225
  %vm2251 = vmor %vm2250, %vm2248
  %v2252 = vld [vmem:[#allocation3 + $0x8] sm:$0xee]
  %v2253 = vsel %vm2251, %v2243, %v2252
  %2254 = vst [vmem:[#allocation3 + $0x8] sm:$0xee] %v2253
  %vm2255 = vcmask 1041408
  %vm2256 = vmand %vm2255, %vm405
  %vm2257 = vcmask 1045508
  %vm2258 = vmand %vm2257, %vm2219
  %vm2259 = vmor %vm2258, %vm2256
  %v2260 = vld [vmem:[#allocation3 + $0x10] sm:$0x33]
  %v2261 = vsel %vm2259, %v2244, %v2260
  %2262 = vst [vmem:[#allocation3 + $0x10] sm:$0x33] %v2261
  %v2263 = vld [vmem:[#allocation3] sm:$0xff]
  %v2264 = vld [vmem:[#allocation3 + $0x8] sm:$0xff]
  %v2265 = vld [vmem:[#allocation3 + $0x10] sm:$0x11]
  %v2266 = vld [vmem:[%s9] sm:$0xff]
  %v2267 = vld [vmem:[%s9 + $0x8] sm:$0xff]
  %v2268 = vld [vmem:[%s9 + $0x10] sm:$0xff]
  %v2269 = vld [vmem:[%s9 + $0x18] sm:$0xff]
  %v2270 = vld [vmem:[%s9 + $0x20] sm:$0xff]
  %v2271 = vld [vmem:[%s9 + $0x28] sm:$0xff]
  %v2272 = vld [vmem:[%s9 + $0x30] sm:$0xff]
  %v2273 = vld [vmem:[%s9 + $0x38] sm:$0xff]
  %v2274 = vld [vmem:[%s9 + $0x40] sm:$0xff]
  %v2275 = vld [vmem:[%s9 + $0x48] sm:$0xff]
  %v2276 = vld [vmem:[%s9 + $0x50] sm:$0xff]
  %v2277 = vld [vmem:[%s9 + $0x58] sm:$0xff]
  %v2278 = vld [vmem:[%s9 + $0x60] sm:$0xff]
  %v2279 = vld [vmem:[%s9 + $0x68] sm:$0xff]
  %v2280 = vld [vmem:[%s9 + $0x70] sm:$0xff]
  %v2281 = vld [vmem:[%s9 + $0x78] sm:$0xff]
  %v2282 = vld [vmem:[%s9 + $0x80] sm:$0xff]
  %v2283 = vld [vmem:[%s9 + $0x88] sm:$0xff]
  %v2284 = vld [vmem:[%s9 + $0x90] sm:$0xff]
  %v2285 = vld [vmem:[%s9 + $0x98] sm:$0xff]
  %v2286 = vld [vmem:[%s9 + $0xa0] sm:$0xff]
  %v2287 = vld [vmem:[%s9 + $0xa8] sm:$0xff]
  %v2288 = vld [vmem:[%s9 + $0xb0] sm:$0xff]
  %v2289 = vld [vmem:[%s9 + $0xb8] sm:$0xff]
  %v2290 = vld [vmem:[%s9 + $0xc0] sm:$0xff]
  %v2291 = vld [vmem:[%s9 + $0xc8] sm:$0xff]
  %v2292 = vld [vmem:[%s9 + $0xd0] sm:$0xff]
  %v2293 = vld [vmem:[%s9 + $0xd8] sm:$0xff]
  %v2294 = vld [vmem:[%s9 + $0xe0] sm:$0xff]
  %v2295 = vld [vmem:[%s9 + $0xe8] sm:$0xff]
  %v2296 = vld [vmem:[%s9 + $0xf0] sm:$0xff]
  %v2297 = vld [vmem:[%s9 + $0xf8] sm:$0xff]
  %v2298 = vld [vmem:[%s9 + $0x100] sm:$0xff]
  %v2299 = vld [vmem:[%s9 + $0x108] sm:$0xff]
  %v2300 = vld [vmem:[%s9 + $0x110] sm:$0xff]
  %v2301 = vld [vmem:[%s9 + $0x118] sm:$0xff]
  %v2302 = vld [vmem:[%s9 + $0x120] sm:$0xff]
  %v2303 = vld [vmem:[%s9 + $0x128] sm:$0xff]
  %v2304 = vld [vmem:[%s9 + $0x130] sm:$0xff]
  %v2305 = vld [vmem:[%s9 + $0x138] sm:$0xff]
  %v2306 = vld [vmem:[%s9 + $0x140] sm:$0xff]
  %v2307 = vld [vmem:[%s9 + $0x148] sm:$0xff]
  %v2308 = vld [vmem:[%s9 + $0x150] sm:$0xff]
  %v2309 = vld [vmem:[%s9 + $0x158] sm:$0xff]
  %v2310 = vld [vmem:[%s9 + $0x160] sm:$0xff]
  %v2311 = vld [vmem:[%s9 + $0x168] sm:$0xff]
  %v2312 = vld [vmem:[%s9 + $0x170] sm:$0xff]
  %v2313 = vld [vmem:[%s9 + $0x178] sm:$0xff]
  %v2314 = vld [vmem:[%s9 + $0x180] sm:$0xff]
  %v2315 = vld [vmem:[%s9 + $0x188] sm:$0xff]
  %v2316 = vld [vmem:[%s9 + $0x190] sm:$0xff]
  %v2317 = vld [vmem:[%s9 + $0x198] sm:$0xff]
  %v2318 = vld [vmem:[%s9 + $0x1a0] sm:$0xff]
  %v2319 = vld [vmem:[%s9 + $0x1a8] sm:$0xff]
  %v2320 = vld [vmem:[%s9 + $0x1b0] sm:$0xff]
  %v2321 = vld [vmem:[%s9 + $0x1b8] sm:$0xff]
  %v2322 = vld [vmem:[%s9 + $0x1c0] sm:$0xff]
  %v2323 = vld [vmem:[%s9 + $0x1c8] sm:$0xff]
  %v2324 = vld [vmem:[%s9 + $0x1d0] sm:$0xff]
  %v2325 = vld [vmem:[%s9 + $0x1d8] sm:$0xff]
  %v2326 = vld [vmem:[%s9 + $0x1e0] sm:$0xff]
  %v2327 = vld [vmem:[%s9 + $0x1e8] sm:$0xff]
  %v2328 = vld [vmem:[%s9 + $0x1f0] sm:$0xff]
  %v2329 = vld [vmem:[%s9 + $0x1f8] sm:$0xff]
  %v2330 = vld [vmem:[#allocation3 + $0x10] sm:$0x33]
  %s2331 = scalar_lea.vmem %s9, 512
  %v2332 = vld [vmem:[%s2331] sm:$0xff]
  %v2333 = vld [vmem:[%s2331 + $0x8] sm:$0xff]
  %v2334 = vld [vmem:[%s2331 + $0x10] sm:$0xff]
  %v2335 = vld [vmem:[%s2331 + $0x18] sm:$0xff]
  %v2336 = vld [vmem:[%s2331 + $0x20] sm:$0xff]
  %v2337 = vld [vmem:[%s2331 + $0x28] sm:$0xff]
  %v2338 = vld [vmem:[%s2331 + $0x30] sm:$0xff]
  %v2339 = vld [vmem:[%s2331 + $0x38] sm:$0xff]
  %v2340 = vld [vmem:[%s2331 + $0x40] sm:$0xff]
  %v2341 = vld [vmem:[%s2331 + $0x48] sm:$0xff]
  %v2342 = vld [vmem:[%s2331 + $0x50] sm:$0xff]
  %v2343 = vld [vmem:[%s2331 + $0x58] sm:$0xff]
  %v2344 = vld [vmem:[%s2331 + $0x60] sm:$0xff]
  %v2345 = vld [vmem:[%s2331 + $0x68] sm:$0xff]
  %v2346 = vld [vmem:[%s2331 + $0x70] sm:$0xff]
  %v2347 = vld [vmem:[%s2331 + $0x78] sm:$0xff]
  %v2348 = vld [vmem:[%s2331 + $0x80] sm:$0xff]
  %v2349 = vld [vmem:[%s2331 + $0x88] sm:$0xff]
  %v2350 = vld [vmem:[%s2331 + $0x90] sm:$0xff]
  %v2351 = vld [vmem:[%s2331 + $0x98] sm:$0xff]
  %v2352 = vld [vmem:[%s2331 + $0xa0] sm:$0xff]
  %v2353 = vld [vmem:[%s2331 + $0xa8] sm:$0xff]
  %v2354 = vld [vmem:[%s2331 + $0xb0] sm:$0xff]
  %v2355 = vld [vmem:[%s2331 + $0xb8] sm:$0xff]
  %v2356 = vld [vmem:[%s2331 + $0xc0] sm:$0xff]
  %v2357 = vld [vmem:[%s2331 + $0xc8] sm:$0xff]
  %v2358 = vld [vmem:[%s2331 + $0xd0] sm:$0xff]
  %v2359 = vld [vmem:[%s2331 + $0xd8] sm:$0xff]
  %v2360 = vld [vmem:[%s2331 + $0xe0] sm:$0xff]
  %v2361 = vld [vmem:[%s2331 + $0xe8] sm:$0xff]
  %v2362 = vld [vmem:[%s2331 + $0xf0] sm:$0xff]
  %v2363 = vld [vmem:[%s2331 + $0xf8] sm:$0xff]
  %v2364 = vld [vmem:[%s2331 + $0x100] sm:$0xff]
  %v2365 = vld [vmem:[%s2331 + $0x108] sm:$0xff]
  %v2366 = vld [vmem:[%s2331 + $0x110] sm:$0xff]
  %v2367 = vld [vmem:[%s2331 + $0x118] sm:$0xff]
  %v2368 = vld [vmem:[%s2331 + $0x120] sm:$0xff]
  %v2369 = vld [vmem:[%s2331 + $0x128] sm:$0xff]
  %v2370 = vld [vmem:[%s2331 + $0x130] sm:$0xff]
  %v2371 = vld [vmem:[%s2331 + $0x138] sm:$0xff]
  %v2372 = vld [vmem:[%s2331 + $0x140] sm:$0xff]
  %v2373 = vld [vmem:[%s2331 + $0x148] sm:$0xff]
  %v2374 = vld [vmem:[%s2331 + $0x150] sm:$0xff]
  %v2375 = vld [vmem:[%s2331 + $0x158] sm:$0xff]
  %v2376 = vld [vmem:[%s2331 + $0x160] sm:$0xff]
  %v2377 = vld [vmem:[%s2331 + $0x168] sm:$0xff]
  %v2378 = vld [vmem:[%s2331 + $0x170] sm:$0xff]
  %v2379 = vld [vmem:[%s2331 + $0x178] sm:$0xff]
  %v2380 = vld [vmem:[%s2331 + $0x180] sm:$0xff]
  %v2381 = vld [vmem:[%s2331 + $0x188] sm:$0xff]
  %v2382 = vld [vmem:[%s2331 + $0x190] sm:$0xff]
  %v2383 = vld [vmem:[%s2331 + $0x198] sm:$0xff]
  %v2384 = vld [vmem:[%s2331 + $0x1a0] sm:$0xff]
  %v2385 = vld [vmem:[%s2331 + $0x1a8] sm:$0xff]
  %v2386 = vld [vmem:[%s2331 + $0x1b0] sm:$0xff]
  %v2387 = vld [vmem:[%s2331 + $0x1b8] sm:$0xff]
  %v2388 = vld [vmem:[%s2331 + $0x1c0] sm:$0xff]
  %v2389 = vld [vmem:[%s2331 + $0x1c8] sm:$0xff]
  %v2390 = vld [vmem:[%s2331 + $0x1d0] sm:$0xff]
  %v2391 = vld [vmem:[%s2331 + $0x1d8] sm:$0xff]
  %v2392 = vld [vmem:[%s2331 + $0x1e0] sm:$0xff]
  %v2393 = vld [vmem:[%s2331 + $0x1e8] sm:$0xff]
  %v2394 = vld [vmem:[%s2331 + $0x1f0] sm:$0xff]
  %v2395 = vld [vmem:[%s2331 + $0x1f8] sm:$0xff]
  %v2399 = vunpack.c.l.b16 %v2263
  %v2400 = vunpack.c.h.b16 %v2263
  %v2401 = vunpack.c.l.b16 %v2264
  %v2402 = vunpack.c.h.b16 %v2264
  %v2403 = vunpack.c.l.b16 %v2330
  %v2404 = vunpack.c.h.b16 %v2330
  %v2405 = vpack.c.b16 %v2401, %v2399
  %v2406 = vpack.c.b16 %v2402, %v2400
  %v2407 = vpack.c.b16 %v2403, %v2403
  %v2408 = vpack.c.b16 %v2404, %v2404
  %vm2409 = vsmask.f32 7424
  %v2411 = vshrl.u32 %v2405, 16
  %v2413 = vshll.u32 %v2405, 16
  %v2415 = vrot.slane %v2413, 1
  %v2416 = vor.u32 %v2411, %v2415
  %v2418 = vshll.u32 %v2407, 16
  %v2420 = vrot.slane %v2418, 1
  %v2421 = vsel %vm2409, %v2416, %v2420
  %v2423 = vshrl.u32 %v2406, 16
  %v2425 = vshll.u32 %v2406, 16
  %v2427 = vrot.slane %v2425, 1
  %v2428 = vor.u32 %v2423, %v2427
  %v2430 = vshll.u32 %v2408, 16
  %v2432 = vrot.slane %v2430, 1
  %v2433 = vsel %vm2409, %v2428, %v2432
  %v2434 = vshrl.u32 %v2407, 16
  %v2436 = vor.u32 %v2434, %v2420
  %v2437 = vshrl.u32 %v2408, 16
  %v2439 = vor.u32 %v2437, %v2432
  %v2508 = vunpack.c.l.b16 %v2332
  %v2509 = vunpack.c.h.b16 %v2332
  %v2510 = vunpack.c.l.b16 %v2333
  %v2511 = vunpack.c.h.b16 %v2333
  %v2512 = vunpack.c.l.b16 %v2334
  %v2513 = vunpack.c.h.b16 %v2334
  %v2514 = vunpack.c.l.b16 %v2335
  %v2515 = vunpack.c.h.b16 %v2335
  %v2516 = vunpack.c.l.b16 %v2336
  %v2517 = vunpack.c.h.b16 %v2336
  %v2518 = vunpack.c.l.b16 %v2337
  %v2519 = vunpack.c.h.b16 %v2337
  %v2520 = vunpack.c.l.b16 %v2338
  %v2521 = vunpack.c.h.b16 %v2338
  %v2522 = vunpack.c.l.b16 %v2339
  %v2523 = vunpack.c.h.b16 %v2339
  %v2524 = vunpack.c.l.b16 %v2340
  %v2525 = vunpack.c.h.b16 %v2340
  %v2526 = vunpack.c.l.b16 %v2341
  %v2527 = vunpack.c.h.b16 %v2341
  %v2528 = vunpack.c.l.b16 %v2342
  %v2529 = vunpack.c.h.b16 %v2342
  %v2530 = vunpack.c.l.b16 %v2343
  %v2531 = vunpack.c.h.b16 %v2343
  %v2532 = vunpack.c.l.b16 %v2344
  %v2533 = vunpack.c.h.b16 %v2344
  %v2534 = vunpack.c.l.b16 %v2345
  %v2535 = vunpack.c.h.b16 %v2345
  %v2536 = vunpack.c.l.b16 %v2346
  %v2537 = vunpack.c.h.b16 %v2346
  %v2538 = vunpack.c.l.b16 %v2347
  %v2539 = vunpack.c.h.b16 %v2347
  %v2540 = vunpack.c.l.b16 %v2348
  %v2541 = vunpack.c.h.b16 %v2348
  %v2542 = vunpack.c.l.b16 %v2349
  %v2543 = vunpack.c.h.b16 %v2349
  %v2544 = vunpack.c.l.b16 %v2350
  %v2545 = vunpack.c.h.b16 %v2350
  %v2546 = vunpack.c.l.b16 %v2351
  %v2547 = vunpack.c.h.b16 %v2351
  %v2548 = vunpack.c.l.b16 %v2352
  %v2549 = vunpack.c.h.b16 %v2352
  %v2550 = vunpack.c.l.b16 %v2353
  %v2551 = vunpack.c.h.b16 %v2353
  %v2552 = vunpack.c.l.b16 %v2354
  %v2553 = vunpack.c.h.b16 %v2354
  %v2554 = vunpack.c.l.b16 %v2355
  %v2555 = vunpack.c.h.b16 %v2355
  %v2556 = vunpack.c.l.b16 %v2356
  %v2557 = vunpack.c.h.b16 %v2356
  %v2558 = vunpack.c.l.b16 %v2357
  %v2559 = vunpack.c.h.b16 %v2357
  %v2560 = vunpack.c.l.b16 %v2358
  %v2561 = vunpack.c.h.b16 %v2358
  %v2562 = vunpack.c.l.b16 %v2359
  %v2563 = vunpack.c.h.b16 %v2359
  %v2564 = vunpack.c.l.b16 %v2360
  %v2565 = vunpack.c.h.b16 %v2360
  %v2566 = vunpack.c.l.b16 %v2361
  %v2567 = vunpack.c.h.b16 %v2361
  %v2568 = vunpack.c.l.b16 %v2362
  %v2569 = vunpack.c.h.b16 %v2362
  %v2570 = vunpack.c.l.b16 %v2363
  %v2571 = vunpack.c.h.b16 %v2363
  %v2572 = vunpack.c.l.b16 %v2364
  %v2573 = vunpack.c.h.b16 %v2364
  %v2574 = vunpack.c.l.b16 %v2365
  %v2575 = vunpack.c.h.b16 %v2365
  %v2576 = vunpack.c.l.b16 %v2366
  %v2577 = vunpack.c.h.b16 %v2366
  %v2578 = vunpack.c.l.b16 %v2367
  %v2579 = vunpack.c.h.b16 %v2367
  %v2580 = vunpack.c.l.b16 %v2368
  %v2581 = vunpack.c.h.b16 %v2368
  %v2582 = vunpack.c.l.b16 %v2369
  %v2583 = vunpack.c.h.b16 %v2369
  %v2584 = vunpack.c.l.b16 %v2370
  %v2585 = vunpack.c.h.b16 %v2370
  %v2586 = vunpack.c.l.b16 %v2371
  %v2587 = vunpack.c.h.b16 %v2371
  %v2588 = vunpack.c.l.b16 %v2372
  %v2589 = vunpack.c.h.b16 %v2372
  %v2590 = vunpack.c.l.b16 %v2373
  %v2591 = vunpack.c.h.b16 %v2373
  %v2592 = vunpack.c.l.b16 %v2374
  %v2593 = vunpack.c.h.b16 %v2374
  %v2594 = vunpack.c.l.b16 %v2375
  %v2595 = vunpack.c.h.b16 %v2375
  %v2596 = vunpack.c.l.b16 %v2376
  %v2597 = vunpack.c.h.b16 %v2376
  %v2598 = vunpack.c.l.b16 %v2377
  %v2599 = vunpack.c.h.b16 %v2377
  %v2600 = vunpack.c.l.b16 %v2378
  %v2601 = vunpack.c.h.b16 %v2378
  %v2602 = vunpack.c.l.b16 %v2379
  %v2603 = vunpack.c.h.b16 %v2379
  %v2604 = vunpack.c.l.b16 %v2380
  %v2605 = vunpack.c.h.b16 %v2380
  %v2606 = vunpack.c.l.b16 %v2381
  %v2607 = vunpack.c.h.b16 %v2381
  %v2608 = vunpack.c.l.b16 %v2382
  %v2609 = vunpack.c.h.b16 %v2382
  %v2610 = vunpack.c.l.b16 %v2383
  %v2611 = vunpack.c.h.b16 %v2383
  %v2612 = vunpack.c.l.b16 %v2384
  %v2613 = vunpack.c.h.b16 %v2384
  %v2614 = vunpack.c.l.b16 %v2385
  %v2615 = vunpack.c.h.b16 %v2385
  %v2616 = vunpack.c.l.b16 %v2386
  %v2617 = vunpack.c.h.b16 %v2386
  %v2618 = vunpack.c.l.b16 %v2387
  %v2619 = vunpack.c.h.b16 %v2387
  %v2620 = vunpack.c.l.b16 %v2388
  %v2621 = vunpack.c.h.b16 %v2388
  %v2622 = vunpack.c.l.b16 %v2389
  %v2623 = vunpack.c.h.b16 %v2389
  %v2624 = vunpack.c.l.b16 %v2390
  %v2625 = vunpack.c.h.b16 %v2390
  %v2626 = vunpack.c.l.b16 %v2391
  %v2627 = vunpack.c.h.b16 %v2391
  %v2628 = vunpack.c.l.b16 %v2392
  %v2629 = vunpack.c.h.b16 %v2392
  %v2630 = vunpack.c.l.b16 %v2393
  %v2631 = vunpack.c.h.b16 %v2393
  %v2632 = vunpack.c.l.b16 %v2394
  %v2633 = vunpack.c.h.b16 %v2394
  %v2634 = vunpack.c.l.b16 %v2395
  %v2635 = vunpack.c.h.b16 %v2395
  %v2636 = vpack.c.b16 %v2512, %v2508
  %v2637 = vpack.c.b16 %v2513, %v2509
  %v2638 = vpack.c.b16 %v2514, %v2510
  %v2639 = vpack.c.b16 %v2515, %v2511
  %v2640 = vpack.c.b16 %v2520, %v2516
  %v2641 = vpack.c.b16 %v2521, %v2517
  %v2642 = vpack.c.b16 %v2522, %v2518
  %v2643 = vpack.c.b16 %v2523, %v2519
  %v2644 = vpack.c.b16 %v2528, %v2524
  %v2645 = vpack.c.b16 %v2529, %v2525
  %v2646 = vpack.c.b16 %v2530, %v2526
  %v2647 = vpack.c.b16 %v2531, %v2527
  %v2648 = vpack.c.b16 %v2536, %v2532
  %v2649 = vpack.c.b16 %v2537, %v2533
  %v2650 = vpack.c.b16 %v2538, %v2534
  %v2651 = vpack.c.b16 %v2539, %v2535
  %v2652 = vpack.c.b16 %v2544, %v2540
  %v2653 = vpack.c.b16 %v2545, %v2541
  %v2654 = vpack.c.b16 %v2546, %v2542
  %v2655 = vpack.c.b16 %v2547, %v2543
  %v2656 = vpack.c.b16 %v2552, %v2548
  %v2657 = vpack.c.b16 %v2553, %v2549
  %v2658 = vpack.c.b16 %v2554, %v2550
  %v2659 = vpack.c.b16 %v2555, %v2551
  %v2660 = vpack.c.b16 %v2560, %v2556
  %v2661 = vpack.c.b16 %v2561, %v2557
  %v2662 = vpack.c.b16 %v2562, %v2558
  %v2663 = vpack.c.b16 %v2563, %v2559
  %v2664 = vpack.c.b16 %v2568, %v2564
  %v2665 = vpack.c.b16 %v2569, %v2565
  %v2666 = vpack.c.b16 %v2570, %v2566
  %v2667 = vpack.c.b16 %v2571, %v2567
  %v2668 = vpack.c.b16 %v2576, %v2572
  %v2669 = vpack.c.b16 %v2577, %v2573
  %v2670 = vpack.c.b16 %v2578, %v2574
  %v2671 = vpack.c.b16 %v2579, %v2575
  %v2672 = vpack.c.b16 %v2584, %v2580
  %v2673 = vpack.c.b16 %v2585, %v2581
  %v2674 = vpack.c.b16 %v2586, %v2582
  %v2675 = vpack.c.b16 %v2587, %v2583
  %v2676 = vpack.c.b16 %v2592, %v2588
  %v2677 = vpack.c.b16 %v2593, %v2589
  %v2678 = vpack.c.b16 %v2594, %v2590
  %v2679 = vpack.c.b16 %v2595, %v2591
  %v2680 = vpack.c.b16 %v2600, %v2596
  %v2681 = vpack.c.b16 %v2601, %v2597
  %v2682 = vpack.c.b16 %v2602, %v2598
  %v2683 = vpack.c.b16 %v2603, %v2599
  %v2684 = vpack.c.b16 %v2608, %v2604
  %v2685 = vpack.c.b16 %v2609, %v2605
  %v2686 = vpack.c.b16 %v2610, %v2606
  %v2687 = vpack.c.b16 %v2611, %v2607
  %v2688 = vpack.c.b16 %v2616, %v2612
  %v2689 = vpack.c.b16 %v2617, %v2613
  %v2690 = vpack.c.b16 %v2618, %v2614
  %v2691 = vpack.c.b16 %v2619, %v2615
  %v2692 = vpack.c.b16 %v2624, %v2620
  %v2693 = vpack.c.b16 %v2625, %v2621
  %v2694 = vpack.c.b16 %v2626, %v2622
  %v2695 = vpack.c.b16 %v2627, %v2623
  %v2696 = vpack.c.b16 %v2632, %v2628
  %v2697 = vpack.c.b16 %v2633, %v2629
  %v2698 = vpack.c.b16 %v2634, %v2630
  %v2699 = vpack.c.b16 %v2635, %v2631
  %2764 = vmatprep.subr.bf16.mxu0 %v2637
  %2765 = vmatpush1.bf16.msra.mxu0 %v2636
  %2766 = vmatprep.subr.bf16.mxu0 %v2641
  %2767 = vmatpush1.bf16.msra.mxu0 %v2640
  %2768 = vmatprep.subr.bf16.mxu0 %v2645
  %2769 = vmatpush1.bf16.msra.mxu0 %v2644
  %2770 = vmatprep.subr.bf16.mxu0 %v2649
  %2771 = vmatpush1.bf16.msra.mxu0 %v2648
  %2772 = vmatprep.subr.bf16.mxu0 %v2653
  %2773 = vmatpush1.bf16.msra.mxu0 %v2652
  %2774 = vmatprep.subr.bf16.mxu0 %v2657
  %2775 = vmatpush1.bf16.msra.mxu0 %v2656
  %2776 = vmatprep.subr.bf16.mxu0 %v2661
  %2777 = vmatpush1.bf16.msra.mxu0 %v2660
  %2778 = vmatprep.subr.bf16.mxu0 %v2665
  %2779 = vmatpush1.bf16.msra.mxu0 %v2664
  %2780 = vmatprep.subr.bf16.mxu0 %v2669
  %2781 = vmatpush1.bf16.msra.mxu0 %v2668
  %2782 = vmatprep.subr.bf16.mxu0 %v2673
  %2783 = vmatpush1.bf16.msra.mxu0 %v2672
  %2784 = vmatprep.subr.bf16.mxu0 %v2677
  %2785 = vmatpush1.bf16.msra.mxu0 %v2676
  %2786 = vmatprep.subr.bf16.mxu0 %v2681
  %2787 = vmatpush1.bf16.msra.mxu0 %v2680
  %2788 = vmatprep.subr.bf16.mxu0 %v2685
  %2789 = vmatpush1.bf16.msra.mxu0 %v2684
  %2790 = vmatprep.subr.bf16.mxu0 %v2689
  %2791 = vmatpush1.bf16.msra.mxu0 %v2688
  %2792 = vmatprep.subr.bf16.mxu0 %v2693
  %2793 = vmatpush1.bf16.msra.mxu0 %v2692
  %2794 = vmatprep.subr.bf16.mxu0 %v2697
  %2795 = vmatpush1.bf16.msra.mxu0 %v2696
  %2796 = vmatprep.mubr.bf16.mxu0 %v2433
  %2797 = vmatmul.mubr.bf16.gmra.mrb[0].mxu0 %v2421
  %v2798 = vpop.f32.mrb[0].mxu0
  %v2799 = vadd.f32 0.0, %v2798
  %v2800 = vpop.f32.mrb[0].mxu0
  %v2801 = vadd.f32 0.0, %v2800
  %v2802 = vpop.f32.mrb[0].mxu0
  %v2803 = vadd.f32 0.0, %v2802
  %v2804 = vpop.f32.mrb[0].mxu0
  %v2805 = vadd.f32 0.0, %v2804
  %2806 = vmatprep.mubr.bf16.mxu0 %v2439
  %2807 = vmatmul.mubr.bf16.gmra.mrb[0].mxu0 %v2436
  %v2808 = vpop.f32.mrb[0].mxu0
  %v2809 = vadd.f32 0.0, %v2808
  %v2810 = vpop.f32.mrb[0].mxu0
  %v2811 = vadd.f32 0.0, %v2810
  %v2812 = vpop.f32.mrb[0].mxu0
  %v2813 = vpop.f32.mrb[0].mxu0
  %2814 = vdwg.mxu0
  %2815 = vmatprep.subr.bf16.mxu0 %v2639
  %2816 = vmatpush1.bf16.msra.mxu0 %v2638
  %2817 = vmatprep.subr.bf16.mxu0 %v2643
  %2818 = vmatpush1.bf16.msra.mxu0 %v2642
  %2819 = vmatprep.subr.bf16.mxu0 %v2647
  %2820 = vmatpush1.bf16.msra.mxu0 %v2646
  %2821 = vmatprep.subr.bf16.mxu0 %v2651
  %2822 = vmatpush1.bf16.msra.mxu0 %v2650
  %2823 = vmatprep.subr.bf16.mxu0 %v2655
  %2824 = vmatpush1.bf16.msra.mxu0 %v2654
  %2825 = vmatprep.subr.bf16.mxu0 %v2659
  %2826 = vmatpush1.bf16.msra.mxu0 %v2658
  %2827 = vmatprep.subr.bf16.mxu0 %v2663
  %2828 = vmatpush1.bf16.msra.mxu0 %v2662
  %2829 = vmatprep.subr.bf16.mxu0 %v2667
  %2830 = vmatpush1.bf16.msra.mxu0 %v2666
  %2831 = vmatprep.subr.bf16.mxu0 %v2671
  %2832 = vmatpush1.bf16.msra.mxu0 %v2670
  %2833 = vmatprep.subr.bf16.mxu0 %v2675
  %2834 = vmatpush1.bf16.msra.mxu0 %v2674
  %2835 = vmatprep.subr.bf16.mxu0 %v2679
  %2836 = vmatpush1.bf16.msra.mxu0 %v2678
  %2837 = vmatprep.subr.bf16.mxu0 %v2683
  %2838 = vmatpush1.bf16.msra.mxu0 %v2682
  %2839 = vmatprep.subr.bf16.mxu0 %v2687
  %2840 = vmatpush1.bf16.msra.mxu0 %v2686
  %2841 = vmatprep.subr.bf16.mxu0 %v2691
  %2842 = vmatpush1.bf16.msra.mxu0 %v2690
  %2843 = vmatprep.subr.bf16.mxu0 %v2695
  %2844 = vmatpush1.bf16.msra.mxu0 %v2694
  %2845 = vmatprep.subr.bf16.mxu0 %v2699
  %2846 = vmatpush1.bf16.msra.mxu0 %v2698
  %2847 = vmatprep.mubr.bf16.mxu0 %v2433
  %2848 = vmatmul.mubr.bf16.gmra.mrb[0].mxu0 %v2421
  %v2849 = vpop.f32.mrb[0].mxu0
  %v2850 = vadd.f32 0.0, %v2849
  %v2851 = vpop.f32.mrb[0].mxu0
  %v2852 = vadd.f32 0.0, %v2851
  %v2853 = vpop.f32.mrb[0].mxu0
  %v2854 = vadd.f32 0.0, %v2853
  %v2855 = vpop.f32.mrb[0].mxu0
  %v2856 = vadd.f32 0.0, %v2855
  %2857 = vmatprep.mubr.bf16.mxu0 %v2439
  %2858 = vmatmul.mubr.bf16.gmra.mrb[0].mxu0 %v2436
  %v2859 = vpop.f32.mrb[0].mxu0
  %v2860 = vadd.f32 0.0, %v2859
  %v2861 = vpop.f32.mrb[0].mxu0
  %v2862 = vadd.f32 0.0, %v2861
  %v2863 = vpop.f32.mrb[0].mxu0
  %v2864 = vpop.f32.mrb[0].mxu0
  %2865 = vdwg.mxu0
  %v2867 = vunpack.c.l.b16 %v2265
  %v2868 = vunpack.c.h.b16 %v2265
  %v2869 = vpack.c.b16 %v2867, %v2867
  %v2870 = vpack.c.b16 %v2868, %v2868
  %v2939 = vunpack.c.l.b16 %v2266
  %v2940 = vunpack.c.h.b16 %v2266
  %v2941 = vunpack.c.l.b16 %v2267
  %v2942 = vunpack.c.h.b16 %v2267
  %v2943 = vunpack.c.l.b16 %v2268
  %v2944 = vunpack.c.h.b16 %v2268
  %v2945 = vunpack.c.l.b16 %v2269
  %v2946 = vunpack.c.h.b16 %v2269
  %v2947 = vunpack.c.l.b16 %v2270
  %v2948 = vunpack.c.h.b16 %v2270
  %v2949 = vunpack.c.l.b16 %v2271
  %v2950 = vunpack.c.h.b16 %v2271
  %v2951 = vunpack.c.l.b16 %v2272
  %v2952 = vunpack.c.h.b16 %v2272
  %v2953 = vunpack.c.l.b16 %v2273
  %v2954 = vunpack.c.h.b16 %v2273
  %v2955 = vunpack.c.l.b16 %v2274
  %v2956 = vunpack.c.h.b16 %v2274
  %v2957 = vunpack.c.l.b16 %v2275
  %v2958 = vunpack.c.h.b16 %v2275
  %v2959 = vunpack.c.l.b16 %v2276
  %v2960 = vunpack.c.h.b16 %v2276
  %v2961 = vunpack.c.l.b16 %v2277
  %v2962 = vunpack.c.h.b16 %v2277
  %v2963 = vunpack.c.l.b16 %v2278
  %v2964 = vunpack.c.h.b16 %v2278
  %v2965 = vunpack.c.l.b16 %v2279
  %v2966 = vunpack.c.h.b16 %v2279
  %v2967 = vunpack.c.l.b16 %v2280
  %v2968 = vunpack.c.h.b16 %v2280
  %v2969 = vunpack.c.l.b16 %v2281
  %v2970 = vunpack.c.h.b16 %v2281
  %v2971 = vunpack.c.l.b16 %v2282
  %v2972 = vunpack.c.h.b16 %v2282
  %v2973 = vunpack.c.l.b16 %v2283
  %v2974 = vunpack.c.h.b16 %v2283
  %v2975 = vunpack.c.l.b16 %v2284
  %v2976 = vunpack.c.h.b16 %v2284
  %v2977 = vunpack.c.l.b16 %v2285
  %v2978 = vunpack.c.h.b16 %v2285
  %v2979 = vunpack.c.l.b16 %v2286
  %v2980 = vunpack.c.h.b16 %v2286
  %v2981 = vunpack.c.l.b16 %v2287
  %v2982 = vunpack.c.h.b16 %v2287
  %v2983 = vunpack.c.l.b16 %v2288
  %v2984 = vunpack.c.h.b16 %v2288
  %v2985 = vunpack.c.l.b16 %v2289
  %v2986 = vunpack.c.h.b16 %v2289
  %v2987 = vunpack.c.l.b16 %v2290
  %v2988 = vunpack.c.h.b16 %v2290
  %v2989 = vunpack.c.l.b16 %v2291
  %v2990 = vunpack.c.h.b16 %v2291
  %v2991 = vunpack.c.l.b16 %v2292
  %v2992 = vunpack.c.h.b16 %v2292
  %v2993 = vunpack.c.l.b16 %v2293
  %v2994 = vunpack.c.h.b16 %v2293
  %v2995 = vunpack.c.l.b16 %v2294
  %v2996 = vunpack.c.h.b16 %v2294
  %v2997 = vunpack.c.l.b16 %v2295
  %v2998 = vunpack.c.h.b16 %v2295
  %v2999 = vunpack.c.l.b16 %v2296
  %v3000 = vunpack.c.h.b16 %v2296
  %v3001 = vunpack.c.l.b16 %v2297
  %v3002 = vunpack.c.h.b16 %v2297
  %v3003 = vunpack.c.l.b16 %v2298
  %v3004 = vunpack.c.h.b16 %v2298
  %v3005 = vunpack.c.l.b16 %v2299
  %v3006 = vunpack.c.h.b16 %v2299
  %v3007 = vunpack.c.l.b16 %v2300
  %v3008 = vunpack.c.h.b16 %v2300
  %v3009 = vunpack.c.l.b16 %v2301
  %v3010 = vunpack.c.h.b16 %v2301
  %v3011 = vunpack.c.l.b16 %v2302
  %v3012 = vunpack.c.h.b16 %v2302
  %v3013 = vunpack.c.l.b16 %v2303
  %v3014 = vunpack.c.h.b16 %v2303
  %v3015 = vunpack.c.l.b16 %v2304
  %v3016 = vunpack.c.h.b16 %v2304
  %v3017 = vunpack.c.l.b16 %v2305
  %v3018 = vunpack.c.h.b16 %v2305
  %v3019 = vunpack.c.l.b16 %v2306
  %v3020 = vunpack.c.h.b16 %v2306
  %v3021 = vunpack.c.l.b16 %v2307
  %v3022 = vunpack.c.h.b16 %v2307
  %v3023 = vunpack.c.l.b16 %v2308
  %v3024 = vunpack.c.h.b16 %v2308
  %v3025 = vunpack.c.l.b16 %v2309
  %v3026 = vunpack.c.h.b16 %v2309
  %v3027 = vunpack.c.l.b16 %v2310
  %v3028 = vunpack.c.h.b16 %v2310
  %v3029 = vunpack.c.l.b16 %v2311
  %v3030 = vunpack.c.h.b16 %v2311
  %v3031 = vunpack.c.l.b16 %v2312
  %v3032 = vunpack.c.h.b16 %v2312
  %v3033 = vunpack.c.l.b16 %v2313
  %v3034 = vunpack.c.h.b16 %v2313
  %v3035 = vunpack.c.l.b16 %v2314
  %v3036 = vunpack.c.h.b16 %v2314
  %v3037 = vunpack.c.l.b16 %v2315
  %v3038 = vunpack.c.h.b16 %v2315
  %v3039 = vunpack.c.l.b16 %v2316
  %v3040 = vunpack.c.h.b16 %v2316
  %v3041 = vunpack.c.l.b16 %v2317
  %v3042 = vunpack.c.h.b16 %v2317
  %v3043 = vunpack.c.l.b16 %v2318
  %v3044 = vunpack.c.h.b16 %v2318
  %v3045 = vunpack.c.l.b16 %v2319
  %v3046 = vunpack.c.h.b16 %v2319
  %v3047 = vunpack.c.l.b16 %v2320
  %v3048 = vunpack.c.h.b16 %v2320
  %v3049 = vunpack.c.l.b16 %v2321
  %v3050 = vunpack.c.h.b16 %v2321
  %v3051 = vunpack.c.l.b16 %v2322
  %v3052 = vunpack.c.h.b16 %v2322
  %v3053 = vunpack.c.l.b16 %v2323
  %v3054 = vunpack.c.h.b16 %v2323
  %v3055 = vunpack.c.l.b16 %v2324
  %v3056 = vunpack.c.h.b16 %v2324
  %v3057 = vunpack.c.l.b16 %v2325
  %v3058 = vunpack.c.h.b16 %v2325
  %v3059 = vunpack.c.l.b16 %v2326
  %v3060 = vunpack.c.h.b16 %v2326
  %v3061 = vunpack.c.l.b16 %v2327
  %v3062 = vunpack.c.h.b16 %v2327
  %v3063 = vunpack.c.l.b16 %v2328
  %v3064 = vunpack.c.h.b16 %v2328
  %v3065 = vunpack.c.l.b16 %v2329
  %v3066 = vunpack.c.h.b16 %v2329
  %v3067 = vpack.c.b16 %v2943, %v2939
  %v3068 = vpack.c.b16 %v2944, %v2940
  %v3069 = vpack.c.b16 %v2945, %v2941
  %v3070 = vpack.c.b16 %v2946, %v2942
  %v3071 = vpack.c.b16 %v2951, %v2947
  %v3072 = vpack.c.b16 %v2952, %v2948
  %v3073 = vpack.c.b16 %v2953, %v2949
  %v3074 = vpack.c.b16 %v2954, %v2950
  %v3075 = vpack.c.b16 %v2959, %v2955
  %v3076 = vpack.c.b16 %v2960, %v2956
  %v3077 = vpack.c.b16 %v2961, %v2957
  %v3078 = vpack.c.b16 %v2962, %v2958
  %v3079 = vpack.c.b16 %v2967, %v2963
  %v3080 = vpack.c.b16 %v2968, %v2964
  %v3081 = vpack.c.b16 %v2969, %v2965
  %v3082 = vpack.c.b16 %v2970, %v2966
  %v3083 = vpack.c.b16 %v2975, %v2971
  %v3084 = vpack.c.b16 %v2976, %v2972
  %v3085 = vpack.c.b16 %v2977, %v2973
  %v3086 = vpack.c.b16 %v2978, %v2974
  %v3087 = vpack.c.b16 %v2983, %v2979
  %v3088 = vpack.c.b16 %v2984, %v2980
  %v3089 = vpack.c.b16 %v2985, %v2981
  %v3090 = vpack.c.b16 %v2986, %v2982
  %v3091 = vpack.c.b16 %v2991, %v2987
  %v3092 = vpack.c.b16 %v2992, %v2988
  %v3093 = vpack.c.b16 %v2993, %v2989
  %v3094 = vpack.c.b16 %v2994, %v2990
  %v3095 = vpack.c.b16 %v2999, %v2995
  %v3096 = vpack.c.b16 %v3000, %v2996
  %v3097 = vpack.c.b16 %v3001, %v2997
  %v3098 = vpack.c.b16 %v3002, %v2998
  %v3099 = vpack.c.b16 %v3007, %v3003
  %v3100 = vpack.c.b16 %v3008, %v3004
  %v3101 = vpack.c.b16 %v3009, %v3005
  %v3102 = vpack.c.b16 %v3010, %v3006
  %v3103 = vpack.c.b16 %v3015, %v3011
  %v3104 = vpack.c.b16 %v3016, %v3012
  %v3105 = vpack.c.b16 %v3017, %v3013
  %v3106 = vpack.c.b16 %v3018, %v3014
  %v3107 = vpack.c.b16 %v3023, %v3019
  %v3108 = vpack.c.b16 %v3024, %v3020
  %v3109 = vpack.c.b16 %v3025, %v3021
  %v3110 = vpack.c.b16 %v3026, %v3022
  %v3111 = vpack.c.b16 %v3031, %v3027
  %v3112 = vpack.c.b16 %v3032, %v3028
  %v3113 = vpack.c.b16 %v3033, %v3029
  %v3114 = vpack.c.b16 %v3034, %v3030
  %v3115 = vpack.c.b16 %v3039, %v3035
  %v3116 = vpack.c.b16 %v3040, %v3036
  %v3117 = vpack.c.b16 %v3041, %v3037
  %v3118 = vpack.c.b16 %v3042, %v3038
  %v3119 = vpack.c.b16 %v3047, %v3043
  %v3120 = vpack.c.b16 %v3048, %v3044
  %v3121 = vpack.c.b16 %v3049, %v3045
  %v3122 = vpack.c.b16 %v3050, %v3046
  %v3123 = vpack.c.b16 %v3055, %v3051
  %v3124 = vpack.c.b16 %v3056, %v3052
  %v3125 = vpack.c.b16 %v3057, %v3053
  %v3126 = vpack.c.b16 %v3058, %v3054
  %v3127 = vpack.c.b16 %v3063, %v3059
  %v3128 = vpack.c.b16 %v3064, %v3060
  %v3129 = vpack.c.b16 %v3065, %v3061
  %v3130 = vpack.c.b16 %v3066, %v3062
  %3195 = vmatprep.subr.bf16.mxu0 %v3068
  %3196 = vmatpush1.bf16.msra.mxu0 %v3067
  %3197 = vmatprep.subr.bf16.mxu0 %v3072
  %3198 = vmatpush1.bf16.msra.mxu0 %v3071
  %3199 = vmatprep.subr.bf16.mxu0 %v3076
  %3200 = vmatpush1.bf16.msra.mxu0 %v3075
  %3201 = vmatprep.subr.bf16.mxu0 %v3080
  %3202 = vmatpush1.bf16.msra.mxu0 %v3079
  %3203 = vmatprep.subr.bf16.mxu0 %v3084
  %3204 = vmatpush1.bf16.msra.mxu0 %v3083
  %3205 = vmatprep.subr.bf16.mxu0 %v3088
  %3206 = vmatpush1.bf16.msra.mxu0 %v3087
  %3207 = vmatprep.subr.bf16.mxu0 %v3092
  %3208 = vmatpush1.bf16.msra.mxu0 %v3091
  %3209 = vmatprep.subr.bf16.mxu0 %v3096
  %3210 = vmatpush1.bf16.msra.mxu0 %v3095
  %3211 = vmatprep.subr.bf16.mxu0 %v3100
  %3212 = vmatpush1.bf16.msra.mxu0 %v3099
  %3213 = vmatprep.subr.bf16.mxu0 %v3104
  %3214 = vmatpush1.bf16.msra.mxu0 %v3103
  %3215 = vmatprep.subr.bf16.mxu0 %v3108
  %3216 = vmatpush1.bf16.msra.mxu0 %v3107
  %3217 = vmatprep.subr.bf16.mxu0 %v3112
  %3218 = vmatpush1.bf16.msra.mxu0 %v3111
  %3219 = vmatprep.subr.bf16.mxu0 %v3116
  %3220 = vmatpush1.bf16.msra.mxu0 %v3115
  %3221 = vmatprep.subr.bf16.mxu0 %v3120
  %3222 = vmatpush1.bf16.msra.mxu0 %v3119
  %3223 = vmatprep.subr.bf16.mxu0 %v3124
  %3224 = vmatpush1.bf16.msra.mxu0 %v3123
  %3225 = vmatprep.subr.bf16.mxu0 %v3128
  %3226 = vmatpush1.bf16.msra.mxu0 %v3127
  %3227 = vmatprep.mubr.bf16.mxu0 %v2406
  %3228 = vmatmul.mubr.bf16.gmra.mrb[0].mxu0 %v2405
  %v3229 = vpop.f32.mrb[0].mxu0
  %v3230 = vadd.f32 %v2799, %v3229
  %v3231 = vpop.f32.mrb[0].mxu0
  %v3232 = vadd.f32 %v2801, %v3231
  %v3233 = vpop.f32.mrb[0].mxu0
  %v3234 = vadd.f32 %v2803, %v3233
  %v3235 = vpop.f32.mrb[0].mxu0
  %v3236 = vadd.f32 %v2805, %v3235
  %3237 = vmatprep.mubr.bf16.mxu0 %v2870
  %3238 = vmatmul.mubr.bf16.gmra.mrb[0].mxu0 %v2869
  %v3239 = vpop.f32.mrb[0].mxu0
  %v3240 = vadd.f32 %v2809, %v3239
  %v3241 = vpop.f32.mrb[0].mxu0
  %v3242 = vadd.f32 %v2811, %v3241
  %v3243 = vpop.f32.mrb[0].mxu0
  %v3244 = vpop.f32.mrb[0].mxu0
  %3245 = vdwg.mxu0
  %3246 = vmatprep.subr.bf16.mxu0 %v3070
  %3247 = vmatpush1.bf16.msra.mxu0 %v3069
  %3248 = vmatprep.subr.bf16.mxu0 %v3074
  %3249 = vmatpush1.bf16.msra.mxu0 %v3073
  %3250 = vmatprep.subr.bf16.mxu0 %v3078
  %3251 = vmatpush1.bf16.msra.mxu0 %v3077
  %3252 = vmatprep.subr.bf16.mxu0 %v3082
  %3253 = vmatpush1.bf16.msra.mxu0 %v3081
  %3254 = vmatprep.subr.bf16.mxu0 %v3086
  %3255 = vmatpush1.bf16.msra.mxu0 %v3085
  %3256 = vmatprep.subr.bf16.mxu0 %v3090
  %3257 = vmatpush1.bf16.msra.mxu0 %v3089
  %3258 = vmatprep.subr.bf16.mxu0 %v3094
  %3259 = vmatpush1.bf16.msra.mxu0 %v3093
  %3260 = vmatprep.subr.bf16.mxu0 %v3098
  %3261 = vmatpush1.bf16.msra.mxu0 %v3097
  %3262 = vmatprep.subr.bf16.mxu0 %v3102
  %3263 = vmatpush1.bf16.msra.mxu0 %v3101
  %3264 = vmatprep.subr.bf16.mxu0 %v3106
  %3265 = vmatpush1.bf16.msra.mxu0 %v3105
  %3266 = vmatprep.subr.bf16.mxu0 %v3110
  %3267 = vmatpush1.bf16.msra.mxu0 %v3109
  %3268 = vmatprep.subr.bf16.mxu0 %v3114
  %3269 = vmatpush1.bf16.msra.mxu0 %v3113
  %3270 = vmatprep.subr.bf16.mxu0 %v3118
  %3271 = vmatpush1.bf16.msra.mxu0 %v3117
  %3272 = vmatprep.subr.bf16.mxu0 %v3122
  %3273 = vmatpush1.bf16.msra.mxu0 %v3121
  %3274 = vmatprep.subr.bf16.mxu0 %v3126
  %3275 = vmatpush1.bf16.msra.mxu0 %v3125
  %3276 = vmatprep.subr.bf16.mxu0 %v3130
  %3277 = vmatpush1.bf16.msra.mxu0 %v3129
  %3278 = vmatprep.mubr.bf16.mxu0 %v2406
  %3279 = vmatmul.mubr.bf16.gmra.mrb[0].mxu0 %v2405
  %v3280 = vpop.f32.mrb[0].mxu0
  %v3281 = vadd.f32 %v2850, %v3280
  %v3282 = vpop.f32.mrb[0].mxu0
  %v3283 = vadd.f32 %v2852, %v3282
  %v3284 = vpop.f32.mrb[0].mxu0
  %v3285 = vadd.f32 %v2854, %v3284
  %v3286 = vpop.f32.mrb[0].mxu0
  %v3287 = vadd.f32 %v2856, %v3286
  %3288 = vmatprep.mubr.bf16.mxu0 %v2870
  %3289 = vmatmul.mubr.bf16.gmra.mrb[0].mxu0 %v2869
  %v3290 = vpop.f32.mrb[0].mxu0
  %v3291 = vadd.f32 %v2860, %v3290
  %v3292 = vpop.f32.mrb[0].mxu0
  %v3293 = vadd.f32 %v2862, %v3292
  %v3294 = vpop.f32.mrb[0].mxu0
  %v3295 = vpop.f32.mrb[0].mxu0
  %3296 = vdwg.mxu0
  %v3297 = vld [vmem:[#allocation3] sm:$0xee]
  %s3298 = scalar_lea.vmem %s9, 1024
  %v3299 = vld [vmem:[%s3298] sm:$0xff]
  %v3300 = vld [vmem:[%s3298 + $0x8] sm:$0xff]
  %v3301 = vld [vmem:[%s3298 + $0x10] sm:$0xff]
  %v3302 = vld [vmem:[%s3298 + $0x18] sm:$0xff]
  %v3303 = vld [vmem:[%s3298 + $0x20] sm:$0xff]
  %v3304 = vld [vmem:[%s3298 + $0x28] sm:$0xff]
  %v3305 = vld [vmem:[%s3298 + $0x30] sm:$0xff]
  %v3306 = vld [vmem:[%s3298 + $0x38] sm:$0xff]
  %v3307 = vld [vmem:[%s3298 + $0x40] sm:$0xff]
  %v3308 = vld [vmem:[%s3298 + $0x48] sm:$0xff]
  %v3309 = vld [vmem:[%s3298 + $0x50] sm:$0xff]
  %v3310 = vld [vmem:[%s3298 + $0x58] sm:$0xff]
  %v3311 = vld [vmem:[%s3298 + $0x60] sm:$0xff]
  %v3312 = vld [vmem:[%s3298 + $0x68] sm:$0xff]
  %v3313 = vld [vmem:[%s3298 + $0x70] sm:$0xff]
  %v3314 = vld [vmem:[%s3298 + $0x78] sm:$0xff]
  %v3315 = vld [vmem:[%s3298 + $0x80] sm:$0xff]
  %v3316 = vld [vmem:[%s3298 + $0x88] sm:$0xff]
  %v3317 = vld [vmem:[%s3298 + $0x90] sm:$0xff]
  %v3318 = vld [vmem:[%s3298 + $0x98] sm:$0xff]
  %v3319 = vld [vmem:[%s3298 + $0xa0] sm:$0xff]
  %v3320 = vld [vmem:[%s3298 + $0xa8] sm:$0xff]
  %v3321 = vld [vmem:[%s3298 + $0xb0] sm:$0xff]
  %v3322 = vld [vmem:[%s3298 + $0xb8] sm:$0xff]
  %v3323 = vld [vmem:[%s3298 + $0xc0] sm:$0xff]
  %v3324 = vld [vmem:[%s3298 + $0xc8] sm:$0xff]
  %v3325 = vld [vmem:[%s3298 + $0xd0] sm:$0xff]
  %v3326 = vld [vmem:[%s3298 + $0xd8] sm:$0xff]
  %v3327 = vld [vmem:[%s3298 + $0xe0] sm:$0xff]
  %v3328 = vld [vmem:[%s3298 + $0xe8] sm:$0xff]
  %v3329 = vld [vmem:[%s3298 + $0xf0] sm:$0xff]
  %v3330 = vld [vmem:[%s3298 + $0xf8] sm:$0xff]
  %v3331 = vld [vmem:[%s3298 + $0x100] sm:$0xff]
  %v3332 = vld [vmem:[%s3298 + $0x108] sm:$0xff]
  %v3333 = vld [vmem:[%s3298 + $0x110] sm:$0xff]
  %v3334 = vld [vmem:[%s3298 + $0x118] sm:$0xff]
  %v3335 = vld [vmem:[%s3298 + $0x120] sm:$0xff]
  %v3336 = vld [vmem:[%s3298 + $0x128] sm:$0xff]
  %v3337 = vld [vmem:[%s3298 + $0x130] sm:$0xff]
  %v3338 = vld [vmem:[%s3298 + $0x138] sm:$0xff]
  %v3339 = vld [vmem:[%s3298 + $0x140] sm:$0xff]
  %v3340 = vld [vmem:[%s3298 + $0x148] sm:$0xff]
  %v3341 = vld [vmem:[%s3298 + $0x150] sm:$0xff]
  %v3342 = vld [vmem:[%s3298 + $0x158] sm:$0xff]
  %v3343 = vld [vmem:[%s3298 + $0x160] sm:$0xff]
  %v3344 = vld [vmem:[%s3298 + $0x168] sm:$0xff]
  %v3345 = vld [vmem:[%s3298 + $0x170] sm:$0xff]
  %v3346 = vld [vmem:[%s3298 + $0x178] sm:$0xff]
  %v3347 = vld [vmem:[%s3298 + $0x180] sm:$0xff]
  %v3348 = vld [vmem:[%s3298 + $0x188] sm:$0xff]
  %v3349 = vld [vmem:[%s3298 + $0x190] sm:$0xff]
  %v3350 = vld [vmem:[%s3298 + $0x198] sm:$0xff]
  %v3351 = vld [vmem:[%s3298 + $0x1a0] sm:$0xff]
  %v3352 = vld [vmem:[%s3298 + $0x1a8] sm:$0xff]
  %v3353 = vld [vmem:[%s3298 + $0x1b0] sm:$0xff]
  %v3354 = vld [vmem:[%s3298 + $0x1b8] sm:$0xff]
  %v3355 = vld [vmem:[%s3298 + $0x1c0] sm:$0xff]
  %v3356 = vld [vmem:[%s3298 + $0x1c8] sm:$0xff]
  %v3357 = vld [vmem:[%s3298 + $0x1d0] sm:$0xff]
  %v3358 = vld [vmem:[%s3298 + $0x1d8] sm:$0xff]
  %v3359 = vld [vmem:[%s3298 + $0x1e0] sm:$0xff]
  %v3360 = vld [vmem:[%s3298 + $0x1e8] sm:$0xff]
  %v3361 = vld [vmem:[%s3298 + $0x1f0] sm:$0xff]
  %v3362 = vld [vmem:[%s3298 + $0x1f8] sm:$0xff]
  %v3364 = vunpack.c.l.b16 %v3297
  %v3365 = vunpack.c.h.b16 %v3297
  %v3366 = vpack.c.b16 %v2401, %v3364
  %v3367 = vpack.c.b16 %v2402, %v3365
  %vm3368 = vcmask 1046528
  %v3369 = vrot.slane %v3366, 1
  %v3370 = vrot.slane %v2407, 1
  %v3371 = vsel %vm3368, %v3369, %v3370
  %v3372 = vrot.slane %v3367, 1
  %v3373 = vrot.slane %v2408, 1
  %v3374 = vsel %vm3368, %v3372, %v3373
  %v3443 = vunpack.c.l.b16 %v3299
  %v3444 = vunpack.c.h.b16 %v3299
  %v3445 = vunpack.c.l.b16 %v3300
  %v3446 = vunpack.c.h.b16 %v3300
  %v3447 = vunpack.c.l.b16 %v3301
  %v3448 = vunpack.c.h.b16 %v3301
  %v3449 = vunpack.c.l.b16 %v3302
  %v3450 = vunpack.c.h.b16 %v3302
  %v3451 = vunpack.c.l.b16 %v3303
  %v3452 = vunpack.c.h.b16 %v3303
  %v3453 = vunpack.c.l.b16 %v3304
  %v3454 = vunpack.c.h.b16 %v3304
  %v3455 = vunpack.c.l.b16 %v3305
  %v3456 = vunpack.c.h.b16 %v3305
  %v3457 = vunpack.c.l.b16 %v3306
  %v3458 = vunpack.c.h.b16 %v3306
  %v3459 = vunpack.c.l.b16 %v3307
  %v3460 = vunpack.c.h.b16 %v3307
  %v3461 = vunpack.c.l.b16 %v3308
  %v3462 = vunpack.c.h.b16 %v3308
  %v3463 = vunpack.c.l.b16 %v3309
  %v3464 = vunpack.c.h.b16 %v3309
  %v3465 = vunpack.c.l.b16 %v3310
  %v3466 = vunpack.c.h.b16 %v3310
  %v3467 = vunpack.c.l.b16 %v3311
  %v3468 = vunpack.c.h.b16 %v3311
  %v3469 = vunpack.c.l.b16 %v3312
  %v3470 = vunpack.c.h.b16 %v3312
  %v3471 = vunpack.c.l.b16 %v3313
  %v3472 = vunpack.c.h.b16 %v3313
  %v3473 = vunpack.c.l.b16 %v3314
  %v3474 = vunpack.c.h.b16 %v3314
  %v3475 = vunpack.c.l.b16 %v3315
  %v3476 = vunpack.c.h.b16 %v3315
  %v3477 = vunpack.c.l.b16 %v3316
  %v3478 = vunpack.c.h.b16 %v3316
  %v3479 = vunpack.c.l.b16 %v3317
  %v3480 = vunpack.c.h.b16 %v3317
  %v3481 = vunpack.c.l.b16 %v3318
  %v3482 = vunpack.c.h.b16 %v3318
  %v3483 = vunpack.c.l.b16 %v3319
  %v3484 = vunpack.c.h.b16 %v3319
  %v3485 = vunpack.c.l.b16 %v3320
  %v3486 = vunpack.c.h.b16 %v3320
  %v3487 = vunpack.c.l.b16 %v3321
  %v3488 = vunpack.c.h.b16 %v3321
  %v3489 = vunpack.c.l.b16 %v3322
  %v3490 = vunpack.c.h.b16 %v3322
  %v3491 = vunpack.c.l.b16 %v3323
  %v3492 = vunpack.c.h.b16 %v3323
  %v3493 = vunpack.c.l.b16 %v3324
  %v3494 = vunpack.c.h.b16 %v3324
  %v3495 = vunpack.c.l.b16 %v3325
  %v3496 = vunpack.c.h.b16 %v3325
  %v3497 = vunpack.c.l.b16 %v3326
  %v3498 = vunpack.c.h.b16 %v3326
  %v3499 = vunpack.c.l.b16 %v3327
  %v3500 = vunpack.c.h.b16 %v3327
  %v3501 = vunpack.c.l.b16 %v3328
  %v3502 = vunpack.c.h.b16 %v3328
  %v3503 = vunpack.c.l.b16 %v3329
  %v3504 = vunpack.c.h.b16 %v3329
  %v3505 = vunpack.c.l.b16 %v3330
  %v3506 = vunpack.c.h.b16 %v3330
  %v3507 = vunpack.c.l.b16 %v3331
  %v3508 = vunpack.c.h.b16 %v3331
  %v3509 = vunpack.c.l.b16 %v3332
  %v3510 = vunpack.c.h.b16 %v3332
  %v3511 = vunpack.c.l.b16 %v3333
  %v3512 = vunpack.c.h.b16 %v3333
  %v3513 = vunpack.c.l.b16 %v3334
  %v3514 = vunpack.c.h.b16 %v3334
  %v3515 = vunpack.c.l.b16 %v3335
  %v3516 = vunpack.c.h.b16 %v3335
  %v3517 = vunpack.c.l.b16 %v3336
  %v3518 = vunpack.c.h.b16 %v3336
  %v3519 = vunpack.c.l.b16 %v3337
  %v3520 = vunpack.c.h.b16 %v3337
  %v3521 = vunpack.c.l.b16 %v3338
  %v3522 = vunpack.c.h.b16 %v3338
  %v3523 = vunpack.c.l.b16 %v3339
  %v3524 = vunpack.c.h.b16 %v3339
  %v3525 = vunpack.c.l.b16 %v3340
  %v3526 = vunpack.c.h.b16 %v3340
  %v3527 = vunpack.c.l.b16 %v3341
  %v3528 = vunpack.c.h.b16 %v3341
  %v3529 = vunpack.c.l.b16 %v3342
  %v3530 = vunpack.c.h.b16 %v3342
  %v3531 = vunpack.c.l.b16 %v3343
  %v3532 = vunpack.c.h.b16 %v3343
  %v3533 = vunpack.c.l.b16 %v3344
  %v3534 = vunpack.c.h.b16 %v3344
  %v3535 = vunpack.c.l.b16 %v3345
  %v3536 = vunpack.c.h.b16 %v3345
  %v3537 = vunpack.c.l.b16 %v3346
  %v3538 = vunpack.c.h.b16 %v3346
  %v3539 = vunpack.c.l.b16 %v3347
  %v3540 = vunpack.c.h.b16 %v3347
  %v3541 = vunpack.c.l.b16 %v3348
  %v3542 = vunpack.c.h.b16 %v3348
  %v3543 = vunpack.c.l.b16 %v3349
  %v3544 = vunpack.c.h.b16 %v3349
  %v3545 = vunpack.c.l.b16 %v3350
  %v3546 = vunpack.c.h.b16 %v3350
  %v3547 = vunpack.c.l.b16 %v3351
  %v3548 = vunpack.c.h.b16 %v3351
  %v3549 = vunpack.c.l.b16 %v3352
  %v3550 = vunpack.c.h.b16 %v3352
  %v3551 = vunpack.c.l.b16 %v3353
  %v3552 = vunpack.c.h.b16 %v3353
  %v3553 = vunpack.c.l.b16 %v3354
  %v3554 = vunpack.c.h.b16 %v3354
  %v3555 = vunpack.c.l.b16 %v3355
  %v3556 = vunpack.c.h.b16 %v3355
  %v3557 = vunpack.c.l.b16 %v3356
  %v3558 = vunpack.c.h.b16 %v3356
  %v3559 = vunpack.c.l.b16 %v3357
  %v3560 = vunpack.c.h.b16 %v3357
  %v3561 = vunpack.c.l.b16 %v3358
  %v3562 = vunpack.c.h.b16 %v3358
  %v3563 = vunpack.c.l.b16 %v3359
  %v3564 = vunpack.c.h.b16 %v3359
  %v3565 = vunpack.c.l.b16 %v3360
  %v3566 = vunpack.c.h.b16 %v3360
  %v3567 = vunpack.c.l.b16 %v3361
  %v3568 = vunpack.c.h.b16 %v3361
  %v3569 = vunpack.c.l.b16 %v3362
  %v3570 = vunpack.c.h.b16 %v3362
  %v3571 = vpack.c.b16 %v3447, %v3443
  %v3572 = vpack.c.b16 %v3448, %v3444
  %v3573 = vpack.c.b16 %v3449, %v3445
  %v3574 = vpack.c.b16 %v3450, %v3446
  %v3575 = vpack.c.b16 %v3455, %v3451
  %v3576 = vpack.c.b16 %v3456, %v3452
  %v3577 = vpack.c.b16 %v3457, %v3453
  %v3578 = vpack.c.b16 %v3458, %v3454
  %v3579 = vpack.c.b16 %v3463, %v3459
  %v3580 = vpack.c.b16 %v3464, %v3460
  %v3581 = vpack.c.b16 %v3465, %v3461
  %v3582 = vpack.c.b16 %v3466, %v3462
  %v3583 = vpack.c.b16 %v3471, %v3467
  %v3584 = vpack.c.b16 %v3472, %v3468
  %v3585 = vpack.c.b16 %v3473, %v3469
  %v3586 = vpack.c.b16 %v3474, %v3470
  %v3587 = vpack.c.b16 %v3479, %v3475
  %v3588 = vpack.c.b16 %v3480, %v3476
  %v3589 = vpack.c.b16 %v3481, %v3477
  %v3590 = vpack.c.b16 %v3482, %v3478
  %v3591 = vpack.c.b16 %v3487, %v3483
  %v3592 = vpack.c.b16 %v3488, %v3484
  %v3593 = vpack.c.b16 %v3489, %v3485
  %v3594 = vpack.c.b16 %v3490, %v3486
  %v3595 = vpack.c.b16 %v3495, %v3491
  %v3596 = vpack.c.b16 %v3496, %v3492
  %v3597 = vpack.c.b16 %v3497, %v3493
  %v3598 = vpack.c.b16 %v3498, %v3494
  %v3599 = vpack.c.b16 %v3503, %v3499
  %v3600 = vpack.c.b16 %v3504, %v3500
  %v3601 = vpack.c.b16 %v3505, %v3501
  %v3602 = vpack.c.b16 %v3506, %v3502
  %v3603 = vpack.c.b16 %v3511, %v3507
  %v3604 = vpack.c.b16 %v3512, %v3508
  %v3605 = vpack.c.b16 %v3513, %v3509
  %v3606 = vpack.c.b16 %v3514, %v3510
  %v3607 = vpack.c.b16 %v3519, %v3515
  %v3608 = vpack.c.b16 %v3520, %v3516
  %v3609 = vpack.c.b16 %v3521, %v3517
  %v3610 = vpack.c.b16 %v3522, %v3518
  %v3611 = vpack.c.b16 %v3527, %v3523
  %v3612 = vpack.c.b16 %v3528, %v3524
  %v3613 = vpack.c.b16 %v3529, %v3525
  %v3614 = vpack.c.b16 %v3530, %v3526
  %v3615 = vpack.c.b16 %v3535, %v3531
  %v3616 = vpack.c.b16 %v3536, %v3532
  %v3617 = vpack.c.b16 %v3537, %v3533
  %v3618 = vpack.c.b16 %v3538, %v3534
  %v3619 = vpack.c.b16 %v3543, %v3539
  %v3620 = vpack.c.b16 %v3544, %v3540
  %v3621 = vpack.c.b16 %v3545, %v3541
  %v3622 = vpack.c.b16 %v3546, %v3542
  %v3623 = vpack.c.b16 %v3551, %v3547
  %v3624 = vpack.c.b16 %v3552, %v3548
  %v3625 = vpack.c.b16 %v3553, %v3549
  %v3626 = vpack.c.b16 %v3554, %v3550
  %v3627 = vpack.c.b16 %v3559, %v3555
  %v3628 = vpack.c.b16 %v3560, %v3556
  %v3629 = vpack.c.b16 %v3561, %v3557
  %v3630 = vpack.c.b16 %v3562, %v3558
  %v3631 = vpack.c.b16 %v3567, %v3563
  %v3632 = vpack.c.b16 %v3568, %v3564
  %v3633 = vpack.c.b16 %v3569, %v3565
  %v3634 = vpack.c.b16 %v3570, %v3566
  %3699 = vmatprep.subr.bf16.mxu0 %v3572
  %3700 = vmatpush1.bf16.msra.mxu0 %v3571
  %3701 = vmatprep.subr.bf16.mxu0 %v3576
  %3702 = vmatpush1.bf16.msra.mxu0 %v3575
  %3703 = vmatprep.subr.bf16.mxu0 %v3580
  %3704 = vmatpush1.bf16.msra.mxu0 %v3579
  %3705 = vmatprep.subr.bf16.mxu0 %v3584
  %3706 = vmatpush1.bf16.msra.mxu0 %v3583
  %3707 = vmatprep.subr.bf16.mxu0 %v3588
  %3708 = vmatpush1.bf16.msra.mxu0 %v3587
  %3709 = vmatprep.subr.bf16.mxu0 %v3592
  %3710 = vmatpush1.bf16.msra.mxu0 %v3591
  %3711 = vmatprep.subr.bf16.mxu0 %v3596
  %3712 = vmatpush1.bf16.msra.mxu0 %v3595
  %3713 = vmatprep.subr.bf16.mxu0 %v3600
  %3714 = vmatpush1.bf16.msra.mxu0 %v3599
  %3715 = vmatprep.subr.bf16.mxu0 %v3604
  %3716 = vmatpush1.bf16.msra.mxu0 %v3603
  %3717 = vmatprep.subr.bf16.mxu0 %v3608
  %3718 = vmatpush1.bf16.msra.mxu0 %v3607
  %3719 = vmatprep.subr.bf16.mxu0 %v3612
  %3720 = vmatpush1.bf16.msra.mxu0 %v3611
  %3721 = vmatprep.subr.bf16.mxu0 %v3616
  %3722 = vmatpush1.bf16.msra.mxu0 %v3615
  %3723 = vmatprep.subr.bf16.mxu0 %v3620
  %3724 = vmatpush1.bf16.msra.mxu0 %v3619
  %3725 = vmatprep.subr.bf16.mxu0 %v3624
  %3726 = vmatpush1.bf16.msra.mxu0 %v3623
  %3727 = vmatprep.subr.bf16.mxu0 %v3628
  %3728 = vmatpush1.bf16.msra.mxu0 %v3627
  %3729 = vmatprep.subr.bf16.mxu0 %v3632
  %3730 = vmatpush1.bf16.msra.mxu0 %v3631
  %3731 = vmatprep.mubr.bf16.mxu0 %v3374
  %3732 = vmatmul.mubr.bf16.gmra.mrb[0].mxu0 %v3371
  %v3733 = vpop.f32.mrb[0].mxu0
  %v3734 = vadd.f32 0.0, %v3733
  %v3735 = vpop.f32.mrb[0].mxu0
  %v3736 = vadd.f32 0.0, %v3735
  %v3737 = vpop.f32.mrb[0].mxu0
  %v3738 = vadd.f32 0.0, %v3737
  %v3739 = vpop.f32.mrb[0].mxu0
  %v3740 = vadd.f32 0.0, %v3739
  %3741 = vmatprep.mubr.bf16.mxu0 %v3373
  %3742 = vmatmul.mubr.bf16.gmra.mrb[0].mxu0 %v3370
  %v3743 = vpop.f32.mrb[0].mxu0
  %v3744 = vadd.f32 0.0, %v3743
  %v3745 = vpop.f32.mrb[0].mxu0
  %v3746 = vadd.f32 0.0, %v3745
  %v3747 = vpop.f32.mrb[0].mxu0
  %v3748 = vpop.f32.mrb[0].mxu0
  %3749 = vdwg.mxu0
  %3750 = vmatprep.subr.bf16.mxu0 %v3574
  %3751 = vmatpush1.bf16.msra.mxu0 %v3573
  %3752 = vmatprep.subr.bf16.mxu0 %v3578
  %3753 = vmatpush1.bf16.msra.mxu0 %v3577
  %3754 = vmatprep.subr.bf16.mxu0 %v3582
  %3755 = vmatpush1.bf16.msra.mxu0 %v3581
  %3756 = vmatprep.subr.bf16.mxu0 %v3586
  %3757 = vmatpush1.bf16.msra.mxu0 %v3585
  %3758 = vmatprep.subr.bf16.mxu0 %v3590
  %3759 = vmatpush1.bf16.msra.mxu0 %v3589
  %3760 = vmatprep.subr.bf16.mxu0 %v3594
  %3761 = vmatpush1.bf16.msra.mxu0 %v3593
  %3762 = vmatprep.subr.bf16.mxu0 %v3598
  %3763 = vmatpush1.bf16.msra.mxu0 %v3597
  %3764 = vmatprep.subr.bf16.mxu0 %v3602
  %3765 = vmatpush1.bf16.msra.mxu0 %v3601
  %3766 = vmatprep.subr.bf16.mxu0 %v3606
  %3767 = vmatpush1.bf16.msra.mxu0 %v3605
  %3768 = vmatprep.subr.bf16.mxu0 %v3610
  %3769 = vmatpush1.bf16.msra.mxu0 %v3609
  %3770 = vmatprep.subr.bf16.mxu0 %v3614
  %3771 = vmatpush1.bf16.msra.mxu0 %v3613
  %3772 = vmatprep.subr.bf16.mxu0 %v3618
  %3773 = vmatpush1.bf16.msra.mxu0 %v3617
  %3774 = vmatprep.subr.bf16.mxu0 %v3622
  %3775 = vmatpush1.bf16.msra.mxu0 %v3621
  %3776 = vmatprep.subr.bf16.mxu0 %v3626
  %3777 = vmatpush1.bf16.msra.mxu0 %v3625
  %3778 = vmatprep.subr.bf16.mxu0 %v3630
  %3779 = vmatpush1.bf16.msra.mxu0 %v3629
  %3780 = vmatprep.subr.bf16.mxu0 %v3634
  %3781 = vmatpush1.bf16.msra.mxu0 %v3633
  %3782 = vmatprep.mubr.bf16.mxu0 %v3374
  %3783 = vmatmul.mubr.bf16.gmra.mrb[0].mxu0 %v3371
  %v3784 = vpop.f32.mrb[0].mxu0
  %v3785 = vadd.f32 0.0, %v3784
  %v3786 = vpop.f32.mrb[0].mxu0
  %v3787 = vadd.f32 0.0, %v3786
  %v3788 = vpop.f32.mrb[0].mxu0
  %v3789 = vadd.f32 0.0, %v3788
  %v3790 = vpop.f32.mrb[0].mxu0
  %v3791 = vadd.f32 0.0, %v3790
  %3792 = vmatprep.mubr.bf16.mxu0 %v3373
  %3793 = vmatmul.mubr.bf16.gmra.mrb[0].mxu0 %v3370
  %v3794 = vpop.f32.mrb[0].mxu0
  %v3795 = vadd.f32 0.0, %v3794
  %v3796 = vpop.f32.mrb[0].mxu0
  %v3797 = vadd.f32 0.0, %v3796
  %v3798 = vpop.f32.mrb[0].mxu0
  %v3799 = vpop.f32.mrb[0].mxu0
  %3800 = vdwg.mxu0
  %v3801 = vadd.f32 %v3230, %v3734
  %v3802 = vadd.f32 %v3232, %v3736
  %v3803 = vadd.f32 %v3281, %v3785
  %v3804 = vadd.f32 %v3283, %v3787
  %v3805 = vadd.f32 %v3234, %v3738
  %v3806 = vadd.f32 %v3236, %v3740
  %v3807 = vadd.f32 %v3285, %v3789
  %v3808 = vadd.f32 %v3287, %v3791
  %v3809 = vadd.f32 %v3240, %v3744
  %v3810 = vadd.f32 %v3242, %v3746
  %v3811 = vadd.f32 %v3291, %v3795
  %v3812 = vadd.f32 %v3293, %v3797
  %v3813 = vrot.slane %v3801, 4
  %v3814 = vadd.f32 %v3801, %v3813
  %v3815 = vrot.slane %v3814, 2
  %v3816 = vadd.f32 %v3814, %v3815
  %v3817 = vrot.slane %v3816, 1
  %v3818 = vadd.f32 %v3816, %v3817
  %v3819 = vrot.slane %v3802, 4
  %v3820 = vadd.f32 %v3802, %v3819
  %v3821 = vrot.slane %v3820, 2
  %v3822 = vadd.f32 %v3820, %v3821
  %v3823 = vrot.slane %v3822, 1
  %v3824 = vadd.f32 %v3822, %v3823
  %v3825 = vadd.f32 %v3818, 0.0
  %v3826 = vadd.f32 %v3824, 0.0
  %v3827 = vrot.slane %v3803, 4
  %v3828 = vadd.f32 %v3803, %v3827
  %v3829 = vrot.slane %v3828, 2
  %v3830 = vadd.f32 %v3828, %v3829
  %v3831 = vrot.slane %v3830, 1
  %v3832 = vadd.f32 %v3830, %v3831
  %v3833 = vrot.slane %v3804, 4
  %v3834 = vadd.f32 %v3804, %v3833
  %v3835 = vrot.slane %v3834, 2
  %v3836 = vadd.f32 %v3834, %v3835
  %v3837 = vrot.slane %v3836, 1
  %v3838 = vadd.f32 %v3836, %v3837
  %v3839 = vadd.f32 %v3825, %v3832
  %v3840 = vadd.f32 %v3826, %v3838
  %vm3845 = vcmask 1045504
  %v3846 = vrot.slane %v3805, 2
  %v3847 = vrot.slane %v3809, 2
  %v3848 = vsel %vm3845, %v3846, %v3847
  %v3849 = vrot.slane %v3806, 2
  %v3850 = vrot.slane %v3810, 2
  %v3851 = vsel %vm3845, %v3849, %v3850
  %v3854 = vrot.slane %v3848, 4
  %v3855 = vadd.f32 %v3848, %v3854
  %v3856 = vrot.slane %v3855, 2
  %v3857 = vadd.f32 %v3855, %v3856
  %v3858 = vrot.slane %v3857, 1
  %v3859 = vadd.f32 %v3857, %v3858
  %v3860 = vrot.slane %v3851, 4
  %v3861 = vadd.f32 %v3851, %v3860
  %v3862 = vrot.slane %v3861, 2
  %v3863 = vadd.f32 %v3861, %v3862
  %v3864 = vrot.slane %v3863, 1
  %v3865 = vadd.f32 %v3863, %v3864
  %v3866 = vadd.f32 %v3839, %v3859
  %v3867 = vadd.f32 %v3840, %v3865
  %v3872 = vrot.slane %v3807, 2
  %v3873 = vrot.slane %v3811, 2
  %v3874 = vsel %vm3845, %v3872, %v3873
  %v3875 = vrot.slane %v3808, 2
  %v3876 = vrot.slane %v3812, 2
  %v3877 = vsel %vm3845, %v3875, %v3876
  %v3880 = vrot.slane %v3874, 4
  %v3881 = vadd.f32 %v3874, %v3880
  %v3882 = vrot.slane %v3881, 2
  %v3883 = vadd.f32 %v3881, %v3882
  %v3884 = vrot.slane %v3883, 1
  %v3885 = vadd.f32 %v3883, %v3884
  %v3886 = vrot.slane %v3877, 4
  %v3887 = vadd.f32 %v3877, %v3886
  %v3888 = vrot.slane %v3887, 2
  %v3889 = vadd.f32 %v3887, %v3888
  %v3890 = vrot.slane %v3889, 1
  %v3891 = vadd.f32 %v3889, %v3890
  %v3892 = vadd.f32 %v3866, %v3885
  %v3893 = vadd.f32 %v3867, %v3891
  %v3894 = vld [vmem:[%s10] sm:$0xff]
  %v3895 = vld [vmem:[%s10 + $0x8] sm:$0xff]
  %v3896 = vld [vmem:[%s10 + $0x10] sm:$0xff]
  %v3897 = vld [vmem:[%s10 + $0x18] sm:$0xff]
  %v3898 = vld [vmem:[%s10 + $0x20] sm:$0xff]
  %v3899 = vld [vmem:[%s10 + $0x28] sm:$0xff]
  %v3900 = vld [vmem:[%s10 + $0x30] sm:$0xff]
  %v3901 = vld [vmem:[%s10 + $0x38] sm:$0xff]
  %v3902 = vld [vmem:[%s10 + $0x40] sm:$0xff]
  %v3903 = vld [vmem:[%s10 + $0x48] sm:$0xff]
  %v3904 = vld [vmem:[%s10 + $0x50] sm:$0xff]
  %v3905 = vld [vmem:[%s10 + $0x58] sm:$0xff]
  %v3906 = vld [vmem:[%s10 + $0x60] sm:$0xff]
  %v3907 = vld [vmem:[%s10 + $0x68] sm:$0xff]
  %v3908 = vld [vmem:[%s10 + $0x70] sm:$0xff]
  %v3909 = vld [vmem:[%s10 + $0x78] sm:$0xff]
  %v3910 = vld [vmem:[%s10 + $0x80] sm:$0xff]
  %v3911 = vld [vmem:[%s10 + $0x88] sm:$0xff]
  %v3912 = vld [vmem:[%s10 + $0x90] sm:$0xff]
  %v3913 = vld [vmem:[%s10 + $0x98] sm:$0xff]
  %v3914 = vld [vmem:[%s10 + $0xa0] sm:$0xff]
  %v3915 = vld [vmem:[%s10 + $0xa8] sm:$0xff]
  %v3916 = vld [vmem:[%s10 + $0xb0] sm:$0xff]
  %v3917 = vld [vmem:[%s10 + $0xb8] sm:$0xff]
  %v3918 = vld [vmem:[%s10 + $0xc0] sm:$0xff]
  %v3919 = vld [vmem:[%s10 + $0xc8] sm:$0xff]
  %v3920 = vld [vmem:[%s10 + $0xd0] sm:$0xff]
  %v3921 = vld [vmem:[%s10 + $0xd8] sm:$0xff]
  %v3922 = vld [vmem:[%s10 + $0xe0] sm:$0xff]
  %v3923 = vld [vmem:[%s10 + $0xe8] sm:$0xff]
  %v3924 = vld [vmem:[%s10 + $0xf0] sm:$0xff]
  %v3925 = vld [vmem:[%s10 + $0xf8] sm:$0xff]
  %v3926 = vld [vmem:[%s10 + $0x100] sm:$0xff]
  %v3927 = vld [vmem:[%s10 + $0x108] sm:$0xff]
  %v3928 = vld [vmem:[%s10 + $0x110] sm:$0xff]
  %v3929 = vld [vmem:[%s10 + $0x118] sm:$0xff]
  %v3930 = vld [vmem:[%s10 + $0x120] sm:$0xff]
  %v3931 = vld [vmem:[%s10 + $0x128] sm:$0xff]
  %v3932 = vld [vmem:[%s10 + $0x130] sm:$0xff]
  %v3933 = vld [vmem:[%s10 + $0x138] sm:$0xff]
  %v3934 = vld [vmem:[%s10 + $0x140] sm:$0xff]
  %v3935 = vld [vmem:[%s10 + $0x148] sm:$0xff]
  %v3936 = vld [vmem:[%s10 + $0x150] sm:$0xff]
  %v3937 = vld [vmem:[%s10 + $0x158] sm:$0xff]
  %v3938 = vld [vmem:[%s10 + $0x160] sm:$0xff]
  %v3939 = vld [vmem:[%s10 + $0x168] sm:$0xff]
  %v3940 = vld [vmem:[%s10 + $0x170] sm:$0xff]
  %v3941 = vld [vmem:[%s10 + $0x178] sm:$0xff]
  %v3942 = vld [vmem:[%s10 + $0x180] sm:$0xff]
  %v3943 = vld [vmem:[%s10 + $0x188] sm:$0xff]
  %v3944 = vld [vmem:[%s10 + $0x190] sm:$0xff]
  %v3945 = vld [vmem:[%s10 + $0x198] sm:$0xff]
  %v3946 = vld [vmem:[%s10 + $0x1a0] sm:$0xff]
  %v3947 = vld [vmem:[%s10 + $0x1a8] sm:$0xff]
  %v3948 = vld [vmem:[%s10 + $0x1b0] sm:$0xff]
  %v3949 = vld [vmem:[%s10 + $0x1b8] sm:$0xff]
  %v3950 = vld [vmem:[%s10 + $0x1c0] sm:$0xff]
  %v3951 = vld [vmem:[%s10 + $0x1c8] sm:$0xff]
  %v3952 = vld [vmem:[%s10 + $0x1d0] sm:$0xff]
  %v3953 = vld [vmem:[%s10 + $0x1d8] sm:$0xff]
  %v3954 = vld [vmem:[%s10 + $0x1e0] sm:$0xff]
  %v3955 = vld [vmem:[%s10 + $0x1e8] sm:$0xff]
  %v3956 = vld [vmem:[%s10 + $0x1f0] sm:$0xff]
  %v3957 = vld [vmem:[%s10 + $0x1f8] sm:$0xff]
  %3958 = vmatprep.subr.mxu0 %v3895
  %3959 = vmatpush1.msra.mxu0 %v3894
  %3960 = vmatprep.subr.mxu0 %v3897
  %3961 = vmatpush1.msra.mxu0 %v3896
  %3962 = vmatprep.subr.mxu0 %v3899
  %3963 = vmatpush1.msra.mxu0 %v3898
  %3964 = vmatprep.subr.mxu0 %v3901
  %3965 = vmatpush1.msra.mxu0 %v3900
  %3966 = vmatprep.subr.mxu0 %v3903
  %3967 = vmatpush1.msra.mxu0 %v3902
  %3968 = vmatprep.subr.mxu0 %v3905
  %3969 = vmatpush1.msra.mxu0 %v3904
  %3970 = vmatprep.subr.mxu0 %v3907
  %3971 = vmatpush1.msra.mxu0 %v3906
  %3972 = vmatprep.subr.mxu0 %v3909
  %3973 = vmatpush1.msra.mxu0 %v3908
  %3974 = vmatprep.subr.mxu0 %v3911
  %3975 = vmatpush1.msra.mxu0 %v3910
  %3976 = vmatprep.subr.mxu0 %v3913
  %3977 = vmatpush1.msra.mxu0 %v3912
  %3978 = vmatprep.subr.mxu0 %v3915
  %3979 = vmatpush1.msra.mxu0 %v3914
  %3980 = vmatprep.subr.mxu0 %v3917
  %3981 = vmatpush1.msra.mxu0 %v3916
  %3982 = vmatprep.subr.mxu0 %v3919
  %3983 = vmatpush1.msra.mxu0 %v3918
  %3984 = vmatprep.subr.mxu0 %v3921
  %3985 = vmatpush1.msra.mxu0 %v3920
  %3986 = vmatprep.subr.mxu0 %v3923
  %3987 = vmatpush1.msra.mxu0 %v3922
  %3988 = vmatprep.subr.mxu0 %v3925
  %3989 = vmatpush1.msra.mxu0 %v3924
  %3990 = vmatprep.subr.mxu0 %v3927
  %3991 = vmatpush1.msra.mxu0 %v3926
  %3992 = vmatprep.subr.mxu0 %v3929
  %3993 = vmatpush1.msra.mxu0 %v3928
  %3994 = vmatprep.subr.mxu0 %v3931
  %3995 = vmatpush1.msra.mxu0 %v3930
  %3996 = vmatprep.subr.mxu0 %v3933
  %3997 = vmatpush1.msra.mxu0 %v3932
  %3998 = vmatprep.subr.mxu0 %v3935
  %3999 = vmatpush1.msra.mxu0 %v3934
  %4000 = vmatprep.subr.mxu0 %v3937
  %4001 = vmatpush1.msra.mxu0 %v3936
  %4002 = vmatprep.subr.mxu0 %v3939
  %4003 = vmatpush1.msra.mxu0 %v3938
  %4004 = vmatprep.subr.mxu0 %v3941
  %4005 = vmatpush1.msra.mxu0 %v3940
  %4006 = vmatprep.subr.mxu0 %v3943
  %4007 = vmatpush1.msra.mxu0 %v3942
  %4008 = vmatprep.subr.mxu0 %v3945
  %4009 = vmatpush1.msra.mxu0 %v3944
  %4010 = vmatprep.subr.mxu0 %v3947
  %4011 = vmatpush1.msra.mxu0 %v3946
  %4012 = vmatprep.subr.mxu0 %v3949
  %4013 = vmatpush1.msra.mxu0 %v3948
  %4014 = vmatprep.subr.mxu0 %v3951
  %4015 = vmatpush1.msra.mxu0 %v3950
  %4016 = vmatprep.subr.mxu0 %v3953
  %4017 = vmatpush1.msra.mxu0 %v3952
  %4018 = vmatprep.subr.mxu0 %v3955
  %4019 = vmatpush1.msra.mxu0 %v3954
  %4020 = vmatprep.subr.mxu0 %v3957
  %4021 = vmatpush1.msra.mxu0 %v3956
  %4022 = vmatprep.mubr.f32.mxu0 %v3893
  %4023 = vmatmul.mubr.f32.gmra.mrb[0].mxu0 %v3892
  %v4024 = vpop.f32.mrb[0].mxu0
  %v4025 = vadd.f32 0.0, %v4024
  %v4026 = vpop.f32.mrb[0].mxu0
  %v4027 = vadd.f32 0.0, %v4026
  %4028 = vdwg.mxu0
  %v4029 = vrcp.pop 512.0
  %v4030 = vmul.f32 %v4025, %v4029
  %v4031 = vmul.f32 %v4027, %v4029
  %v4032 = vlaneseq
  %v4033 = vshrl.u32 %v4032, 7
  %v4034 = vsub.s32 0, %v4033
  %v4035 = vrot.slane %v4030, %v4034
  %v4036 = vlaneseq
  %v4037 = vshrl.u32 %v4036, 7
  %v4038 = vsub.s32 0, %v4037
  %v4039 = vrot.slane %v4031, %v4038
  %v4040 = vsub.f32 %v3801, %v4035
  %v4041 = vsub.f32 %v3802, %v4039
  %v4042 = vsub.f32 %v3803, %v4035
  %v4043 = vsub.f32 %v3804, %v4039
  %v4044 = vmul.f32 %v4040, %v4040
  %v4045 = vmul.f32 %v4041, %v4041
  %v4046 = vrot.slane %v4044, 4
  %v4047 = vadd.f32 %v4044, %v4046
  %v4048 = vrot.slane %v4047, 2
  %v4049 = vadd.f32 %v4047, %v4048
  %v4050 = vrot.slane %v4049, 1
  %v4051 = vadd.f32 %v4049, %v4050
  %v4052 = vrot.slane %v4045, 4
  %v4053 = vadd.f32 %v4045, %v4052
  %v4054 = vrot.slane %v4053, 2
  %v4055 = vadd.f32 %v4053, %v4054
  %v4056 = vrot.slane %v4055, 1
  %v4057 = vadd.f32 %v4055, %v4056
  %v4058 = vadd.f32 %v4051, 0.0
  %v4059 = vadd.f32 %v4057, 0.0
  %v4060 = vmul.f32 %v4042, %v4042
  %v4061 = vmul.f32 %v4043, %v4043
  %v4062 = vrot.slane %v4060, 4
  %v4063 = vadd.f32 %v4060, %v4062
  %v4064 = vrot.slane %v4063, 2
  %v4065 = vadd.f32 %v4063, %v4064
  %v4066 = vrot.slane %v4065, 1
  %v4067 = vadd.f32 %v4065, %v4066
  %v4068 = vrot.slane %v4061, 4
  %v4069 = vadd.f32 %v4061, %v4068
  %v4070 = vrot.slane %v4069, 2
  %v4071 = vadd.f32 %v4069, %v4070
  %v4072 = vrot.slane %v4071, 1
  %v4073 = vadd.f32 %v4071, %v4072
  %v4074 = vadd.f32 %v4058, %v4067
  %v4075 = vadd.f32 %v4059, %v4073
  %v4076 = vsub.f32 %v3805, %v4035
  %v4077 = vsub.f32 %v3806, %v4039
  %v4078 = vsub.f32 %v3809, %v4035
  %v4079 = vsub.f32 %v3810, %v4039
  %v4080 = vsub.f32 %v3807, %v4035
  %v4081 = vsub.f32 %v3808, %v4039
  %v4082 = vsub.f32 %v3811, %v4035
  %v4083 = vsub.f32 %v3812, %v4039
  %v4084 = vmul.f32 %v4076, %v4076
  %v4085 = vmul.f32 %v4077, %v4077
  %v4086 = vmul.f32 %v4078, %v4078
  %v4087 = vmul.f32 %v4079, %v4079
  %v4092 = vrot.slane %v4084, 2
  %v4093 = vrot.slane %v4086, 2
  %v4094 = vsel %vm3845, %v4092, %v4093
  %v4095 = vrot.slane %v4085, 2
  %v4096 = vrot.slane %v4087, 2
  %v4097 = vsel %vm3845, %v4095, %v4096
  %v4100 = vrot.slane %v4094, 4
  %v4101 = vadd.f32 %v4094, %v4100
  %v4102 = vrot.slane %v4101, 2
  %v4103 = vadd.f32 %v4101, %v4102
  %v4104 = vrot.slane %v4103, 1
  %v4105 = vadd.f32 %v4103, %v4104
  %v4106 = vrot.slane %v4097, 4
  %v4107 = vadd.f32 %v4097, %v4106
  %v4108 = vrot.slane %v4107, 2
  %v4109 = vadd.f32 %v4107, %v4108
  %v4110 = vrot.slane %v4109, 1
  %v4111 = vadd.f32 %v4109, %v4110
  %v4112 = vadd.f32 %v4074, %v4105
  %v4113 = vadd.f32 %v4075, %v4111
  %v4114 = vmul.f32 %v4080, %v4080
  %v4115 = vmul.f32 %v4081, %v4081
  %v4116 = vmul.f32 %v4082, %v4082
  %v4117 = vmul.f32 %v4083, %v4083
  %v4122 = vrot.slane %v4114, 2
  %v4123 = vrot.slane %v4116, 2
  %v4124 = vsel %vm3845, %v4122, %v4123
  %v4125 = vrot.slane %v4115, 2
  %v4126 = vrot.slane %v4117, 2
  %v4127 = vsel %vm3845, %v4125, %v4126
  %v4130 = vrot.slane %v4124, 4
  %v4131 = vadd.f32 %v4124, %v4130
  %v4132 = vrot.slane %v4131, 2
  %v4133 = vadd.f32 %v4131, %v4132
  %v4134 = vrot.slane %v4133, 1
  %v4135 = vadd.f32 %v4133, %v4134
  %v4136 = vrot.slane %v4127, 4
  %v4137 = vadd.f32 %v4127, %v4136
  %v4138 = vrot.slane %v4137, 2
  %v4139 = vadd.f32 %v4137, %v4138
  %v4140 = vrot.slane %v4139, 1
  %v4141 = vadd.f32 %v4139, %v4140
  %v4142 = vadd.f32 %v4112, %v4135
  %v4143 = vadd.f32 %v4113, %v4141
  %4144 = vmatprep.subr.mxu0 %v3895
  %4145 = vmatpush1.msra.mxu0 %v3894
  %4146 = vmatprep.subr.mxu0 %v3897
  %4147 = vmatpush1.msra.mxu0 %v3896
  %4148 = vmatprep.subr.mxu0 %v3899
  %4149 = vmatpush1.msra.mxu0 %v3898
  %4150 = vmatprep.subr.mxu0 %v3901
  %4151 = vmatpush1.msra.mxu0 %v3900
  %4152 = vmatprep.subr.mxu0 %v3903
  %4153 = vmatpush1.msra.mxu0 %v3902
  %4154 = vmatprep.subr.mxu0 %v3905
  %4155 = vmatpush1.msra.mxu0 %v3904
  %4156 = vmatprep.subr.mxu0 %v3907
  %4157 = vmatpush1.msra.mxu0 %v3906
  %4158 = vmatprep.subr.mxu0 %v3909
  %4159 = vmatpush1.msra.mxu0 %v3908
  %4160 = vmatprep.subr.mxu0 %v3911
  %4161 = vmatpush1.msra.mxu0 %v3910
  %4162 = vmatprep.subr.mxu0 %v3913
  %4163 = vmatpush1.msra.mxu0 %v3912
  %4164 = vmatprep.subr.mxu0 %v3915
  %4165 = vmatpush1.msra.mxu0 %v3914
  %4166 = vmatprep.subr.mxu0 %v3917
  %4167 = vmatpush1.msra.mxu0 %v3916
  %4168 = vmatprep.subr.mxu0 %v3919
  %4169 = vmatpush1.msra.mxu0 %v3918
  %4170 = vmatprep.subr.mxu0 %v3921
  %4171 = vmatpush1.msra.mxu0 %v3920
  %4172 = vmatprep.subr.mxu0 %v3923
  %4173 = vmatpush1.msra.mxu0 %v3922
  %4174 = vmatprep.subr.mxu0 %v3925
  %4175 = vmatpush1.msra.mxu0 %v3924
  %4176 = vmatprep.subr.mxu0 %v3927
  %4177 = vmatpush1.msra.mxu0 %v3926
  %4178 = vmatprep.subr.mxu0 %v3929
  %4179 = vmatpush1.msra.mxu0 %v3928
  %4180 = vmatprep.subr.mxu0 %v3931
  %4181 = vmatpush1.msra.mxu0 %v3930
  %4182 = vmatprep.subr.mxu0 %v3933
  %4183 = vmatpush1.msra.mxu0 %v3932
  %4184 = vmatprep.subr.mxu0 %v3935
  %4185 = vmatpush1.msra.mxu0 %v3934
  %4186 = vmatprep.subr.mxu0 %v3937
  %4187 = vmatpush1.msra.mxu0 %v3936
  %4188 = vmatprep.subr.mxu0 %v3939
  %4189 = vmatpush1.msra.mxu0 %v3938
  %4190 = vmatprep.subr.mxu0 %v3941
  %4191 = vmatpush1.msra.mxu0 %v3940
  %4192 = vmatprep.subr.mxu0 %v3943
  %4193 = vmatpush1.msra.mxu0 %v3942
  %4194 = vmatprep.subr.mxu0 %v3945
  %4195 = vmatpush1.msra.mxu0 %v3944
  %4196 = vmatprep.subr.mxu0 %v3947
  %4197 = vmatpush1.msra.mxu0 %v3946
  %4198 = vmatprep.subr.mxu0 %v3949
  %4199 = vmatpush1.msra.mxu0 %v3948
  %4200 = vmatprep.subr.mxu0 %v3951
  %4201 = vmatpush1.msra.mxu0 %v3950
  %4202 = vmatprep.subr.mxu0 %v3953
  %4203 = vmatpush1.msra.mxu0 %v3952
  %4204 = vmatprep.subr.mxu0 %v3955
  %4205 = vmatpush1.msra.mxu0 %v3954
  %4206 = vmatprep.subr.mxu0 %v3957
  %4207 = vmatpush1.msra.mxu0 %v3956
  %4208 = vmatprep.mubr.f32.mxu0 %v4143
  %4209 = vmatmul.mubr.f32.gmra.mrb[0].mxu0 %v4142
  %v4210 = vpop.f32.mrb[0].mxu0
  %v4211 = vadd.f32 0.0, %v4210
  %v4212 = vpop.f32.mrb[0].mxu0
  %v4213 = vadd.f32 0.0, %v4212
  %4214 = vdwg.mxu0
  %v4215 = vmul.f32 %v4211, %v4029
  %v4216 = vmul.f32 %v4213, %v4029
  %v4217 = vld [vmem:[%s11] sm:$0x3]
  %v4218 = vadd.f32 %v4215, 1e-05
  %v4219 = vadd.f32 %v4216, 1e-05
  %v4220 = vrsqrt.pop %v4218
  %v4221 = vrsqrt.pop %v4219
  %v4224 = vcombine.low %v4220, %v4221
  %v4226 = vunpack.c.l.s4 1966171168
  %v4227 = vunpack.c.0.s8 %v4226
  %v4228 = vlaneseq
  %v4229 = vshrl.u32 %v4228, 7
  %v4230 = vsub.s32 %v4227, %v4229
  %v4231 = vrot.slane %v4224, %v4230
  %v4233 = vunpack.c.l.s4 1966171168
  %v4234 = vunpack.c.0.s8 %v4233
  %v4235 = vlaneseq
  %v4236 = vshrl.u32 %v4235, 7
  %v4237 = vsub.s32 %v4234, %v4236
  %v4238 = vrot.slane %v4231, %v4237
  %v4240 = vmul.f32 %v4217, %v4238
  %v4241 = vld [vmem:[%s12] sm:$0x3]
  %v4243 = vlaneseq
  %v4244 = vshrl.u32 %v4243, 7
  %v4245 = vsub.s32 0, %v4244
  %v4246 = vrot.slane %v4240, %v4245
  %v4247 = vlaneseq
  %v4248 = vshrl.u32 %v4247, 7
  %v4249 = vsub.s32 1, %v4248
  %v4250 = vrot.slane %v4240, %v4249
  %v4253 = vmul.f32 %v4030, %v4246
  %v4254 = vmul.f32 %v4031, %v4250
  %v4257 = vcombine.low %v4253, %v4254
  %v4259 = vunpack.c.l.s4 1966171168
  %v4260 = vunpack.c.0.s8 %v4259
  %v4261 = vlaneseq
  %v4262 = vshrl.u32 %v4261, 7
  %v4263 = vsub.s32 %v4260, %v4262
  %v4264 = vrot.slane %v4257, %v4263
  %v4266 = vunpack.c.l.s4 1966171168
  %v4267 = vunpack.c.0.s8 %v4266
  %v4268 = vlaneseq
  %v4269 = vshrl.u32 %v4268, 7
  %v4270 = vsub.s32 %v4267, %v4269
  %v4271 = vrot.slane %v4264, %v4270
  %v4273 = vsub.f32 %v4241, %v4271
  %v4274 = vld [vmem:[%s13] sm:$0xff]
  %v4275 = vld [vmem:[%s13 + $0x8] sm:$0xff]
  %s4276 = scalar_lea.vmem %s13, 16
  %v4277 = vld [vmem:[%s4276] sm:$0xff]
  %v4278 = vld [vmem:[%s4276 + $0x8] sm:$0xff]
  %v4279 = vmul.f32 %v3801, %v4246
  %v4280 = vmul.f32 %v3802, %v4250
  %v4282 = vlaneseq
  %v4283 = vshrl.u32 %v4282, 7
  %v4284 = vsub.s32 0, %v4283
  %v4285 = vrot.slane %v4273, %v4284
  %v4286 = vlaneseq
  %v4287 = vshrl.u32 %v4286, 7
  %v4288 = vsub.s32 1, %v4287
  %v4289 = vrot.slane %v4273, %v4288
  %v4292 = vadd.f32 %v4279, %v4285
  %v4293 = vadd.f32 %v4280, %v4289
  %v4294 = vmax.f32 %v4292, 0.0
  %v4295 = vmax.f32 %v4293, 0.0
  %v4296 = vmul.f32 %v3803, %v4246
  %v4297 = vmul.f32 %v3804, %v4250
  %v4298 = vadd.f32 %v4296, %v4285
  %v4299 = vadd.f32 %v4297, %v4289
  %v4300 = vmax.f32 %v4298, 0.0
  %v4301 = vmax.f32 %v4299, 0.0
  %vm4302 = vcmask 64512
  %v4304 = vsel %vm4302, %v4277, 0
  %v4307 = vsel %vm4302, %v4278, 0
  %4309 = vmatprep.subr.mxu0 %v4301
  %4310 = vmatpush1.msra.mxu0 %v4300
  %4311 = vmatprep.subr.mxu0 0.0
  %4312 = vmatpush1.msra.mxu0 0.0
  %4313 = vmatprep.subr.mxu0 0.0
  %4314 = vmatpush1.msra.mxu0 0.0
  %4315 = vmatprep.subr.mxu0 0.0
  %4316 = vmatpush1.msra.mxu0 0.0
  %4317 = vmatprep.subr.mxu0 0.0
  %4318 = vmatpush1.msra.mxu0 0.0
  %4319 = vmatprep.subr.mxu0 0.0
  %4320 = vmatpush1.msra.mxu0 0.0
  %4321 = vmatprep.subr.mxu0 0.0
  %4322 = vmatpush1.msra.mxu0 0.0
  %4323 = vmatprep.subr.mxu0 0.0
  %4324 = vmatpush1.msra.mxu0 0.0
  %4325 = vmatprep.subr.mxu0 0.0
  %4326 = vmatpush1.msra.mxu0 0.0
  %4327 = vmatprep.subr.mxu0 0.0
  %4328 = vmatpush1.msra.mxu0 0.0
  %4329 = vmatprep.subr.mxu0 0.0
  %4330 = vmatpush1.msra.mxu0 0.0
  %4331 = vmatprep.subr.mxu0 0.0
  %4332 = vmatpush1.msra.mxu0 0.0
  %4333 = vmatprep.subr.mxu0 0.0
  %4334 = vmatpush1.msra.mxu0 0.0
  %4335 = vmatprep.subr.mxu0 0.0
  %4336 = vmatpush1.msra.mxu0 0.0
  %4337 = vmatprep.subr.mxu0 0.0
  %4338 = vmatpush1.msra.mxu0 0.0
  %4339 = vmatprep.subr.mxu0 0.0
  %4340 = vmatpush1.msra.mxu0 0.0
  %4341 = vmatprep.subr.mxu0 0.0
  %4342 = vmatpush1.msra.mxu0 0.0
  %4343 = vmatprep.subr.mxu0 0.0
  %4344 = vmatpush1.msra.mxu0 0.0
  %4345 = vmatprep.subr.mxu0 0.0
  %4346 = vmatpush1.msra.mxu0 0.0
  %4347 = vmatprep.subr.mxu0 0.0
  %4348 = vmatpush1.msra.mxu0 0.0
  %4349 = vmatprep.subr.mxu0 0.0
  %4350 = vmatpush1.msra.mxu0 0.0
  %4351 = vmatprep.subr.mxu0 0.0
  %4352 = vmatpush1.msra.mxu0 0.0
  %4353 = vmatprep.subr.mxu0 0.0
  %4354 = vmatpush1.msra.mxu0 0.0
  %4355 = vmatprep.subr.mxu0 0.0
  %4356 = vmatpush1.msra.mxu0 0.0
  %4357 = vmatprep.subr.mxu0 0.0
  %4358 = vmatpush1.msra.mxu0 0.0
  %4359 = vmatprep.subr.mxu0 0.0
  %4360 = vmatpush1.msra.mxu0 0.0
  %4361 = vmatprep.subr.mxu0 0.0
  %4362 = vmatpush1.msra.mxu0 0.0
  %4363 = vmatprep.subr.mxu0 0.0
  %4364 = vmatpush1.msra.mxu0 0.0
  %4365 = vmatprep.subr.mxu0 0.0
  %4366 = vmatpush1.msra.mxu0 0.0
  %4367 = vmatprep.subr.mxu0 0.0
  %4368 = vmatpush1.msra.mxu0 0.0
  %4369 = vmatprep.subr.mxu0 0.0
  %4370 = vmatpush1.msra.mxu0 0.0
  %4371 = vmatprep.subr.mxu0 0.0
  %4372 = vmatpush1.msra.mxu0 0.0
  %4373 = vmatprep.mubr.f32.mxu0 0.0
  %4374 = vmatmul.mubr.f32.gmra.mrb[0].mxu0 %v4304
  %v4375 = vpop.f32.mrb[0].mxu0
  %v4376 = vadd.f32 0.0, %v4375
  %v4377 = vpop.f32.mrb[0].mxu0
  %v4378 = vadd.f32 0.0, %v4377
  %4379 = vmatprep.mubr.f32.mxu0 0.0
  %4380 = vmatmul.mubr.f32.gmra.mrb[0].mxu0 %v4307
  %v4381 = vpop.f32.mrb[0].mxu0
  %v4382 = vadd.f32 0.0, %v4381
  %v4383 = vpop.f32.mrb[0].mxu0
  %v4384 = vadd.f32 0.0, %v4383
  %4385 = vdwg.mxu0
  %v4387 = vsel %vm4302, %v4274, 0
  %v4390 = vsel %vm4302, %v4275, 0
  %4392 = vmatprep.subr.mxu0 %v4295
  %4393 = vmatpush1.msra.mxu0 %v4294
  %4394 = vmatprep.subr.mxu0 0.0
  %4395 = vmatpush1.msra.mxu0 0.0
  %4396 = vmatprep.subr.mxu0 0.0
  %4397 = vmatpush1.msra.mxu0 0.0
  %4398 = vmatprep.subr.mxu0 0.0
  %4399 = vmatpush1.msra.mxu0 0.0
  %4400 = vmatprep.subr.mxu0 0.0
  %4401 = vmatpush1.msra.mxu0 0.0
  %4402 = vmatprep.subr.mxu0 0.0
  %4403 = vmatpush1.msra.mxu0 0.0
  %4404 = vmatprep.subr.mxu0 0.0
  %4405 = vmatpush1.msra.mxu0 0.0
  %4406 = vmatprep.subr.mxu0 0.0
  %4407 = vmatpush1.msra.mxu0 0.0
  %4408 = vmatprep.subr.mxu0 0.0
  %4409 = vmatpush1.msra.mxu0 0.0
  %4410 = vmatprep.subr.mxu0 0.0
  %4411 = vmatpush1.msra.mxu0 0.0
  %4412 = vmatprep.subr.mxu0 0.0
  %4413 = vmatpush1.msra.mxu0 0.0
  %4414 = vmatprep.subr.mxu0 0.0
  %4415 = vmatpush1.msra.mxu0 0.0
  %4416 = vmatprep.subr.mxu0 0.0
  %4417 = vmatpush1.msra.mxu0 0.0
  %4418 = vmatprep.subr.mxu0 0.0
  %4419 = vmatpush1.msra.mxu0 0.0
  %4420 = vmatprep.subr.mxu0 0.0
  %4421 = vmatpush1.msra.mxu0 0.0
  %4422 = vmatprep.subr.mxu0 0.0
  %4423 = vmatpush1.msra.mxu0 0.0
  %4424 = vmatprep.subr.mxu0 0.0
  %4425 = vmatpush1.msra.mxu0 0.0
  %4426 = vmatprep.subr.mxu0 0.0
  %4427 = vmatpush1.msra.mxu0 0.0
  %4428 = vmatprep.subr.mxu0 0.0
  %4429 = vmatpush1.msra.mxu0 0.0
  %4430 = vmatprep.subr.mxu0 0.0
  %4431 = vmatpush1.msra.mxu0 0.0
  %4432 = vmatprep.subr.mxu0 0.0
  %4433 = vmatpush1.msra.mxu0 0.0
  %4434 = vmatprep.subr.mxu0 0.0
  %4435 = vmatpush1.msra.mxu0 0.0
  %4436 = vmatprep.subr.mxu0 0.0
  %4437 = vmatpush1.msra.mxu0 0.0
  %4438 = vmatprep.subr.mxu0 0.0
  %4439 = vmatpush1.msra.mxu0 0.0
  %4440 = vmatprep.subr.mxu0 0.0
  %4441 = vmatpush1.msra.mxu0 0.0
  %4442 = vmatprep.subr.mxu0 0.0
  %4443 = vmatpush1.msra.mxu0 0.0
  %4444 = vmatprep.subr.mxu0 0.0
  %4445 = vmatpush1.msra.mxu0 0.0
  %4446 = vmatprep.subr.mxu0 0.0
  %4447 = vmatpush1.msra.mxu0 0.0
  %4448 = vmatprep.subr.mxu0 0.0
  %4449 = vmatpush1.msra.mxu0 0.0
  %4450 = vmatprep.subr.mxu0 0.0
  %4451 = vmatpush1.msra.mxu0 0.0
  %4452 = vmatprep.subr.mxu0 0.0
  %4453 = vmatpush1.msra.mxu0 0.0
  %4454 = vmatprep.subr.mxu0 0.0
  %4455 = vmatpush1.msra.mxu0 0.0
  %4456 = vmatprep.mubr.f32.mxu0 0.0
  %4457 = vmatmul.mubr.f32.gmra.mrb[0].mxu0 %v4387
  %v4458 = vpop.f32.mrb[0].mxu0
  %v4459 = vadd.f32 %v4376, %v4458
  %v4460 = vpop.f32.mrb[0].mxu0
  %v4461 = vadd.f32 %v4378, %v4460
  %4462 = vmatprep.mubr.f32.mxu0 0.0
  %4463 = vmatmul.mubr.f32.gmra.mrb[0].mxu0 %v4390
  %v4464 = vpop.f32.mrb[0].mxu0
  %v4465 = vadd.f32 %v4382, %v4464
  %v4466 = vpop.f32.mrb[0].mxu0
  %v4467 = vadd.f32 %v4384, %v4466
  %4468 = vdwg.mxu0
  %v4469 = vpack.c.bf16 %v4465, %v4459
  %v4470 = vpack.c.bf16 %v4467, %v4461
  %v4471 = vmul.f32 %v3805, %v4246
  %v4472 = vmul.f32 %v3806, %v4250
  %v4473 = vmul.f32 %v3809, %v4246
  %v4474 = vmul.f32 %v3810, %v4250
  %v4475 = vadd.f32 %v4471, %v4285
  %v4476 = vadd.f32 %v4472, %v4289
  %v4477 = vadd.f32 %v4473, %v4285
  %v4478 = vadd.f32 %v4474, %v4289
  %v4479 = vmax.f32 %v4475, 0.0
  %v4480 = vmax.f32 %v4476, 0.0
  %v4481 = vmax.f32 %v4477, 0.0
  %v4482 = vmax.f32 %v4478, 0.0
  %v4483 = vmul.f32 %v3807, %v4246
  %v4484 = vmul.f32 %v3808, %v4250
  %v4485 = vmul.f32 %v3811, %v4246
  %v4486 = vmul.f32 %v3812, %v4250
  %v4487 = vadd.f32 %v4483, %v4285
  %v4488 = vadd.f32 %v4484, %v4289
  %v4489 = vadd.f32 %v4485, %v4285
  %v4490 = vadd.f32 %v4486, %v4289
  %v4491 = vmax.f32 %v4487, 0.0
  %v4492 = vmax.f32 %v4488, 0.0
  %v4493 = vmax.f32 %v4489, 0.0
  %v4494 = vmax.f32 %v4490, 0.0
  %v4499 = vrot.slane %v4491, 2
  %v4500 = vrot.slane %v4493, 2
  %v4501 = vsel %vm3845, %v4499, %v4500
  %v4502 = vrot.slane %v4492, 2
  %v4503 = vrot.slane %v4494, 2
  %v4504 = vsel %vm3845, %v4502, %v4503
  %4507 = vmatprep.subr.mxu0 %v4504
  %4508 = vmatpush1.msra.mxu0 %v4501
  %4509 = vmatprep.subr.mxu0 0.0
  %4510 = vmatpush1.msra.mxu0 0.0
  %4511 = vmatprep.subr.mxu0 0.0
  %4512 = vmatpush1.msra.mxu0 0.0
  %4513 = vmatprep.subr.mxu0 0.0
  %4514 = vmatpush1.msra.mxu0 0.0
  %4515 = vmatprep.subr.mxu0 0.0
  %4516 = vmatpush1.msra.mxu0 0.0
  %4517 = vmatprep.subr.mxu0 0.0
  %4518 = vmatpush1.msra.mxu0 0.0
  %4519 = vmatprep.subr.mxu0 0.0
  %4520 = vmatpush1.msra.mxu0 0.0
  %4521 = vmatprep.subr.mxu0 0.0
  %4522 = vmatpush1.msra.mxu0 0.0
  %4523 = vmatprep.subr.mxu0 0.0
  %4524 = vmatpush1.msra.mxu0 0.0
  %4525 = vmatprep.subr.mxu0 0.0
  %4526 = vmatpush1.msra.mxu0 0.0
  %4527 = vmatprep.subr.mxu0 0.0
  %4528 = vmatpush1.msra.mxu0 0.0
  %4529 = vmatprep.subr.mxu0 0.0
  %4530 = vmatpush1.msra.mxu0 0.0
  %4531 = vmatprep.subr.mxu0 0.0
  %4532 = vmatpush1.msra.mxu0 0.0
  %4533 = vmatprep.subr.mxu0 0.0
  %4534 = vmatpush1.msra.mxu0 0.0
  %4535 = vmatprep.subr.mxu0 0.0
  %4536 = vmatpush1.msra.mxu0 0.0
  %4537 = vmatprep.subr.mxu0 0.0
  %4538 = vmatpush1.msra.mxu0 0.0
  %4539 = vmatprep.subr.mxu0 0.0
  %4540 = vmatpush1.msra.mxu0 0.0
  %4541 = vmatprep.subr.mxu0 0.0
  %4542 = vmatpush1.msra.mxu0 0.0
  %4543 = vmatprep.subr.mxu0 0.0
  %4544 = vmatpush1.msra.mxu0 0.0
  %4545 = vmatprep.subr.mxu0 0.0
  %4546 = vmatpush1.msra.mxu0 0.0
  %4547 = vmatprep.subr.mxu0 0.0
  %4548 = vmatpush1.msra.mxu0 0.0
  %4549 = vmatprep.subr.mxu0 0.0
  %4550 = vmatpush1.msra.mxu0 0.0
  %4551 = vmatprep.subr.mxu0 0.0
  %4552 = vmatpush1.msra.mxu0 0.0
  %4553 = vmatprep.subr.mxu0 0.0
  %4554 = vmatpush1.msra.mxu0 0.0
  %4555 = vmatprep.subr.mxu0 0.0
  %4556 = vmatpush1.msra.mxu0 0.0
  %4557 = vmatprep.subr.mxu0 0.0
  %4558 = vmatpush1.msra.mxu0 0.0
  %4559 = vmatprep.subr.mxu0 0.0
  %4560 = vmatpush1.msra.mxu0 0.0
  %4561 = vmatprep.subr.mxu0 0.0
  %4562 = vmatpush1.msra.mxu0 0.0
  %4563 = vmatprep.subr.mxu0 0.0
  %4564 = vmatpush1.msra.mxu0 0.0
  %4565 = vmatprep.subr.mxu0 0.0
  %4566 = vmatpush1.msra.mxu0 0.0
  %4567 = vmatprep.subr.mxu0 0.0
  %4568 = vmatpush1.msra.mxu0 0.0
  %4569 = vmatprep.subr.mxu0 0.0
  %4570 = vmatpush1.msra.mxu0 0.0
  %4571 = vmatprep.mubr.f32.mxu0 0.0
  %4572 = vmatmul.mubr.f32.gmra.mrb[0].mxu0 %v4304
  %v4573 = vpop.f32.mrb[0].mxu0
  %v4574 = vadd.f32 0.0, %v4573
  %v4575 = vpop.f32.mrb[0].mxu0
  %v4576 = vadd.f32 0.0, %v4575
  %4577 = vmatprep.mubr.f32.mxu0 0.0
  %4578 = vmatmul.mubr.f32.gmra.mrb[0].mxu0 %v4307
  %v4579 = vpop.f32.mrb[0].mxu0
  %v4580 = vadd.f32 0.0, %v4579
  %v4581 = vpop.f32.mrb[0].mxu0
  %v4582 = vadd.f32 0.0, %v4581
  %4583 = vdwg.mxu0
  %v4588 = vrot.slane %v4479, 2
  %v4589 = vrot.slane %v4481, 2
  %v4590 = vsel %vm3845, %v4588, %v4589
  %v4591 = vrot.slane %v4480, 2
  %v4592 = vrot.slane %v4482, 2
  %v4593 = vsel %vm3845, %v4591, %v4592
  %4596 = vmatprep.subr.mxu0 %v4593
  %4597 = vmatpush1.msra.mxu0 %v4590
  %4598 = vmatprep.subr.mxu0 0.0
  %4599 = vmatpush1.msra.mxu0 0.0
  %4600 = vmatprep.subr.mxu0 0.0
  %4601 = vmatpush1.msra.mxu0 0.0
  %4602 = vmatprep.subr.mxu0 0.0
  %4603 = vmatpush1.msra.mxu0 0.0
  %4604 = vmatprep.subr.mxu0 0.0
  %4605 = vmatpush1.msra.mxu0 0.0
  %4606 = vmatprep.subr.mxu0 0.0
  %4607 = vmatpush1.msra.mxu0 0.0
  %4608 = vmatprep.subr.mxu0 0.0
  %4609 = vmatpush1.msra.mxu0 0.0
  %4610 = vmatprep.subr.mxu0 0.0
  %4611 = vmatpush1.msra.mxu0 0.0
  %4612 = vmatprep.subr.mxu0 0.0
  %4613 = vmatpush1.msra.mxu0 0.0
  %4614 = vmatprep.subr.mxu0 0.0
  %4615 = vmatpush1.msra.mxu0 0.0
  %4616 = vmatprep.subr.mxu0 0.0
  %4617 = vmatpush1.msra.mxu0 0.0
  %4618 = vmatprep.subr.mxu0 0.0
  %4619 = vmatpush1.msra.mxu0 0.0
  %4620 = vmatprep.subr.mxu0 0.0
  %4621 = vmatpush1.msra.mxu0 0.0
  %4622 = vmatprep.subr.mxu0 0.0
  %4623 = vmatpush1.msra.mxu0 0.0
  %4624 = vmatprep.subr.mxu0 0.0
  %4625 = vmatpush1.msra.mxu0 0.0
  %4626 = vmatprep.subr.mxu0 0.0
  %4627 = vmatpush1.msra.mxu0 0.0
  %4628 = vmatprep.subr.mxu0 0.0
  %4629 = vmatpush1.msra.mxu0 0.0
  %4630 = vmatprep.subr.mxu0 0.0
  %4631 = vmatpush1.msra.mxu0 0.0
  %4632 = vmatprep.subr.mxu0 0.0
  %4633 = vmatpush1.msra.mxu0 0.0
  %4634 = vmatprep.subr.mxu0 0.0
  %4635 = vmatpush1.msra.mxu0 0.0
  %4636 = vmatprep.subr.mxu0 0.0
  %4637 = vmatpush1.msra.mxu0 0.0
  %4638 = vmatprep.subr.mxu0 0.0
  %4639 = vmatpush1.msra.mxu0 0.0
  %4640 = vmatprep.subr.mxu0 0.0
  %4641 = vmatpush1.msra.mxu0 0.0
  %4642 = vmatprep.subr.mxu0 0.0
  %4643 = vmatpush1.msra.mxu0 0.0
  %4644 = vmatprep.subr.mxu0 0.0
  %4645 = vmatpush1.msra.mxu0 0.0
  %4646 = vmatprep.subr.mxu0 0.0
  %4647 = vmatpush1.msra.mxu0 0.0
  %4648 = vmatprep.subr.mxu0 0.0
  %4649 = vmatpush1.msra.mxu0 0.0
  %4650 = vmatprep.subr.mxu0 0.0
  %4651 = vmatpush1.msra.mxu0 0.0
  %4652 = vmatprep.subr.mxu0 0.0
  %4653 = vmatpush1.msra.mxu0 0.0
  %4654 = vmatprep.subr.mxu0 0.0
  %4655 = vmatpush1.msra.mxu0 0.0
  %4656 = vmatprep.subr.mxu0 0.0
  %4657 = vmatpush1.msra.mxu0 0.0
  %4658 = vmatprep.subr.mxu0 0.0
  %4659 = vmatpush1.msra.mxu0 0.0
  %4660 = vmatprep.mubr.f32.mxu0 0.0
  %4661 = vmatmul.mubr.f32.gmra.mrb[0].mxu0 %v4387
  %v4662 = vpop.f32.mrb[0].mxu0
  %v4663 = vadd.f32 %v4574, %v4662
  %v4664 = vpop.f32.mrb[0].mxu0
  %v4665 = vadd.f32 %v4576, %v4664
  %4666 = vmatprep.mubr.f32.mxu0 0.0
  %4667 = vmatmul.mubr.f32.gmra.mrb[0].mxu0 %v4390
  %v4668 = vpop.f32.mrb[0].mxu0
  %v4669 = vadd.f32 %v4580, %v4668
  %v4670 = vpop.f32.mrb[0].mxu0
  %v4671 = vadd.f32 %v4582, %v4670
  %4672 = vdwg.mxu0
  %v4673 = vpack.c.bf16 %v4669, %v4663
  %v4674 = vpack.c.bf16 %v4671, %v4665
  %v4675 = vld [vmem:[#allocation4] sm:$0x11]
  %v4676 = vsel %vm2182, 0, %v4675
  %4677 = vst [vmem:[#allocation4] sm:$0x11] %v4676
  %v4678 = vld [vmem:[#allocation4 + $0x10] sm:$0x11]
  %v4679 = vsel %vm2188, 0, %v4678
  %4680 = vst [vmem:[#allocation4 + $0x10] sm:$0x11] %v4679
  %v4683 = vunpack.c.l.b16 %v4469
  %v4684 = vunpack.c.l.b16 %v4470
  %v4685 = vunpack.c.h.b16 %v4469
  %v4686 = vunpack.c.h.b16 %v4470
  %v4687 = vpack.c.b16 %v4684, %v4683
  %v4688 = vpack.c.b16 %v4686, %v4685
  %vm4689 = vsmask.f32 4368
  %vm4690 = vmor %vm374, %vm4689
  %v4692 = vshrl.u32 %v4687, 16
  %v4694 = vrot.slane %v4692, 7
  %v4695 = vshll.u32 %v4687, 16
  %v4697 = vor.u32 %v4694, %v4695
  %v4698 = vrot.slane %v4694, 4
  %v4700 = vshrl.u32 %v4688, 16
  %v4702 = vrot.slane %v4700, 7
  %v4703 = vshll.u32 %v4688, 16
  %v4705 = vor.u32 %v4702, %v4703
  %v4706 = vsel %vm4690, %v4698, %v4705
  %v4707 = vrot.slane %v4702, 4
  %v4711 = vld [vmem:[#allocation4] sm:$0xff]
  %v4712 = vsel %vm2211, %v4697, %v4711
  %4713 = vst [vmem:[#allocation4] sm:$0xff] %v4712
  %4714 = vst [vmem:[#allocation4 + $0x8] sm:$0xff] %v4706
  %v4715 = vld [vmem:[#allocation4 + $0x10] sm:$0x11]
  %v4716 = vsel %vm2182, %v4707, %v4715
  %4717 = vst [vmem:[#allocation4 + $0x10] sm:$0x11] %v4716
  %v4718 = vld [vmem:[#allocation4 + $0x10] sm:$0x22]
  %v4719 = vsel %vm2221, 0, %v4718
  %4720 = vst [vmem:[#allocation4 + $0x10] sm:$0x22] %v4719
  %v4721 = vld [vmem:[#allocation4 + $0x20] sm:$0x22]
  %v4722 = vsel %vm2227, 0, %v4721
  %4723 = vst [vmem:[#allocation4 + $0x20] sm:$0x22] %v4722
  %v4726 = vunpack.c.l.b16 %v4673
  %v4727 = vunpack.c.l.b16 %v4674
  %v4728 = vunpack.c.h.b16 %v4673
  %v4729 = vunpack.c.h.b16 %v4674
  %v4730 = vpack.c.b16 %v4727, %v4726
  %v4731 = vpack.c.b16 %v4729, %v4728
  %vm4732 = vsmask.f32 5392
  %vm4733 = vmor %vm405, %vm4732
  %v4735 = vshrl.u32 %v4730, 16
  %v4737 = vrot.slane %v4735, 6
  %v4738 = vshll.u32 %v4730, 16
  %v4740 = vrot.slane %v4738, 7
  %v4741 = vor.u32 %v4737, %v4740
  %v4742 = vrot.slane %v4741, 4
  %v4744 = vshrl.u32 %v4731, 16
  %v4746 = vrot.slane %v4744, 6
  %v4747 = vshll.u32 %v4731, 16
  %v4749 = vrot.slane %v4747, 7
  %v4750 = vor.u32 %v4746, %v4749
  %v4751 = vsel %vm4733, %v4742, %v4750
  %v4752 = vrot.slane %v4750, 4
  %v4756 = vld [vmem:[#allocation4 + $0x10] sm:$0xee]
  %v4757 = vsel %vm2251, %v4741, %v4756
  %4758 = vst [vmem:[#allocation4 + $0x10] sm:$0xee] %v4757
  %4759 = vst [vmem:[#allocation4 + $0x18] sm:$0xff] %v4751
  %v4760 = vld [vmem:[#allocation4 + $0x20] sm:$0x33]
  %v4761 = vsel %vm2259, %v4752, %v4760
  %4762 = vst [vmem:[#allocation4 + $0x20] sm:$0x33] %v4761
  %v4763 = vld [vmem:[#allocation4] sm:$0xff]
  %v4764 = vld [vmem:[#allocation4 + $0x8] sm:$0xff]
  %v4765 = vld [vmem:[#allocation4 + $0x10] sm:$0xff]
  %v4766 = vld [vmem:[#allocation4 + $0x18] sm:$0xff]
  %v4767 = vld [vmem:[#allocation4 + $0x20] sm:$0x11]
  %v4768 = vld [vmem:[%s14] sm:$0xff]
  %v4769 = vld [vmem:[%s14 + $0x8] sm:$0xff]
  %v4770 = vld [vmem:[%s14 + $0x10] sm:$0xff]
  %v4771 = vld [vmem:[%s14 + $0x18] sm:$0xff]
  %v4772 = vld [vmem:[%s14 + $0x20] sm:$0xff]
  %v4773 = vld [vmem:[%s14 + $0x28] sm:$0xff]
  %v4774 = vld [vmem:[%s14 + $0x30] sm:$0xff]
  %v4775 = vld [vmem:[%s14 + $0x38] sm:$0xff]
  %v4776 = vld [vmem:[%s14 + $0x40] sm:$0xff]
  %v4777 = vld [vmem:[%s14 + $0x48] sm:$0xff]
  %v4778 = vld [vmem:[%s14 + $0x50] sm:$0xff]
  %v4779 = vld [vmem:[%s14 + $0x58] sm:$0xff]
  %v4780 = vld [vmem:[%s14 + $0x60] sm:$0xff]
  %v4781 = vld [vmem:[%s14 + $0x68] sm:$0xff]
  %v4782 = vld [vmem:[%s14 + $0x70] sm:$0xff]
  %v4783 = vld [vmem:[%s14 + $0x78] sm:$0xff]
  %v4784 = vld [vmem:[%s14 + $0x80] sm:$0xff]
  %v4785 = vld [vmem:[%s14 + $0x88] sm:$0xff]
  %v4786 = vld [vmem:[%s14 + $0x90] sm:$0xff]
  %v4787 = vld [vmem:[%s14 + $0x98] sm:$0xff]
  %v4788 = vld [vmem:[%s14 + $0xa0] sm:$0xff]
  %v4789 = vld [vmem:[%s14 + $0xa8] sm:$0xff]
  %v4790 = vld [vmem:[%s14 + $0xb0] sm:$0xff]
  %v4791 = vld [vmem:[%s14 + $0xb8] sm:$0xff]
  %v4792 = vld [vmem:[%s14 + $0xc0] sm:$0xff]
  %v4793 = vld [vmem:[%s14 + $0xc8] sm:$0xff]
  %v4794 = vld [vmem:[%s14 + $0xd0] sm:$0xff]
  %v4795 = vld [vmem:[%s14 + $0xd8] sm:$0xff]
  %v4796 = vld [vmem:[%s14 + $0xe0] sm:$0xff]
  %v4797 = vld [vmem:[%s14 + $0xe8] sm:$0xff]
  %v4798 = vld [vmem:[%s14 + $0xf0] sm:$0xff]
  %v4799 = vld [vmem:[%s14 + $0xf8] sm:$0xff]
  %v4800 = vld [vmem:[#allocation4 + $0x20] sm:$0x33]
  %s4801 = scalar_lea.vmem %s14, 256
  %v4802 = vld [vmem:[%s4801] sm:$0xff]
  %v4803 = vld [vmem:[%s4801 + $0x8] sm:$0xff]
  %v4804 = vld [vmem:[%s4801 + $0x10] sm:$0xff]
  %v4805 = vld [vmem:[%s4801 + $0x18] sm:$0xff]
  %v4806 = vld [vmem:[%s4801 + $0x20] sm:$0xff]
  %v4807 = vld [vmem:[%s4801 + $0x28] sm:$0xff]
  %v4808 = vld [vmem:[%s4801 + $0x30] sm:$0xff]
  %v4809 = vld [vmem:[%s4801 + $0x38] sm:$0xff]
  %v4810 = vld [vmem:[%s4801 + $0x40] sm:$0xff]
  %v4811 = vld [vmem:[%s4801 + $0x48] sm:$0xff]
  %v4812 = vld [vmem:[%s4801 + $0x50] sm:$0xff]
  %v4813 = vld [vmem:[%s4801 + $0x58] sm:$0xff]
  %v4814 = vld [vmem:[%s4801 + $0x60] sm:$0xff]
  %v4815 = vld [vmem:[%s4801 + $0x68] sm:$0xff]
  %v4816 = vld [vmem:[%s4801 + $0x70] sm:$0xff]
  %v4817 = vld [vmem:[%s4801 + $0x78] sm:$0xff]
  %v4818 = vld [vmem:[%s4801 + $0x80] sm:$0xff]
  %v4819 = vld [vmem:[%s4801 + $0x88] sm:$0xff]
  %v4820 = vld [vmem:[%s4801 + $0x90] sm:$0xff]
  %v4821 = vld [vmem:[%s4801 + $0x98] sm:$0xff]
  %v4822 = vld [vmem:[%s4801 + $0xa0] sm:$0xff]
  %v4823 = vld [vmem:[%s4801 + $0xa8] sm:$0xff]
  %v4824 = vld [vmem:[%s4801 + $0xb0] sm:$0xff]
  %v4825 = vld [vmem:[%s4801 + $0xb8] sm:$0xff]
  %v4826 = vld [vmem:[%s4801 + $0xc0] sm:$0xff]
  %v4827 = vld [vmem:[%s4801 + $0xc8] sm:$0xff]
  %v4828 = vld [vmem:[%s4801 + $0xd0] sm:$0xff]
  %v4829 = vld [vmem:[%s4801 + $0xd8] sm:$0xff]
  %v4830 = vld [vmem:[%s4801 + $0xe0] sm:$0xff]
  %v4831 = vld [vmem:[%s4801 + $0xe8] sm:$0xff]
  %v4832 = vld [vmem:[%s4801 + $0xf0] sm:$0xff]
  %v4833 = vld [vmem:[%s4801 + $0xf8] sm:$0xff]
  %v4839 = vunpack.c.l.b16 %v4763
  %v4840 = vunpack.c.h.b16 %v4763
  %v4841 = vunpack.c.l.b16 %v4764
  %v4842 = vunpack.c.h.b16 %v4764
  %v4843 = vunpack.c.l.b16 %v4765
  %v4844 = vunpack.c.h.b16 %v4765
  %v4845 = vunpack.c.l.b16 %v4766
  %v4846 = vunpack.c.h.b16 %v4766
  %v4847 = vunpack.c.l.b16 %v4800
  %v4848 = vunpack.c.h.b16 %v4800
  %v4849 = vpack.c.b16 %v4841, %v4839
  %v4850 = vpack.c.b16 %v4842, %v4840
  %v4851 = vpack.c.b16 %v4845, %v4843
  %v4852 = vpack.c.b16 %v4846, %v4844
  %v4853 = vpack.c.b16 %v4847, %v4847
  %v4854 = vpack.c.b16 %v4848, %v4848
  %v4856 = vshrl.u32 %v4849, 16
  %v4858 = vshll.u32 %v4849, 16
  %v4860 = vrot.slane %v4858, 1
  %v4861 = vor.u32 %v4856, %v4860
  %v4863 = vshll.u32 %v4851, 16
  %v4865 = vrot.slane %v4863, 1
  %v4866 = vsel %vm2409, %v4861, %v4865
  %v4868 = vshrl.u32 %v4850, 16
  %v4870 = vshll.u32 %v4850, 16
  %v4872 = vrot.slane %v4870, 1
  %v4873 = vor.u32 %v4868, %v4872
  %v4875 = vshll.u32 %v4852, 16
  %v4877 = vrot.slane %v4875, 1
  %v4878 = vsel %vm2409, %v4873, %v4877
  %v4879 = vshrl.u32 %v4851, 16
  %v4881 = vor.u32 %v4879, %v4865
  %v4883 = vshll.u32 %v4853, 16
  %v4885 = vrot.slane %v4883, 1
  %v4886 = vsel %vm2409, %v4881, %v4885
  %v4887 = vshrl.u32 %v4852, 16
  %v4889 = vor.u32 %v4887, %v4877
  %v4891 = vshll.u32 %v4854, 16
  %v4893 = vrot.slane %v4891, 1
  %v4894 = vsel %vm2409, %v4889, %v4893
  %v4895 = vshrl.u32 %v4853, 16
  %v4897 = vor.u32 %v4895, %v4885
  %v4898 = vshrl.u32 %v4854, 16
  %v4900 = vor.u32 %v4898, %v4893
  %v4939 = vunpack.c.l.b16 %v4802
  %v4940 = vunpack.c.h.b16 %v4802
  %v4941 = vunpack.c.l.b16 %v4803
  %v4942 = vunpack.c.h.b16 %v4803
  %v4943 = vunpack.c.l.b16 %v4804
  %v4944 = vunpack.c.h.b16 %v4804
  %v4945 = vunpack.c.l.b16 %v4805
  %v4946 = vunpack.c.h.b16 %v4805
  %v4947 = vunpack.c.l.b16 %v4806
  %v4948 = vunpack.c.h.b16 %v4806
  %v4949 = vunpack.c.l.b16 %v4807
  %v4950 = vunpack.c.h.b16 %v4807
  %v4951 = vunpack.c.l.b16 %v4808
  %v4952 = vunpack.c.h.b16 %v4808
  %v4953 = vunpack.c.l.b16 %v4809
  %v4954 = vunpack.c.h.b16 %v4809
  %v4955 = vunpack.c.l.b16 %v4810
  %v4956 = vunpack.c.h.b16 %v4810
  %v4957 = vunpack.c.l.b16 %v4811
  %v4958 = vunpack.c.h.b16 %v4811
  %v4959 = vunpack.c.l.b16 %v4812
  %v4960 = vunpack.c.h.b16 %v4812
  %v4961 = vunpack.c.l.b16 %v4813
  %v4962 = vunpack.c.h.b16 %v4813
  %v4963 = vunpack.c.l.b16 %v4814
  %v4964 = vunpack.c.h.b16 %v4814
  %v4965 = vunpack.c.l.b16 %v4815
  %v4966 = vunpack.c.h.b16 %v4815
  %v4967 = vunpack.c.l.b16 %v4816
  %v4968 = vunpack.c.h.b16 %v4816
  %v4969 = vunpack.c.l.b16 %v4817
  %v4970 = vunpack.c.h.b16 %v4817
  %v4971 = vunpack.c.l.b16 %v4818
  %v4972 = vunpack.c.h.b16 %v4818
  %v4973 = vunpack.c.l.b16 %v4819
  %v4974 = vunpack.c.h.b16 %v4819
  %v4975 = vunpack.c.l.b16 %v4820
  %v4976 = vunpack.c.h.b16 %v4820
  %v4977 = vunpack.c.l.b16 %v4821
  %v4978 = vunpack.c.h.b16 %v4821
  %v4979 = vunpack.c.l.b16 %v4822
  %v4980 = vunpack.c.h.b16 %v4822
  %v4981 = vunpack.c.l.b16 %v4823
  %v4982 = vunpack.c.h.b16 %v4823
  %v4983 = vunpack.c.l.b16 %v4824
  %v4984 = vunpack.c.h.b16 %v4824
  %v4985 = vunpack.c.l.b16 %v4825
  %v4986 = vunpack.c.h.b16 %v4825
  %v4987 = vunpack.c.l.b16 %v4826
  %v4988 = vunpack.c.h.b16 %v4826
  %v4989 = vunpack.c.l.b16 %v4827
  %v4990 = vunpack.c.h.b16 %v4827
  %v4991 = vunpack.c.l.b16 %v4828
  %v4992 = vunpack.c.h.b16 %v4828
  %v4993 = vunpack.c.l.b16 %v4829
  %v4994 = vunpack.c.h.b16 %v4829
  %v4995 = vunpack.c.l.b16 %v4830
  %v4996 = vunpack.c.h.b16 %v4830
  %v4997 = vunpack.c.l.b16 %v4831
  %v4998 = vunpack.c.h.b16 %v4831
  %v4999 = vunpack.c.l.b16 %v4832
  %v5000 = vunpack.c.h.b16 %v4832
  %v5001 = vunpack.c.l.b16 %v4833
  %v5002 = vunpack.c.h.b16 %v4833
  %v5003 = vpack.c.b16 %v4941, %v4939
  %v5004 = vpack.c.b16 %v4942, %v4940
  %v5005 = vpack.c.b16 %v4945, %v4943
  %v5006 = vpack.c.b16 %v4946, %v4944
  %v5007 = vpack.c.b16 %v4949, %v4947
  %v5008 = vpack.c.b16 %v4950, %v4948
  %v5009 = vpack.c.b16 %v4953, %v4951
  %v5010 = vpack.c.b16 %v4954, %v4952
  %v5011 = vpack.c.b16 %v4957, %v4955
  %v5012 = vpack.c.b16 %v4958, %v4956
  %v5013 = vpack.c.b16 %v4961, %v4959
  %v5014 = vpack.c.b16 %v4962, %v4960
  %v5015 = vpack.c.b16 %v4965, %v4963
  %v5016 = vpack.c.b16 %v4966, %v4964
  %v5017 = vpack.c.b16 %v4969, %v4967
  %v5018 = vpack.c.b16 %v4970, %v4968
  %v5019 = vpack.c.b16 %v4973, %v4971
  %v5020 = vpack.c.b16 %v4974, %v4972
  %v5021 = vpack.c.b16 %v4977, %v4975
  %v5022 = vpack.c.b16 %v4978, %v4976
  %v5023 = vpack.c.b16 %v4981, %v4979
  %v5024 = vpack.c.b16 %v4982, %v4980
  %v5025 = vpack.c.b16 %v4985, %v4983
  %v5026 = vpack.c.b16 %v4986, %v4984
  %v5027 = vpack.c.b16 %v4989, %v4987
  %v5028 = vpack.c.b16 %v4990, %v4988
  %v5029 = vpack.c.b16 %v4993, %v4991
  %v5030 = vpack.c.b16 %v4994, %v4992
  %v5031 = vpack.c.b16 %v4997, %v4995
  %v5032 = vpack.c.b16 %v4998, %v4996
  %v5033 = vpack.c.b16 %v5001, %v4999
  %v5034 = vpack.c.b16 %v5002, %v5000
  %5067 = vmatprep.subr.bf16.mxu0 %v5004
  %5068 = vmatpush1.bf16.msra.mxu0 %v5003
  %5069 = vmatprep.subr.bf16.mxu0 %v5006
  %5070 = vmatpush1.bf16.msra.mxu0 %v5005
  %5071 = vmatprep.subr.bf16.mxu0 %v5008
  %5072 = vmatpush1.bf16.msra.mxu0 %v5007
  %5073 = vmatprep.subr.bf16.mxu0 %v5010
  %5074 = vmatpush1.bf16.msra.mxu0 %v5009
  %5075 = vmatprep.subr.bf16.mxu0 %v5012
  %5076 = vmatpush1.bf16.msra.mxu0 %v5011
  %5077 = vmatprep.subr.bf16.mxu0 %v5014
  %5078 = vmatpush1.bf16.msra.mxu0 %v5013
  %5079 = vmatprep.subr.bf16.mxu0 %v5016
  %5080 = vmatpush1.bf16.msra.mxu0 %v5015
  %5081 = vmatprep.subr.bf16.mxu0 %v5018
  %5082 = vmatpush1.bf16.msra.mxu0 %v5017
  %5083 = vmatprep.subr.bf16.mxu0 %v5020
  %5084 = vmatpush1.bf16.msra.mxu0 %v5019
  %5085 = vmatprep.subr.bf16.mxu0 %v5022
  %5086 = vmatpush1.bf16.msra.mxu0 %v5021
  %5087 = vmatprep.subr.bf16.mxu0 %v5024
  %5088 = vmatpush1.bf16.msra.mxu0 %v5023
  %5089 = vmatprep.subr.bf16.mxu0 %v5026
  %5090 = vmatpush1.bf16.msra.mxu0 %v5025
  %5091 = vmatprep.subr.bf16.mxu0 %v5028
  %5092 = vmatpush1.bf16.msra.mxu0 %v5027
  %5093 = vmatprep.subr.bf16.mxu0 %v5030
  %5094 = vmatpush1.bf16.msra.mxu0 %v5029
  %5095 = vmatprep.subr.bf16.mxu0 %v5032
  %5096 = vmatpush1.bf16.msra.mxu0 %v5031
  %5097 = vmatprep.subr.bf16.mxu0 %v5034
  %5098 = vmatpush1.bf16.msra.mxu0 %v5033
  %5099 = vmatprep.mubr.bf16.mxu0 %v4878
  %5100 = vmatmul.mubr.bf16.gmra.mrb[0].mxu0 %v4866
  %v5101 = vpop.f32.mrb[0].mxu0
  %v5102 = vadd.f32 0.0, %v5101
  %v5103 = vpop.f32.mrb[0].mxu0
  %v5104 = vadd.f32 0.0, %v5103
  %v5105 = vpop.f32.mrb[0].mxu0
  %v5106 = vadd.f32 0.0, %v5105
  %v5107 = vpop.f32.mrb[0].mxu0
  %v5108 = vadd.f32 0.0, %v5107
  %5109 = vmatprep.mubr.bf16.mxu0 %v4894
  %5110 = vmatmul.mubr.bf16.gmra.mrb[0].mxu0 %v4886
  %v5111 = vpop.f32.mrb[0].mxu0
  %v5112 = vadd.f32 0.0, %v5111
  %v5113 = vpop.f32.mrb[0].mxu0
  %v5114 = vadd.f32 0.0, %v5113
  %v5115 = vpop.f32.mrb[0].mxu0
  %v5116 = vadd.f32 0.0, %v5115
  %v5117 = vpop.f32.mrb[0].mxu0
  %v5118 = vadd.f32 0.0, %v5117
  %5119 = vmatprep.mubr.bf16.mxu0 %v4900
  %5120 = vmatmul.mubr.bf16.gmra.mrb[0].mxu0 %v4897
  %v5121 = vpop.f32.mrb[0].mxu0
  %v5122 = vadd.f32 0.0, %v5121
  %v5123 = vpop.f32.mrb[0].mxu0
  %v5124 = vadd.f32 0.0, %v5123
  %v5125 = vpop.f32.mrb[0].mxu0
  %v5126 = vpop.f32.mrb[0].mxu0
  %5127 = vdwg.mxu0
  %v5129 = vunpack.c.l.b16 %v4767
  %v5130 = vunpack.c.h.b16 %v4767
  %v5131 = vpack.c.b16 %v5129, %v5129
  %v5132 = vpack.c.b16 %v5130, %v5130
  %v5171 = vunpack.c.l.b16 %v4768
  %v5172 = vunpack.c.h.b16 %v4768
  %v5173 = vunpack.c.l.b16 %v4769
  %v5174 = vunpack.c.h.b16 %v4769
  %v5175 = vunpack.c.l.b16 %v4770
  %v5176 = vunpack.c.h.b16 %v4770
  %v5177 = vunpack.c.l.b16 %v4771
  %v5178 = vunpack.c.h.b16 %v4771
  %v5179 = vunpack.c.l.b16 %v4772
  %v5180 = vunpack.c.h.b16 %v4772
  %v5181 = vunpack.c.l.b16 %v4773
  %v5182 = vunpack.c.h.b16 %v4773
  %v5183 = vunpack.c.l.b16 %v4774
  %v5184 = vunpack.c.h.b16 %v4774
  %v5185 = vunpack.c.l.b16 %v4775
  %v5186 = vunpack.c.h.b16 %v4775
  %v5187 = vunpack.c.l.b16 %v4776
  %v5188 = vunpack.c.h.b16 %v4776
  %v5189 = vunpack.c.l.b16 %v4777
  %v5190 = vunpack.c.h.b16 %v4777
  %v5191 = vunpack.c.l.b16 %v4778
  %v5192 = vunpack.c.h.b16 %v4778
  %v5193 = vunpack.c.l.b16 %v4779
  %v5194 = vunpack.c.h.b16 %v4779
  %v5195 = vunpack.c.l.b16 %v4780
  %v5196 = vunpack.c.h.b16 %v4780
  %v5197 = vunpack.c.l.b16 %v4781
  %v5198 = vunpack.c.h.b16 %v4781
  %v5199 = vunpack.c.l.b16 %v4782
  %v5200 = vunpack.c.h.b16 %v4782
  %v5201 = vunpack.c.l.b16 %v4783
  %v5202 = vunpack.c.h.b16 %v4783
  %v5203 = vunpack.c.l.b16 %v4784
  %v5204 = vunpack.c.h.b16 %v4784
  %v5205 = vunpack.c.l.b16 %v4785
  %v5206 = vunpack.c.h.b16 %v4785
  %v5207 = vunpack.c.l.b16 %v4786
  %v5208 = vunpack.c.h.b16 %v4786
  %v5209 = vunpack.c.l.b16 %v4787
  %v5210 = vunpack.c.h.b16 %v4787
  %v5211 = vunpack.c.l.b16 %v4788
  %v5212 = vunpack.c.h.b16 %v4788
  %v5213 = vunpack.c.l.b16 %v4789
  %v5214 = vunpack.c.h.b16 %v4789
  %v5215 = vunpack.c.l.b16 %v4790
  %v5216 = vunpack.c.h.b16 %v4790
  %v5217 = vunpack.c.l.b16 %v4791
  %v5218 = vunpack.c.h.b16 %v4791
  %v5219 = vunpack.c.l.b16 %v4792
  %v5220 = vunpack.c.h.b16 %v4792
  %v5221 = vunpack.c.l.b16 %v4793
  %v5222 = vunpack.c.h.b16 %v4793
  %v5223 = vunpack.c.l.b16 %v4794
  %v5224 = vunpack.c.h.b16 %v4794
  %v5225 = vunpack.c.l.b16 %v4795
  %v5226 = vunpack.c.h.b16 %v4795
  %v5227 = vunpack.c.l.b16 %v4796
  %v5228 = vunpack.c.h.b16 %v4796
  %v5229 = vunpack.c.l.b16 %v4797
  %v5230 = vunpack.c.h.b16 %v4797
  %v5231 = vunpack.c.l.b16 %v4798
  %v5232 = vunpack.c.h.b16 %v4798
  %v5233 = vunpack.c.l.b16 %v4799
  %v5234 = vunpack.c.h.b16 %v4799
  %v5235 = vpack.c.b16 %v5173, %v5171
  %v5236 = vpack.c.b16 %v5174, %v5172
  %v5237 = vpack.c.b16 %v5177, %v5175
  %v5238 = vpack.c.b16 %v5178, %v5176
  %v5239 = vpack.c.b16 %v5181, %v5179
  %v5240 = vpack.c.b16 %v5182, %v5180
  %v5241 = vpack.c.b16 %v5185, %v5183
  %v5242 = vpack.c.b16 %v5186, %v5184
  %v5243 = vpack.c.b16 %v5189, %v5187
  %v5244 = vpack.c.b16 %v5190, %v5188
  %v5245 = vpack.c.b16 %v5193, %v5191
  %v5246 = vpack.c.b16 %v5194, %v5192
  %v5247 = vpack.c.b16 %v5197, %v5195
  %v5248 = vpack.c.b16 %v5198, %v5196
  %v5249 = vpack.c.b16 %v5201, %v5199
  %v5250 = vpack.c.b16 %v5202, %v5200
  %v5251 = vpack.c.b16 %v5205, %v5203
  %v5252 = vpack.c.b16 %v5206, %v5204
  %v5253 = vpack.c.b16 %v5209, %v5207
  %v5254 = vpack.c.b16 %v5210, %v5208
  %v5255 = vpack.c.b16 %v5213, %v5211
  %v5256 = vpack.c.b16 %v5214, %v5212
  %v5257 = vpack.c.b16 %v5217, %v5215
  %v5258 = vpack.c.b16 %v5218, %v5216
  %v5259 = vpack.c.b16 %v5221, %v5219
  %v5260 = vpack.c.b16 %v5222, %v5220
  %v5261 = vpack.c.b16 %v5225, %v5223
  %v5262 = vpack.c.b16 %v5226, %v5224
  %v5263 = vpack.c.b16 %v5229, %v5227
  %v5264 = vpack.c.b16 %v5230, %v5228
  %v5265 = vpack.c.b16 %v5233, %v5231
  %v5266 = vpack.c.b16 %v5234, %v5232
  %5299 = vmatprep.subr.bf16.mxu0 %v5236
  %5300 = vmatpush1.bf16.msra.mxu0 %v5235
  %5301 = vmatprep.subr.bf16.mxu0 %v5238
  %5302 = vmatpush1.bf16.msra.mxu0 %v5237
  %5303 = vmatprep.subr.bf16.mxu0 %v5240
  %5304 = vmatpush1.bf16.msra.mxu0 %v5239
  %5305 = vmatprep.subr.bf16.mxu0 %v5242
  %5306 = vmatpush1.bf16.msra.mxu0 %v5241
  %5307 = vmatprep.subr.bf16.mxu0 %v5244
  %5308 = vmatpush1.bf16.msra.mxu0 %v5243
  %5309 = vmatprep.subr.bf16.mxu0 %v5246
  %5310 = vmatpush1.bf16.msra.mxu0 %v5245
  %5311 = vmatprep.subr.bf16.mxu0 %v5248
  %5312 = vmatpush1.bf16.msra.mxu0 %v5247
  %5313 = vmatprep.subr.bf16.mxu0 %v5250
  %5314 = vmatpush1.bf16.msra.mxu0 %v5249
  %5315 = vmatprep.subr.bf16.mxu0 %v5252
  %5316 = vmatpush1.bf16.msra.mxu0 %v5251
  %5317 = vmatprep.subr.bf16.mxu0 %v5254
  %5318 = vmatpush1.bf16.msra.mxu0 %v5253
  %5319 = vmatprep.subr.bf16.mxu0 %v5256
  %5320 = vmatpush1.bf16.msra.mxu0 %v5255
  %5321 = vmatprep.subr.bf16.mxu0 %v5258
  %5322 = vmatpush1.bf16.msra.mxu0 %v5257
  %5323 = vmatprep.subr.bf16.mxu0 %v5260
  %5324 = vmatpush1.bf16.msra.mxu0 %v5259
  %5325 = vmatprep.subr.bf16.mxu0 %v5262
  %5326 = vmatpush1.bf16.msra.mxu0 %v5261
  %5327 = vmatprep.subr.bf16.mxu0 %v5264
  %5328 = vmatpush1.bf16.msra.mxu0 %v5263
  %5329 = vmatprep.subr.bf16.mxu0 %v5266
  %5330 = vmatpush1.bf16.msra.mxu0 %v5265
  %5331 = vmatprep.mubr.bf16.mxu0 %v4850
  %5332 = vmatmul.mubr.bf16.gmra.mrb[0].mxu0 %v4849
  %v5333 = vpop.f32.mrb[0].mxu0
  %v5334 = vadd.f32 %v5102, %v5333
  %v5335 = vpop.f32.mrb[0].mxu0
  %v5336 = vadd.f32 %v5104, %v5335
  %v5337 = vpop.f32.mrb[0].mxu0
  %v5338 = vadd.f32 %v5106, %v5337
  %v5339 = vpop.f32.mrb[0].mxu0
  %v5340 = vadd.f32 %v5108, %v5339
  %5341 = vmatprep.mubr.bf16.mxu0 %v4852
  %5342 = vmatmul.mubr.bf16.gmra.mrb[0].mxu0 %v4851
  %v5343 = vpop.f32.mrb[0].mxu0
  %v5344 = vadd.f32 %v5112, %v5343
  %v5345 = vpop.f32.mrb[0].mxu0
  %v5346 = vadd.f32 %v5114, %v5345
  %v5347 = vpop.f32.mrb[0].mxu0
  %v5348 = vadd.f32 %v5116, %v5347
  %v5349 = vpop.f32.mrb[0].mxu0
  %v5350 = vadd.f32 %v5118, %v5349
  %5351 = vmatprep.mubr.bf16.mxu0 %v5132
  %5352 = vmatmul.mubr.bf16.gmra.mrb[0].mxu0 %v5131
  %v5353 = vpop.f32.mrb[0].mxu0
  %v5354 = vadd.f32 %v5122, %v5353
  %v5355 = vpop.f32.mrb[0].mxu0
  %v5356 = vadd.f32 %v5124, %v5355
  %v5357 = vpop.f32.mrb[0].mxu0
  %v5358 = vpop.f32.mrb[0].mxu0
  %5359 = vdwg.mxu0
  %v5360 = vld [vmem:[#allocation4] sm:$0xee]
  %s5361 = scalar_lea.vmem %s14, 512
  %v5362 = vld [vmem:[%s5361] sm:$0xff]
  %v5363 = vld [vmem:[%s5361 + $0x8] sm:$0xff]
  %v5364 = vld [vmem:[%s5361 + $0x10] sm:$0xff]
  %v5365 = vld [vmem:[%s5361 + $0x18] sm:$0xff]
  %v5366 = vld [vmem:[%s5361 + $0x20] sm:$0xff]
  %v5367 = vld [vmem:[%s5361 + $0x28] sm:$0xff]
  %v5368 = vld [vmem:[%s5361 + $0x30] sm:$0xff]
  %v5369 = vld [vmem:[%s5361 + $0x38] sm:$0xff]
  %v5370 = vld [vmem:[%s5361 + $0x40] sm:$0xff]
  %v5371 = vld [vmem:[%s5361 + $0x48] sm:$0xff]
  %v5372 = vld [vmem:[%s5361 + $0x50] sm:$0xff]
  %v5373 = vld [vmem:[%s5361 + $0x58] sm:$0xff]
  %v5374 = vld [vmem:[%s5361 + $0x60] sm:$0xff]
  %v5375 = vld [vmem:[%s5361 + $0x68] sm:$0xff]
  %v5376 = vld [vmem:[%s5361 + $0x70] sm:$0xff]
  %v5377 = vld [vmem:[%s5361 + $0x78] sm:$0xff]
  %v5378 = vld [vmem:[%s5361 + $0x80] sm:$0xff]
  %v5379 = vld [vmem:[%s5361 + $0x88] sm:$0xff]
  %v5380 = vld [vmem:[%s5361 + $0x90] sm:$0xff]
  %v5381 = vld [vmem:[%s5361 + $0x98] sm:$0xff]
  %v5382 = vld [vmem:[%s5361 + $0xa0] sm:$0xff]
  %v5383 = vld [vmem:[%s5361 + $0xa8] sm:$0xff]
  %v5384 = vld [vmem:[%s5361 + $0xb0] sm:$0xff]
  %v5385 = vld [vmem:[%s5361 + $0xb8] sm:$0xff]
  %v5386 = vld [vmem:[%s5361 + $0xc0] sm:$0xff]
  %v5387 = vld [vmem:[%s5361 + $0xc8] sm:$0xff]
  %v5388 = vld [vmem:[%s5361 + $0xd0] sm:$0xff]
  %v5389 = vld [vmem:[%s5361 + $0xd8] sm:$0xff]
  %v5390 = vld [vmem:[%s5361 + $0xe0] sm:$0xff]
  %v5391 = vld [vmem:[%s5361 + $0xe8] sm:$0xff]
  %v5392 = vld [vmem:[%s5361 + $0xf0] sm:$0xff]
  %v5393 = vld [vmem:[%s5361 + $0xf8] sm:$0xff]
  %v5395 = vunpack.c.l.b16 %v5360
  %v5396 = vunpack.c.h.b16 %v5360
  %v5397 = vpack.c.b16 %v4841, %v5395
  %v5398 = vpack.c.b16 %v4842, %v5396
  %v5399 = vrot.slane %v5397, 1
  %v5400 = vrot.slane %v4851, 1
  %v5401 = vsel %vm3368, %v5399, %v5400
  %v5402 = vrot.slane %v5398, 1
  %v5403 = vrot.slane %v4852, 1
  %v5404 = vsel %vm3368, %v5402, %v5403
  %v5405 = vrot.slane %v4853, 1
  %v5406 = vsel %vm3368, %v5400, %v5405
  %v5407 = vrot.slane %v4854, 1
  %v5408 = vsel %vm3368, %v5403, %v5407
  %v5447 = vunpack.c.l.b16 %v5362
  %v5448 = vunpack.c.h.b16 %v5362
  %v5449 = vunpack.c.l.b16 %v5363
  %v5450 = vunpack.c.h.b16 %v5363
  %v5451 = vunpack.c.l.b16 %v5364
  %v5452 = vunpack.c.h.b16 %v5364
  %v5453 = vunpack.c.l.b16 %v5365
  %v5454 = vunpack.c.h.b16 %v5365
  %v5455 = vunpack.c.l.b16 %v5366
  %v5456 = vunpack.c.h.b16 %v5366
  %v5457 = vunpack.c.l.b16 %v5367
  %v5458 = vunpack.c.h.b16 %v5367
  %v5459 = vunpack.c.l.b16 %v5368
  %v5460 = vunpack.c.h.b16 %v5368
  %v5461 = vunpack.c.l.b16 %v5369
  %v5462 = vunpack.c.h.b16 %v5369
  %v5463 = vunpack.c.l.b16 %v5370
  %v5464 = vunpack.c.h.b16 %v5370
  %v5465 = vunpack.c.l.b16 %v5371
  %v5466 = vunpack.c.h.b16 %v5371
  %v5467 = vunpack.c.l.b16 %v5372
  %v5468 = vunpack.c.h.b16 %v5372
  %v5469 = vunpack.c.l.b16 %v5373
  %v5470 = vunpack.c.h.b16 %v5373
  %v5471 = vunpack.c.l.b16 %v5374
  %v5472 = vunpack.c.h.b16 %v5374
  %v5473 = vunpack.c.l.b16 %v5375
  %v5474 = vunpack.c.h.b16 %v5375
  %v5475 = vunpack.c.l.b16 %v5376
  %v5476 = vunpack.c.h.b16 %v5376
  %v5477 = vunpack.c.l.b16 %v5377
  %v5478 = vunpack.c.h.b16 %v5377
  %v5479 = vunpack.c.l.b16 %v5378
  %v5480 = vunpack.c.h.b16 %v5378
  %v5481 = vunpack.c.l.b16 %v5379
  %v5482 = vunpack.c.h.b16 %v5379
  %v5483 = vunpack.c.l.b16 %v5380
  %v5484 = vunpack.c.h.b16 %v5380
  %v5485 = vunpack.c.l.b16 %v5381
  %v5486 = vunpack.c.h.b16 %v5381
  %v5487 = vunpack.c.l.b16 %v5382
  %v5488 = vunpack.c.h.b16 %v5382
  %v5489 = vunpack.c.l.b16 %v5383
  %v5490 = vunpack.c.h.b16 %v5383
  %v5491 = vunpack.c.l.b16 %v5384
  %v5492 = vunpack.c.h.b16 %v5384
  %v5493 = vunpack.c.l.b16 %v5385
  %v5494 = vunpack.c.h.b16 %v5385
  %v5495 = vunpack.c.l.b16 %v5386
  %v5496 = vunpack.c.h.b16 %v5386
  %v5497 = vunpack.c.l.b16 %v5387
  %v5498 = vunpack.c.h.b16 %v5387
  %v5499 = vunpack.c.l.b16 %v5388
  %v5500 = vunpack.c.h.b16 %v5388
  %v5501 = vunpack.c.l.b16 %v5389
  %v5502 = vunpack.c.h.b16 %v5389
  %v5503 = vunpack.c.l.b16 %v5390
  %v5504 = vunpack.c.h.b16 %v5390
  %v5505 = vunpack.c.l.b16 %v5391
  %v5506 = vunpack.c.h.b16 %v5391
  %v5507 = vunpack.c.l.b16 %v5392
  %v5508 = vunpack.c.h.b16 %v5392
  %v5509 = vunpack.c.l.b16 %v5393
  %v5510 = vunpack.c.h.b16 %v5393
  %v5511 = vpack.c.b16 %v5449, %v5447
  %v5512 = vpack.c.b16 %v5450, %v5448
  %v5513 = vpack.c.b16 %v5453, %v5451
  %v5514 = vpack.c.b16 %v5454, %v5452
  %v5515 = vpack.c.b16 %v5457, %v5455
  %v5516 = vpack.c.b16 %v5458, %v5456
  %v5517 = vpack.c.b16 %v5461, %v5459
  %v5518 = vpack.c.b16 %v5462, %v5460
  %v5519 = vpack.c.b16 %v5465, %v5463
  %v5520 = vpack.c.b16 %v5466, %v5464
  %v5521 = vpack.c.b16 %v5469, %v5467
  %v5522 = vpack.c.b16 %v5470, %v5468
  %v5523 = vpack.c.b16 %v5473, %v5471
  %v5524 = vpack.c.b16 %v5474, %v5472
  %v5525 = vpack.c.b16 %v5477, %v5475
  %v5526 = vpack.c.b16 %v5478, %v5476
  %v5527 = vpack.c.b16 %v5481, %v5479
  %v5528 = vpack.c.b16 %v5482, %v5480
  %v5529 = vpack.c.b16 %v5485, %v5483
  %v5530 = vpack.c.b16 %v5486, %v5484
  %v5531 = vpack.c.b16 %v5489, %v5487
  %v5532 = vpack.c.b16 %v5490, %v5488
  %v5533 = vpack.c.b16 %v5493, %v5491
  %v5534 = vpack.c.b16 %v5494, %v5492
  %v5535 = vpack.c.b16 %v5497, %v5495
  %v5536 = vpack.c.b16 %v5498, %v5496
  %v5537 = vpack.c.b16 %v5501, %v5499
  %v5538 = vpack.c.b16 %v5502, %v5500
  %v5539 = vpack.c.b16 %v5505, %v5503
  %v5540 = vpack.c.b16 %v5506, %v5504
  %v5541 = vpack.c.b16 %v5509, %v5507
  %v5542 = vpack.c.b16 %v5510, %v5508
  %5575 = vmatprep.subr.bf16.mxu0 %v5512
  %5576 = vmatpush1.bf16.msra.mxu0 %v5511
  %5577 = vmatprep.subr.bf16.mxu0 %v5514
  %5578 = vmatpush1.bf16.msra.mxu0 %v5513
  %5579 = vmatprep.subr.bf16.mxu0 %v5516
  %5580 = vmatpush1.bf16.msra.mxu0 %v5515
  %5581 = vmatprep.subr.bf16.mxu0 %v5518
  %5582 = vmatpush1.bf16.msra.mxu0 %v5517
  %5583 = vmatprep.subr.bf16.mxu0 %v5520
  %5584 = vmatpush1.bf16.msra.mxu0 %v5519
  %5585 = vmatprep.subr.bf16.mxu0 %v5522
  %5586 = vmatpush1.bf16.msra.mxu0 %v5521
  %5587 = vmatprep.subr.bf16.mxu0 %v5524
  %5588 = vmatpush1.bf16.msra.mxu0 %v5523
  %5589 = vmatprep.subr.bf16.mxu0 %v5526
  %5590 = vmatpush1.bf16.msra.mxu0 %v5525
  %5591 = vmatprep.subr.bf16.mxu0 %v5528
  %5592 = vmatpush1.bf16.msra.mxu0 %v5527
  %5593 = vmatprep.subr.bf16.mxu0 %v5530
  %5594 = vmatpush1.bf16.msra.mxu0 %v5529
  %5595 = vmatprep.subr.bf16.mxu0 %v5532
  %5596 = vmatpush1.bf16.msra.mxu0 %v5531
  %5597 = vmatprep.subr.bf16.mxu0 %v5534
  %5598 = vmatpush1.bf16.msra.mxu0 %v5533
  %5599 = vmatprep.subr.bf16.mxu0 %v5536
  %5600 = vmatpush1.bf16.msra.mxu0 %v5535
  %5601 = vmatprep.subr.bf16.mxu0 %v5538
  %5602 = vmatpush1.bf16.msra.mxu0 %v5537
  %5603 = vmatprep.subr.bf16.mxu0 %v5540
  %5604 = vmatpush1.bf16.msra.mxu0 %v5539
  %5605 = vmatprep.subr.bf16.mxu0 %v5542
  %5606 = vmatpush1.bf16.msra.mxu0 %v5541
  %5607 = vmatprep.mubr.bf16.mxu0 %v5404
  %5608 = vmatmul.mubr.bf16.gmra.mrb[0].mxu0 %v5401
  %v5609 = vpop.f32.mrb[0].mxu0
  %v5610 = vadd.f32 0.0, %v5609
  %v5611 = vpop.f32.mrb[0].mxu0
  %v5612 = vadd.f32 0.0, %v5611
  %v5613 = vpop.f32.mrb[0].mxu0
  %v5614 = vadd.f32 0.0, %v5613
  %v5615 = vpop.f32.mrb[0].mxu0
  %v5616 = vadd.f32 0.0, %v5615
  %5617 = vmatprep.mubr.bf16.mxu0 %v5408
  %5618 = vmatmul.mubr.bf16.gmra.mrb[0].mxu0 %v5406
  %v5619 = vpop.f32.mrb[0].mxu0
  %v5620 = vadd.f32 0.0, %v5619
  %v5621 = vpop.f32.mrb[0].mxu0
  %v5622 = vadd.f32 0.0, %v5621
  %v5623 = vpop.f32.mrb[0].mxu0
  %v5624 = vadd.f32 0.0, %v5623
  %v5625 = vpop.f32.mrb[0].mxu0
  %v5626 = vadd.f32 0.0, %v5625
  %5627 = vmatprep.mubr.bf16.mxu0 %v5407
  %5628 = vmatmul.mubr.bf16.gmra.mrb[0].mxu0 %v5405
  %v5629 = vpop.f32.mrb[0].mxu0
  %v5630 = vadd.f32 0.0, %v5629
  %v5631 = vpop.f32.mrb[0].mxu0
  %v5632 = vadd.f32 0.0, %v5631
  %v5633 = vpop.f32.mrb[0].mxu0
  %v5634 = vpop.f32.mrb[0].mxu0
  %5635 = vdwg.mxu0
  %v5636 = vadd.f32 %v5334, %v5610
  %v5637 = vadd.f32 %v5336, %v5612
  %v5638 = vadd.f32 %v5338, %v5614
  %v5639 = vadd.f32 %v5340, %v5616
  %v5640 = vadd.f32 %v5344, %v5620
  %v5641 = vadd.f32 %v5346, %v5622
  %v5642 = vadd.f32 %v5348, %v5624
  %v5643 = vadd.f32 %v5350, %v5626
  %v5644 = vadd.f32 %v5354, %v5630
  %v5645 = vadd.f32 %v5356, %v5632
  %v5646 = vadd.f32 %v5636, %v5638
  %v5647 = vrot.slane %v5646, 4
  %v5648 = vadd.f32 %v5646, %v5647
  %v5649 = vrot.slane %v5648, 2
  %v5650 = vadd.f32 %v5648, %v5649
  %v5651 = vrot.slane %v5650, 1
  %v5652 = vadd.f32 %v5650, %v5651
  %v5653 = vadd.f32 %v5652, 0.0
  %v5654 = vadd.f32 %v5637, %v5639
  %v5655 = vrot.slane %v5654, 4
  %v5656 = vadd.f32 %v5654, %v5655
  %v5657 = vrot.slane %v5656, 2
  %v5658 = vadd.f32 %v5656, %v5657
  %v5659 = vrot.slane %v5658, 1
  %v5660 = vadd.f32 %v5658, %v5659
  %v5661 = vadd.f32 %v5653, %v5660
  %v5665 = vrot.slane %v5640, 2
  %v5666 = vrot.slane %v5642, 2
  %v5667 = vsel %vm3845, %v5665, %v5666
  %v5668 = vrot.slane %v5644, 2
  %v5669 = vsel %vm3845, %v5666, %v5668
  %v5672 = vadd.f32 %v5667, %v5669
  %v5673 = vrot.slane %v5672, 4
  %v5674 = vadd.f32 %v5672, %v5673
  %v5675 = vrot.slane %v5674, 2
  %v5676 = vadd.f32 %v5674, %v5675
  %v5677 = vrot.slane %v5676, 1
  %v5678 = vadd.f32 %v5676, %v5677
  %v5679 = vadd.f32 %v5661, %v5678
  %v5683 = vrot.slane %v5641, 2
  %v5684 = vrot.slane %v5643, 2
  %v5685 = vsel %vm3845, %v5683, %v5684
  %v5686 = vrot.slane %v5645, 2
  %v5687 = vsel %vm3845, %v5684, %v5686
  %v5690 = vadd.f32 %v5685, %v5687
  %v5691 = vrot.slane %v5690, 4
  %v5692 = vadd.f32 %v5690, %v5691
  %v5693 = vrot.slane %v5692, 2
  %v5694 = vadd.f32 %v5692, %v5693
  %v5695 = vrot.slane %v5694, 1
  %v5696 = vadd.f32 %v5694, %v5695
  %v5697 = vadd.f32 %v5679, %v5696
  %v5698 = vld [vmem:[%s15] sm:$0xff]
  %v5699 = vld [vmem:[%s15 + $0x8] sm:$0xff]
  %v5700 = vld [vmem:[%s15 + $0x10] sm:$0xff]
  %v5701 = vld [vmem:[%s15 + $0x18] sm:$0xff]
  %v5702 = vld [vmem:[%s15 + $0x20] sm:$0xff]
  %v5703 = vld [vmem:[%s15 + $0x28] sm:$0xff]
  %v5704 = vld [vmem:[%s15 + $0x30] sm:$0xff]
  %v5705 = vld [vmem:[%s15 + $0x38] sm:$0xff]
  %v5706 = vld [vmem:[%s15 + $0x40] sm:$0xff]
  %v5707 = vld [vmem:[%s15 + $0x48] sm:$0xff]
  %v5708 = vld [vmem:[%s15 + $0x50] sm:$0xff]
  %v5709 = vld [vmem:[%s15 + $0x58] sm:$0xff]
  %v5710 = vld [vmem:[%s15 + $0x60] sm:$0xff]
  %v5711 = vld [vmem:[%s15 + $0x68] sm:$0xff]
  %v5712 = vld [vmem:[%s15 + $0x70] sm:$0xff]
  %v5713 = vld [vmem:[%s15 + $0x78] sm:$0xff]
  %5714 = vmatprep.subr.mxu0 0.0
  %5715 = vmatpush1.msra.mxu0 %v5698
  %5716 = vmatprep.subr.mxu0 0.0
  %5717 = vmatpush1.msra.mxu0 %v5699
  %5718 = vmatprep.subr.mxu0 0.0
  %5719 = vmatpush1.msra.mxu0 %v5700
  %5720 = vmatprep.subr.mxu0 0.0
  %5721 = vmatpush1.msra.mxu0 %v5701
  %5722 = vmatprep.subr.mxu0 0.0
  %5723 = vmatpush1.msra.mxu0 %v5702
  %5724 = vmatprep.subr.mxu0 0.0
  %5725 = vmatpush1.msra.mxu0 %v5703
  %5726 = vmatprep.subr.mxu0 0.0
  %5727 = vmatpush1.msra.mxu0 %v5704
  %5728 = vmatprep.subr.mxu0 0.0
  %5729 = vmatpush1.msra.mxu0 %v5705
  %5730 = vmatprep.subr.mxu0 0.0
  %5731 = vmatpush1.msra.mxu0 %v5706
  %5732 = vmatprep.subr.mxu0 0.0
  %5733 = vmatpush1.msra.mxu0 %v5707
  %5734 = vmatprep.subr.mxu0 0.0
  %5735 = vmatpush1.msra.mxu0 %v5708
  %5736 = vmatprep.subr.mxu0 0.0
  %5737 = vmatpush1.msra.mxu0 %v5709
  %5738 = vmatprep.subr.mxu0 0.0
  %5739 = vmatpush1.msra.mxu0 %v5710
  %5740 = vmatprep.subr.mxu0 0.0
  %5741 = vmatpush1.msra.mxu0 %v5711
  %5742 = vmatprep.subr.mxu0 0.0
  %5743 = vmatpush1.msra.mxu0 %v5712
  %5744 = vmatprep.subr.mxu0 0.0
  %5745 = vmatpush1.msra.mxu0 %v5713
  %5746 = vmatprep.subr.mxu0 0.0
  %5747 = vmatpush1.msra.mxu0 0.0
  %5748 = vmatprep.subr.mxu0 0.0
  %5749 = vmatpush1.msra.mxu0 0.0
  %5750 = vmatprep.subr.mxu0 0.0
  %5751 = vmatpush1.msra.mxu0 0.0
  %5752 = vmatprep.subr.mxu0 0.0
  %5753 = vmatpush1.msra.mxu0 0.0
  %5754 = vmatprep.subr.mxu0 0.0
  %5755 = vmatpush1.msra.mxu0 0.0
  %5756 = vmatprep.subr.mxu0 0.0
  %5757 = vmatpush1.msra.mxu0 0.0
  %5758 = vmatprep.subr.mxu0 0.0
  %5759 = vmatpush1.msra.mxu0 0.0
  %5760 = vmatprep.subr.mxu0 0.0
  %5761 = vmatpush1.msra.mxu0 0.0
  %5762 = vmatprep.subr.mxu0 0.0
  %5763 = vmatpush1.msra.mxu0 0.0
  %5764 = vmatprep.subr.mxu0 0.0
  %5765 = vmatpush1.msra.mxu0 0.0
  %5766 = vmatprep.subr.mxu0 0.0
  %5767 = vmatpush1.msra.mxu0 0.0
  %5768 = vmatprep.subr.mxu0 0.0
  %5769 = vmatpush1.msra.mxu0 0.0
  %5770 = vmatprep.subr.mxu0 0.0
  %5771 = vmatpush1.msra.mxu0 0.0
  %5772 = vmatprep.subr.mxu0 0.0
  %5773 = vmatpush1.msra.mxu0 0.0
  %5774 = vmatprep.subr.mxu0 0.0
  %5775 = vmatpush1.msra.mxu0 0.0
  %5776 = vmatprep.subr.mxu0 0.0
  %5777 = vmatpush1.msra.mxu0 0.0
  %5778 = vmatprep.mubr.f32.mxu0 0.0
  %5779 = vmatmul.mubr.f32.gmra.mrb[0].mxu0 %v5697
  %v5780 = vpop.f32.mrb[0].mxu0
  %v5781 = vadd.f32 0.0, %v5780
  %v5782 = vpop.f32.mrb[0].mxu0
  %5783 = vdwg.mxu0
  %v5784 = vrcp.pop 2048.0
  %v5785 = vmul.f32 %v5781, %v5784
  %v5786 = vlaneseq
  %v5787 = vshrl.u32 %v5786, 7
  %v5788 = vsub.s32 0, %v5787
  %v5789 = vrot.slane %v5785, %v5788
  %v5790 = vsub.f32 %v5636, %v5789
  %v5791 = vsub.f32 %v5638, %v5789
  %v5792 = vsub.f32 %v5637, %v5789
  %v5793 = vsub.f32 %v5639, %v5789
  %v5794 = vmul.f32 %v5790, %v5790
  %v5795 = vmul.f32 %v5791, %v5791
  %v5796 = vadd.f32 %v5794, %v5795
  %v5797 = vrot.slane %v5796, 4
  %v5798 = vadd.f32 %v5796, %v5797
  %v5799 = vrot.slane %v5798, 2
  %v5800 = vadd.f32 %v5798, %v5799
  %v5801 = vrot.slane %v5800, 1
  %v5802 = vadd.f32 %v5800, %v5801
  %v5803 = vadd.f32 %v5802, 0.0
  %v5804 = vmul.f32 %v5792, %v5792
  %v5805 = vmul.f32 %v5793, %v5793
  %v5806 = vadd.f32 %v5804, %v5805
  %v5807 = vrot.slane %v5806, 4
  %v5808 = vadd.f32 %v5806, %v5807
  %v5809 = vrot.slane %v5808, 2
  %v5810 = vadd.f32 %v5808, %v5809
  %v5811 = vrot.slane %v5810, 1
  %v5812 = vadd.f32 %v5810, %v5811
  %v5813 = vadd.f32 %v5803, %v5812
  %v5814 = vsub.f32 %v5640, %v5789
  %v5815 = vsub.f32 %v5642, %v5789
  %v5816 = vsub.f32 %v5644, %v5789
  %v5817 = vsub.f32 %v5641, %v5789
  %v5818 = vsub.f32 %v5643, %v5789
  %v5819 = vsub.f32 %v5645, %v5789
  %v5820 = vmul.f32 %v5814, %v5814
  %v5821 = vmul.f32 %v5815, %v5815
  %v5822 = vmul.f32 %v5816, %v5816
  %v5826 = vrot.slane %v5820, 2
  %v5827 = vrot.slane %v5821, 2
  %v5828 = vsel %vm3845, %v5826, %v5827
  %v5829 = vrot.slane %v5822, 2
  %v5830 = vsel %vm3845, %v5827, %v5829
  %v5833 = vadd.f32 %v5828, %v5830
  %v5834 = vrot.slane %v5833, 4
  %v5835 = vadd.f32 %v5833, %v5834
  %v5836 = vrot.slane %v5835, 2
  %v5837 = vadd.f32 %v5835, %v5836
  %v5838 = vrot.slane %v5837, 1
  %v5839 = vadd.f32 %v5837, %v5838
  %v5840 = vadd.f32 %v5813, %v5839
  %v5841 = vmul.f32 %v5817, %v5817
  %v5842 = vmul.f32 %v5818, %v5818
  %v5843 = vmul.f32 %v5819, %v5819
  %v5847 = vrot.slane %v5841, 2
  %v5848 = vrot.slane %v5842, 2
  %v5849 = vsel %vm3845, %v5847, %v5848
  %v5850 = vrot.slane %v5843, 2
  %v5851 = vsel %vm3845, %v5848, %v5850
  %v5854 = vadd.f32 %v5849, %v5851
  %v5855 = vrot.slane %v5854, 4
  %v5856 = vadd.f32 %v5854, %v5855
  %v5857 = vrot.slane %v5856, 2
  %v5858 = vadd.f32 %v5856, %v5857
  %v5859 = vrot.slane %v5858, 1
  %v5860 = vadd.f32 %v5858, %v5859
  %v5861 = vadd.f32 %v5840, %v5860
  %5862 = vmatprep.subr.mxu0 0.0
  %5863 = vmatpush1.msra.mxu0 %v5698
  %5864 = vmatprep.subr.mxu0 0.0
  %5865 = vmatpush1.msra.mxu0 %v5699
  %5866 = vmatprep.subr.mxu0 0.0
  %5867 = vmatpush1.msra.mxu0 %v5700
  %5868 = vmatprep.subr.mxu0 0.0
  %5869 = vmatpush1.msra.mxu0 %v5701
  %5870 = vmatprep.subr.mxu0 0.0
  %5871 = vmatpush1.msra.mxu0 %v5702
  %5872 = vmatprep.subr.mxu0 0.0
  %5873 = vmatpush1.msra.mxu0 %v5703
  %5874 = vmatprep.subr.mxu0 0.0
  %5875 = vmatpush1.msra.mxu0 %v5704
  %5876 = vmatprep.subr.mxu0 0.0
  %5877 = vmatpush1.msra.mxu0 %v5705
  %5878 = vmatprep.subr.mxu0 0.0
  %5879 = vmatpush1.msra.mxu0 %v5706
  %5880 = vmatprep.subr.mxu0 0.0
  %5881 = vmatpush1.msra.mxu0 %v5707
  %5882 = vmatprep.subr.mxu0 0.0
  %5883 = vmatpush1.msra.mxu0 %v5708
  %5884 = vmatprep.subr.mxu0 0.0
  %5885 = vmatpush1.msra.mxu0 %v5709
  %5886 = vmatprep.subr.mxu0 0.0
  %5887 = vmatpush1.msra.mxu0 %v5710
  %5888 = vmatprep.subr.mxu0 0.0
  %5889 = vmatpush1.msra.mxu0 %v5711
  %5890 = vmatprep.subr.mxu0 0.0
  %5891 = vmatpush1.msra.mxu0 %v5712
  %5892 = vmatprep.subr.mxu0 0.0
  %5893 = vmatpush1.msra.mxu0 %v5713
  %5894 = vmatprep.subr.mxu0 0.0
  %5895 = vmatpush1.msra.mxu0 0.0
  %5896 = vmatprep.subr.mxu0 0.0
  %5897 = vmatpush1.msra.mxu0 0.0
  %5898 = vmatprep.subr.mxu0 0.0
  %5899 = vmatpush1.msra.mxu0 0.0
  %5900 = vmatprep.subr.mxu0 0.0
  %5901 = vmatpush1.msra.mxu0 0.0
  %5902 = vmatprep.subr.mxu0 0.0
  %5903 = vmatpush1.msra.mxu0 0.0
  %5904 = vmatprep.subr.mxu0 0.0
  %5905 = vmatpush1.msra.mxu0 0.0
  %5906 = vmatprep.subr.mxu0 0.0
  %5907 = vmatpush1.msra.mxu0 0.0
  %5908 = vmatprep.subr.mxu0 0.0
  %5909 = vmatpush1.msra.mxu0 0.0
  %5910 = vmatprep.subr.mxu0 0.0
  %5911 = vmatpush1.msra.mxu0 0.0
  %5912 = vmatprep.subr.mxu0 0.0
  %5913 = vmatpush1.msra.mxu0 0.0
  %5914 = vmatprep.subr.mxu0 0.0
  %5915 = vmatpush1.msra.mxu0 0.0
  %5916 = vmatprep.subr.mxu0 0.0
  %5917 = vmatpush1.msra.mxu0 0.0
  %5918 = vmatprep.subr.mxu0 0.0
  %5919 = vmatpush1.msra.mxu0 0.0
  %5920 = vmatprep.subr.mxu0 0.0
  %5921 = vmatpush1.msra.mxu0 0.0
  %5922 = vmatprep.subr.mxu0 0.0
  %5923 = vmatpush1.msra.mxu0 0.0
  %5924 = vmatprep.subr.mxu0 0.0
  %5925 = vmatpush1.msra.mxu0 0.0
  %5926 = vmatprep.mubr.f32.mxu0 0.0
  %5927 = vmatmul.mubr.f32.gmra.mrb[0].mxu0 %v5861
  %v5928 = vpop.f32.mrb[0].mxu0
  %v5929 = vadd.f32 0.0, %v5928
  %v5930 = vpop.f32.mrb[0].mxu0
  %5931 = vdwg.mxu0
  %v5932 = vmul.f32 %v5929, %v5784
  %v5933 = vld [vmem:[%s16] sm:$0x1]
  %v5934 = vadd.f32 %v5932, 1e-05
  %v5935 = vrsqrt.pop %v5934
  %v5936 = vmul.f32 %v5933, %v5935
  %v5937 = vld [vmem:[%s17] sm:$0x1]
  %v5938 = vmul.f32 %v5785, %v5936
  %v5939 = vsub.f32 %v5937, %v5938
  %v5940 = vld [vmem:[%s18] sm:$0xff]
  %v5941 = vld [vmem:[%s18 + $0x8] sm:$0xff]
  %v5942 = vld [vmem:[%s18 + $0x10] sm:$0xff]
  %v5943 = vld [vmem:[%s18 + $0x18] sm:$0xff]
  %s5944 = scalar_lea.vmem %s18, 32
  %v5945 = vld [vmem:[%s5944] sm:$0xff]
  %v5946 = vld [vmem:[%s5944 + $0x8] sm:$0xff]
  %v5947 = vld [vmem:[%s5944 + $0x10] sm:$0xff]
  %v5948 = vld [vmem:[%s5944 + $0x18] sm:$0xff]
  %v5950 = vlaneseq
  %v5951 = vshrl.u32 %v5950, 7
  %v5952 = vsub.s32 0, %v5951
  %v5953 = vrot.slane %v5936, %v5952
  %v5955 = vmul.f32 %v5636, %v5953
  %v5956 = vmul.f32 %v5638, %v5953
  %v5958 = vlaneseq
  %v5959 = vshrl.u32 %v5958, 7
  %v5960 = vsub.s32 0, %v5959
  %v5961 = vrot.slane %v5939, %v5960
  %v5963 = vadd.f32 %v5955, %v5961
  %v5964 = vadd.f32 %v5956, %v5961
  %v5965 = vmax.f32 %v5963, 0.0
  %v5966 = vmax.f32 %v5964, 0.0
  %v5967 = vmul.f32 %v5637, %v5953
  %v5968 = vmul.f32 %v5639, %v5953
  %v5969 = vadd.f32 %v5967, %v5961
  %v5970 = vadd.f32 %v5968, %v5961
  %v5971 = vmax.f32 %v5969, 0.0
  %v5972 = vmax.f32 %v5970, 0.0
  %vm5973 = vcmask 130048
  %v5975 = vsel %vm5973, %v5945, 0
  %v5978 = vsel %vm5973, %v5946, 0
  %v5981 = vsel %vm5973, %v5947, 0
  %v5984 = vsel %vm5973, %v5948, 0
  %5986 = vmatprep.subr.mxu0 0.0
  %5987 = vmatpush1.msra.mxu0 %v5971
  %5988 = vmatprep.subr.mxu0 0.0
  %5989 = vmatpush1.msra.mxu0 %v5972
  %5990 = vmatprep.subr.mxu0 0.0
  %5991 = vmatpush1.msra.mxu0 0.0
  %5992 = vmatprep.subr.mxu0 0.0
  %5993 = vmatpush1.msra.mxu0 0.0
  %5994 = vmatprep.subr.mxu0 0.0
  %5995 = vmatpush1.msra.mxu0 0.0
  %5996 = vmatprep.subr.mxu0 0.0
  %5997 = vmatpush1.msra.mxu0 0.0
  %5998 = vmatprep.subr.mxu0 0.0
  %5999 = vmatpush1.msra.mxu0 0.0
  %6000 = vmatprep.subr.mxu0 0.0
  %6001 = vmatpush1.msra.mxu0 0.0
  %6002 = vmatprep.subr.mxu0 0.0
  %6003 = vmatpush1.msra.mxu0 0.0
  %6004 = vmatprep.subr.mxu0 0.0
  %6005 = vmatpush1.msra.mxu0 0.0
  %6006 = vmatprep.subr.mxu0 0.0
  %6007 = vmatpush1.msra.mxu0 0.0
  %6008 = vmatprep.subr.mxu0 0.0
  %6009 = vmatpush1.msra.mxu0 0.0
  %6010 = vmatprep.subr.mxu0 0.0
  %6011 = vmatpush1.msra.mxu0 0.0
  %6012 = vmatprep.subr.mxu0 0.0
  %6013 = vmatpush1.msra.mxu0 0.0
  %6014 = vmatprep.subr.mxu0 0.0
  %6015 = vmatpush1.msra.mxu0 0.0
  %6016 = vmatprep.subr.mxu0 0.0
  %6017 = vmatpush1.msra.mxu0 0.0
  %6018 = vmatprep.subr.mxu0 0.0
  %6019 = vmatpush1.msra.mxu0 0.0
  %6020 = vmatprep.subr.mxu0 0.0
  %6021 = vmatpush1.msra.mxu0 0.0
  %6022 = vmatprep.subr.mxu0 0.0
  %6023 = vmatpush1.msra.mxu0 0.0
  %6024 = vmatprep.subr.mxu0 0.0
  %6025 = vmatpush1.msra.mxu0 0.0
  %6026 = vmatprep.subr.mxu0 0.0
  %6027 = vmatpush1.msra.mxu0 0.0
  %6028 = vmatprep.subr.mxu0 0.0
  %6029 = vmatpush1.msra.mxu0 0.0
  %6030 = vmatprep.subr.mxu0 0.0
  %6031 = vmatpush1.msra.mxu0 0.0
  %6032 = vmatprep.subr.mxu0 0.0
  %6033 = vmatpush1.msra.mxu0 0.0
  %6034 = vmatprep.subr.mxu0 0.0
  %6035 = vmatpush1.msra.mxu0 0.0
  %6036 = vmatprep.subr.mxu0 0.0
  %6037 = vmatpush1.msra.mxu0 0.0
  %6038 = vmatprep.subr.mxu0 0.0
  %6039 = vmatpush1.msra.mxu0 0.0
  %6040 = vmatprep.subr.mxu0 0.0
  %6041 = vmatpush1.msra.mxu0 0.0
  %6042 = vmatprep.subr.mxu0 0.0
  %6043 = vmatpush1.msra.mxu0 0.0
  %6044 = vmatprep.subr.mxu0 0.0
  %6045 = vmatpush1.msra.mxu0 0.0
  %6046 = vmatprep.subr.mxu0 0.0
  %6047 = vmatpush1.msra.mxu0 0.0
  %6048 = vmatprep.subr.mxu0 0.0
  %6049 = vmatpush1.msra.mxu0 0.0
  %6050 = vmatprep.mubr.f32.mxu0 0.0
  %6051 = vmatmul.mubr.f32.gmra.mrb[0].mxu0 %v5975
  %v6052 = vpop.f32.mrb[0].mxu0
  %v6053 = vadd.f32 0.0, %v6052
  %v6054 = vpop.f32.mrb[0].mxu0
  %6055 = vmatprep.mubr.f32.mxu0 0.0
  %6056 = vmatmul.mubr.f32.gmra.mrb[0].mxu0 %v5978
  %v6057 = vpop.f32.mrb[0].mxu0
  %v6058 = vadd.f32 0.0, %v6057
  %v6059 = vpop.f32.mrb[0].mxu0
  %6060 = vmatprep.mubr.f32.mxu0 0.0
  %6061 = vmatmul.mubr.f32.gmra.mrb[0].mxu0 %v5981
  %v6062 = vpop.f32.mrb[0].mxu0
  %v6063 = vadd.f32 0.0, %v6062
  %v6064 = vpop.f32.mrb[0].mxu0
  %6065 = vmatprep.mubr.f32.mxu0 0.0
  %6066 = vmatmul.mubr.f32.gmra.mrb[0].mxu0 %v5984
  %v6067 = vpop.f32.mrb[0].mxu0
  %v6068 = vadd.f32 0.0, %v6067
  %v6069 = vpop.f32.mrb[0].mxu0
  %6070 = vdwg.mxu0
  %v6072 = vsel %vm5973, %v5940, 0
  %v6075 = vsel %vm5973, %v5941, 0
  %v6078 = vsel %vm5973, %v5942, 0
  %v6081 = vsel %vm5973, %v5943, 0
  %6083 = vmatprep.subr.mxu0 0.0
  %6084 = vmatpush1.msra.mxu0 %v5965
  %6085 = vmatprep.subr.mxu0 0.0
  %6086 = vmatpush1.msra.mxu0 %v5966
  %6087 = vmatprep.subr.mxu0 0.0
  %6088 = vmatpush1.msra.mxu0 0.0
  %6089 = vmatprep.subr.mxu0 0.0
  %6090 = vmatpush1.msra.mxu0 0.0
  %6091 = vmatprep.subr.mxu0 0.0
  %6092 = vmatpush1.msra.mxu0 0.0
  %6093 = vmatprep.subr.mxu0 0.0
  %6094 = vmatpush1.msra.mxu0 0.0
  %6095 = vmatprep.subr.mxu0 0.0
  %6096 = vmatpush1.msra.mxu0 0.0
  %6097 = vmatprep.subr.mxu0 0.0
  %6098 = vmatpush1.msra.mxu0 0.0
  %6099 = vmatprep.subr.mxu0 0.0
  %6100 = vmatpush1.msra.mxu0 0.0
  %6101 = vmatprep.subr.mxu0 0.0
  %6102 = vmatpush1.msra.mxu0 0.0
  %6103 = vmatprep.subr.mxu0 0.0
  %6104 = vmatpush1.msra.mxu0 0.0
  %6105 = vmatprep.subr.mxu0 0.0
  %6106 = vmatpush1.msra.mxu0 0.0
  %6107 = vmatprep.subr.mxu0 0.0
  %6108 = vmatpush1.msra.mxu0 0.0
  %6109 = vmatprep.subr.mxu0 0.0
  %6110 = vmatpush1.msra.mxu0 0.0
  %6111 = vmatprep.subr.mxu0 0.0
  %6112 = vmatpush1.msra.mxu0 0.0
  %6113 = vmatprep.subr.mxu0 0.0
  %6114 = vmatpush1.msra.mxu0 0.0
  %6115 = vmatprep.subr.mxu0 0.0
  %6116 = vmatpush1.msra.mxu0 0.0
  %6117 = vmatprep.subr.mxu0 0.0
  %6118 = vmatpush1.msra.mxu0 0.0
  %6119 = vmatprep.subr.mxu0 0.0
  %6120 = vmatpush1.msra.mxu0 0.0
  %6121 = vmatprep.subr.mxu0 0.0
  %6122 = vmatpush1.msra.mxu0 0.0
  %6123 = vmatprep.subr.mxu0 0.0
  %6124 = vmatpush1.msra.mxu0 0.0
  %6125 = vmatprep.subr.mxu0 0.0
  %6126 = vmatpush1.msra.mxu0 0.0
  %6127 = vmatprep.subr.mxu0 0.0
  %6128 = vmatpush1.msra.mxu0 0.0
  %6129 = vmatprep.subr.mxu0 0.0
  %6130 = vmatpush1.msra.mxu0 0.0
  %6131 = vmatprep.subr.mxu0 0.0
  %6132 = vmatpush1.msra.mxu0 0.0
  %6133 = vmatprep.subr.mxu0 0.0
  %6134 = vmatpush1.msra.mxu0 0.0
  %6135 = vmatprep.subr.mxu0 0.0
  %6136 = vmatpush1.msra.mxu0 0.0
  %6137 = vmatprep.subr.mxu0 0.0
  %6138 = vmatpush1.msra.mxu0 0.0
  %6139 = vmatprep.subr.mxu0 0.0
  %6140 = vmatpush1.msra.mxu0 0.0
  %6141 = vmatprep.subr.mxu0 0.0
  %6142 = vmatpush1.msra.mxu0 0.0
  %6143 = vmatprep.subr.mxu0 0.0
  %6144 = vmatpush1.msra.mxu0 0.0
  %6145 = vmatprep.subr.mxu0 0.0
  %6146 = vmatpush1.msra.mxu0 0.0
  %6147 = vmatprep.mubr.f32.mxu0 0.0
  %6148 = vmatmul.mubr.f32.gmra.mrb[0].mxu0 %v6072
  %v6149 = vpop.f32.mrb[0].mxu0
  %v6150 = vadd.f32 %v6053, %v6149
  %v6151 = vpop.f32.mrb[0].mxu0
  %6152 = vmatprep.mubr.f32.mxu0 0.0
  %6153 = vmatmul.mubr.f32.gmra.mrb[0].mxu0 %v6075
  %v6154 = vpop.f32.mrb[0].mxu0
  %v6155 = vadd.f32 %v6058, %v6154
  %v6156 = vpop.f32.mrb[0].mxu0
  %6157 = vmatprep.mubr.f32.mxu0 0.0
  %6158 = vmatmul.mubr.f32.gmra.mrb[0].mxu0 %v6078
  %v6159 = vpop.f32.mrb[0].mxu0
  %v6160 = vadd.f32 %v6063, %v6159
  %v6161 = vpop.f32.mrb[0].mxu0
  %6162 = vmatprep.mubr.f32.mxu0 0.0
  %6163 = vmatmul.mubr.f32.gmra.mrb[0].mxu0 %v6081
  %v6164 = vpop.f32.mrb[0].mxu0
  %v6165 = vadd.f32 %v6068, %v6164
  %v6166 = vpop.f32.mrb[0].mxu0
  %6167 = vdwg.mxu0
  %v6168 = vpack.c.bf16 %v6155, %v6150
  %v6169 = vpack.c.bf16 %v6165, %v6160
  %v6170 = vmul.f32 %v5640, %v5953
  %v6171 = vmul.f32 %v5642, %v5953
  %v6172 = vmul.f32 %v5644, %v5953
  %v6173 = vadd.f32 %v6170, %v5961
  %v6174 = vadd.f32 %v6171, %v5961
  %v6175 = vadd.f32 %v6172, %v5961
  %v6176 = vmax.f32 %v6173, 0.0
  %v6177 = vmax.f32 %v6174, 0.0
  %v6178 = vmax.f32 %v6175, 0.0
  %v6179 = vmul.f32 %v5641, %v5953
  %v6180 = vmul.f32 %v5643, %v5953
  %v6181 = vmul.f32 %v5645, %v5953
  %v6182 = vadd.f32 %v6179, %v5961
  %v6183 = vadd.f32 %v6180, %v5961
  %v6184 = vadd.f32 %v6181, %v5961
  %v6185 = vmax.f32 %v6182, 0.0
  %v6186 = vmax.f32 %v6183, 0.0
  %v6187 = vmax.f32 %v6184, 0.0
  %v6191 = vrot.slane %v6185, 2
  %v6192 = vrot.slane %v6186, 2
  %v6193 = vsel %vm3845, %v6191, %v6192
  %v6194 = vrot.slane %v6187, 2
  %v6195 = vsel %vm3845, %v6192, %v6194
  %6198 = vmatprep.subr.mxu0 0.0
  %6199 = vmatpush1.msra.mxu0 %v6193
  %6200 = vmatprep.subr.mxu0 0.0
  %6201 = vmatpush1.msra.mxu0 %v6195
  %6202 = vmatprep.subr.mxu0 0.0
  %6203 = vmatpush1.msra.mxu0 0.0
  %6204 = vmatprep.subr.mxu0 0.0
  %6205 = vmatpush1.msra.mxu0 0.0
  %6206 = vmatprep.subr.mxu0 0.0
  %6207 = vmatpush1.msra.mxu0 0.0
  %6208 = vmatprep.subr.mxu0 0.0
  %6209 = vmatpush1.msra.mxu0 0.0
  %6210 = vmatprep.subr.mxu0 0.0
  %6211 = vmatpush1.msra.mxu0 0.0
  %6212 = vmatprep.subr.mxu0 0.0
  %6213 = vmatpush1.msra.mxu0 0.0
  %6214 = vmatprep.subr.mxu0 0.0
  %6215 = vmatpush1.msra.mxu0 0.0
  %6216 = vmatprep.subr.mxu0 0.0
  %6217 = vmatpush1.msra.mxu0 0.0
  %6218 = vmatprep.subr.mxu0 0.0
  %6219 = vmatpush1.msra.mxu0 0.0
  %6220 = vmatprep.subr.mxu0 0.0
  %6221 = vmatpush1.msra.mxu0 0.0
  %6222 = vmatprep.subr.mxu0 0.0
  %6223 = vmatpush1.msra.mxu0 0.0
  %6224 = vmatprep.subr.mxu0 0.0
  %6225 = vmatpush1.msra.mxu0 0.0
  %6226 = vmatprep.subr.mxu0 0.0
  %6227 = vmatpush1.msra.mxu0 0.0
  %6228 = vmatprep.subr.mxu0 0.0
  %6229 = vmatpush1.msra.mxu0 0.0
  %6230 = vmatprep.subr.mxu0 0.0
  %6231 = vmatpush1.msra.mxu0 0.0
  %6232 = vmatprep.subr.mxu0 0.0
  %6233 = vmatpush1.msra.mxu0 0.0
  %6234 = vmatprep.subr.mxu0 0.0
  %6235 = vmatpush1.msra.mxu0 0.0
  %6236 = vmatprep.subr.mxu0 0.0
  %6237 = vmatpush1.msra.mxu0 0.0
  %6238 = vmatprep.subr.mxu0 0.0
  %6239 = vmatpush1.msra.mxu0 0.0
  %6240 = vmatprep.subr.mxu0 0.0
  %6241 = vmatpush1.msra.mxu0 0.0
  %6242 = vmatprep.subr.mxu0 0.0
  %6243 = vmatpush1.msra.mxu0 0.0
  %6244 = vmatprep.subr.mxu0 0.0
  %6245 = vmatpush1.msra.mxu0 0.0
  %6246 = vmatprep.subr.mxu0 0.0
  %6247 = vmatpush1.msra.mxu0 0.0
  %6248 = vmatprep.subr.mxu0 0.0
  %6249 = vmatpush1.msra.mxu0 0.0
  %6250 = vmatprep.subr.mxu0 0.0
  %6251 = vmatpush1.msra.mxu0 0.0
  %6252 = vmatprep.subr.mxu0 0.0
  %6253 = vmatpush1.msra.mxu0 0.0
  %6254 = vmatprep.subr.mxu0 0.0
  %6255 = vmatpush1.msra.mxu0 0.0
  %6256 = vmatprep.subr.mxu0 0.0
  %6257 = vmatpush1.msra.mxu0 0.0
  %6258 = vmatprep.subr.mxu0 0.0
  %6259 = vmatpush1.msra.mxu0 0.0
  %6260 = vmatprep.subr.mxu0 0.0
  %6261 = vmatpush1.msra.mxu0 0.0
  %6262 = vmatprep.mubr.f32.mxu0 0.0
  %6263 = vmatmul.mubr.f32.gmra.mrb[0].mxu0 %v5975
  %v6264 = vpop.f32.mrb[0].mxu0
  %v6265 = vadd.f32 0.0, %v6264
  %v6266 = vpop.f32.mrb[0].mxu0
  %6267 = vmatprep.mubr.f32.mxu0 0.0
  %6268 = vmatmul.mubr.f32.gmra.mrb[0].mxu0 %v5978
  %v6269 = vpop.f32.mrb[0].mxu0
  %v6270 = vadd.f32 0.0, %v6269
  %v6271 = vpop.f32.mrb[0].mxu0
  %6272 = vmatprep.mubr.f32.mxu0 0.0
  %6273 = vmatmul.mubr.f32.gmra.mrb[0].mxu0 %v5981
  %v6274 = vpop.f32.mrb[0].mxu0
  %v6275 = vadd.f32 0.0, %v6274
  %v6276 = vpop.f32.mrb[0].mxu0
  %6277 = vmatprep.mubr.f32.mxu0 0.0
  %6278 = vmatmul.mubr.f32.gmra.mrb[0].mxu0 %v5984
  %v6279 = vpop.f32.mrb[0].mxu0
  %v6280 = vadd.f32 0.0, %v6279
  %v6281 = vpop.f32.mrb[0].mxu0
  %6282 = vdwg.mxu0
  %v6286 = vrot.slane %v6176, 2
  %v6287 = vrot.slane %v6177, 2
  %v6288 = vsel %vm3845, %v6286, %v6287
  %v6289 = vrot.slane %v6178, 2
  %v6290 = vsel %vm3845, %v6287, %v6289
  %6293 = vmatprep.subr.mxu0 0.0
  %6294 = vmatpush1.msra.mxu0 %v6288
  %6295 = vmatprep.subr.mxu0 0.0
  %6296 = vmatpush1.msra.mxu0 %v6290
  %6297 = vmatprep.subr.mxu0 0.0
  %6298 = vmatpush1.msra.mxu0 0.0
  %6299 = vmatprep.subr.mxu0 0.0
  %6300 = vmatpush1.msra.mxu0 0.0
  %6301 = vmatprep.subr.mxu0 0.0
  %6302 = vmatpush1.msra.mxu0 0.0
  %6303 = vmatprep.subr.mxu0 0.0
  %6304 = vmatpush1.msra.mxu0 0.0
  %6305 = vmatprep.subr.mxu0 0.0
  %6306 = vmatpush1.msra.mxu0 0.0
  %6307 = vmatprep.subr.mxu0 0.0
  %6308 = vmatpush1.msra.mxu0 0.0
  %6309 = vmatprep.subr.mxu0 0.0
  %6310 = vmatpush1.msra.mxu0 0.0
  %6311 = vmatprep.subr.mxu0 0.0
  %6312 = vmatpush1.msra.mxu0 0.0
  %6313 = vmatprep.subr.mxu0 0.0
  %6314 = vmatpush1.msra.mxu0 0.0
  %6315 = vmatprep.subr.mxu0 0.0
  %6316 = vmatpush1.msra.mxu0 0.0
  %6317 = vmatprep.subr.mxu0 0.0
  %6318 = vmatpush1.msra.mxu0 0.0
  %6319 = vmatprep.subr.mxu0 0.0
  %6320 = vmatpush1.msra.mxu0 0.0
  %6321 = vmatprep.subr.mxu0 0.0
  %6322 = vmatpush1.msra.mxu0 0.0
  %6323 = vmatprep.subr.mxu0 0.0
  %6324 = vmatpush1.msra.mxu0 0.0
  %6325 = vmatprep.subr.mxu0 0.0
  %6326 = vmatpush1.msra.mxu0 0.0
  %6327 = vmatprep.subr.mxu0 0.0
  %6328 = vmatpush1.msra.mxu0 0.0
  %6329 = vmatprep.subr.mxu0 0.0
  %6330 = vmatpush1.msra.mxu0 0.0
  %6331 = vmatprep.subr.mxu0 0.0
  %6332 = vmatpush1.msra.mxu0 0.0
  %6333 = vmatprep.subr.mxu0 0.0
  %6334 = vmatpush1.msra.mxu0 0.0
  %6335 = vmatprep.subr.mxu0 0.0
  %6336 = vmatpush1.msra.mxu0 0.0
  %6337 = vmatprep.subr.mxu0 0.0
  %6338 = vmatpush1.msra.mxu0 0.0
  %6339 = vmatprep.subr.mxu0 0.0
  %6340 = vmatpush1.msra.mxu0 0.0
  %6341 = vmatprep.subr.mxu0 0.0
  %6342 = vmatpush1.msra.mxu0 0.0
  %6343 = vmatprep.subr.mxu0 0.0
  %6344 = vmatpush1.msra.mxu0 0.0
  %6345 = vmatprep.subr.mxu0 0.0
  %6346 = vmatpush1.msra.mxu0 0.0
  %6347 = vmatprep.subr.mxu0 0.0
  %6348 = vmatpush1.msra.mxu0 0.0
  %6349 = vmatprep.subr.mxu0 0.0
  %6350 = vmatpush1.msra.mxu0 0.0
  %6351 = vmatprep.subr.mxu0 0.0
  %6352 = vmatpush1.msra.mxu0 0.0
  %6353 = vmatprep.subr.mxu0 0.0
  %6354 = vmatpush1.msra.mxu0 0.0
  %6355 = vmatprep.subr.mxu0 0.0
  %6356 = vmatpush1.msra.mxu0 0.0
  %6357 = vmatprep.mubr.f32.mxu0 0.0
  %6358 = vmatmul.mubr.f32.gmra.mrb[0].mxu0 %v6072
  %v6359 = vpop.f32.mrb[0].mxu0
  %v6360 = vadd.f32 %v6265, %v6359
  %v6361 = vpop.f32.mrb[0].mxu0
  %6362 = vmatprep.mubr.f32.mxu0 0.0
  %6363 = vmatmul.mubr.f32.gmra.mrb[0].mxu0 %v6075
  %v6364 = vpop.f32.mrb[0].mxu0
  %v6365 = vadd.f32 %v6270, %v6364
  %v6366 = vpop.f32.mrb[0].mxu0
  %6367 = vmatprep.mubr.f32.mxu0 0.0
  %6368 = vmatmul.mubr.f32.gmra.mrb[0].mxu0 %v6078
  %v6369 = vpop.f32.mrb[0].mxu0
  %v6370 = vadd.f32 %v6275, %v6369
  %v6371 = vpop.f32.mrb[0].mxu0
  %6372 = vmatprep.mubr.f32.mxu0 0.0
  %6373 = vmatmul.mubr.f32.gmra.mrb[0].mxu0 %v6081
  %v6374 = vpop.f32.mrb[0].mxu0
  %v6375 = vadd.f32 %v6280, %v6374
  %v6376 = vpop.f32.mrb[0].mxu0
  %6377 = vdwg.mxu0
  %v6378 = vpack.c.bf16 %v6365, %v6360
  %v6379 = vpack.c.bf16 %v6375, %v6370
  %6380 = vst [vmem:[#allocation5] sm:$0x1] 0
  %6381 = vst [vmem:[#allocation5 + $0x10] sm:$0x2] 0
  %v6384 = vunpack.c.l.b16 %v6168
  %v6385 = vunpack.c.h.b16 %v6168
  %v6386 = vunpack.c.l.b16 %v6169
  %v6387 = vunpack.c.h.b16 %v6169
  %v6388 = vpack.c.b16 %v6384, %v6384
  %v6389 = vpack.c.b16 %v6385, %v6385
  %v6390 = vpack.c.b16 %v6386, %v6386
  %v6391 = vpack.c.b16 %v6387, %v6387
  %vm6392 = vmor %vm373, %vm2179
  %v6393 = vrot.slane %v6388, 7
  %v6394 = vrot.slane %v6393, 4
  %v6395 = vrot.slane %v6389, 7
  %v6396 = vsel %vm6392, %v6394, %v6395
  %v6397 = vrot.slane %v6395, 4
  %v6398 = vrot.slane %v6390, 7
  %v6399 = vsel %vm6392, %v6397, %v6398
  %v6400 = vrot.slane %v6398, 4
  %v6401 = vrot.slane %v6391, 7
  %v6402 = vsel %vm6392, %v6400, %v6401
  %v6403 = vrot.slane %v6401, 4
  %6409 = vst [vmem:[#allocation5] sm:$0xe] %v6393
  %6410 = vst [vmem:[#allocation5 + $0x4] sm:$0xf] %v6396
  %6411 = vst [vmem:[#allocation5 + $0x8] sm:$0xf] %v6399
  %6412 = vst [vmem:[#allocation5 + $0xc] sm:$0xf] %v6402
  %6413 = vst [vmem:[#allocation5 + $0x10] sm:$0x1] %v6403
  %6414 = vst [vmem:[#allocation5 + $0x10] sm:$0x4] 0
  %6415 = vst [vmem:[#allocation5 + $0x20] sm:$0x8] 0
  %v6418 = vunpack.c.l.b16 %v6378
  %v6419 = vunpack.c.h.b16 %v6378
  %v6420 = vunpack.c.l.b16 %v6379
  %v6421 = vunpack.c.h.b16 %v6379
  %v6422 = vpack.c.b16 %v6418, %v6418
  %v6423 = vpack.c.b16 %v6419, %v6419
  %v6424 = vpack.c.b16 %v6420, %v6420
  %v6425 = vpack.c.b16 %v6421, %v6421
  %vm6426 = vcmask 1042432
  %vm6427 = vcmask 1046532
  %vm6428 = vmor %vm6426, %vm6427
  %v6429 = vrot.slane %v6422, 5
  %v6430 = vrot.slane %v6429, 4
  %v6431 = vrot.slane %v6423, 5
  %v6432 = vsel %vm6428, %v6430, %v6431
  %v6433 = vrot.slane %v6431, 4
  %v6434 = vrot.slane %v6424, 5
  %v6435 = vsel %vm6428, %v6433, %v6434
  %v6436 = vrot.slane %v6434, 4
  %v6437 = vrot.slane %v6425, 5
  %v6438 = vsel %vm6428, %v6436, %v6437
  %v6439 = vrot.slane %v6437, 4
  %6445 = vst [vmem:[#allocation5 + $0x10] sm:$0x8] %v6429
  %6446 = vst [vmem:[#allocation5 + $0x14] sm:$0xf] %v6432
  %6447 = vst [vmem:[#allocation5 + $0x18] sm:$0xf] %v6435
  %6448 = vst [vmem:[#allocation5 + $0x1c] sm:$0xf] %v6438
  %6449 = vst [vmem:[#allocation5 + $0x20] sm:$0x7] %v6439
  %v6450 = vld [vmem:[#allocation5] sm:$0xf]
  %v6451 = vld [vmem:[#allocation5 + $0x4] sm:$0xf]
  %v6452 = vld [vmem:[#allocation5 + $0x8] sm:$0xf]
  %v6453 = vld [vmem:[#allocation5 + $0xc] sm:$0xf]
  %v6454 = vld [vmem:[#allocation5 + $0x10] sm:$0xf]
  %v6455 = vld [vmem:[#allocation5 + $0x14] sm:$0xf]
  %v6456 = vld [vmem:[#allocation5 + $0x18] sm:$0xf]
  %v6457 = vld [vmem:[#allocation5 + $0x1c] sm:$0xf]
  %v6458 = vld [vmem:[#allocation5 + $0x20] sm:$0x3]
  %v6459 = vld [vmem:[%s19] sm:$0xf]
  %v6460 = vld [vmem:[%s19 + $0x4] sm:$0xf]
  %v6461 = vld [vmem:[%s19 + $0x8] sm:$0xf]
  %v6462 = vld [vmem:[%s19 + $0xc] sm:$0xf]
  %v6463 = vld [vmem:[%s19 + $0x10] sm:$0xf]
  %v6464 = vld [vmem:[%s19 + $0x14] sm:$0xf]
  %v6465 = vld [vmem:[%s19 + $0x18] sm:$0xf]
  %v6466 = vld [vmem:[%s19 + $0x1c] sm:$0xf]
  %v6467 = vld [vmem:[%s19 + $0x20] sm:$0xf]
  %v6468 = vld [vmem:[%s19 + $0x24] sm:$0xf]
  %v6469 = vld [vmem:[%s19 + $0x28] sm:$0xf]
  %v6470 = vld [vmem:[%s19 + $0x2c] sm:$0xf]
  %v6471 = vld [vmem:[%s19 + $0x30] sm:$0xf]
  %v6472 = vld [vmem:[%s19 + $0x34] sm:$0xf]
  %v6473 = vld [vmem:[%s19 + $0x38] sm:$0xf]
  %v6474 = vld [vmem:[%s19 + $0x3c] sm:$0xf]
  %v6475 = vld [vmem:[#allocation5 + $0x20] sm:$0x7]
  %s6476 = scalar_lea.vmem %s19, 64
  %v6477 = vld [vmem:[%s6476] sm:$0xf]
  %v6478 = vld [vmem:[%s6476 + $0x4] sm:$0xf]
  %v6479 = vld [vmem:[%s6476 + $0x8] sm:$0xf]
  %v6480 = vld [vmem:[%s6476 + $0xc] sm:$0xf]
  %v6481 = vld [vmem:[%s6476 + $0x10] sm:$0xf]
  %v6482 = vld [vmem:[%s6476 + $0x14] sm:$0xf]
  %v6483 = vld [vmem:[%s6476 + $0x18] sm:$0xf]
  %v6484 = vld [vmem:[%s6476 + $0x1c] sm:$0xf]
  %v6485 = vld [vmem:[%s6476 + $0x20] sm:$0xf]
  %v6486 = vld [vmem:[%s6476 + $0x24] sm:$0xf]
  %v6487 = vld [vmem:[%s6476 + $0x28] sm:$0xf]
  %v6488 = vld [vmem:[%s6476 + $0x2c] sm:$0xf]
  %v6489 = vld [vmem:[%s6476 + $0x30] sm:$0xf]
  %v6490 = vld [vmem:[%s6476 + $0x34] sm:$0xf]
  %v6491 = vld [vmem:[%s6476 + $0x38] sm:$0xf]
  %v6492 = vld [vmem:[%s6476 + $0x3c] sm:$0xf]
  %v6502 = vunpack.c.l.b16 %v6450
  %v6503 = vunpack.c.l.b16 %v6451
  %v6504 = vunpack.c.l.b16 %v6452
  %v6505 = vunpack.c.l.b16 %v6453
  %v6506 = vunpack.c.l.b16 %v6454
  %v6507 = vunpack.c.l.b16 %v6455
  %v6508 = vunpack.c.l.b16 %v6456
  %v6509 = vunpack.c.l.b16 %v6457
  %v6510 = vunpack.c.l.b16 %v6475
  %v6511 = vpack.c.b16 %v6503, %v6502
  %v6512 = vpack.c.b16 %v6505, %v6504
  %v6513 = vpack.c.b16 %v6507, %v6506
  %v6514 = vpack.c.b16 %v6509, %v6508
  %v6515 = vpack.c.b16 %v6510, %v6510
  %v6517 = vshrl.u32 %v6511, 16
  %v6519 = vshll.u32 %v6511, 16
  %v6521 = vrot.slane %v6519, 1
  %v6522 = vor.u32 %v6517, %v6521
  %v6524 = vshll.u32 %v6512, 16
  %v6526 = vrot.slane %v6524, 1
  %v6527 = vsel %vm2409, %v6522, %v6526
  %v6528 = vshrl.u32 %v6512, 16
  %v6530 = vor.u32 %v6528, %v6526
  %v6532 = vshll.u32 %v6513, 16
  %v6534 = vrot.slane %v6532, 1
  %v6535 = vsel %vm2409, %v6530, %v6534
  %v6536 = vshrl.u32 %v6513, 16
  %v6538 = vor.u32 %v6536, %v6534
  %v6540 = vshll.u32 %v6514, 16
  %v6542 = vrot.slane %v6540, 1
  %v6543 = vsel %vm2409, %v6538, %v6542
  %v6544 = vshrl.u32 %v6514, 16
  %v6546 = vor.u32 %v6544, %v6542
  %v6548 = vshll.u32 %v6515, 16
  %v6550 = vrot.slane %v6548, 1
  %v6551 = vsel %vm2409, %v6546, %v6550
  %v6552 = vshrl.u32 %v6515, 16
  %v6554 = vor.u32 %v6552, %v6550
  %v6576 = vunpack.c.l.b16 %v6477
  %v6577 = vunpack.c.l.b16 %v6478
  %v6578 = vunpack.c.l.b16 %v6479
  %v6579 = vunpack.c.l.b16 %v6480
  %v6580 = vunpack.c.l.b16 %v6481
  %v6581 = vunpack.c.l.b16 %v6482
  %v6582 = vunpack.c.l.b16 %v6483
  %v6583 = vunpack.c.l.b16 %v6484
  %v6584 = vunpack.c.l.b16 %v6485
  %v6585 = vunpack.c.l.b16 %v6486
  %v6586 = vunpack.c.l.b16 %v6487
  %v6587 = vunpack.c.l.b16 %v6488
  %v6588 = vunpack.c.l.b16 %v6489
  %v6589 = vunpack.c.l.b16 %v6490
  %v6590 = vunpack.c.l.b16 %v6491
  %v6591 = vunpack.c.l.b16 %v6492
  %v6592 = vpack.c.b16 %v6577, %v6576
  %v6593 = vpack.c.b16 %v6579, %v6578
  %v6594 = vpack.c.b16 %v6581, %v6580
  %v6595 = vpack.c.b16 %v6583, %v6582
  %v6596 = vpack.c.b16 %v6585, %v6584
  %v6597 = vpack.c.b16 %v6587, %v6586
  %v6598 = vpack.c.b16 %v6589, %v6588
  %v6599 = vpack.c.b16 %v6591, %v6590
  %6608 = vmatprep.subr.bf16.mxu0 0
  %6609 = vmatpush1.bf16.msra.mxu0 %v6592
  %6610 = vmatprep.subr.bf16.mxu0 0
  %6611 = vmatpush1.bf16.msra.mxu0 %v6593
  %6612 = vmatprep.subr.bf16.mxu0 0
  %6613 = vmatpush1.bf16.msra.mxu0 %v6594
  %6614 = vmatprep.subr.bf16.mxu0 0
  %6615 = vmatpush1.bf16.msra.mxu0 %v6595
  %6616 = vmatprep.subr.bf16.mxu0 0
  %6617 = vmatpush1.bf16.msra.mxu0 %v6596
  %6618 = vmatprep.subr.bf16.mxu0 0
  %6619 = vmatpush1.bf16.msra.mxu0 %v6597
  %6620 = vmatprep.subr.bf16.mxu0 0
  %6621 = vmatpush1.bf16.msra.mxu0 %v6598
  %6622 = vmatprep.subr.bf16.mxu0 0
  %6623 = vmatpush1.bf16.msra.mxu0 %v6599
  %6624 = vmatprep.subr.bf16.mxu0 0
  %6625 = vmatpush1.bf16.msra.mxu0 0
  %6626 = vmatprep.subr.bf16.mxu0 0
  %6627 = vmatpush1.bf16.msra.mxu0 0
  %6628 = vmatprep.subr.bf16.mxu0 0
  %6629 = vmatpush1.bf16.msra.mxu0 0
  %6630 = vmatprep.subr.bf16.mxu0 0
  %6631 = vmatpush1.bf16.msra.mxu0 0
  %6632 = vmatprep.subr.bf16.mxu0 0
  %6633 = vmatpush1.bf16.msra.mxu0 0
  %6634 = vmatprep.subr.bf16.mxu0 0
  %6635 = vmatpush1.bf16.msra.mxu0 0
  %6636 = vmatprep.subr.bf16.mxu0 0
  %6637 = vmatpush1.bf16.msra.mxu0 0
  %6638 = vmatprep.subr.bf16.mxu0 0
  %6639 = vmatpush1.bf16.msra.mxu0 0
  %6640 = vmatprep.mubr.bf16.mxu0 0
  %6641 = vmatmul.mubr.bf16.gmra.mrb[0].mxu0 %v6527
  %v6642 = vpop.f32.mrb[0].mxu0
  %v6643 = vadd.f32 0.0, %v6642
  %v6644 = vpop.f32.mrb[0].mxu0
  %v6645 = vpop.f32.mrb[0].mxu0
  %v6646 = vadd.f32 0.0, %v6645
  %v6647 = vpop.f32.mrb[0].mxu0
  %6648 = vmatprep.mubr.bf16.mxu0 0
  %6649 = vmatmul.mubr.bf16.gmra.mrb[0].mxu0 %v6535
  %v6650 = vpop.f32.mrb[0].mxu0
  %v6651 = vadd.f32 0.0, %v6650
  %v6652 = vpop.f32.mrb[0].mxu0
  %v6653 = vpop.f32.mrb[0].mxu0
  %v6654 = vadd.f32 0.0, %v6653
  %v6655 = vpop.f32.mrb[0].mxu0
  %6656 = vmatprep.mubr.bf16.mxu0 0
  %6657 = vmatmul.mubr.bf16.gmra.mrb[0].mxu0 %v6543
  %v6658 = vpop.f32.mrb[0].mxu0
  %v6659 = vadd.f32 0.0, %v6658
  %v6660 = vpop.f32.mrb[0].mxu0
  %v6661 = vpop.f32.mrb[0].mxu0
  %v6662 = vadd.f32 0.0, %v6661
  %v6663 = vpop.f32.mrb[0].mxu0
  %6664 = vmatprep.mubr.bf16.mxu0 0
  %6665 = vmatmul.mubr.bf16.gmra.mrb[0].mxu0 %v6551
  %v6666 = vpop.f32.mrb[0].mxu0
  %v6667 = vadd.f32 0.0, %v6666
  %v6668 = vpop.f32.mrb[0].mxu0
  %v6669 = vpop.f32.mrb[0].mxu0
  %v6670 = vadd.f32 0.0, %v6669
  %v6671 = vpop.f32.mrb[0].mxu0
  %6672 = vmatprep.mubr.bf16.mxu0 0
  %6673 = vmatmul.mubr.bf16.gmra.mrb[0].mxu0 %v6554
  %v6674 = vpop.f32.mrb[0].mxu0
  %v6675 = vadd.f32 0.0, %v6674
  %v6676 = vpop.f32.mrb[0].mxu0
  %v6677 = vpop.f32.mrb[0].mxu0
  %v6678 = vpop.f32.mrb[0].mxu0
  %6679 = vdwg.mxu0
  %v6681 = vunpack.c.l.b16 %v6458
  %v6682 = vpack.c.b16 %v6681, %v6681
  %v6704 = vunpack.c.l.b16 %v6459
  %v6705 = vunpack.c.l.b16 %v6460
  %v6706 = vunpack.c.l.b16 %v6461
  %v6707 = vunpack.c.l.b16 %v6462
  %v6708 = vunpack.c.l.b16 %v6463
  %v6709 = vunpack.c.l.b16 %v6464
  %v6710 = vunpack.c.l.b16 %v6465
  %v6711 = vunpack.c.l.b16 %v6466
  %v6712 = vunpack.c.l.b16 %v6467
  %v6713 = vunpack.c.l.b16 %v6468
  %v6714 = vunpack.c.l.b16 %v6469
  %v6715 = vunpack.c.l.b16 %v6470
  %v6716 = vunpack.c.l.b16 %v6471
  %v6717 = vunpack.c.l.b16 %v6472
  %v6718 = vunpack.c.l.b16 %v6473
  %v6719 = vunpack.c.l.b16 %v6474
  %v6720 = vpack.c.b16 %v6705, %v6704
  %v6721 = vpack.c.b16 %v6707, %v6706
  %v6722 = vpack.c.b16 %v6709, %v6708
  %v6723 = vpack.c.b16 %v6711, %v6710
  %v6724 = vpack.c.b16 %v6713, %v6712
  %v6725 = vpack.c.b16 %v6715, %v6714
  %v6726 = vpack.c.b16 %v6717, %v6716
  %v6727 = vpack.c.b16 %v6719, %v6718
  %6736 = vmatprep.subr.bf16.mxu0 0
  %6737 = vmatpush1.bf16.msra.mxu0 %v6720
  %6738 = vmatprep.subr.bf16.mxu0 0
  %6739 = vmatpush1.bf16.msra.mxu0 %v6721
  %6740 = vmatprep.subr.bf16.mxu0 0
  %6741 = vmatpush1.bf16.msra.mxu0 %v6722
  %6742 = vmatprep.subr.bf16.mxu0 0
  %6743 = vmatpush1.bf16.msra.mxu0 %v6723
  %6744 = vmatprep.subr.bf16.mxu0 0
  %6745 = vmatpush1.bf16.msra.mxu0 %v6724
  %6746 = vmatprep.subr.bf16.mxu0 0
  %6747 = vmatpush1.bf16.msra.mxu0 %v6725
  %6748 = vmatprep.subr.bf16.mxu0 0
  %6749 = vmatpush1.bf16.msra.mxu0 %v6726
  %6750 = vmatprep.subr.bf16.mxu0 0
  %6751 = vmatpush1.bf16.msra.mxu0 %v6727
  %6752 = vmatprep.subr.bf16.mxu0 0
  %6753 = vmatpush1.bf16.msra.mxu0 0
  %6754 = vmatprep.subr.bf16.mxu0 0
  %6755 = vmatpush1.bf16.msra.mxu0 0
  %6756 = vmatprep.subr.bf16.mxu0 0
  %6757 = vmatpush1.bf16.msra.mxu0 0
  %6758 = vmatprep.subr.bf16.mxu0 0
  %6759 = vmatpush1.bf16.msra.mxu0 0
  %6760 = vmatprep.subr.bf16.mxu0 0
  %6761 = vmatpush1.bf16.msra.mxu0 0
  %6762 = vmatprep.subr.bf16.mxu0 0
  %6763 = vmatpush1.bf16.msra.mxu0 0
  %6764 = vmatprep.subr.bf16.mxu0 0
  %6765 = vmatpush1.bf16.msra.mxu0 0
  %6766 = vmatprep.subr.bf16.mxu0 0
  %6767 = vmatpush1.bf16.msra.mxu0 0
  %6768 = vmatprep.mubr.bf16.mxu0 0
  %6769 = vmatmul.mubr.bf16.gmra.mrb[0].mxu0 %v6511
  %v6770 = vpop.f32.mrb[0].mxu0
  %v6771 = vadd.f32 %v6643, %v6770
  %v6772 = vpop.f32.mrb[0].mxu0
  %v6773 = vpop.f32.mrb[0].mxu0
  %v6774 = vadd.f32 %v6646, %v6773
  %v6775 = vpop.f32.mrb[0].mxu0
  %6776 = vmatprep.mubr.bf16.mxu0 0
  %6777 = vmatmul.mubr.bf16.gmra.mrb[0].mxu0 %v6512
  %v6778 = vpop.f32.mrb[0].mxu0
  %v6779 = vadd.f32 %v6651, %v6778
  %v6780 = vpop.f32.mrb[0].mxu0
  %v6781 = vpop.f32.mrb[0].mxu0
  %v6782 = vadd.f32 %v6654, %v6781
  %v6783 = vpop.f32.mrb[0].mxu0
  %6784 = vmatprep.mubr.bf16.mxu0 0
  %6785 = vmatmul.mubr.bf16.gmra.mrb[0].mxu0 %v6513
  %v6786 = vpop.f32.mrb[0].mxu0
  %v6787 = vadd.f32 %v6659, %v6786
  %v6788 = vpop.f32.mrb[0].mxu0
  %v6789 = vpop.f32.mrb[0].mxu0
  %v6790 = vadd.f32 %v6662, %v6789
  %v6791 = vpop.f32.mrb[0].mxu0
  %6792 = vmatprep.mubr.bf16.mxu0 0
  %6793 = vmatmul.mubr.bf16.gmra.mrb[0].mxu0 %v6514
  %v6794 = vpop.f32.mrb[0].mxu0
  %v6795 = vadd.f32 %v6667, %v6794
  %v6796 = vpop.f32.mrb[0].mxu0
  %v6797 = vpop.f32.mrb[0].mxu0
  %v6798 = vadd.f32 %v6670, %v6797
  %v6799 = vpop.f32.mrb[0].mxu0
  %6800 = vmatprep.mubr.bf16.mxu0 0
  %6801 = vmatmul.mubr.bf16.gmra.mrb[0].mxu0 %v6682
  %v6802 = vpop.f32.mrb[0].mxu0
  %v6803 = vadd.f32 %v6675, %v6802
  %v6804 = vpop.f32.mrb[0].mxu0
  %v6805 = vpop.f32.mrb[0].mxu0
  %v6806 = vpop.f32.mrb[0].mxu0
  %6807 = vdwg.mxu0
  %v6808 = vld [vmem:[#allocation5] sm:$0xe]
  %s6809 = scalar_lea.vmem %s19, 128
  %v6810 = vld [vmem:[%s6809] sm:$0xf]
  %v6811 = vld [vmem:[%s6809 + $0x4] sm:$0xf]
  %v6812 = vld [vmem:[%s6809 + $0x8] sm:$0xf]
  %v6813 = vld [vmem:[%s6809 + $0xc] sm:$0xf]
  %v6814 = vld [vmem:[%s6809 + $0x10] sm:$0xf]
  %v6815 = vld [vmem:[%s6809 + $0x14] sm:$0xf]
  %v6816 = vld [vmem:[%s6809 + $0x18] sm:$0xf]
  %v6817 = vld [vmem:[%s6809 + $0x1c] sm:$0xf]
  %v6818 = vld [vmem:[%s6809 + $0x20] sm:$0xf]
  %v6819 = vld [vmem:[%s6809 + $0x24] sm:$0xf]
  %v6820 = vld [vmem:[%s6809 + $0x28] sm:$0xf]
  %v6821 = vld [vmem:[%s6809 + $0x2c] sm:$0xf]
  %v6822 = vld [vmem:[%s6809 + $0x30] sm:$0xf]
  %v6823 = vld [vmem:[%s6809 + $0x34] sm:$0xf]
  %v6824 = vld [vmem:[%s6809 + $0x38] sm:$0xf]
  %v6825 = vld [vmem:[%s6809 + $0x3c] sm:$0xf]
  %v6827 = vunpack.c.l.b16 %v6808
  %v6828 = vpack.c.b16 %v6503, %v6827
  %v6829 = vrot.slane %v6828, 1
  %v6830 = vrot.slane %v6512, 1
  %v6831 = vsel %vm3368, %v6829, %v6830
  %v6832 = vrot.slane %v6513, 1
  %v6833 = vsel %vm3368, %v6830, %v6832
  %v6834 = vrot.slane %v6514, 1
  %v6835 = vsel %vm3368, %v6832, %v6834
  %v6836 = vrot.slane %v6515, 1
  %v6837 = vsel %vm3368, %v6834, %v6836
  %v6859 = vunpack.c.l.b16 %v6810
  %v6860 = vunpack.c.l.b16 %v6811
  %v6861 = vunpack.c.l.b16 %v6812
  %v6862 = vunpack.c.l.b16 %v6813
  %v6863 = vunpack.c.l.b16 %v6814
  %v6864 = vunpack.c.l.b16 %v6815
  %v6865 = vunpack.c.l.b16 %v6816
  %v6866 = vunpack.c.l.b16 %v6817
  %v6867 = vunpack.c.l.b16 %v6818
  %v6868 = vunpack.c.l.b16 %v6819
  %v6869 = vunpack.c.l.b16 %v6820
  %v6870 = vunpack.c.l.b16 %v6821
  %v6871 = vunpack.c.l.b16 %v6822
  %v6872 = vunpack.c.l.b16 %v6823
  %v6873 = vunpack.c.l.b16 %v6824
  %v6874 = vunpack.c.l.b16 %v6825
  %v6875 = vpack.c.b16 %v6860, %v6859
  %v6876 = vpack.c.b16 %v6862, %v6861
  %v6877 = vpack.c.b16 %v6864, %v6863
  %v6878 = vpack.c.b16 %v6866, %v6865
  %v6879 = vpack.c.b16 %v6868, %v6867
  %v6880 = vpack.c.b16 %v6870, %v6869
  %v6881 = vpack.c.b16 %v6872, %v6871
  %v6882 = vpack.c.b16 %v6874, %v6873
  %6891 = vmatprep.subr.bf16.mxu0 0
  %6892 = vmatpush1.bf16.msra.mxu0 %v6875
  %6893 = vmatprep.subr.bf16.mxu0 0
  %6894 = vmatpush1.bf16.msra.mxu0 %v6876
  %6895 = vmatprep.subr.bf16.mxu0 0
  %6896 = vmatpush1.bf16.msra.mxu0 %v6877
  %6897 = vmatprep.subr.bf16.mxu0 0
  %6898 = vmatpush1.bf16.msra.mxu0 %v6878
  %6899 = vmatprep.subr.bf16.mxu0 0
  %6900 = vmatpush1.bf16.msra.mxu0 %v6879
  %6901 = vmatprep.subr.bf16.mxu0 0
  %6902 = vmatpush1.bf16.msra.mxu0 %v6880
  %6903 = vmatprep.subr.bf16.mxu0 0
  %6904 = vmatpush1.bf16.msra.mxu0 %v6881
  %6905 = vmatprep.subr.bf16.mxu0 0
  %6906 = vmatpush1.bf16.msra.mxu0 %v6882
  %6907 = vmatprep.subr.bf16.mxu0 0
  %6908 = vmatpush1.bf16.msra.mxu0 0
  %6909 = vmatprep.subr.bf16.mxu0 0
  %6910 = vmatpush1.bf16.msra.mxu0 0
  %6911 = vmatprep.subr.bf16.mxu0 0
  %6912 = vmatpush1.bf16.msra.mxu0 0
  %6913 = vmatprep.subr.bf16.mxu0 0
  %6914 = vmatpush1.bf16.msra.mxu0 0
  %6915 = vmatprep.subr.bf16.mxu0 0
  %6916 = vmatpush1.bf16.msra.mxu0 0
  %6917 = vmatprep.subr.bf16.mxu0 0
  %6918 = vmatpush1.bf16.msra.mxu0 0
  %6919 = vmatprep.subr.bf16.mxu0 0
  %6920 = vmatpush1.bf16.msra.mxu0 0
  %6921 = vmatprep.subr.bf16.mxu0 0
  %6922 = vmatpush1.bf16.msra.mxu0 0
  %6923 = vmatprep.mubr.bf16.mxu0 0
  %6924 = vmatmul.mubr.bf16.gmra.mrb[0].mxu0 %v6831
  %v6925 = vpop.f32.mrb[0].mxu0
  %v6926 = vadd.f32 0.0, %v6925
  %v6927 = vpop.f32.mrb[0].mxu0
  %v6928 = vpop.f32.mrb[0].mxu0
  %v6929 = vadd.f32 0.0, %v6928
  %v6930 = vpop.f32.mrb[0].mxu0
  %6931 = vmatprep.mubr.bf16.mxu0 0
  %6932 = vmatmul.mubr.bf16.gmra.mrb[0].mxu0 %v6833
  %v6933 = vpop.f32.mrb[0].mxu0
  %v6934 = vadd.f32 0.0, %v6933
  %v6935 = vpop.f32.mrb[0].mxu0
  %v6936 = vpop.f32.mrb[0].mxu0
  %v6937 = vadd.f32 0.0, %v6936
  %v6938 = vpop.f32.mrb[0].mxu0
  %6939 = vmatprep.mubr.bf16.mxu0 0
  %6940 = vmatmul.mubr.bf16.gmra.mrb[0].mxu0 %v6835
  %v6941 = vpop.f32.mrb[0].mxu0
  %v6942 = vadd.f32 0.0, %v6941
  %v6943 = vpop.f32.mrb[0].mxu0
  %v6944 = vpop.f32.mrb[0].mxu0
  %v6945 = vadd.f32 0.0, %v6944
  %v6946 = vpop.f32.mrb[0].mxu0
  %6947 = vmatprep.mubr.bf16.mxu0 0
  %6948 = vmatmul.mubr.bf16.gmra.mrb[0].mxu0 %v6837
  %v6949 = vpop.f32.mrb[0].mxu0
  %v6950 = vadd.f32 0.0, %v6949
  %v6951 = vpop.f32.mrb[0].mxu0
  %v6952 = vpop.f32.mrb[0].mxu0
  %v6953 = vadd.f32 0.0, %v6952
  %v6954 = vpop.f32.mrb[0].mxu0
  %6955 = vmatprep.mubr.bf16.mxu0 0
  %6956 = vmatmul.mubr.bf16.gmra.mrb[0].mxu0 %v6836
  %v6957 = vpop.f32.mrb[0].mxu0
  %v6958 = vadd.f32 0.0, %v6957
  %v6959 = vpop.f32.mrb[0].mxu0
  %v6960 = vpop.f32.mrb[0].mxu0
  %v6961 = vpop.f32.mrb[0].mxu0
  %6962 = vdwg.mxu0
  %v6963 = vadd.f32 %v6771, %v6926
  %v6964 = vadd.f32 %v6774, %v6929
  %v6965 = vadd.f32 %v6779, %v6934
  %v6966 = vadd.f32 %v6782, %v6937
  %v6967 = vadd.f32 %v6787, %v6942
  %v6968 = vadd.f32 %v6790, %v6945
  %v6969 = vadd.f32 %v6795, %v6950
  %v6970 = vadd.f32 %v6798, %v6953
  %v6971 = vadd.f32 %v6803, %v6958
  %v6972 = vld [vmem:[#allocation5 + $0x20] sm:$0xf]
  %s6973 = scalar_lea.vmem %s19, 192
  %v6974 = vld [vmem:[%s6973] sm:$0xf]
  %v6975 = vld [vmem:[%s6973 + $0x4] sm:$0xf]
  %v6976 = vld [vmem:[%s6973 + $0x8] sm:$0xf]
  %v6977 = vld [vmem:[%s6973 + $0xc] sm:$0xf]
  %v6978 = vld [vmem:[%s6973 + $0x10] sm:$0xf]
  %v6979 = vld [vmem:[%s6973 + $0x14] sm:$0xf]
  %v6980 = vld [vmem:[%s6973 + $0x18] sm:$0xf]
  %v6981 = vld [vmem:[%s6973 + $0x1c] sm:$0xf]
  %v6982 = vld [vmem:[%s6973 + $0x20] sm:$0xf]
  %v6983 = vld [vmem:[%s6973 + $0x24] sm:$0xf]
  %v6984 = vld [vmem:[%s6973 + $0x28] sm:$0xf]
  %v6985 = vld [vmem:[%s6973 + $0x2c] sm:$0xf]
  %v6986 = vld [vmem:[%s6973 + $0x30] sm:$0xf]
  %v6987 = vld [vmem:[%s6973 + $0x34] sm:$0xf]
  %v6988 = vld [vmem:[%s6973 + $0x38] sm:$0xf]
  %v6989 = vld [vmem:[%s6973 + $0x3c] sm:$0xf]
  %v6991 = vunpack.c.l.b16 %v6972
  %v6992 = vpack.c.b16 %v6991, %v6991
  %vm6993 = vsmask.f32 6400
  %v6995 = vshrl.u32 %v6828, 16
  %v6997 = vrot.slane %v6995, 1
  %v6998 = vshll.u32 %v6828, 16
  %v7000 = vrot.slane %v6998, 2
  %v7001 = vor.u32 %v6997, %v7000
  %v7002 = vrot.slane %v6528, 1
  %v7003 = vrot.slane %v6524, 2
  %v7004 = vor.u32 %v7002, %v7003
  %v7005 = vsel %vm6993, %v7001, %v7004
  %v7006 = vrot.slane %v6536, 1
  %v7007 = vrot.slane %v6532, 2
  %v7008 = vor.u32 %v7006, %v7007
  %v7009 = vsel %vm6993, %v7004, %v7008
  %v7010 = vrot.slane %v6544, 1
  %v7011 = vrot.slane %v6540, 2
  %v7012 = vor.u32 %v7010, %v7011
  %v7013 = vsel %vm6993, %v7008, %v7012
  %v7015 = vshrl.u32 %v6992, 16
  %v7017 = vrot.slane %v7015, 1
  %v7018 = vshll.u32 %v6992, 16
  %v7020 = vrot.slane %v7018, 2
  %v7021 = vor.u32 %v7017, %v7020
  %v7022 = vsel %vm6993, %v7012, %v7021
  %v7044 = vunpack.c.l.b16 %v6974
  %v7045 = vunpack.c.l.b16 %v6975
  %v7046 = vunpack.c.l.b16 %v6976
  %v7047 = vunpack.c.l.b16 %v6977
  %v7048 = vunpack.c.l.b16 %v6978
  %v7049 = vunpack.c.l.b16 %v6979
  %v7050 = vunpack.c.l.b16 %v6980
  %v7051 = vunpack.c.l.b16 %v6981
  %v7052 = vunpack.c.l.b16 %v6982
  %v7053 = vunpack.c.l.b16 %v6983
  %v7054 = vunpack.c.l.b16 %v6984
  %v7055 = vunpack.c.l.b16 %v6985
  %v7056 = vunpack.c.l.b16 %v6986
  %v7057 = vunpack.c.l.b16 %v6987
  %v7058 = vunpack.c.l.b16 %v6988
  %v7059 = vunpack.c.l.b16 %v6989
  %v7060 = vpack.c.b16 %v7045, %v7044
  %v7061 = vpack.c.b16 %v7047, %v7046
  %v7062 = vpack.c.b16 %v7049, %v7048
  %v7063 = vpack.c.b16 %v7051, %v7050
  %v7064 = vpack.c.b16 %v7053, %v7052
  %v7065 = vpack.c.b16 %v7055, %v7054
  %v7066 = vpack.c.b16 %v7057, %v7056
  %v7067 = vpack.c.b16 %v7059, %v7058
  %7076 = vmatprep.subr.bf16.mxu0 0
  %7077 = vmatpush1.bf16.msra.mxu0 %v7060
  %7078 = vmatprep.subr.bf16.mxu0 0
  %7079 = vmatpush1.bf16.msra.mxu0 %v7061
  %7080 = vmatprep.subr.bf16.mxu0 0
  %7081 = vmatpush1.bf16.msra.mxu0 %v7062
  %7082 = vmatprep.subr.bf16.mxu0 0
  %7083 = vmatpush1.bf16.msra.mxu0 %v7063
  %7084 = vmatprep.subr.bf16.mxu0 0
  %7085 = vmatpush1.bf16.msra.mxu0 %v7064
  %7086 = vmatprep.subr.bf16.mxu0 0
  %7087 = vmatpush1.bf16.msra.mxu0 %v7065
  %7088 = vmatprep.subr.bf16.mxu0 0
  %7089 = vmatpush1.bf16.msra.mxu0 %v7066
  %7090 = vmatprep.subr.bf16.mxu0 0
  %7091 = vmatpush1.bf16.msra.mxu0 %v7067
  %7092 = vmatprep.subr.bf16.mxu0 0
  %7093 = vmatpush1.bf16.msra.mxu0 0
  %7094 = vmatprep.subr.bf16.mxu0 0
  %7095 = vmatpush1.bf16.msra.mxu0 0
  %7096 = vmatprep.subr.bf16.mxu0 0
  %7097 = vmatpush1.bf16.msra.mxu0 0
  %7098 = vmatprep.subr.bf16.mxu0 0
  %7099 = vmatpush1.bf16.msra.mxu0 0
  %7100 = vmatprep.subr.bf16.mxu0 0
  %7101 = vmatpush1.bf16.msra.mxu0 0
  %7102 = vmatprep.subr.bf16.mxu0 0
  %7103 = vmatpush1.bf16.msra.mxu0 0
  %7104 = vmatprep.subr.bf16.mxu0 0
  %7105 = vmatpush1.bf16.msra.mxu0 0
  %7106 = vmatprep.subr.bf16.mxu0 0
  %7107 = vmatpush1.bf16.msra.mxu0 0
  %7108 = vmatprep.mubr.bf16.mxu0 0
  %7109 = vmatmul.mubr.bf16.gmra.mrb[0].mxu0 %v7005
  %v7110 = vpop.f32.mrb[0].mxu0
  %v7111 = vadd.f32 0.0, %v7110
  %v7112 = vpop.f32.mrb[0].mxu0
  %v7113 = vpop.f32.mrb[0].mxu0
  %v7114 = vadd.f32 0.0, %v7113
  %v7115 = vpop.f32.mrb[0].mxu0
  %7116 = vmatprep.mubr.bf16.mxu0 0
  %7117 = vmatmul.mubr.bf16.gmra.mrb[0].mxu0 %v7009
  %v7118 = vpop.f32.mrb[0].mxu0
  %v7119 = vadd.f32 0.0, %v7118
  %v7120 = vpop.f32.mrb[0].mxu0
  %v7121 = vpop.f32.mrb[0].mxu0
  %v7122 = vadd.f32 0.0, %v7121
  %v7123 = vpop.f32.mrb[0].mxu0
  %7124 = vmatprep.mubr.bf16.mxu0 0
  %7125 = vmatmul.mubr.bf16.gmra.mrb[0].mxu0 %v7013
  %v7126 = vpop.f32.mrb[0].mxu0
  %v7127 = vadd.f32 0.0, %v7126
  %v7128 = vpop.f32.mrb[0].mxu0
  %v7129 = vpop.f32.mrb[0].mxu0
  %v7130 = vadd.f32 0.0, %v7129
  %v7131 = vpop.f32.mrb[0].mxu0
  %7132 = vmatprep.mubr.bf16.mxu0 0
  %7133 = vmatmul.mubr.bf16.gmra.mrb[0].mxu0 %v7022
  %v7134 = vpop.f32.mrb[0].mxu0
  %v7135 = vadd.f32 0.0, %v7134
  %v7136 = vpop.f32.mrb[0].mxu0
  %v7137 = vpop.f32.mrb[0].mxu0
  %v7138 = vadd.f32 0.0, %v7137
  %v7139 = vpop.f32.mrb[0].mxu0
  %7140 = vmatprep.mubr.bf16.mxu0 0
  %7141 = vmatmul.mubr.bf16.gmra.mrb[0].mxu0 %v7021
  %v7142 = vpop.f32.mrb[0].mxu0
  %v7143 = vadd.f32 0.0, %v7142
  %v7144 = vpop.f32.mrb[0].mxu0
  %v7145 = vpop.f32.mrb[0].mxu0
  %v7146 = vpop.f32.mrb[0].mxu0
  %7147 = vdwg.mxu0
  %v7148 = vadd.f32 %v6963, %v7111
  %v7149 = vadd.f32 %v6964, %v7114
  %v7150 = vadd.f32 %v6965, %v7119
  %v7151 = vadd.f32 %v6966, %v7122
  %v7152 = vadd.f32 %v6967, %v7127
  %v7153 = vadd.f32 %v6968, %v7130
  %v7154 = vadd.f32 %v6969, %v7135
  %v7155 = vadd.f32 %v6970, %v7138
  %v7156 = vadd.f32 %v6971, %v7143
  %v7157 = vld [vmem:[#allocation5] sm:$0xc]
  %s7158 = scalar_lea.vmem %s19, 256
  %v7159 = vld [vmem:[%s7158] sm:$0xf]
  %v7160 = vld [vmem:[%s7158 + $0x4] sm:$0xf]
  %v7161 = vld [vmem:[%s7158 + $0x8] sm:$0xf]
  %v7162 = vld [vmem:[%s7158 + $0xc] sm:$0xf]
  %v7163 = vld [vmem:[%s7158 + $0x10] sm:$0xf]
  %v7164 = vld [vmem:[%s7158 + $0x14] sm:$0xf]
  %v7165 = vld [vmem:[%s7158 + $0x18] sm:$0xf]
  %v7166 = vld [vmem:[%s7158 + $0x1c] sm:$0xf]
  %v7167 = vld [vmem:[%s7158 + $0x20] sm:$0xf]
  %v7168 = vld [vmem:[%s7158 + $0x24] sm:$0xf]
  %v7169 = vld [vmem:[%s7158 + $0x28] sm:$0xf]
  %v7170 = vld [vmem:[%s7158 + $0x2c] sm:$0xf]
  %v7171 = vld [vmem:[%s7158 + $0x30] sm:$0xf]
  %v7172 = vld [vmem:[%s7158 + $0x34] sm:$0xf]
  %v7173 = vld [vmem:[%s7158 + $0x38] sm:$0xf]
  %v7174 = vld [vmem:[%s7158 + $0x3c] sm:$0xf]
  %v7176 = vunpack.c.l.b16 %v7157
  %v7177 = vpack.c.b16 %v6503, %v7176
  %vm7178 = vcmask 1045504
  %v7179 = vrot.slane %v7177, 2
  %v7180 = vrot.slane %v6512, 2
  %v7181 = vsel %vm7178, %v7179, %v7180
  %v7182 = vrot.slane %v6513, 2
  %v7183 = vsel %vm7178, %v7180, %v7182
  %v7184 = vrot.slane %v6514, 2
  %v7185 = vsel %vm7178, %v7182, %v7184
  %v7186 = vrot.slane %v6992, 2
  %v7187 = vsel %vm7178, %v7184, %v7186
  %v7209 = vunpack.c.l.b16 %v7159
  %v7210 = vunpack.c.l.b16 %v7160
  %v7211 = vunpack.c.l.b16 %v7161
  %v7212 = vunpack.c.l.b16 %v7162
  %v7213 = vunpack.c.l.b16 %v7163
  %v7214 = vunpack.c.l.b16 %v7164
  %v7215 = vunpack.c.l.b16 %v7165
  %v7216 = vunpack.c.l.b16 %v7166
  %v7217 = vunpack.c.l.b16 %v7167
  %v7218 = vunpack.c.l.b16 %v7168
  %v7219 = vunpack.c.l.b16 %v7169
  %v7220 = vunpack.c.l.b16 %v7170
  %v7221 = vunpack.c.l.b16 %v7171
  %v7222 = vunpack.c.l.b16 %v7172
  %v7223 = vunpack.c.l.b16 %v7173
  %v7224 = vunpack.c.l.b16 %v7174
  %v7225 = vpack.c.b16 %v7210, %v7209
  %v7226 = vpack.c.b16 %v7212, %v7211
  %v7227 = vpack.c.b16 %v7214, %v7213
  %v7228 = vpack.c.b16 %v7216, %v7215
  %v7229 = vpack.c.b16 %v7218, %v7217
  %v7230 = vpack.c.b16 %v7220, %v7219
  %v7231 = vpack.c.b16 %v7222, %v7221
  %v7232 = vpack.c.b16 %v7224, %v7223
  %7241 = vmatprep.subr.bf16.mxu0 0
  %7242 = vmatpush1.bf16.msra.mxu0 %v7225
  %7243 = vmatprep.subr.bf16.mxu0 0
  %7244 = vmatpush1.bf16.msra.mxu0 %v7226
  %7245 = vmatprep.subr.bf16.mxu0 0
  %7246 = vmatpush1.bf16.msra.mxu0 %v7227
  %7247 = vmatprep.subr.bf16.mxu0 0
  %7248 = vmatpush1.bf16.msra.mxu0 %v7228
  %7249 = vmatprep.subr.bf16.mxu0 0
  %7250 = vmatpush1.bf16.msra.mxu0 %v7229
  %7251 = vmatprep.subr.bf16.mxu0 0
  %7252 = vmatpush1.bf16.msra.mxu0 %v7230
  %7253 = vmatprep.subr.bf16.mxu0 0
  %7254 = vmatpush1.bf16.msra.mxu0 %v7231
  %7255 = vmatprep.subr.bf16.mxu0 0
  %7256 = vmatpush1.bf16.msra.mxu0 %v7232
  %7257 = vmatprep.subr.bf16.mxu0 0
  %7258 = vmatpush1.bf16.msra.mxu0 0
  %7259 = vmatprep.subr.bf16.mxu0 0
  %7260 = vmatpush1.bf16.msra.mxu0 0
  %7261 = vmatprep.subr.bf16.mxu0 0
  %7262 = vmatpush1.bf16.msra.mxu0 0
  %7263 = vmatprep.subr.bf16.mxu0 0
  %7264 = vmatpush1.bf16.msra.mxu0 0
  %7265 = vmatprep.subr.bf16.mxu0 0
  %7266 = vmatpush1.bf16.msra.mxu0 0
  %7267 = vmatprep.subr.bf16.mxu0 0
  %7268 = vmatpush1.bf16.msra.mxu0 0
  %7269 = vmatprep.subr.bf16.mxu0 0
  %7270 = vmatpush1.bf16.msra.mxu0 0
  %7271 = vmatprep.subr.bf16.mxu0 0
  %7272 = vmatpush1.bf16.msra.mxu0 0
  %7273 = vmatprep.mubr.bf16.mxu0 0
  %7274 = vmatmul.mubr.bf16.gmra.mrb[0].mxu0 %v7181
  %v7275 = vpop.f32.mrb[0].mxu0
  %v7276 = vadd.f32 0.0, %v7275
  %v7277 = vpop.f32.mrb[0].mxu0
  %v7278 = vpop.f32.mrb[0].mxu0
  %v7279 = vadd.f32 0.0, %v7278
  %v7280 = vpop.f32.mrb[0].mxu0
  %7281 = vmatprep.mubr.bf16.mxu0 0
  %7282 = vmatmul.mubr.bf16.gmra.mrb[0].mxu0 %v7183
  %v7283 = vpop.f32.mrb[0].mxu0
  %v7284 = vadd.f32 0.0, %v7283
  %v7285 = vpop.f32.mrb[0].mxu0
  %v7286 = vpop.f32.mrb[0].mxu0
  %v7287 = vadd.f32 0.0, %v7286
  %v7288 = vpop.f32.mrb[0].mxu0
  %7289 = vmatprep.mubr.bf16.mxu0 0
  %7290 = vmatmul.mubr.bf16.gmra.mrb[0].mxu0 %v7185
  %v7291 = vpop.f32.mrb[0].mxu0
  %v7292 = vadd.f32 0.0, %v7291
  %v7293 = vpop.f32.mrb[0].mxu0
  %v7294 = vpop.f32.mrb[0].mxu0
  %v7295 = vadd.f32 0.0, %v7294
  %v7296 = vpop.f32.mrb[0].mxu0
  %7297 = vmatprep.mubr.bf16.mxu0 0
  %7298 = vmatmul.mubr.bf16.gmra.mrb[0].mxu0 %v7187
  %v7299 = vpop.f32.mrb[0].mxu0
  %v7300 = vadd.f32 0.0, %v7299
  %v7301 = vpop.f32.mrb[0].mxu0
  %v7302 = vpop.f32.mrb[0].mxu0
  %v7303 = vadd.f32 0.0, %v7302
  %v7304 = vpop.f32.mrb[0].mxu0
  %7305 = vmatprep.mubr.bf16.mxu0 0
  %7306 = vmatmul.mubr.bf16.gmra.mrb[0].mxu0 %v7186
  %v7307 = vpop.f32.mrb[0].mxu0
  %v7308 = vadd.f32 0.0, %v7307
  %v7309 = vpop.f32.mrb[0].mxu0
  %v7310 = vpop.f32.mrb[0].mxu0
  %v7311 = vpop.f32.mrb[0].mxu0
  %7312 = vdwg.mxu0
  %v7313 = vadd.f32 %v7148, %v7276
  %v7314 = vadd.f32 %v7149, %v7279
  %v7315 = vadd.f32 %v7150, %v7284
  %v7316 = vadd.f32 %v7151, %v7287
  %v7317 = vadd.f32 %v7152, %v7292
  %v7318 = vadd.f32 %v7153, %v7295
  %v7319 = vadd.f32 %v7154, %v7300
  %v7320 = vadd.f32 %v7155, %v7303
  %v7321 = vadd.f32 %v7156, %v7308
  %v7322 = vld [vmem:[%s20] sm:$0x1]
  %v7324 = vlaneseq
  %v7325 = vshrl.u32 %v7324, 7
  %v7326 = vsub.s32 0, %v7325
  %v7327 = vrot.slane %v7322, %v7326
  %v7329 = vadd.f32 %v7313, %v7327
  %v7330 = vadd.f32 %v7314, %v7327
  %v7331 = vadd.f32 %v7315, %v7327
  %v7332 = vadd.f32 %v7316, %v7327
  %v7333 = vtanh.pop %v7329
  %v7334 = vtanh.pop %v7330
  %v7335 = vtanh.pop %v7331
  %v7336 = vtanh.pop %v7332
  %7337 = vst [vmem:[%s21] sm:$0xff] %v7333
  %7338 = vst [vmem:[%s21 + $0x8] sm:$0xff] %v7334
  %7339 = vst [vmem:[%s21 + $0x10] sm:$0xff] %v7335
  %7340 = vst [vmem:[%s21 + $0x18] sm:$0xff] %v7336
  %v7341 = vld [vmem:[%s20] sm:$0x1]
  %v7343 = vlaneseq
  %v7344 = vshrl.u32 %v7343, 7
  %v7345 = vsub.s32 0, %v7344
  %v7346 = vrot.slane %v7341, %v7345
  %v7348 = vadd.f32 %v7317, %v7346
  %v7349 = vadd.f32 %v7318, %v7346
  %v7350 = vadd.f32 %v7319, %v7346
  %v7351 = vadd.f32 %v7320, %v7346
  %v7352 = vadd.f32 %v7321, %v7346
  %v7353 = vtanh.pop %v7348
  %v7354 = vtanh.pop %v7349
  %v7355 = vtanh.pop %v7350
  %v7356 = vtanh.pop %v7351
  %v7357 = vtanh.pop %v7352
  %s7358 = scalar_lea.vmem %s21, 32
  %7359 = vst [vmem:[%s7358 - $0x4] sm:$0xf0] %v7353
  %7360 = vst [vmem:[%s7358 + $0x4] sm:$0xff] %v7354
  %7361 = vst [vmem:[%s7358 + $0xc] sm:$0xff] %v7355
  %7362 = vst [vmem:[%s7358 + $0x14] sm:$0xff] %v7356
  %7363 = vst [vmem:[%s7358 + $0x1c] sm:$0xf] %v7357
  // Predicated region
  $region86: #{_lambda_.1} parent=0 // pred_check
    _
  $region87: #{_lambda_.1} parent=0 // pred_check_branch
    %7365 = sbr.rel (0) target = $region89
  $region88: #{_lambda_.1} parent=0 // pred_region
    _
  $region89: #{_lambda_.1} parent=0 // pred_fallthru
    _
  // Predicated region
  $region90: #{_lambda_.1} parent=0 // pred_check
    _
  $region91: #{_lambda_.1} parent=0 // pred_check_branch
    %7367 = sbr.rel (0) target = $region93
  $region92: #{_lambda_.1} parent=0 // pred_region
    _
  $region93: #{_lambda_.1} parent=0 // pred_fallthru
    _

</llo_original>
